<compile_context>
chip_gen: v7x
topology: tpu7x:2x2x1
jax: 0.10.0
libtpu: 0.0.40
codegen_flags: <defaults>
</compile_context>

<pallas_src>
import functools

import jax
import jax.numpy as jnp
from jax import lax
from jax.experimental import pallas as pl
from jax.experimental.pallas import tpu as pltpu

_EPS = 1e-5
_MIB = 1024 * 1024


def _bn_eval(v, gamma, beta, mean, var):
    # eval-mode BatchNorm1d: rows = samples, cols = channels
    return (v - mean) * gamma * lax.rsqrt(var + _EPS) + beta


def _round_up(v, m):
    return (v + m - 1) // m * m


def _vmem_limit_bytes():
    """Per-generation VMEM cap: ~112 MiB on 128-MiB parts (v5e/v6e), ~48 MiB on v7x."""
    try:
        cap = pltpu.get_tpu_info().vmem_capacity_bytes
    except Exception:
        kind = jax.devices()[0].device_kind.lower()
        cap = 64 * _MIB if "v7" in kind else 128 * _MIB
    return int(min(max(cap - 16 * _MIB, 32 * _MIB), 112 * _MIB))


# ----------------------------- Pallas kernels ------------------------------

def encoder_kernel(x_ref, w1_ref, b1_ref, g_ref, be_ref, m_ref, v_ref,
                   w2_ref, b2_ref, o_ref):
    """Node encoder: Linear -> BN(eval) -> ReLU -> (Dropout=id) -> Linear.  Node-tiled."""
    h = (jnp.dot(x_ref[...].astype(jnp.bfloat16), w1_ref[...],
                 preferred_element_type=jnp.float32) + b1_ref[...])
    h = _bn_eval(h, g_ref[...], be_ref[...], m_ref[...], v_ref[...])
    h = jnp.maximum(h, 0.0)
    o_ref[...] = (jnp.dot(h.astype(jnp.bfloat16), w2_ref[...],
                          preferred_element_type=jnp.float32) + b2_ref[...])


def conv_gatprep_kernel(ea_ref, src_ref, dstrow_ref, x_ref,
                        ew1_ref, eb1_ref, eg_ref, ebe_ref, em_ref, ev_ref,
                        ew2_ref, eb2m_ref,
                        root_ref, cb_ref, g_ref, be_ref, m_ref, v_ref,
                        invdeg_ref, gatw_ref, attsrc_ref, attdst_ref,
                        s_ref, adst_ref, acc_ref, *, hdim, heads, hh):
    """NNConv(aggr='mean') with the shared edge MLP recomputed per edge tile, then
    ELU -> BN(eval) -> (Dropout=id) -> fused GAT prep.  Grid: edge tiles (reduction)."""
    f32, bf16 = jnp.float32, jnp.bfloat16
    t = pl.program_id(0)
    nt = pl.num_programs(0)
    te = ea_ref.shape[0]
    n_pad = acc_ref.shape[0]

    @pl.when(t == 0)
    def _():
        acc_ref[...] = jnp.zeros_like(acc_ref)

    # --- gather x_j: per-tile one-hot lives only in vregs; bf16 -> single-pass MXU ---
    iota_n = lax.broadcasted_iota(jnp.int32, (te, n_pad), 1)
    src_oh = (src_ref[...] == iota_n).astype(bf16)                      # (TE, N)
    x_bf = x_ref[...].astype(bf16)
    x_src = jnp.dot(src_oh, x_bf, preferred_element_type=f32)           # (TE, H) f32

    # --- shared edge MLP layer 1 recomputed per tile: (E,H,H) never materialized ---
    he = (jnp.dot(ea_ref[...].astype(bf16), ew1_ref[...],
                  preferred_element_type=f32) + eb1_ref[...])
    he = _bn_eval(he, eg_ref[...], ebe_ref[...], em_ref[...], ev_ref[...])
    he = jnp.maximum(he, 0.0).astype(bf16)

    # --- per-edge x_j @ W_e restaged: layer-2 weights consumed as aligned (H,H) windows
    #     of the (H,H,H) ref, so the (TE, H*H) value is never live (bounded vregs).
    #     The layer-2 bias is folded into the (H, H) matrix eb2m applied to x_j.
    msg = jnp.dot(x_src.astype(bf16), eb2m_ref[...], preferred_element_type=f32)
    for h in range(hdim):
        ew_h = jnp.dot(he, ew2_ref[h], preferred_element_type=f32)      # (TE, H)
        msg = msg + x_src[:, h:h + 1] * ew_h

    # --- scatter-add messages to destination nodes ---
    iota_e = lax.broadcasted_iota(jnp.int32, (n_pad, te), 0)
    dst_oh_t = (dstrow_ref[0] == iota_e).astype(bf16)                   # (N, TE)
    acc_ref[...] += jnp.dot(dst_oh_t, msg.astype(bf16), preferred_element_type=f32)

    @pl.when(t == nt - 1)
    def _():
        aggr = acc_ref[...] * invdeg_ref[...]                           # mean aggregation
        out = (aggr
               + jnp.dot(x_bf, root_ref[...], preferred_element_type=f32)
               + cb_ref[...])
        out = jnp.where(out > 0.0, out, jnp.exp(jnp.minimum(out, 0.0)) - 1.0)   # ELU
        out = _bn_eval(out, g_ref[...], be_ref[...], m_ref[...], v_ref[...])
        xp = jnp.dot(out.astype(bf16), gatw_ref[...], preferred_element_type=f32)  # (N, HH)
        xp_bf = xp.astype(bf16)
        # fused GAT source-side matrix: [ W x | 1-mask | a_src . (W x) ]
        s_ref[:, 0:hh] = xp
        s_ref[:, hh:hh + heads] = jnp.ones((n_pad, heads), f32)
        s_ref[:, hh + heads:] = jnp.dot(xp_bf, attsrc_ref[...],
                                        preferred_element_type=f32)
        adst_ref[...] = jnp.dot(xp_bf, attdst_ref[...], preferred_element_type=f32)


def gat_aggregate_kernel(src_ref, dstc_ref, dstrow_ref, s_ref, d_ref,
                         exp2_ref, exph_ref, bias_ref,
                         o_ref, acc_ref, *, heads, hh):
    """GATConv segment softmax + weighted aggregation (heads concatenated).
    Grid: edge tiles (self-loops included).  Fused gathers/scatter, bf16 one-hot dots."""
    f32, bf16 = jnp.float32, jnp.bfloat16
    t = pl.program_id(0)
    nt = pl.num_programs(0)
    te = src_ref.shape[0]
    n_pad = acc_ref.shape[0]

    @pl.when(t == 0)
    def _():
        acc_ref[...] = jnp.zeros_like(acc_ref)

    iota_n = lax.broadcasted_iota(jnp.int32, (te, n_pad), 1)
    src_oh = (src_ref[...] == iota_n).astype(bf16)                      # (TE, N)
    dst_oh = (dstc_ref[...] == iota_n).astype(bf16)                     # (TE, N)
    iota_e = lax.broadcasted_iota(jnp.int32, (n_pad, te), 0)
    dst_oh_t = (dstrow_ref[0] == iota_e).astype(bf16)                   # (N, TE)

    # fused gathers: source side brings [xp | 1-mask | a_src], destination [a_dst | cmax]
    g_src = jnp.dot(src_oh, s_ref[...].astype(bf16), preferred_element_type=f32)
    g_dst = jnp.dot(dst_oh, d_ref[...].astype(bf16), preferred_element_type=f32)
    xps_and_mask = g_src[:, :hh + heads]                                # (TE, HH+heads)
    a_src = g_src[:, hh + heads:]                                       # (TE, heads)
    a_dst = g_dst[:, :heads]
    c_max = g_dst[:, heads:]

    logit = a_src + a_dst
    logit = jnp.where(logit > 0.0, logit, 0.2 * logit)                  # LeakyReLU(0.2)
    p = jnp.exp(logit - c_max)                                          # exact per-dst max

    # tiny bf16 matmul produces [expand_heads(p) | p] in one push (no reshape needed)
    w2 = jnp.dot(p.astype(bf16), exp2_ref[...], preferred_element_type=f32)
    scat = xps_and_mask * w2                                            # [p*xp_src | p*mask]
    acc_ref[...] += jnp.dot(dst_oh_t, scat.astype(bf16), preferred_element_type=f32)

    @pl.when(t == nt - 1)
    def _():
        # real rows have den >= ~1 (max attained); padded rows have den == 0 -> clamp
        den = jnp.maximum(acc_ref[:, hh:], 1e-6)
        inv = pl.reciprocal(den, approx=True)                           # EUP slot
        invw = jnp.dot(inv.astype(bf16), exph_ref[...], preferred_element_type=f32)
        o_ref[...] = acc_ref[:, :hh] * invw + bias_ref[...]


def pool_output_kernel(x_ref, bidrow_ref, invc_ref,
                       w1m_ref, w1a_ref, b1_ref, g_ref, be_ref, m_ref, v_ref,
                       w2_ref, b2_ref, w3_ref, b3_ref,
                       o_ref, acc_ref):
    """[global_mean_pool ; global_add_pool] -> output MLP.  Grid: node tiles."""
    f32, bf16 = jnp.float32, jnp.bfloat16
    t = pl.program_id(0)
    nt = pl.num_programs(0)
    tn = x_ref.shape[0]
    g_pad = acc_ref.shape[0]

    @pl.when(t == 0)
    def _():
        acc_ref[...] = jnp.zeros_like(acc_ref)

    iota_n = lax.broadcasted_iota(jnp.int32, (g_pad, tn), 0)
    b_oh_t = (bidrow_ref[0] == iota_n).astype(bf16)    # (G, TN); padded nodes -> zero column
    acc_ref[...] += jnp.dot(b_oh_t, x_ref[...].astype(bf16), preferred_element_type=f32)

    @pl.when(t == nt - 1)
    def _():
        addp = acc_ref[...]
        meanp = addp * invc_ref[...]
        # concat([mean, add]) @ W1 == mean @ W1[:H] + add @ W1[H:]
        h = (jnp.dot(meanp.astype(bf16), w1m_ref[...], preferred_element_type=f32)
             + jnp.dot(addp.astype(bf16), w1a_ref[...], preferred_element_type=f32)
             + b1_ref[...])
        h = _bn_eval(h, g_ref[...], be_ref[...], m_ref[...], v_ref[...])
        h = jnp.maximum(h, 0.0)
        h = jnp.dot(h.astype(bf16), w2_ref[...], preferred_element_type=f32) + b2_ref[...]
        h = jnp.maximum(h, 0.0)
        o_ref[...] = (jnp.dot(h.astype(bf16), w3_ref[...],
                              preferred_element_type=f32) + b3_ref[...])


# ------------------------------ call plumbing ------------------------------

def _full_block(shape):
    nd = len(shape)
    return pl.BlockSpec(tuple(shape), lambda *_: (0,) * nd)


def _call(kernel, grid, args, out_shape, out_specs, scratch, semantics):
    arrays = [a for a, _ in args]
    specs = [s if s is not None else _full_block(a.shape) for a, s in args]
    return pl.pallas_call(
        kernel,
        grid=grid,
        in_specs=specs,
        out_specs=out_specs,
        out_shape=out_shape,
        scratch_shapes=scratch,
        compiler_params=pltpu.CompilerParams(
            dimension_semantics=semantics,
            vmem_limit_bytes=_vmem_limit_bytes()),
    )(*arrays)


# ------------------------------- glue / setup ------------------------------

def _att_to_matrix(att):
    """att (heads, hd) -> M (heads*hd, heads) with M[h*hd+d, h] = att[h, d]."""
    heads, hd = att.shape
    eye = jnp.eye(heads, dtype=jnp.float32)
    return (att[:, :, None] * eye[:, None, :]).reshape(heads * hd, heads)


def init_params(key, f_node, f_edge, hidden, heads, hd):
    def nrm(k, shape, scale=0.1):
        return scale * jax.random.normal(k, shape, dtype=jnp.float32)

    def bn(k, dim):
        k1, k2, k3, k4 = jax.random.split(k, 4)
        return dict(gamma=1.0 + 0.05 * jax.random.normal(k1, (1, dim), dtype=jnp.float32),
                    beta=0.05 * jax.random.normal(k2, (1, dim), dtype=jnp.float32),
                    mean=0.1 * jax.random.normal(k3, (1, dim), dtype=jnp.float32),
                    var=1.0 + 0.1 * jax.random.uniform(k4, (1, dim), dtype=jnp.float32))

    ks = jax.random.split(key, 32)
    H = hidden
    p = {}
    p['enc_w1'] = nrm(ks[0], (f_node, H)); p['enc_b1'] = nrm(ks[1], (1, H))
    p['enc_bn'] = bn(ks[2], H)
    p['enc_w2'] = nrm(ks[3], (H, H)); p['enc_b2'] = nrm(ks[4], (1, H))
    p['edge_w1'] = nrm(ks[5], (f_edge, H)); p['edge_b1'] = nrm(ks[6], (1, H))
    p['edge_bn'] = bn(ks[7], H)
    p['edge_w2'] = nrm(ks[8], (H, H * H), 0.05); p['edge_b2'] = nrm(ks[9], (1, H * H), 0.05)
    p['conv1_root'] = nrm(ks[10], (H, H)); p['conv1_bias'] = nrm(ks[11], (1, H))
    p['conv2_root'] = nrm(ks[12], (H, H)); p['conv2_bias'] = nrm(ks[13], (1, H))
    p['bn1'] = bn(ks[14], H); p['bn2'] = bn(ks[15], H)
    p['gat1_w'] = nrm(ks[16], (H, heads * hd)); p['gat1_bias'] = nrm(ks[17], (1, heads * hd))
    p['gat1_asrc'] = nrm(ks[18], (heads, hd)); p['gat1_adst'] = nrm(ks[19], (heads, hd))
    p['gat2_w'] = nrm(ks[20], (H, heads * hd)); p['gat2_bias'] = nrm(ks[21], (1, heads * hd))
    p['gat2_asrc'] = nrm(ks[22], (heads, hd)); p['gat2_adst'] = nrm(ks[23], (heads, hd))
    p['out_w1'] = nrm(ks[24], (2 * H, H)); p['out_b1'] = nrm(ks[25], (1, H))
    p['out_bn'] = bn(ks[26], H)
    p['out_w2'] = nrm(ks[27], (H, H // 2)); p['out_b2'] = nrm(ks[28], (1, H // 2))
    p['out_w3'] = nrm(ks[29], (H // 2, 1)); p['out_b3'] = nrm(ks[30], (1, 1))
    return p


def enhanced_molecular_graph_forward(params, x, edge_index, edge_attr, batch,
                                     num_graphs, hidden, heads, hd,
                                     tile_nodes=None, tile_edges=None):
    f32, bf16, i32 = jnp.float32, jnp.bfloat16, jnp.int32
    N, F_node = x.shape
    E = edge_index.shape[1]
    F_edge = edge_attr.shape[1]
    H = hidden
    HH = heads * hd

    # Tile sizes: 128-512 in production (biggest single lever per the perf review),
    # clamped to the padded problem size so small demos still run.
    TN = tile_nodes if tile_nodes is not None else min(256, _round_up(N, 8))
    TE = tile_edges if tile_edges is not None else min(512, _round_up(E + N, 8))
    assert TN % 8 == 0 and TE % 8 == 0

    N_pad = _round_up(N, TN)
    E_pad = _round_up(E, TE)
    G_pad = _round_up(num_graphs, 8)

    src = edge_index[0].astype(i32)
    dst = edge_index[1].astype(i32)

    x_pad = jnp.zeros((N_pad, F_node), f32).at[:N].set(x.astype(f32))
    ea_pad = jnp.zeros((E_pad, F_edge), f32).at[:E].set(edge_attr.astype(f32))

    # NNConv edge index arrays (padded edges get id -1 -> never matched by the one-hots)
    src_col = jnp.full((E_pad, 1), -1, i32).at[:E, 0].set(src)
    dst_row = jnp.full((E_pad,), -1, i32).at[:E].set(dst).reshape(E_pad // TE, 1, TE)
    deg = jnp.zeros((N_pad,), f32).at[dst].add(1.0)
    inv_deg = (1.0 / jnp.maximum(deg, 1.0)).reshape(N_pad, 1)

    # GAT edge list: self-loops for *real* nodes only (PyG default add_self_loops)
    loops = jnp.arange(N, dtype=i32)
    src2 = jnp.concatenate([src, loops])
    dst2 = jnp.concatenate([dst, loops])
    E2 = E + N
    E2_pad = _round_up(E2, TE)
    src2_col = jnp.full((E2_pad, 1), -1, i32).at[:E2, 0].set(src2)
    dst2_col = jnp.full((E2_pad, 1), -1, i32).at[:E2, 0].set(dst2)
    dst2_row = jnp.full((E2_pad,), -1, i32).at[:E2].set(dst2).reshape(E2_pad // TE, 1, TE)

    # pooling operators
    bid = batch.astype(i32)
    bid_row = jnp.full((N_pad,), -1, i32).at[:N].set(bid).reshape(N_pad // TN, 1, TN)
    cnt = jnp.zeros((G_pad,), f32).at[bid].add(1.0)
    inv_cnt = (1.0 / jnp.maximum(cnt, 1.0)).reshape(G_pad, 1)

    # GAT attention projections and head-expansion matrices (tiny, exact in bf16)
    att1_src = _att_to_matrix(params['gat1_asrc']); att1_dst = _att_to_matrix(params['gat1_adst'])
    att2_src = _att_to_matrix(params['gat2_asrc']); att2_dst = _att_to_matrix(params['gat2_adst'])
    expand_hh = jnp.kron(jnp.eye(heads, dtype=f32), jnp.ones((1, hd), dtype=f32))  # (heads, HH)
    expand2 = jnp.concatenate([expand_hh, jnp.eye(heads, dtype=f32)], axis=1)      # (heads, HH+h)

    bc = lambda w: w.astype(bf16)      # bf16 MXU operands; elementwise math stays f32
    # Layer-2 edge-MLP weight as (H, H, H): slice h is the aligned (H, H) block that
    # multiplies x_j[h]; its bias folded into an (H, H) matrix applied to x_j.
    ew2_3d = bc(params['edge_w2'].reshape(H, H, H).transpose(1, 0, 2))
    eb2_mat = bc(params['edge_b2'].reshape(H, H))

    # ---------------- 1) node encoder ----------------
    h0 = _call(
        encoder_kernel, grid=(N_pad // TN,),
        args=[(x_pad, pl.BlockSpec((TN, F_node), lambda t: (t, 0))),
              (bc(params['enc_w1']), None), (params['enc_b1'], None),
              (params['enc_bn']['gamma'], None), (params['enc_bn']['beta'], None),
              (params['enc_bn']['mean'], None), (params['enc_bn']['var'], None),
              (bc(params['enc_w2']), None), (params['enc_b2'], None)],
        out_shape=jax.ShapeDtypeStruct((N_pad, H), f32),
        out_specs=pl.BlockSpec((TN, H), lambda t: (t, 0)),
        scratch=[], semantics=("parallel",))

    conv_kernel = functools.partial(conv_gatprep_kernel, hdim=H, heads=heads, hh=HH)
    gat_kernel = functools.partial(gat_aggregate_kernel, heads=heads, hh=HH)

    # ------------- fused NNConv(+ELU+BN) + GAT-prep layer -------------
    def conv_gat_prep(x_nodes, root_bf, cbias, bn_p, gatw_bf, attsrc, attdst):
        args = [
            (ea_pad, pl.BlockSpec((TE, F_edge), lambda t: (t, 0))),
            (src_col, pl.BlockSpec((TE, 1), lambda t: (t, 0))),
            (dst_row, pl.BlockSpec((1, 1, TE), lambda t: (t, 0, 0))),
            (x_nodes, None),
            (bc(params['edge_w1']), None), (params['edge_b1'], None),
            (params['edge_bn']['gamma'], None), (params['edge_bn']['beta'], None),
            (params['edge_bn']['mean'], None), (params['edge_bn']['var'], None),
            (ew2_3d, None), (eb2_mat, None),
            (root_bf, None), (cbias, None),
            (bn_p['gamma'], None), (bn_p['beta'], None),
            (bn_p['mean'], None), (bn_p['var'], None),
            (inv_deg, None),
            (gatw_bf, None), (bc(attsrc), None), (bc(attdst), None),
        ]
        return _call(
            conv_kernel, grid=(E_pad // TE,), args=args,
            out_shape=(jax.ShapeDtypeStruct((N_pad, HH + 2 * heads), f32),
                       jax.ShapeDtypeStruct((N_pad, heads), f32)),
            out_specs=(_full_block((N_pad, HH + 2 * heads)), _full_block((N_pad, heads))),
            scratch=[pltpu.VMEM((N_pad, H), f32)],
            semantics=("arbitrary",))

    # ------------- GAT segment softmax + aggregation layer -------------
    def gat_layer(s_mat, adst, gat_bias):
        a_src = s_mat[:, HH + heads:]
        # exact per-destination max (LeakyReLU is monotone, so max over incoming edges
        # = LeakyReLU(max_src a_src + a_dst)); small indexed XLA scatter-max, no one-hot.
        seg = jnp.full((N_pad, heads), -1e30, f32).at[dst2].max(a_src[src2])
        cmax = seg + adst
        cmax = jnp.where(cmax > 0.0, cmax, 0.2 * cmax)
        cmax = jnp.where(seg > -1e29, cmax, 0.0)
        d_mat = jnp.concatenate([adst, cmax], axis=1)                   # (N, 2*heads)
        args = [
            (src2_col, pl.BlockSpec((TE, 1), lambda t: (t, 0))),
            (dst2_col, pl.BlockSpec((TE, 1), lambda t: (t, 0))),
            (dst2_row, pl.BlockSpec((1, 1, TE), lambda t: (t, 0, 0))),
            (s_mat, None), (d_mat, None),
            (bc(expand2), None), (bc(expand_hh), None), (gat_bias, None),
        ]
        return _call(
            gat_kernel, grid=(E2_pad // TE,), args=args,
            out_shape=jax.ShapeDtypeStruct((N_pad, HH), f32),
            out_specs=_full_block((N_pad, HH)),
            scratch=[pltpu.VMEM((N_pad, HH + heads), f32)],
            semantics=("arbitrary",))

    # conv1 -> ELU -> BN1 -> gat1
    s1, adst1 = conv_gat_prep(h0, bc(params['conv1_root']), params['conv1_bias'],
                              params['bn1'], bc(params['gat1_w']), att1_src, att1_dst)
    x1 = gat_layer(s1, adst1, params['gat1_bias'])

    # conv2 -> ELU -> BN2 -> gat2
    s2, adst2 = conv_gat_prep(x1, bc(params['conv2_root']), params['conv2_bias'],
                              params['bn2'], bc(params['gat2_w']), att2_src, att2_dst)
    x2 = gat_layer(s2, adst2, params['gat2_bias'])

    # ---------------- pooling + output MLP ----------------
    w1m = bc(params['out_w1'][:H, :])
    w1a = bc(params['out_w1'][H:, :])
    out = _call(
        pool_output_kernel, grid=(N_pad // TN,),
        args=[(x2, pl.BlockSpec((TN, H), lambda t: (t, 0))),
              (bid_row, pl.BlockSpec((1, 1, TN), lambda t: (t, 0, 0))),
              (inv_cnt, None),
              (w1m, None), (w1a, None), (params['out_b1'], None),
              (params['out_bn']['gamma'], None), (params['out_bn']['beta'], None),
              (params['out_bn']['mean'], None), (params['out_bn']['var'], None),
              (bc(params['out_w2']), None), (params['out_b2'], None),
              (bc(params['out_w3']), None), (params['out_b3'], None)],
        out_shape=jax.ShapeDtypeStruct((G_pad, 1), f32),
        out_specs=_full_block((G_pad, 1)),
        scratch=[pltpu.VMEM((G_pad, H), f32)],
        semantics=("arbitrary",))
    return out[:num_graphs, 0]   # .squeeze(-1)


if __name__ == "__main__":
    key = jax.random.PRNGKey(0)
    # two small molecules: 6-node rings (both edge directions), batched together
    N, G = 12, 2
    F_NODE, F_EDGE, HIDDEN = 16, 8, 32
    HEADS, HD = 8, HIDDEN // 8         # GAT: 8 heads x (hidden//8) -> hidden on concat

    src_l, dst_l = [], []
    for off in (0, 6):
        for i in range(6):
            a, b = off + i, off + (i + 1) % 6
            src_l += [a, b]
            dst_l += [b, a]
    edge_index = jnp.array([src_l, dst_l], dtype=jnp.int32)
    E = edge_index.shape[1]
    batch = jnp.array([0] * 6 + [1] * 6, dtype=jnp.int32)

    k_x, k_e, k_p = jax.random.split(key, 3)
    x = jax.random.normal(k_x, (N, F_NODE), dtype=jnp.float32)
    edge_attr = jax.random.normal(k_e, (E, F_EDGE), dtype=jnp.float32)

    params = init_params(k_p, F_NODE, F_EDGE, HIDDEN, HEADS, HD)

    fwd = jax.jit(enhanced_molecular_graph_forward,
                  static_argnames=("num_graphs", "hidden", "heads", "hd",
                                   "tile_nodes", "tile_edges"))
    # tiny explicit tiles so the demo exercises the multi-tile accumulation paths;
    # production leaves tile_nodes/tile_edges=None (128-512 rows per the perf review).
    out = fwd(params, x, edge_index, edge_attr, batch,
              num_graphs=G, hidden=HIDDEN, heads=HEADS, hd=HD,
              tile_nodes=8, tile_edges=8)
    out = jax.block_until_ready(out)
    assert out.shape == (G,) and out.dtype == jnp.float32
    assert bool(jnp.all(jnp.isfinite(out)))
    print("KERNEL_OK")
</pallas_src>

<mosaic_0001>
module attributes {stable_mosaic.version = 11 : i64} {
  func.func @conv_gatprep_kernel(%arg0: i32, %arg1: memref<8x8xf32, #tpu.memory_space<vmem>>, %arg2: memref<8x1xi32, #tpu.memory_space<vmem>>, %arg3: memref<1x1x8xi32, #tpu.memory_space<vmem>>, %arg4: memref<16x32xf32, #tpu.memory_space<vmem>>, %arg5: memref<8x32xbf16, #tpu.memory_space<vmem>>, %arg6: memref<1x32xf32, #tpu.memory_space<vmem>>, %arg7: memref<1x32xf32, #tpu.memory_space<vmem>>, %arg8: memref<1x32xf32, #tpu.memory_space<vmem>>, %arg9: memref<1x32xf32, #tpu.memory_space<vmem>>, %arg10: memref<1x32xf32, #tpu.memory_space<vmem>>, %arg11: memref<32x32x32xbf16, #tpu.memory_space<vmem>>, %arg12: memref<32x32xbf16, #tpu.memory_space<vmem>>, %arg13: memref<32x32xbf16, #tpu.memory_space<vmem>>, %arg14: memref<1x32xf32, #tpu.memory_space<vmem>>, %arg15: memref<1x32xf32, #tpu.memory_space<vmem>>, %arg16: memref<1x32xf32, #tpu.memory_space<vmem>>, %arg17: memref<1x32xf32, #tpu.memory_space<vmem>>, %arg18: memref<1x32xf32, #tpu.memory_space<vmem>>, %arg19: memref<16x1xf32, #tpu.memory_space<vmem>>, %arg20: memref<32x32xbf16, #tpu.memory_space<vmem>>, %arg21: memref<32x8xbf16, #tpu.memory_space<vmem>>, %arg22: memref<32x8xbf16, #tpu.memory_space<vmem>>, %arg23: memref<16x48xf32, #tpu.memory_space<vmem>>, %arg24: memref<16x8xf32, #tpu.memory_space<vmem>>, %arg25: memref<16x32xf32, #tpu.memory_space<vmem>>) attributes {dimension_semantics = [#tpu.dimension_semantics<arbitrary>], iteration_bounds = array<i64: 3>, scalar_prefetch = 0 : i64, scratch_operands = 1 : i64, tpu.core_type = #tpu.core_type<tc>, window_params = [{transform_indices = @transform_0, window_bounds = array<i64: 8, 8>}, {transform_indices = @transform_1, window_bounds = array<i64: 8, 1>}, {transform_indices = @transform_2, window_bounds = array<i64: 1, 1, 8>}, {pipeline_mode = #tpu.pipeline_mode<synchronous>, transform_indices = @transform_3, window_bounds = array<i64: 16, 32>}, {pipeline_mode = #tpu.pipeline_mode<synchronous>, transform_indices = @transform_4, window_bounds = array<i64: 8, 32>}, {pipeline_mode = #tpu.pipeline_mode<synchronous>, transform_indices = @transform_5, window_bounds = array<i64: 1, 32>}, {pipeline_mode = #tpu.pipeline_mode<synchronous>, transform_indices = @transform_6, window_bounds = array<i64: 1, 32>}, {pipeline_mode = #tpu.pipeline_mode<synchronous>, transform_indices = @transform_7, window_bounds = array<i64: 1, 32>}, {pipeline_mode = #tpu.pipeline_mode<synchronous>, transform_indices = @transform_8, window_bounds = array<i64: 1, 32>}, {pipeline_mode = #tpu.pipeline_mode<synchronous>, transform_indices = @transform_9, window_bounds = array<i64: 1, 32>}, {pipeline_mode = #tpu.pipeline_mode<synchronous>, transform_indices = @transform_10, window_bounds = array<i64: 32, 32, 32>}, {pipeline_mode = #tpu.pipeline_mode<synchronous>, transform_indices = @transform_11, window_bounds = array<i64: 32, 32>}, {pipeline_mode = #tpu.pipeline_mode<synchronous>, transform_indices = @transform_12, window_bounds = array<i64: 32, 32>}, {pipeline_mode = #tpu.pipeline_mode<synchronous>, transform_indices = @transform_13, window_bounds = array<i64: 1, 32>}, {pipeline_mode = #tpu.pipeline_mode<synchronous>, transform_indices = @transform_14, window_bounds = array<i64: 1, 32>}, {pipeline_mode = #tpu.pipeline_mode<synchronous>, transform_indices = @transform_15, window_bounds = array<i64: 1, 32>}, {pipeline_mode = #tpu.pipeline_mode<synchronous>, transform_indices = @transform_16, window_bounds = array<i64: 1, 32>}, {pipeline_mode = #tpu.pipeline_mode<synchronous>, transform_indices = @transform_17, window_bounds = array<i64: 1, 32>}, {pipeline_mode = #tpu.pipeline_mode<synchronous>, transform_indices = @transform_18, window_bounds = array<i64: 16, 1>}, {pipeline_mode = #tpu.pipeline_mode<synchronous>, transform_indices = @transform_19, window_bounds = array<i64: 32, 32>}, {pipeline_mode = #tpu.pipeline_mode<synchronous>, transform_indices = @transform_20, window_bounds = array<i64: 32, 8>}, {pipeline_mode = #tpu.pipeline_mode<synchronous>, transform_indices = @transform_21, window_bounds = array<i64: 32, 8>}, {pipeline_mode = #tpu.pipeline_mode<synchronous>, transform_indices = @transform_22, window_bounds = array<i64: 16, 48>}, {pipeline_mode = #tpu.pipeline_mode<synchronous>, transform_indices = @transform_23, window_bounds = array<i64: 16, 8>}]} {
    %c0_i32 = arith.constant 0 : i32
    %0 = arith.cmpi eq, %arg0, %c0_i32 : i32
    %1 = arith.extui %0 : i1 to i32
    %c0_i32_0 = arith.constant 0 : i32
    %2 = arith.cmpi ne, %1, %c0_i32_0 : i32
    scf.if %2 {
      %cst_130 = arith.constant 0.000000e+00 : f32
      %281 = vector.broadcast %cst_130 : f32 to vector<16x32xf32>
      %c0_131 = arith.constant 0 : index
      %c0_132 = arith.constant 0 : index
      %282 = vector.load %arg25[%c0_131, %c0_132] : memref<16x32xf32, #tpu.memory_space<vmem>>, vector<16x32xf32>
      tpu.vector_store %arg25[%c0_131, %c0_132], %281 {strides = array<i32>} : memref<16x32xf32, #tpu.memory_space<vmem>>, vector<16x32xf32>,
    } else {
    }
    %3 = tpu.iota {dimensions = array<i32: 1>} : vector<8x16xi32>
    %c0 = arith.constant 0 : index
    %c0_1 = arith.constant 0 : index
    %4 = vector.load %arg2[%c0, %c0_1] : memref<8x1xi32, #tpu.memory_space<vmem>>, vector<8x1xi32>
    %5 = vector.broadcast %4 : vector<8x1xi32> to vector<8x16xi32>
    %6 = arith.cmpi eq, %5, %3 : vector<8x16xi32>
    %7 = arith.extui %6 : vector<8x16xi1> to vector<8x16xi32>
    %8 = arith.sitofp %7 : vector<8x16xi32> to vector<8x16xf32>
    %9 = arith.truncf %8 : vector<8x16xf32> to vector<8x16xbf16>
    %c0_2 = arith.constant 0 : index
    %c0_3 = arith.constant 0 : index
    %10 = vector.load %arg4[%c0_2, %c0_3] : memref<16x32xf32, #tpu.memory_space<vmem>>, vector<16x32xf32>
    %11 = arith.truncf %10 : vector<16x32xf32> to vector<16x32xbf16>
    %cst = arith.constant dense<0.000000e+00> : vector<8x32xf32>
    %12 = tpu.matmul %9, %11, %cst {dimension_numbers = #tpu.dot_dimension_numbers<[1], [0], [0], [1], [0, 0, 1, 1], [], []>} : vector<8x16xbf16>, vector<16x32xbf16>, vector<8x32xf32> -> vector<8x32xf32>
    %c0_4 = arith.constant 0 : index
    %c0_5 = arith.constant 0 : index
    %13 = vector.load %arg1[%c0_4, %c0_5] : memref<8x8xf32, #tpu.memory_space<vmem>>, vector<8x8xf32>
    %14 = arith.truncf %13 : vector<8x8xf32> to vector<8x8xbf16>
    %c0_6 = arith.constant 0 : index
    %c0_7 = arith.constant 0 : index
    %15 = vector.load %arg5[%c0_6, %c0_7] : memref<8x32xbf16, #tpu.memory_space<vmem>>, vector<8x32xbf16>
    %cst_8 = arith.constant dense<0.000000e+00> : vector<8x32xf32>
    %16 = tpu.matmul %14, %15, %cst_8 {dimension_numbers = #tpu.dot_dimension_numbers<[1], [0], [0], [1], [0, 0, 1, 1], [], []>} : vector<8x8xbf16>, vector<8x32xbf16>, vector<8x32xf32> -> vector<8x32xf32>
    %c0_9 = arith.constant 0 : index
    %c0_10 = arith.constant 0 : index
    %17 = vector.load %arg6[%c0_9, %c0_10] : memref<1x32xf32, #tpu.memory_space<vmem>>, vector<1x32xf32>
    %18 = vector.broadcast %17 : vector<1x32xf32> to vector<8x32xf32>
    %19 = arith.addf %16, %18 : vector<8x32xf32>
    %c0_11 = arith.constant 0 : index
    %c0_12 = arith.constant 0 : index
    %20 = vector.load %arg7[%c0_11, %c0_12] : memref<1x32xf32, #tpu.memory_space<vmem>>, vector<1x32xf32>
    %c0_13 = arith.constant 0 : index
    %c0_14 = arith.constant 0 : index
    %21 = vector.load %arg8[%c0_13, %c0_14] : memref<1x32xf32, #tpu.memory_space<vmem>>, vector<1x32xf32>
    %c0_15 = arith.constant 0 : index
    %c0_16 = arith.constant 0 : index
    %22 = vector.load %arg9[%c0_15, %c0_16] : memref<1x32xf32, #tpu.memory_space<vmem>>, vector<1x32xf32>
    %c0_17 = arith.constant 0 : index
    %c0_18 = arith.constant 0 : index
    %23 = vector.load %arg10[%c0_17, %c0_18] : memref<1x32xf32, #tpu.memory_space<vmem>>, vector<1x32xf32>
    %24 = vector.broadcast %22 : vector<1x32xf32> to vector<8x32xf32>
    %25 = arith.subf %19, %24 : vector<8x32xf32>
    %26 = vector.broadcast %20 : vector<1x32xf32> to vector<8x32xf32>
    %27 = arith.mulf %25, %26 : vector<8x32xf32>
    %cst_19 = arith.constant 9.99999974E-6 : f32
    %28 = vector.broadcast %cst_19 : f32 to vector<1x32xf32>
    %29 = arith.addf %23, %28 : vector<1x32xf32>
    %30 = math.rsqrt %29 : vector<1x32xf32>
    %31 = vector.broadcast %30 : vector<1x32xf32> to vector<8x32xf32>
    %32 = arith.mulf %27, %31 : vector<8x32xf32>
    %33 = vector.broadcast %21 : vector<1x32xf32> to vector<8x32xf32>
    %34 = arith.addf %32, %33 : vector<8x32xf32>
    %cst_20 = arith.constant 0.000000e+00 : f32
    %35 = vector.broadcast %cst_20 : f32 to vector<8x32xf32>
    %36 = arith.maximumf %34, %35 : vector<8x32xf32>
    %37 = arith.truncf %36 : vector<8x32xf32> to vector<8x32xbf16>
    %38 = arith.truncf %12 : vector<8x32xf32> to vector<8x32xbf16>
    %c0_21 = arith.constant 0 : index
    %c0_22 = arith.constant 0 : index
    %39 = vector.load %arg12[%c0_21, %c0_22] : memref<32x32xbf16, #tpu.memory_space<vmem>>, vector<32x32xbf16>
    %cst_23 = arith.constant dense<0.000000e+00> : vector<8x32xf32>
    %40 = tpu.matmul %38, %39, %cst_23 {dimension_numbers = #tpu.dot_dimension_numbers<[1], [0], [0], [1], [0, 0, 1, 1], [], []>} : vector<8x32xbf16>, vector<32x32xbf16>, vector<8x32xf32> -> vector<8x32xf32>
    %c0_24 = arith.constant 0 : index
    %c0_25 = arith.constant 0 : index
    %c0_26 = arith.constant 0 : index
    %41 = vector.load %arg11[%c0_24, %c0_25, %c0_26] : memref<32x32x32xbf16, #tpu.memory_space<vmem>>, vector<1x32x32xbf16>
    %42 = vector.shape_cast %41 : vector<1x32x32xbf16> to vector<32x32xbf16>
    %cst_27 = arith.constant dense<0.000000e+00> : vector<8x32xf32>
    %43 = tpu.matmul %37, %42, %cst_27 {dimension_numbers = #tpu.dot_dimension_numbers<[1], [0], [0], [1], [0, 0, 1, 1], [], []>} : vector<8x32xbf16>, vector<32x32xbf16>, vector<8x32xf32> -> vector<8x32xf32>
    %44 = vector.extract_strided_slice %12 {offsets = [0, 0], sizes = [8, 1], strides = [1, 1]} : vector<8x32xf32> to vector<8x1xf32>
    %45 = vector.broadcast %44 : vector<8x1xf32> to vector<8x32xf32>
    %46 = arith.mulf %45, %43 : vector<8x32xf32>
    %47 = arith.addf %40, %46 : vector<8x32xf32>
    %c1 = arith.constant 1 : index
    %c0_28 = arith.constant 0 : index
    %c0_29 = arith.constant 0 : index
    %48 = vector.load %arg11[%c1, %c0_28, %c0_29] : memref<32x32x32xbf16, #tpu.memory_space<vmem>>, vector<1x32x32xbf16>
    %49 = vector.shape_cast %48 : vector<1x32x32xbf16> to vector<32x32xbf16>
    %cst_30 = arith.constant dense<0.000000e+00> : vector<8x32xf32>
    %50 = tpu.matmul %37, %49, %cst_30 {dimension_numbers = #tpu.dot_dimension_numbers<[1], [0], [0], [1], [0, 0, 1, 1], [], []>} : vector<8x32xbf16>, vector<32x32xbf16>, vector<8x32xf32> -> vector<8x32xf32>
    %51 = vector.extract_strided_slice %12 {offsets = [0, 1], sizes = [8, 1], strides = [1, 1]} : vector<8x32xf32> to vector<8x1xf32>
    %52 = vector.broadcast %51 : vector<8x1xf32> to vector<8x32xf32>
    %53 = arith.mulf %52, %50 : vector<8x32xf32>
    %54 = arith.addf %47, %53 : vector<8x32xf32>
    %c2 = arith.constant 2 : index
    %c0_31 = arith.constant 0 : index
    %c0_32 = arith.constant 0 : index
    %55 = vector.load %arg11[%c2, %c0_31, %c0_32] : memref<32x32x32xbf16, #tpu.memory_space<vmem>>, vector<1x32x32xbf16>
    %56 = vector.shape_cast %55 : vector<1x32x32xbf16> to vector<32x32xbf16>
    %cst_33 = arith.constant dense<0.000000e+00> : vector<8x32xf32>
    %57 = tpu.matmul %37, %56, %cst_33 {dimension_numbers = #tpu.dot_dimension_numbers<[1], [0], [0], [1], [0, 0, 1, 1], [], []>} : vector<8x32xbf16>, vector<32x32xbf16>, vector<8x32xf32> -> vector<8x32xf32>
    %58 = vector.extract_strided_slice %12 {offsets = [0, 2], sizes = [8, 1], strides = [1, 1]} : vector<8x32xf32> to vector<8x1xf32>
    %59 = vector.broadcast %58 : vector<8x1xf32> to vector<8x32xf32>
    %60 = arith.mulf %59, %57 : vector<8x32xf32>
    %61 = arith.addf %54, %60 : vector<8x32xf32>
    %c3 = arith.constant 3 : index
    %c0_34 = arith.constant 0 : index
    %c0_35 = arith.constant 0 : index
    %62 = vector.load %arg11[%c3, %c0_34, %c0_35] : memref<32x32x32xbf16, #tpu.memory_space<vmem>>, vector<1x32x32xbf16>
    %63 = vector.shape_cast %62 : vector<1x32x32xbf16> to vector<32x32xbf16>
    %cst_36 = arith.constant dense<0.000000e+00> : vector<8x32xf32>
    %64 = tpu.matmul %37, %63, %cst_36 {dimension_numbers = #tpu.dot_dimension_numbers<[1], [0], [0], [1], [0, 0, 1, 1], [], []>} : vector<8x32xbf16>, vector<32x32xbf16>, vector<8x32xf32> -> vector<8x32xf32>
    %65 = vector.extract_strided_slice %12 {offsets = [0, 3], sizes = [8, 1], strides = [1, 1]} : vector<8x32xf32> to vector<8x1xf32>
    %66 = vector.broadcast %65 : vector<8x1xf32> to vector<8x32xf32>
    %67 = arith.mulf %66, %64 : vector<8x32xf32>
    %68 = arith.addf %61, %67 : vector<8x32xf32>
    %c4 = arith.constant 4 : index
    %c0_37 = arith.constant 0 : index
    %c0_38 = arith.constant 0 : index
    %69 = vector.load %arg11[%c4, %c0_37, %c0_38] : memref<32x32x32xbf16, #tpu.memory_space<vmem>>, vector<1x32x32xbf16>
    %70 = vector.shape_cast %69 : vector<1x32x32xbf16> to vector<32x32xbf16>
    %cst_39 = arith.constant dense<0.000000e+00> : vector<8x32xf32>
    %71 = tpu.matmul %37, %70, %cst_39 {dimension_numbers = #tpu.dot_dimension_numbers<[1], [0], [0], [1], [0, 0, 1, 1], [], []>} : vector<8x32xbf16>, vector<32x32xbf16>, vector<8x32xf32> -> vector<8x32xf32>
    %72 = vector.extract_strided_slice %12 {offsets = [0, 4], sizes = [8, 1], strides = [1, 1]} : vector<8x32xf32> to vector<8x1xf32>
    %73 = vector.broadcast %72 : vector<8x1xf32> to vector<8x32xf32>
    %74 = arith.mulf %73, %71 : vector<8x32xf32>
    %75 = arith.addf %68, %74 : vector<8x32xf32>
    %c5 = arith.constant 5 : index
    %c0_40 = arith.constant 0 : index
    %c0_41 = arith.constant 0 : index
    %76 = vector.load %arg11[%c5, %c0_40, %c0_41] : memref<32x32x32xbf16, #tpu.memory_space<vmem>>, vector<1x32x32xbf16>
    %77 = vector.shape_cast %76 : vector<1x32x32xbf16> to vector<32x32xbf16>
    %cst_42 = arith.constant dense<0.000000e+00> : vector<8x32xf32>
    %78 = tpu.matmul %37, %77, %cst_42 {dimension_numbers = #tpu.dot_dimension_numbers<[1], [0], [0], [1], [0, 0, 1, 1], [], []>} : vector<8x32xbf16>, vector<32x32xbf16>, vector<8x32xf32> -> vector<8x32xf32>
    %79 = vector.extract_strided_slice %12 {offsets = [0, 5], sizes = [8, 1], strides = [1, 1]} : vector<8x32xf32> to vector<8x1xf32>
    %80 = vector.broadcast %79 : vector<8x1xf32> to vector<8x32xf32>
    %81 = arith.mulf %80, %78 : vector<8x32xf32>
    %82 = arith.addf %75, %81 : vector<8x32xf32>
    %c6 = arith.constant 6 : index
    %c0_43 = arith.constant 0 : index
    %c0_44 = arith.constant 0 : index
    %83 = vector.load %arg11[%c6, %c0_43, %c0_44] : memref<32x32x32xbf16, #tpu.memory_space<vmem>>, vector<1x32x32xbf16>
    %84 = vector.shape_cast %83 : vector<1x32x32xbf16> to vector<32x32xbf16>
    %cst_45 = arith.constant dense<0.000000e+00> : vector<8x32xf32>
    %85 = tpu.matmul %37, %84, %cst_45 {dimension_numbers = #tpu.dot_dimension_numbers<[1], [0], [0], [1], [0, 0, 1, 1], [], []>} : vector<8x32xbf16>, vector<32x32xbf16>, vector<8x32xf32> -> vector<8x32xf32>
    %86 = vector.extract_strided_slice %12 {offsets = [0, 6], sizes = [8, 1], strides = [1, 1]} : vector<8x32xf32> to vector<8x1xf32>
    %87 = vector.broadcast %86 : vector<8x1xf32> to vector<8x32xf32>
    %88 = arith.mulf %87, %85 : vector<8x32xf32>
    %89 = arith.addf %82, %88 : vector<8x32xf32>
    %c7 = arith.constant 7 : index
    %c0_46 = arith.constant 0 : index
    %c0_47 = arith.constant 0 : index
    %90 = vector.load %arg11[%c7, %c0_46, %c0_47] : memref<32x32x32xbf16, #tpu.memory_space<vmem>>, vector<1x32x32xbf16>
    %91 = vector.shape_cast %90 : vector<1x32x32xbf16> to vector<32x32xbf16>
    %cst_48 = arith.constant dense<0.000000e+00> : vector<8x32xf32>
    %92 = tpu.matmul %37, %91, %cst_48 {dimension_numbers = #tpu.dot_dimension_numbers<[1], [0], [0], [1], [0, 0, 1, 1], [], []>} : vector<8x32xbf16>, vector<32x32xbf16>, vector<8x32xf32> -> vector<8x32xf32>
    %93 = vector.extract_strided_slice %12 {offsets = [0, 7], sizes = [8, 1], strides = [1, 1]} : vector<8x32xf32> to vector<8x1xf32>
    %94 = vector.broadcast %93 : vector<8x1xf32> to vector<8x32xf32>
    %95 = arith.mulf %94, %92 : vector<8x32xf32>
    %96 = arith.addf %89, %95 : vector<8x32xf32>
    %c8 = arith.constant 8 : index
    %c0_49 = arith.constant 0 : index
    %c0_50 = arith.constant 0 : index
    %97 = vector.load %arg11[%c8, %c0_49, %c0_50] : memref<32x32x32xbf16, #tpu.memory_space<vmem>>, vector<1x32x32xbf16>
    %98 = vector.shape_cast %97 : vector<1x32x32xbf16> to vector<32x32xbf16>
    %cst_51 = arith.constant dense<0.000000e+00> : vector<8x32xf32>
    %99 = tpu.matmul %37, %98, %cst_51 {dimension_numbers = #tpu.dot_dimension_numbers<[1], [0], [0], [1], [0, 0, 1, 1], [], []>} : vector<8x32xbf16>, vector<32x32xbf16>, vector<8x32xf32> -> vector<8x32xf32>
    %100 = vector.extract_strided_slice %12 {offsets = [0, 8], sizes = [8, 1], strides = [1, 1]} : vector<8x32xf32> to vector<8x1xf32>
    %101 = vector.broadcast %100 : vector<8x1xf32> to vector<8x32xf32>
    %102 = arith.mulf %101, %99 : vector<8x32xf32>
    %103 = arith.addf %96, %102 : vector<8x32xf32>
    %c9 = arith.constant 9 : index
    %c0_52 = arith.constant 0 : index
    %c0_53 = arith.constant 0 : index
    %104 = vector.load %arg11[%c9, %c0_52, %c0_53] : memref<32x32x32xbf16, #tpu.memory_space<vmem>>, vector<1x32x32xbf16>
    %105 = vector.shape_cast %104 : vector<1x32x32xbf16> to vector<32x32xbf16>
    %cst_54 = arith.constant dense<0.000000e+00> : vector<8x32xf32>
    %106 = tpu.matmul %37, %105, %cst_54 {dimension_numbers = #tpu.dot_dimension_numbers<[1], [0], [0], [1], [0, 0, 1, 1], [], []>} : vector<8x32xbf16>, vector<32x32xbf16>, vector<8x32xf32> -> vector<8x32xf32>
    %107 = vector.extract_strided_slice %12 {offsets = [0, 9], sizes = [8, 1], strides = [1, 1]} : vector<8x32xf32> to vector<8x1xf32>
    %108 = vector.broadcast %107 : vector<8x1xf32> to vector<8x32xf32>
    %109 = arith.mulf %108, %106 : vector<8x32xf32>
    %110 = arith.addf %103, %109 : vector<8x32xf32>
    %c10 = arith.constant 10 : index
    %c0_55 = arith.constant 0 : index
    %c0_56 = arith.constant 0 : index
    %111 = vector.load %arg11[%c10, %c0_55, %c0_56] : memref<32x32x32xbf16, #tpu.memory_space<vmem>>, vector<1x32x32xbf16>
    %112 = vector.shape_cast %111 : vector<1x32x32xbf16> to vector<32x32xbf16>
    %cst_57 = arith.constant dense<0.000000e+00> : vector<8x32xf32>
    %113 = tpu.matmul %37, %112, %cst_57 {dimension_numbers = #tpu.dot_dimension_numbers<[1], [0], [0], [1], [0, 0, 1, 1], [], []>} : vector<8x32xbf16>, vector<32x32xbf16>, vector<8x32xf32> -> vector<8x32xf32>
    %114 = vector.extract_strided_slice %12 {offsets = [0, 10], sizes = [8, 1], strides = [1, 1]} : vector<8x32xf32> to vector<8x1xf32>
    %115 = vector.broadcast %114 : vector<8x1xf32> to vector<8x32xf32>
    %116 = arith.mulf %115, %113 : vector<8x32xf32>
    %117 = arith.addf %110, %116 : vector<8x32xf32>
    %c11 = arith.constant 11 : index
    %c0_58 = arith.constant 0 : index
    %c0_59 = arith.constant 0 : index
    %118 = vector.load %arg11[%c11, %c0_58, %c0_59] : memref<32x32x32xbf16, #tpu.memory_space<vmem>>, vector<1x32x32xbf16>
    %119 = vector.shape_cast %118 : vector<1x32x32xbf16> to vector<32x32xbf16>
    %cst_60 = arith.constant dense<0.000000e+00> : vector<8x32xf32>
    %120 = tpu.matmul %37, %119, %cst_60 {dimension_numbers = #tpu.dot_dimension_numbers<[1], [0], [0], [1], [0, 0, 1, 1], [], []>} : vector<8x32xbf16>, vector<32x32xbf16>, vector<8x32xf32> -> vector<8x32xf32>
    %121 = vector.extract_strided_slice %12 {offsets = [0, 11], sizes = [8, 1], strides = [1, 1]} : vector<8x32xf32> to vector<8x1xf32>
    %122 = vector.broadcast %121 : vector<8x1xf32> to vector<8x32xf32>
    %123 = arith.mulf %122, %120 : vector<8x32xf32>
    %124 = arith.addf %117, %123 : vector<8x32xf32>
    %c12 = arith.constant 12 : index
    %c0_61 = arith.constant 0 : index
    %c0_62 = arith.constant 0 : index
    %125 = vector.load %arg11[%c12, %c0_61, %c0_62] : memref<32x32x32xbf16, #tpu.memory_space<vmem>>, vector<1x32x32xbf16>
    %126 = vector.shape_cast %125 : vector<1x32x32xbf16> to vector<32x32xbf16>
    %cst_63 = arith.constant dense<0.000000e+00> : vector<8x32xf32>
    %127 = tpu.matmul %37, %126, %cst_63 {dimension_numbers = #tpu.dot_dimension_numbers<[1], [0], [0], [1], [0, 0, 1, 1], [], []>} : vector<8x32xbf16>, vector<32x32xbf16>, vector<8x32xf32> -> vector<8x32xf32>
    %128 = vector.extract_strided_slice %12 {offsets = [0, 12], sizes = [8, 1], strides = [1, 1]} : vector<8x32xf32> to vector<8x1xf32>
    %129 = vector.broadcast %128 : vector<8x1xf32> to vector<8x32xf32>
    %130 = arith.mulf %129, %127 : vector<8x32xf32>
    %131 = arith.addf %124, %130 : vector<8x32xf32>
    %c13 = arith.constant 13 : index
    %c0_64 = arith.constant 0 : index
    %c0_65 = arith.constant 0 : index
    %132 = vector.load %arg11[%c13, %c0_64, %c0_65] : memref<32x32x32xbf16, #tpu.memory_space<vmem>>, vector<1x32x32xbf16>
    %133 = vector.shape_cast %132 : vector<1x32x32xbf16> to vector<32x32xbf16>
    %cst_66 = arith.constant dense<0.000000e+00> : vector<8x32xf32>
    %134 = tpu.matmul %37, %133, %cst_66 {dimension_numbers = #tpu.dot_dimension_numbers<[1], [0], [0], [1], [0, 0, 1, 1], [], []>} : vector<8x32xbf16>, vector<32x32xbf16>, vector<8x32xf32> -> vector<8x32xf32>
    %135 = vector.extract_strided_slice %12 {offsets = [0, 13], sizes = [8, 1], strides = [1, 1]} : vector<8x32xf32> to vector<8x1xf32>
    %136 = vector.broadcast %135 : vector<8x1xf32> to vector<8x32xf32>
    %137 = arith.mulf %136, %134 : vector<8x32xf32>
    %138 = arith.addf %131, %137 : vector<8x32xf32>
    %c14 = arith.constant 14 : index
    %c0_67 = arith.constant 0 : index
    %c0_68 = arith.constant 0 : index
    %139 = vector.load %arg11[%c14, %c0_67, %c0_68] : memref<32x32x32xbf16, #tpu.memory_space<vmem>>, vector<1x32x32xbf16>
    %140 = vector.shape_cast %139 : vector<1x32x32xbf16> to vector<32x32xbf16>
    %cst_69 = arith.constant dense<0.000000e+00> : vector<8x32xf32>
    %141 = tpu.matmul %37, %140, %cst_69 {dimension_numbers = #tpu.dot_dimension_numbers<[1], [0], [0], [1], [0, 0, 1, 1], [], []>} : vector<8x32xbf16>, vector<32x32xbf16>, vector<8x32xf32> -> vector<8x32xf32>
    %142 = vector.extract_strided_slice %12 {offsets = [0, 14], sizes = [8, 1], strides = [1, 1]} : vector<8x32xf32> to vector<8x1xf32>
    %143 = vector.broadcast %142 : vector<8x1xf32> to vector<8x32xf32>
    %144 = arith.mulf %143, %141 : vector<8x32xf32>
    %145 = arith.addf %138, %144 : vector<8x32xf32>
    %c15 = arith.constant 15 : index
    %c0_70 = arith.constant 0 : index
    %c0_71 = arith.constant 0 : index
    %146 = vector.load %arg11[%c15, %c0_70, %c0_71] : memref<32x32x32xbf16, #tpu.memory_space<vmem>>, vector<1x32x32xbf16>
    %147 = vector.shape_cast %146 : vector<1x32x32xbf16> to vector<32x32xbf16>
    %cst_72 = arith.constant dense<0.000000e+00> : vector<8x32xf32>
    %148 = tpu.matmul %37, %147, %cst_72 {dimension_numbers = #tpu.dot_dimension_numbers<[1], [0], [0], [1], [0, 0, 1, 1], [], []>} : vector<8x32xbf16>, vector<32x32xbf16>, vector<8x32xf32> -> vector<8x32xf32>
    %149 = vector.extract_strided_slice %12 {offsets = [0, 15], sizes = [8, 1], strides = [1, 1]} : vector<8x32xf32> to vector<8x1xf32>
    %150 = vector.broadcast %149 : vector<8x1xf32> to vector<8x32xf32>
    %151 = arith.mulf %150, %148 : vector<8x32xf32>
    %152 = arith.addf %145, %151 : vector<8x32xf32>
    %c16 = arith.constant 16 : index
    %c0_73 = arith.constant 0 : index
    %c0_74 = arith.constant 0 : index
    %153 = vector.load %arg11[%c16, %c0_73, %c0_74] : memref<32x32x32xbf16, #tpu.memory_space<vmem>>, vector<1x32x32xbf16>
    %154 = vector.shape_cast %153 : vector<1x32x32xbf16> to vector<32x32xbf16>
    %cst_75 = arith.constant dense<0.000000e+00> : vector<8x32xf32>
    %155 = tpu.matmul %37, %154, %cst_75 {dimension_numbers = #tpu.dot_dimension_numbers<[1], [0], [0], [1], [0, 0, 1, 1], [], []>} : vector<8x32xbf16>, vector<32x32xbf16>, vector<8x32xf32> -> vector<8x32xf32>
    %156 = vector.extract_strided_slice %12 {offsets = [0, 16], sizes = [8, 1], strides = [1, 1]} : vector<8x32xf32> to vector<8x1xf32>
    %157 = vector.broadcast %156 : vector<8x1xf32> to vector<8x32xf32>
    %158 = arith.mulf %157, %155 : vector<8x32xf32>
    %159 = arith.addf %152, %158 : vector<8x32xf32>
    %c17 = arith.constant 17 : index
    %c0_76 = arith.constant 0 : index
    %c0_77 = arith.constant 0 : index
    %160 = vector.load %arg11[%c17, %c0_76, %c0_77] : memref<32x32x32xbf16, #tpu.memory_space<vmem>>, vector<1x32x32xbf16>
    %161 = vector.shape_cast %160 : vector<1x32x32xbf16> to vector<32x32xbf16>
    %cst_78 = arith.constant dense<0.000000e+00> : vector<8x32xf32>
    %162 = tpu.matmul %37, %161, %cst_78 {dimension_numbers = #tpu.dot_dimension_numbers<[1], [0], [0], [1], [0, 0, 1, 1], [], []>} : vector<8x32xbf16>, vector<32x32xbf16>, vector<8x32xf32> -> vector<8x32xf32>
    %163 = vector.extract_strided_slice %12 {offsets = [0, 17], sizes = [8, 1], strides = [1, 1]} : vector<8x32xf32> to vector<8x1xf32>
    %164 = vector.broadcast %163 : vector<8x1xf32> to vector<8x32xf32>
    %165 = arith.mulf %164, %162 : vector<8x32xf32>
    %166 = arith.addf %159, %165 : vector<8x32xf32>
    %c18 = arith.constant 18 : index
    %c0_79 = arith.constant 0 : index
    %c0_80 = arith.constant 0 : index
    %167 = vector.load %arg11[%c18, %c0_79, %c0_80] : memref<32x32x32xbf16, #tpu.memory_space<vmem>>, vector<1x32x32xbf16>
    %168 = vector.shape_cast %167 : vector<1x32x32xbf16> to vector<32x32xbf16>
    %cst_81 = arith.constant dense<0.000000e+00> : vector<8x32xf32>
    %169 = tpu.matmul %37, %168, %cst_81 {dimension_numbers = #tpu.dot_dimension_numbers<[1], [0], [0], [1], [0, 0, 1, 1], [], []>} : vector<8x32xbf16>, vector<32x32xbf16>, vector<8x32xf32> -> vector<8x32xf32>
    %170 = vector.extract_strided_slice %12 {offsets = [0, 18], sizes = [8, 1], strides = [1, 1]} : vector<8x32xf32> to vector<8x1xf32>
    %171 = vector.broadcast %170 : vector<8x1xf32> to vector<8x32xf32>
    %172 = arith.mulf %171, %169 : vector<8x32xf32>
    %173 = arith.addf %166, %172 : vector<8x32xf32>
    %c19 = arith.constant 19 : index
    %c0_82 = arith.constant 0 : index
    %c0_83 = arith.constant 0 : index
    %174 = vector.load %arg11[%c19, %c0_82, %c0_83] : memref<32x32x32xbf16, #tpu.memory_space<vmem>>, vector<1x32x32xbf16>
    %175 = vector.shape_cast %174 : vector<1x32x32xbf16> to vector<32x32xbf16>
    %cst_84 = arith.constant dense<0.000000e+00> : vector<8x32xf32>
    %176 = tpu.matmul %37, %175, %cst_84 {dimension_numbers = #tpu.dot_dimension_numbers<[1], [0], [0], [1], [0, 0, 1, 1], [], []>} : vector<8x32xbf16>, vector<32x32xbf16>, vector<8x32xf32> -> vector<8x32xf32>
    %177 = vector.extract_strided_slice %12 {offsets = [0, 19], sizes = [8, 1], strides = [1, 1]} : vector<8x32xf32> to vector<8x1xf32>
    %178 = vector.broadcast %177 : vector<8x1xf32> to vector<8x32xf32>
    %179 = arith.mulf %178, %176 : vector<8x32xf32>
    %180 = arith.addf %173, %179 : vector<8x32xf32>
    %c20 = arith.constant 20 : index
    %c0_85 = arith.constant 0 : index
    %c0_86 = arith.constant 0 : index
    %181 = vector.load %arg11[%c20, %c0_85, %c0_86] : memref<32x32x32xbf16, #tpu.memory_space<vmem>>, vector<1x32x32xbf16>
    %182 = vector.shape_cast %181 : vector<1x32x32xbf16> to vector<32x32xbf16>
    %cst_87 = arith.constant dense<0.000000e+00> : vector<8x32xf32>
    %183 = tpu.matmul %37, %182, %cst_87 {dimension_numbers = #tpu.dot_dimension_numbers<[1], [0], [0], [1], [0, 0, 1, 1], [], []>} : vector<8x32xbf16>, vector<32x32xbf16>, vector<8x32xf32> -> vector<8x32xf32>
    %184 = vector.extract_strided_slice %12 {offsets = [0, 20], sizes = [8, 1], strides = [1, 1]} : vector<8x32xf32> to vector<8x1xf32>
    %185 = vector.broadcast %184 : vector<8x1xf32> to vector<8x32xf32>
    %186 = arith.mulf %185, %183 : vector<8x32xf32>
    %187 = arith.addf %180, %186 : vector<8x32xf32>
    %c21 = arith.constant 21 : index
    %c0_88 = arith.constant 0 : index
    %c0_89 = arith.constant 0 : index
    %188 = vector.load %arg11[%c21, %c0_88, %c0_89] : memref<32x32x32xbf16, #tpu.memory_space<vmem>>, vector<1x32x32xbf16>
    %189 = vector.shape_cast %188 : vector<1x32x32xbf16> to vector<32x32xbf16>
    %cst_90 = arith.constant dense<0.000000e+00> : vector<8x32xf32>
    %190 = tpu.matmul %37, %189, %cst_90 {dimension_numbers = #tpu.dot_dimension_numbers<[1], [0], [0], [1], [0, 0, 1, 1], [], []>} : vector<8x32xbf16>, vector<32x32xbf16>, vector<8x32xf32> -> vector<8x32xf32>
    %191 = vector.extract_strided_slice %12 {offsets = [0, 21], sizes = [8, 1], strides = [1, 1]} : vector<8x32xf32> to vector<8x1xf32>
    %192 = vector.broadcast %191 : vector<8x1xf32> to vector<8x32xf32>
    %193 = arith.mulf %192, %190 : vector<8x32xf32>
    %194 = arith.addf %187, %193 : vector<8x32xf32>
    %c22 = arith.constant 22 : index
    %c0_91 = arith.constant 0 : index
    %c0_92 = arith.constant 0 : index
    %195 = vector.load %arg11[%c22, %c0_91, %c0_92] : memref<32x32x32xbf16, #tpu.memory_space<vmem>>, vector<1x32x32xbf16>
    %196 = vector.shape_cast %195 : vector<1x32x32xbf16> to vector<32x32xbf16>
    %cst_93 = arith.constant dense<0.000000e+00> : vector<8x32xf32>
    %197 = tpu.matmul %37, %196, %cst_93 {dimension_numbers = #tpu.dot_dimension_numbers<[1], [0], [0], [1], [0, 0, 1, 1], [], []>} : vector<8x32xbf16>, vector<32x32xbf16>, vector<8x32xf32> -> vector<8x32xf32>
    %198 = vector.extract_strided_slice %12 {offsets = [0, 22], sizes = [8, 1], strides = [1, 1]} : vector<8x32xf32> to vector<8x1xf32>
    %199 = vector.broadcast %198 : vector<8x1xf32> to vector<8x32xf32>
    %200 = arith.mulf %199, %197 : vector<8x32xf32>
    %201 = arith.addf %194, %200 : vector<8x32xf32>
    %c23 = arith.constant 23 : index
    %c0_94 = arith.constant 0 : index
    %c0_95 = arith.constant 0 : index
    %202 = vector.load %arg11[%c23, %c0_94, %c0_95] : memref<32x32x32xbf16, #tpu.memory_space<vmem>>, vector<1x32x32xbf16>
    %203 = vector.shape_cast %202 : vector<1x32x32xbf16> to vector<32x32xbf16>
    %cst_96 = arith.constant dense<0.000000e+00> : vector<8x32xf32>
    %204 = tpu.matmul %37, %203, %cst_96 {dimension_numbers = #tpu.dot_dimension_numbers<[1], [0], [0], [1], [0, 0, 1, 1], [], []>} : vector<8x32xbf16>, vector<32x32xbf16>, vector<8x32xf32> -> vector<8x32xf32>
    %205 = vector.extract_strided_slice %12 {offsets = [0, 23], sizes = [8, 1], strides = [1, 1]} : vector<8x32xf32> to vector<8x1xf32>
    %206 = vector.broadcast %205 : vector<8x1xf32> to vector<8x32xf32>
    %207 = arith.mulf %206, %204 : vector<8x32xf32>
    %208 = arith.addf %201, %207 : vector<8x32xf32>
    %c24 = arith.constant 24 : index
    %c0_97 = arith.constant 0 : index
    %c0_98 = arith.constant 0 : index
    %209 = vector.load %arg11[%c24, %c0_97, %c0_98] : memref<32x32x32xbf16, #tpu.memory_space<vmem>>, vector<1x32x32xbf16>
    %210 = vector.shape_cast %209 : vector<1x32x32xbf16> to vector<32x32xbf16>
    %cst_99 = arith.constant dense<0.000000e+00> : vector<8x32xf32>
    %211 = tpu.matmul %37, %210, %cst_99 {dimension_numbers = #tpu.dot_dimension_numbers<[1], [0], [0], [1], [0, 0, 1, 1], [], []>} : vector<8x32xbf16>, vector<32x32xbf16>, vector<8x32xf32> -> vector<8x32xf32>
    %212 = vector.extract_strided_slice %12 {offsets = [0, 24], sizes = [8, 1], strides = [1, 1]} : vector<8x32xf32> to vector<8x1xf32>
    %213 = vector.broadcast %212 : vector<8x1xf32> to vector<8x32xf32>
    %214 = arith.mulf %213, %211 : vector<8x32xf32>
    %215 = arith.addf %208, %214 : vector<8x32xf32>
    %c25 = arith.constant 25 : index
    %c0_100 = arith.constant 0 : index
    %c0_101 = arith.constant 0 : index
    %216 = vector.load %arg11[%c25, %c0_100, %c0_101] : memref<32x32x32xbf16, #tpu.memory_space<vmem>>, vector<1x32x32xbf16>
    %217 = vector.shape_cast %216 : vector<1x32x32xbf16> to vector<32x32xbf16>
    %cst_102 = arith.constant dense<0.000000e+00> : vector<8x32xf32>
    %218 = tpu.matmul %37, %217, %cst_102 {dimension_numbers = #tpu.dot_dimension_numbers<[1], [0], [0], [1], [0, 0, 1, 1], [], []>} : vector<8x32xbf16>, vector<32x32xbf16>, vector<8x32xf32> -> vector<8x32xf32>
    %219 = vector.extract_strided_slice %12 {offsets = [0, 25], sizes = [8, 1], strides = [1, 1]} : vector<8x32xf32> to vector<8x1xf32>
    %220 = vector.broadcast %219 : vector<8x1xf32> to vector<8x32xf32>
    %221 = arith.mulf %220, %218 : vector<8x32xf32>
    %222 = arith.addf %215, %221 : vector<8x32xf32>
    %c26 = arith.constant 26 : index
    %c0_103 = arith.constant 0 : index
    %c0_104 = arith.constant 0 : index
    %223 = vector.load %arg11[%c26, %c0_103, %c0_104] : memref<32x32x32xbf16, #tpu.memory_space<vmem>>, vector<1x32x32xbf16>
    %224 = vector.shape_cast %223 : vector<1x32x32xbf16> to vector<32x32xbf16>
    %cst_105 = arith.constant dense<0.000000e+00> : vector<8x32xf32>
    %225 = tpu.matmul %37, %224, %cst_105 {dimension_numbers = #tpu.dot_dimension_numbers<[1], [0], [0], [1], [0, 0, 1, 1], [], []>} : vector<8x32xbf16>, vector<32x32xbf16>, vector<8x32xf32> -> vector<8x32xf32>
    %226 = vector.extract_strided_slice %12 {offsets = [0, 26], sizes = [8, 1], strides = [1, 1]} : vector<8x32xf32> to vector<8x1xf32>
    %227 = vector.broadcast %226 : vector<8x1xf32> to vector<8x32xf32>
    %228 = arith.mulf %227, %225 : vector<8x32xf32>
    %229 = arith.addf %222, %228 : vector<8x32xf32>
    %c27 = arith.constant 27 : index
    %c0_106 = arith.constant 0 : index
    %c0_107 = arith.constant 0 : index
    %230 = vector.load %arg11[%c27, %c0_106, %c0_107] : memref<32x32x32xbf16, #tpu.memory_space<vmem>>, vector<1x32x32xbf16>
    %231 = vector.shape_cast %230 : vector<1x32x32xbf16> to vector<32x32xbf16>
    %cst_108 = arith.constant dense<0.000000e+00> : vector<8x32xf32>
    %232 = tpu.matmul %37, %231, %cst_108 {dimension_numbers = #tpu.dot_dimension_numbers<[1], [0], [0], [1], [0, 0, 1, 1], [], []>} : vector<8x32xbf16>, vector<32x32xbf16>, vector<8x32xf32> -> vector<8x32xf32>
    %233 = vector.extract_strided_slice %12 {offsets = [0, 27], sizes = [8, 1], strides = [1, 1]} : vector<8x32xf32> to vector<8x1xf32>
    %234 = vector.broadcast %233 : vector<8x1xf32> to vector<8x32xf32>
    %235 = arith.mulf %234, %232 : vector<8x32xf32>
    %236 = arith.addf %229, %235 : vector<8x32xf32>
    %c28 = arith.constant 28 : index
    %c0_109 = arith.constant 0 : index
    %c0_110 = arith.constant 0 : index
    %237 = vector.load %arg11[%c28, %c0_109, %c0_110] : memref<32x32x32xbf16, #tpu.memory_space<vmem>>, vector<1x32x32xbf16>
    %238 = vector.shape_cast %237 : vector<1x32x32xbf16> to vector<32x32xbf16>
    %cst_111 = arith.constant dense<0.000000e+00> : vector<8x32xf32>
    %239 = tpu.matmul %37, %238, %cst_111 {dimension_numbers = #tpu.dot_dimension_numbers<[1], [0], [0], [1], [0, 0, 1, 1], [], []>} : vector<8x32xbf16>, vector<32x32xbf16>, vector<8x32xf32> -> vector<8x32xf32>
    %240 = vector.extract_strided_slice %12 {offsets = [0, 28], sizes = [8, 1], strides = [1, 1]} : vector<8x32xf32> to vector<8x1xf32>
    %241 = vector.broadcast %240 : vector<8x1xf32> to vector<8x32xf32>
    %242 = arith.mulf %241, %239 : vector<8x32xf32>
    %243 = arith.addf %236, %242 : vector<8x32xf32>
    %c29 = arith.constant 29 : index
    %c0_112 = arith.constant 0 : index
    %c0_113 = arith.constant 0 : index
    %244 = vector.load %arg11[%c29, %c0_112, %c0_113] : memref<32x32x32xbf16, #tpu.memory_space<vmem>>, vector<1x32x32xbf16>
    %245 = vector.shape_cast %244 : vector<1x32x32xbf16> to vector<32x32xbf16>
    %cst_114 = arith.constant dense<0.000000e+00> : vector<8x32xf32>
    %246 = tpu.matmul %37, %245, %cst_114 {dimension_numbers = #tpu.dot_dimension_numbers<[1], [0], [0], [1], [0, 0, 1, 1], [], []>} : vector<8x32xbf16>, vector<32x32xbf16>, vector<8x32xf32> -> vector<8x32xf32>
    %247 = vector.extract_strided_slice %12 {offsets = [0, 29], sizes = [8, 1], strides = [1, 1]} : vector<8x32xf32> to vector<8x1xf32>
    %248 = vector.broadcast %247 : vector<8x1xf32> to vector<8x32xf32>
    %249 = arith.mulf %248, %246 : vector<8x32xf32>
    %250 = arith.addf %243, %249 : vector<8x32xf32>
    %c30 = arith.constant 30 : index
    %c0_115 = arith.constant 0 : index
    %c0_116 = arith.constant 0 : index
    %251 = vector.load %arg11[%c30, %c0_115, %c0_116] : memref<32x32x32xbf16, #tpu.memory_space<vmem>>, vector<1x32x32xbf16>
    %252 = vector.shape_cast %251 : vector<1x32x32xbf16> to vector<32x32xbf16>
    %cst_117 = arith.constant dense<0.000000e+00> : vector<8x32xf32>
    %253 = tpu.matmul %37, %252, %cst_117 {dimension_numbers = #tpu.dot_dimension_numbers<[1], [0], [0], [1], [0, 0, 1, 1], [], []>} : vector<8x32xbf16>, vector<32x32xbf16>, vector<8x32xf32> -> vector<8x32xf32>
    %254 = vector.extract_strided_slice %12 {offsets = [0, 30], sizes = [8, 1], strides = [1, 1]} : vector<8x32xf32> to vector<8x1xf32>
    %255 = vector.broadcast %254 : vector<8x1xf32> to vector<8x32xf32>
    %256 = arith.mulf %255, %253 : vector<8x32xf32>
    %257 = arith.addf %250, %256 : vector<8x32xf32>
    %c31 = arith.constant 31 : index
    %c0_118 = arith.constant 0 : index
    %c0_119 = arith.constant 0 : index
    %258 = vector.load %arg11[%c31, %c0_118, %c0_119] : memref<32x32x32xbf16, #tpu.memory_space<vmem>>, vector<1x32x32xbf16>
    %259 = vector.shape_cast %258 : vector<1x32x32xbf16> to vector<32x32xbf16>
    %cst_120 = arith.constant dense<0.000000e+00> : vector<8x32xf32>
    %260 = tpu.matmul %37, %259, %cst_120 {dimension_numbers = #tpu.dot_dimension_numbers<[1], [0], [0], [1], [0, 0, 1, 1], [], []>} : vector<8x32xbf16>, vector<32x32xbf16>, vector<8x32xf32> -> vector<8x32xf32>
    %261 = vector.extract_strided_slice %12 {offsets = [0, 31], sizes = [8, 1], strides = [1, 1]} : vector<8x32xf32> to vector<8x1xf32>
    %262 = vector.broadcast %261 : vector<8x1xf32> to vector<8x32xf32>
    %263 = arith.mulf %262, %260 : vector<8x32xf32>
    %264 = arith.addf %257, %263 : vector<8x32xf32>
    %265 = tpu.iota {dimensions = array<i32: 0>} : vector<16x8xi32>
    %c0_121 = arith.constant 0 : index
    %c0_122 = arith.constant 0 : index
    %c0_123 = arith.constant 0 : index
    %266 = vector.load %arg3[%c0_121, %c0_122, %c0_123] : memref<1x1x8xi32, #tpu.memory_space<vmem>>, vector<1x1x8xi32>
    %267 = vector.shape_cast %266 : vector<1x1x8xi32> to vector<1x8xi32>
    %268 = vector.broadcast %267 : vector<1x8xi32> to vector<16x8xi32>
    %269 = arith.cmpi eq, %268, %265 : vector<16x8xi32>
    %270 = arith.extui %269 : vector<16x8xi1> to vector<16x8xi32>
    %271 = arith.sitofp %270 : vector<16x8xi32> to vector<16x8xf32>
    %272 = arith.truncf %271 : vector<16x8xf32> to vector<16x8xbf16>
    %c0_124 = arith.constant 0 : index
    %c0_125 = arith.constant 0 : index
    %273 = vector.load %arg25[%c0_124, %c0_125] : memref<16x32xf32, #tpu.memory_space<vmem>>, vector<16x32xf32>
    %274 = arith.truncf %264 : vector<8x32xf32> to vector<8x32xbf16>
    %cst_126 = arith.constant dense<0.000000e+00> : vector<16x32xf32>
    %275 = tpu.matmul %272, %274, %cst_126 {dimension_numbers = #tpu.dot_dimension_numbers<[1], [0], [0], [1], [0, 0, 1, 1], [], []>} : vector<16x8xbf16>, vector<8x32xbf16>, vector<16x32xf32> -> vector<16x32xf32>
    %276 = arith.addf %273, %275 : vector<16x32xf32>
    %c0_127 = arith.constant 0 : index
    %c0_128 = arith.constant 0 : index
    %277 = vector.load %arg25[%c0_127, %c0_128] : memref<16x32xf32, #tpu.memory_space<vmem>>, vector<16x32xf32>
    tpu.vector_store %arg25[%c0_127, %c0_128], %276 {strides = array<i32>} : memref<16x32xf32, #tpu.memory_space<vmem>>, vector<16x32xf32>,
    %c2_i32 = arith.constant 2 : i32
    %278 = arith.cmpi eq, %arg0, %c2_i32 : i32
    %279 = arith.extui %278 : i1 to i32
    %c0_i32_129 = arith.constant 0 : i32
    %280 = arith.cmpi ne, %279, %c0_i32_129 : i32
    scf.if %280 {
      %c0_130 = arith.constant 0 : index
      %c0_131 = arith.constant 0 : index
      %281 = vector.load %arg25[%c0_130, %c0_131] : memref<16x32xf32, #tpu.memory_space<vmem>>, vector<16x32xf32>
      %c0_132 = arith.constant 0 : index
      %c0_133 = arith.constant 0 : index
      %282 = vector.load %arg19[%c0_132, %c0_133] : memref<16x1xf32, #tpu.memory_space<vmem>>, vector<16x1xf32>
      %283 = vector.broadcast %282 : vector<16x1xf32> to vector<16x32xf32>
      %284 = arith.mulf %281, %283 : vector<16x32xf32>
      %c0_134 = arith.constant 0 : index
      %c0_135 = arith.constant 0 : index
      %285 = vector.load %arg13[%c0_134, %c0_135] : memref<32x32xbf16, #tpu.memory_space<vmem>>, vector<32x32xbf16>
      %cst_136 = arith.constant dense<0.000000e+00> : vector<16x32xf32>
      %286 = tpu.matmul %11, %285, %cst_136 {dimension_numbers = #tpu.dot_dimension_numbers<[1], [0], [0], [1], [0, 0, 1, 1], [], []>} : vector<16x32xbf16>, vector<32x32xbf16>, vector<16x32xf32> -> vector<16x32xf32>
      %287 = arith.addf %284, %286 : vector<16x32xf32>
      %c0_137 = arith.constant 0 : index
      %c0_138 = arith.constant 0 : index
      %288 = vector.load %arg14[%c0_137, %c0_138] : memref<1x32xf32, #tpu.memory_space<vmem>>, vector<1x32xf32>
      %289 = vector.broadcast %288 : vector<1x32xf32> to vector<16x32xf32>
      %290 = arith.addf %287, %289 : vector<16x32xf32>
      %cst_139 = arith.constant 0.000000e+00 : f32
      %291 = vector.broadcast %cst_139 : f32 to vector<16x32xf32>
      %292 = arith.cmpf ogt, %290, %291 : vector<16x32xf32>
      %cst_140 = arith.constant 0.000000e+00 : f32
      %293 = vector.broadcast %cst_140 : f32 to vector<16x32xf32>
      %294 = arith.minimumf %290, %293 : vector<16x32xf32>
      %295 = math.exp %294 : vector<16x32xf32>
      %cst_141 = arith.constant 1.000000e+00 : f32
      %296 = vector.broadcast %cst_141 : f32 to vector<16x32xf32>
      %297 = arith.subf %295, %296 : vector<16x32xf32>
      %298 = arith.select %292, %290, %297 : vector<16x32xi1>, vector<16x32xf32>
      %c0_142 = arith.constant 0 : index
      %c0_143 = arith.constant 0 : index
      %299 = vector.load %arg15[%c0_142, %c0_143] : memref<1x32xf32, #tpu.memory_space<vmem>>, vector<1x32xf32>
      %c0_144 = arith.constant 0 : index
      %c0_145 = arith.constant 0 : index
      %300 = vector.load %arg16[%c0_144, %c0_145] : memref<1x32xf32, #tpu.memory_space<vmem>>, vector<1x32xf32>
      %c0_146 = arith.constant 0 : index
      %c0_147 = arith.constant 0 : index
      %301 = vector.load %arg17[%c0_146, %c0_147] : memref<1x32xf32, #tpu.memory_space<vmem>>, vector<1x32xf32>
      %c0_148 = arith.constant 0 : index
      %c0_149 = arith.constant 0 : index
      %302 = vector.load %arg18[%c0_148, %c0_149] : memref<1x32xf32, #tpu.memory_space<vmem>>, vector<1x32xf32>
      %303 = vector.broadcast %301 : vector<1x32xf32> to vector<16x32xf32>
      %304 = arith.subf %298, %303 : vector<16x32xf32>
      %305 = vector.broadcast %299 : vector<1x32xf32> to vector<16x32xf32>
      %306 = arith.mulf %304, %305 : vector<16x32xf32>
      %cst_150 = arith.constant 9.99999974E-6 : f32
      %307 = vector.broadcast %cst_150 : f32 to vector<1x32xf32>
      %308 = arith.addf %302, %307 : vector<1x32xf32>
      %309 = math.rsqrt %308 : vector<1x32xf32>
      %310 = vector.broadcast %309 : vector<1x32xf32> to vector<16x32xf32>
      %311 = arith.mulf %306, %310 : vector<16x32xf32>
      %312 = vector.broadcast %300 : vector<1x32xf32> to vector<16x32xf32>
      %313 = arith.addf %311, %312 : vector<16x32xf32>
      %314 = arith.truncf %313 : vector<16x32xf32> to vector<16x32xbf16>
      %c0_151 = arith.constant 0 : index
      %c0_152 = arith.constant 0 : index
      %315 = vector.load %arg20[%c0_151, %c0_152] : memref<32x32xbf16, #tpu.memory_space<vmem>>, vector<32x32xbf16>
      %cst_153 = arith.constant dense<0.000000e+00> : vector<16x32xf32>
      %316 = tpu.matmul %314, %315, %cst_153 {dimension_numbers = #tpu.dot_dimension_numbers<[1], [0], [0], [1], [0, 0, 1, 1], [], []>} : vector<16x32xbf16>, vector<32x32xbf16>, vector<16x32xf32> -> vector<16x32xf32>
      %317 = arith.truncf %316 : vector<16x32xf32> to vector<16x32xbf16>
      %c0_154 = arith.constant 0 : index
      %c0_155 = arith.constant 0 : index
      %318 = vector.load %arg23[%c0_154, %c0_155] : memref<16x48xf32, #tpu.memory_space<vmem>>, vector<16x32xf32>
      tpu.vector_store %arg23[%c0_154, %c0_155], %316 {strides = array<i32>} : memref<16x48xf32, #tpu.memory_space<vmem>>, vector<16x32xf32>,
      %cst_156 = arith.constant 1.000000e+00 : f32
      %319 = vector.broadcast %cst_156 : f32 to vector<16x8xf32>
      %c0_157 = arith.constant 0 : index
      %c32 = arith.constant 32 : index
      %320 = vector.load %arg23[%c0_157, %c32] : memref<16x48xf32, #tpu.memory_space<vmem>>, vector<16x8xf32>
      tpu.vector_store %arg23[%c0_157, %c32], %319 {strides = array<i32>} : memref<16x48xf32, #tpu.memory_space<vmem>>, vector<16x8xf32>,
      %c0_158 = arith.constant 0 : index
      %c0_159 = arith.constant 0 : index
      %321 = vector.load %arg21[%c0_158, %c0_159] : memref<32x8xbf16, #tpu.memory_space<vmem>>, vector<32x8xbf16>
      %cst_160 = arith.constant dense<0.000000e+00> : vector<16x8xf32>
      %322 = tpu.matmul %317, %321, %cst_160 {dimension_numbers = #tpu.dot_dimension_numbers<[1], [0], [0], [1], [0, 0, 1, 1], [], []>} : vector<16x32xbf16>, vector<32x8xbf16>, vector<16x8xf32> -> vector<16x8xf32>
      %c0_161 = arith.constant 0 : index
      %c40 = arith.constant 40 : index
      %323 = vector.load %arg23[%c0_161, %c40] : memref<16x48xf32, #tpu.memory_space<vmem>>, vector<16x8xf32>
      tpu.vector_store %arg23[%c0_161, %c40], %322 {strides = array<i32>} : memref<16x48xf32, #tpu.memory_space<vmem>>, vector<16x8xf32>,
      %c0_162 = arith.constant 0 : index
      %c0_163 = arith.constant 0 : index
      %324 = vector.load %arg22[%c0_162, %c0_163] : memref<32x8xbf16, #tpu.memory_space<vmem>>, vector<32x8xbf16>
      %cst_164 = arith.constant dense<0.000000e+00> : vector<16x8xf32>
      %325 = tpu.matmul %317, %324, %cst_164 {dimension_numbers = #tpu.dot_dimension_numbers<[1], [0], [0], [1], [0, 0, 1, 1], [], []>} : vector<16x32xbf16>, vector<32x8xbf16>, vector<16x8xf32> -> vector<16x8xf32>
      %c0_165 = arith.constant 0 : index
      %c0_166 = arith.constant 0 : index
      %326 = vector.load %arg24[%c0_165, %c0_166] : memref<16x8xf32, #tpu.memory_space<vmem>>, vector<16x8xf32>
      tpu.vector_store %arg24[%c0_165, %c0_166], %325 {strides = array<i32>} : memref<16x8xf32, #tpu.memory_space<vmem>>, vector<16x8xf32>,
    } else {
    }
    return
  }
  func.func @transform_0(%arg0: i32) -> (i32, i32) {
    %c0_i32 = arith.constant 0 : i32
    %c0_i32_0 = arith.constant 0 : i32
    return %arg0, %c0_i32 : i32, i32
  }
  func.func @transform_1(%arg0: i32) -> (i32, i32) {
    %c0_i32 = arith.constant 0 : i32
    %c0_i32_0 = arith.constant 0 : i32
    return %arg0, %c0_i32 : i32, i32
  }
  func.func @transform_2(%arg0: i32) -> (i32, i32, i32) {
    %c0_i32 = arith.constant 0 : i32
    %c0_i32_0 = arith.constant 0 : i32
    %c0_i32_1 = arith.constant 0 : i32
    return %arg0, %c0_i32, %c0_i32_0 : i32, i32, i32
  }
  func.func @transform_3(%arg0: i32) -> (i32, i32) {
    %c0_i32 = arith.constant 0 : i32
    %c0_i32_0 = arith.constant 0 : i32
    %c0_i32_1 = arith.constant 0 : i32
    return %c0_i32, %c0_i32_0 : i32, i32
  }
  func.func @transform_4(%arg0: i32) -> (i32, i32) {
    %c0_i32 = arith.constant 0 : i32
    %c0_i32_0 = arith.constant 0 : i32
    %c0_i32_1 = arith.constant 0 : i32
    return %c0_i32, %c0_i32_0 : i32, i32
  }
  func.func @transform_5(%arg0: i32) -> (i32, i32) {
    %c0_i32 = arith.constant 0 : i32
    %c0_i32_0 = arith.constant 0 : i32
    %c0_i32_1 = arith.constant 0 : i32
    return %c0_i32, %c0_i32_0 : i32, i32
  }
  func.func @transform_6(%arg0: i32) -> (i32, i32) {
    %c0_i32 = arith.constant 0 : i32
    %c0_i32_0 = arith.constant 0 : i32
    %c0_i32_1 = arith.constant 0 : i32
    return %c0_i32, %c0_i32_0 : i32, i32
  }
  func.func @transform_7(%arg0: i32) -> (i32, i32) {
    %c0_i32 = arith.constant 0 : i32
    %c0_i32_0 = arith.constant 0 : i32
    %c0_i32_1 = arith.constant 0 : i32
    return %c0_i32, %c0_i32_0 : i32, i32
  }
  func.func @transform_8(%arg0: i32) -> (i32, i32) {
    %c0_i32 = arith.constant 0 : i32
    %c0_i32_0 = arith.constant 0 : i32
    %c0_i32_1 = arith.constant 0 : i32
    return %c0_i32, %c0_i32_0 : i32, i32
  }
  func.func @transform_9(%arg0: i32) -> (i32, i32) {
    %c0_i32 = arith.constant 0 : i32
    %c0_i32_0 = arith.constant 0 : i32
    %c0_i32_1 = arith.constant 0 : i32
    return %c0_i32, %c0_i32_0 : i32, i32
  }
  func.func @transform_10(%arg0: i32) -> (i32, i32, i32) {
    %c0_i32 = arith.constant 0 : i32
    %c0_i32_0 = arith.constant 0 : i32
    %c0_i32_1 = arith.constant 0 : i32
    %c0_i32_2 = arith.constant 0 : i32
    return %c0_i32, %c0_i32_0, %c0_i32_1 : i32, i32, i32
  }
  func.func @transform_11(%arg0: i32) -> (i32, i32) {
    %c0_i32 = arith.constant 0 : i32
    %c0_i32_0 = arith.constant 0 : i32
    %c0_i32_1 = arith.constant 0 : i32
    return %c0_i32, %c0_i32_0 : i32, i32
  }
  func.func @transform_12(%arg0: i32) -> (i32, i32) {
    %c0_i32 = arith.constant 0 : i32
    %c0_i32_0 = arith.constant 0 : i32
    %c0_i32_1 = arith.constant 0 : i32
    return %c0_i32, %c0_i32_0 : i32, i32
  }
  func.func @transform_13(%arg0: i32) -> (i32, i32) {
    %c0_i32 = arith.constant 0 : i32
    %c0_i32_0 = arith.constant 0 : i32
    %c0_i32_1 = arith.constant 0 : i32
    return %c0_i32, %c0_i32_0 : i32, i32
  }
  func.func @transform_14(%arg0: i32) -> (i32, i32) {
    %c0_i32 = arith.constant 0 : i32
    %c0_i32_0 = arith.constant 0 : i32
    %c0_i32_1 = arith.constant 0 : i32
    return %c0_i32, %c0_i32_0 : i32, i32
  }
  func.func @transform_15(%arg0: i32) -> (i32, i32) {
    %c0_i32 = arith.constant 0 : i32
    %c0_i32_0 = arith.constant 0 : i32
    %c0_i32_1 = arith.constant 0 : i32
    return %c0_i32, %c0_i32_0 : i32, i32
  }
  func.func @transform_16(%arg0: i32) -> (i32, i32) {
    %c0_i32 = arith.constant 0 : i32
    %c0_i32_0 = arith.constant 0 : i32
    %c0_i32_1 = arith.constant 0 : i32
    return %c0_i32, %c0_i32_0 : i32, i32
  }
  func.func @transform_17(%arg0: i32) -> (i32, i32) {
    %c0_i32 = arith.constant 0 : i32
    %c0_i32_0 = arith.constant 0 : i32
    %c0_i32_1 = arith.constant 0 : i32
    return %c0_i32, %c0_i32_0 : i32, i32
  }
  func.func @transform_18(%arg0: i32) -> (i32, i32) {
    %c0_i32 = arith.constant 0 : i32
    %c0_i32_0 = arith.constant 0 : i32
    %c0_i32_1 = arith.constant 0 : i32
    return %c0_i32, %c0_i32_0 : i32, i32
  }
  func.func @transform_19(%arg0: i32) -> (i32, i32) {
    %c0_i32 = arith.constant 0 : i32
    %c0_i32_0 = arith.constant 0 : i32
    %c0_i32_1 = arith.constant 0 : i32
    return %c0_i32, %c0_i32_0 : i32, i32
  }
  func.func @transform_20(%arg0: i32) -> (i32, i32) {
    %c0_i32 = arith.constant 0 : i32
    %c0_i32_0 = arith.constant 0 : i32
    %c0_i32_1 = arith.constant 0 : i32
    return %c0_i32, %c0_i32_0 : i32, i32
  }
  func.func @transform_21(%arg0: i32) -> (i32, i32) {
    %c0_i32 = arith.constant 0 : i32
    %c0_i32_0 = arith.constant 0 : i32
    %c0_i32_1 = arith.constant 0 : i32
    return %c0_i32, %c0_i32_0 : i32, i32
  }
  func.func @transform_22(%arg0: i32) -> (i32, i32) {
    %c0_i32 = arith.constant 0 : i32
    %c0_i32_0 = arith.constant 0 : i32
    %c0_i32_1 = arith.constant 0 : i32
    return %c0_i32, %c0_i32_0 : i32, i32
  }
  func.func @transform_23(%arg0: i32) -> (i32, i32) {
    %c0_i32 = arith.constant 0 : i32
    %c0_i32_0 = arith.constant 0 : i32
    %c0_i32_1 = arith.constant 0 : i32
    return %c0_i32, %c0_i32_0 : i32, i32
  }
}

module attributes {stable_mosaic.version = 11 : i64} {
  func.func @encoder_kernel(%arg0: i32, %arg1: memref<8x16xf32, #tpu.memory_space<vmem>>, %arg2: memref<16x32xbf16, #tpu.memory_space<vmem>>, %arg3: memref<1x32xf32, #tpu.memory_space<vmem>>, %arg4: memref<1x32xf32, #tpu.memory_space<vmem>>, %arg5: memref<1x32xf32, #tpu.memory_space<vmem>>, %arg6: memref<1x32xf32, #tpu.memory_space<vmem>>, %arg7: memref<1x32xf32, #tpu.memory_space<vmem>>, %arg8: memref<32x32xbf16, #tpu.memory_space<vmem>>, %arg9: memref<1x32xf32, #tpu.memory_space<vmem>>, %arg10: memref<8x32xf32, #tpu.memory_space<vmem>>) attributes {dimension_semantics = [#tpu.dimension_semantics<parallel>], iteration_bounds = array<i64: 2>, scalar_prefetch = 0 : i64, scratch_operands = 0 : i64, tpu.core_type = #tpu.core_type<tc>, window_params = [{transform_indices = @transform_0, window_bounds = array<i64: 8, 16>}, {pipeline_mode = #tpu.pipeline_mode<synchronous>, transform_indices = @transform_1, window_bounds = array<i64: 16, 32>}, {pipeline_mode = #tpu.pipeline_mode<synchronous>, transform_indices = @transform_2, window_bounds = array<i64: 1, 32>}, {pipeline_mode = #tpu.pipeline_mode<synchronous>, transform_indices = @transform_3, window_bounds = array<i64: 1, 32>}, {pipeline_mode = #tpu.pipeline_mode<synchronous>, transform_indices = @transform_4, window_bounds = array<i64: 1, 32>}, {pipeline_mode = #tpu.pipeline_mode<synchronous>, transform_indices = @transform_5, window_bounds = array<i64: 1, 32>}, {pipeline_mode = #tpu.pipeline_mode<synchronous>, transform_indices = @transform_6, window_bounds = array<i64: 1, 32>}, {pipeline_mode = #tpu.pipeline_mode<synchronous>, transform_indices = @transform_7, window_bounds = array<i64: 32, 32>}, {pipeline_mode = #tpu.pipeline_mode<synchronous>, transform_indices = @transform_8, window_bounds = array<i64: 1, 32>}, {transform_indices = @transform_9, window_bounds = array<i64: 8, 32>}]} {
    %c0 = arith.constant 0 : index
    %c0_0 = arith.constant 0 : index
    %0 = vector.load %arg1[%c0, %c0_0] : memref<8x16xf32, #tpu.memory_space<vmem>>, vector<8x16xf32>
    %1 = arith.truncf %0 : vector<8x16xf32> to vector<8x16xbf16>
    %c0_1 = arith.constant 0 : index
    %c0_2 = arith.constant 0 : index
    %2 = vector.load %arg2[%c0_1, %c0_2] : memref<16x32xbf16, #tpu.memory_space<vmem>>, vector<16x32xbf16>
    %cst = arith.constant dense<0.000000e+00> : vector<8x32xf32>
    %3 = tpu.matmul %1, %2, %cst {dimension_numbers = #tpu.dot_dimension_numbers<[1], [0], [0], [1], [0, 0, 1, 1], [], []>} : vector<8x16xbf16>, vector<16x32xbf16>, vector<8x32xf32> -> vector<8x32xf32>
    %c0_3 = arith.constant 0 : index
    %c0_4 = arith.constant 0 : index
    %4 = vector.load %arg3[%c0_3, %c0_4] : memref<1x32xf32, #tpu.memory_space<vmem>>, vector<1x32xf32>
    %5 = vector.broadcast %4 : vector<1x32xf32> to vector<8x32xf32>
    %6 = arith.addf %3, %5 : vector<8x32xf32>
    %c0_5 = arith.constant 0 : index
    %c0_6 = arith.constant 0 : index
    %7 = vector.load %arg4[%c0_5, %c0_6] : memref<1x32xf32, #tpu.memory_space<vmem>>, vector<1x32xf32>
    %c0_7 = arith.constant 0 : index
    %c0_8 = arith.constant 0 : index
    %8 = vector.load %arg5[%c0_7, %c0_8] : memref<1x32xf32, #tpu.memory_space<vmem>>, vector<1x32xf32>
    %c0_9 = arith.constant 0 : index
    %c0_10 = arith.constant 0 : index
    %9 = vector.load %arg6[%c0_9, %c0_10] : memref<1x32xf32, #tpu.memory_space<vmem>>, vector<1x32xf32>
    %c0_11 = arith.constant 0 : index
    %c0_12 = arith.constant 0 : index
    %10 = vector.load %arg7[%c0_11, %c0_12] : memref<1x32xf32, #tpu.memory_space<vmem>>, vector<1x32xf32>
    %11 = vector.broadcast %9 : vector<1x32xf32> to vector<8x32xf32>
    %12 = arith.subf %6, %11 : vector<8x32xf32>
    %13 = vector.broadcast %7 : vector<1x32xf32> to vector<8x32xf32>
    %14 = arith.mulf %12, %13 : vector<8x32xf32>
    %cst_13 = arith.constant 9.99999974E-6 : f32
    %15 = vector.broadcast %cst_13 : f32 to vector<1x32xf32>
    %16 = arith.addf %10, %15 : vector<1x32xf32>
    %17 = math.rsqrt %16 : vector<1x32xf32>
    %18 = vector.broadcast %17 : vector<1x32xf32> to vector<8x32xf32>
    %19 = arith.mulf %14, %18 : vector<8x32xf32>
    %20 = vector.broadcast %8 : vector<1x32xf32> to vector<8x32xf32>
    %21 = arith.addf %19, %20 : vector<8x32xf32>
    %cst_14 = arith.constant 0.000000e+00 : f32
    %22 = vector.broadcast %cst_14 : f32 to vector<8x32xf32>
    %23 = arith.maximumf %21, %22 : vector<8x32xf32>
    %24 = arith.truncf %23 : vector<8x32xf32> to vector<8x32xbf16>
    %c0_15 = arith.constant 0 : index
    %c0_16 = arith.constant 0 : index
    %25 = vector.load %arg8[%c0_15, %c0_16] : memref<32x32xbf16, #tpu.memory_space<vmem>>, vector<32x32xbf16>
    %cst_17 = arith.constant dense<0.000000e+00> : vector<8x32xf32>
    %26 = tpu.matmul %24, %25, %cst_17 {dimension_numbers = #tpu.dot_dimension_numbers<[1], [0], [0], [1], [0, 0, 1, 1], [], []>} : vector<8x32xbf16>, vector<32x32xbf16>, vector<8x32xf32> -> vector<8x32xf32>
    %c0_18 = arith.constant 0 : index
    %c0_19 = arith.constant 0 : index
    %27 = vector.load %arg9[%c0_18, %c0_19] : memref<1x32xf32, #tpu.memory_space<vmem>>, vector<1x32xf32>
    %28 = vector.broadcast %27 : vector<1x32xf32> to vector<8x32xf32>
    %29 = arith.addf %26, %28 : vector<8x32xf32>
    %c0_20 = arith.constant 0 : index
    %c0_21 = arith.constant 0 : index
    %30 = vector.load %arg10[%c0_20, %c0_21] : memref<8x32xf32, #tpu.memory_space<vmem>>, vector<8x32xf32>
    tpu.vector_store %arg10[%c0_20, %c0_21], %29 {strides = array<i32>} : memref<8x32xf32, #tpu.memory_space<vmem>>, vector<8x32xf32>,
    return
  }
  func.func @transform_0(%arg0: i32) -> (i32, i32) {
    %c0_i32 = arith.constant 0 : i32
    %c0_i32_0 = arith.constant 0 : i32
    return %arg0, %c0_i32 : i32, i32
  }
  func.func @transform_1(%arg0: i32) -> (i32, i32) {
    %c0_i32 = arith.constant 0 : i32
    %c0_i32_0 = arith.constant 0 : i32
    %c0_i32_1 = arith.constant 0 : i32
    return %c0_i32, %c0_i32_0 : i32, i32
  }
  func.func @transform_2(%arg0: i32) -> (i32, i32) {
    %c0_i32 = arith.constant 0 : i32
    %c0_i32_0 = arith.constant 0 : i32
    %c0_i32_1 = arith.constant 0 : i32
    return %c0_i32, %c0_i32_0 : i32, i32
  }
  func.func @transform_3(%arg0: i32) -> (i32, i32) {
    %c0_i32 = arith.constant 0 : i32
    %c0_i32_0 = arith.constant 0 : i32
    %c0_i32_1 = arith.constant 0 : i32
    return %c0_i32, %c0_i32_0 : i32, i32
  }
  func.func @transform_4(%arg0: i32) -> (i32, i32) {
    %c0_i32 = arith.constant 0 : i32
    %c0_i32_0 = arith.constant 0 : i32
    %c0_i32_1 = arith.constant 0 : i32
    return %c0_i32, %c0_i32_0 : i32, i32
  }
  func.func @transform_5(%arg0: i32) -> (i32, i32) {
    %c0_i32 = arith.constant 0 : i32
    %c0_i32_0 = arith.constant 0 : i32
    %c0_i32_1 = arith.constant 0 : i32
    return %c0_i32, %c0_i32_0 : i32, i32
  }
  func.func @transform_6(%arg0: i32) -> (i32, i32) {
    %c0_i32 = arith.constant 0 : i32
    %c0_i32_0 = arith.constant 0 : i32
    %c0_i32_1 = arith.constant 0 : i32
    return %c0_i32, %c0_i32_0 : i32, i32
  }
  func.func @transform_7(%arg0: i32) -> (i32, i32) {
    %c0_i32 = arith.constant 0 : i32
    %c0_i32_0 = arith.constant 0 : i32
    %c0_i32_1 = arith.constant 0 : i32
    return %c0_i32, %c0_i32_0 : i32, i32
  }
  func.func @transform_8(%arg0: i32) -> (i32, i32) {
    %c0_i32 = arith.constant 0 : i32
    %c0_i32_0 = arith.constant 0 : i32
    %c0_i32_1 = arith.constant 0 : i32
    return %c0_i32, %c0_i32_0 : i32, i32
  }
  func.func @transform_9(%arg0: i32) -> (i32, i32) {
    %c0_i32 = arith.constant 0 : i32
    %c0_i32_0 = arith.constant 0 : i32
    return %arg0, %c0_i32 : i32, i32
  }
}

module attributes {stable_mosaic.version = 11 : i64} {
  func.func @gat_aggregate_kernel(%arg0: i32, %arg1: memref<8x1xi32, #tpu.memory_space<vmem>>, %arg2: memref<8x1xi32, #tpu.memory_space<vmem>>, %arg3: memref<1x1x8xi32, #tpu.memory_space<vmem>>, %arg4: memref<16x48xf32, #tpu.memory_space<vmem>>, %arg5: memref<16x16xf32, #tpu.memory_space<vmem>>, %arg6: memref<8x40xbf16, #tpu.memory_space<vmem>>, %arg7: memref<8x32xbf16, #tpu.memory_space<vmem>>, %arg8: memref<1x32xf32, #tpu.memory_space<vmem>>, %arg9: memref<16x32xf32, #tpu.memory_space<vmem>>, %arg10: memref<16x40xf32, #tpu.memory_space<vmem>>) attributes {dimension_semantics = [#tpu.dimension_semantics<arbitrary>], iteration_bounds = array<i64: 5>, scalar_prefetch = 0 : i64, scratch_operands = 1 : i64, tpu.core_type = #tpu.core_type<tc>, window_params = [{transform_indices = @transform_0, window_bounds = array<i64: 8, 1>}, {transform_indices = @transform_1, window_bounds = array<i64: 8, 1>}, {transform_indices = @transform_2, window_bounds = array<i64: 1, 1, 8>}, {pipeline_mode = #tpu.pipeline_mode<synchronous>, transform_indices = @transform_3, window_bounds = array<i64: 16, 48>}, {pipeline_mode = #tpu.pipeline_mode<synchronous>, transform_indices = @transform_4, window_bounds = array<i64: 16, 16>}, {pipeline_mode = #tpu.pipeline_mode<synchronous>, transform_indices = @transform_5, window_bounds = array<i64: 8, 40>}, {pipeline_mode = #tpu.pipeline_mode<synchronous>, transform_indices = @transform_6, window_bounds = array<i64: 8, 32>}, {pipeline_mode = #tpu.pipeline_mode<synchronous>, transform_indices = @transform_7, window_bounds = array<i64: 1, 32>}, {pipeline_mode = #tpu.pipeline_mode<synchronous>, transform_indices = @transform_8, window_bounds = array<i64: 16, 32>}]} {
    %c0_i32 = arith.constant 0 : i32
    %0 = arith.cmpi eq, %arg0, %c0_i32 : i32
    %1 = arith.extui %0 : i1 to i32
    %c0_i32_0 = arith.constant 0 : i32
    %2 = arith.cmpi ne, %1, %c0_i32_0 : i32
    scf.if %2 {
      %cst_23 = arith.constant 0.000000e+00 : f32
      %54 = vector.broadcast %cst_23 : f32 to vector<16x40xf32>
      %c0_24 = arith.constant 0 : index
      %c0_25 = arith.constant 0 : index
      %55 = vector.load %arg10[%c0_24, %c0_25] : memref<16x40xf32, #tpu.memory_space<vmem>>, vector<16x40xf32>
      tpu.vector_store %arg10[%c0_24, %c0_25], %54 {strides = array<i32>} : memref<16x40xf32, #tpu.memory_space<vmem>>, vector<16x40xf32>,
    } else {
    }
    %3 = tpu.iota {dimensions = array<i32: 1>} : vector<8x16xi32>
    %c0 = arith.constant 0 : index
    %c0_1 = arith.constant 0 : index
    %4 = vector.load %arg1[%c0, %c0_1] : memref<8x1xi32, #tpu.memory_space<vmem>>, vector<8x1xi32>
    %5 = vector.broadcast %4 : vector<8x1xi32> to vector<8x16xi32>
    %6 = arith.cmpi eq, %5, %3 : vector<8x16xi32>
    %7 = arith.extui %6 : vector<8x16xi1> to vector<8x16xi32>
    %8 = arith.sitofp %7 : vector<8x16xi32> to vector<8x16xf32>
    %9 = arith.truncf %8 : vector<8x16xf32> to vector<8x16xbf16>
    %c0_2 = arith.constant 0 : index
    %c0_3 = arith.constant 0 : index
    %10 = vector.load %arg2[%c0_2, %c0_3] : memref<8x1xi32, #tpu.memory_space<vmem>>, vector<8x1xi32>
    %11 = vector.broadcast %10 : vector<8x1xi32> to vector<8x16xi32>
    %12 = arith.cmpi eq, %11, %3 : vector<8x16xi32>
    %13 = arith.extui %12 : vector<8x16xi1> to vector<8x16xi32>
    %14 = arith.sitofp %13 : vector<8x16xi32> to vector<8x16xf32>
    %15 = arith.truncf %14 : vector<8x16xf32> to vector<8x16xbf16>
    %16 = tpu.iota {dimensions = array<i32: 0>} : vector<16x8xi32>
    %c0_4 = arith.constant 0 : index
    %c0_5 = arith.constant 0 : index
    %c0_6 = arith.constant 0 : index
    %17 = vector.load %arg3[%c0_4, %c0_5, %c0_6] : memref<1x1x8xi32, #tpu.memory_space<vmem>>, vector<1x1x8xi32>
    %18 = vector.shape_cast %17 : vector<1x1x8xi32> to vector<1x8xi32>
    %19 = vector.broadcast %18 : vector<1x8xi32> to vector<16x8xi32>
    %20 = arith.cmpi eq, %19, %16 : vector<16x8xi32>
    %21 = arith.extui %20 : vector<16x8xi1> to vector<16x8xi32>
    %22 = arith.sitofp %21 : vector<16x8xi32> to vector<16x8xf32>
    %23 = arith.truncf %22 : vector<16x8xf32> to vector<16x8xbf16>
    %c0_7 = arith.constant 0 : index
    %c0_8 = arith.constant 0 : index
    %24 = vector.load %arg4[%c0_7, %c0_8] : memref<16x48xf32, #tpu.memory_space<vmem>>, vector<16x48xf32>
    %25 = arith.truncf %24 : vector<16x48xf32> to vector<16x48xbf16>
    %cst = arith.constant dense<0.000000e+00> : vector<8x48xf32>
    %26 = tpu.matmul %9, %25, %cst {dimension_numbers = #tpu.dot_dimension_numbers<[1], [0], [0], [1], [0, 0, 1, 1], [], []>} : vector<8x16xbf16>, vector<16x48xbf16>, vector<8x48xf32> -> vector<8x48xf32>
    %c0_9 = arith.constant 0 : index
    %c0_10 = arith.constant 0 : index
    %27 = vector.load %arg5[%c0_9, %c0_10] : memref<16x16xf32, #tpu.memory_space<vmem>>, vector<16x16xf32>
    %28 = arith.truncf %27 : vector<16x16xf32> to vector<16x16xbf16>
    %cst_11 = arith.constant dense<0.000000e+00> : vector<8x16xf32>
    %29 = tpu.matmul %15, %28, %cst_11 {dimension_numbers = #tpu.dot_dimension_numbers<[1], [0], [0], [1], [0, 0, 1, 1], [], []>} : vector<8x16xbf16>, vector<16x16xbf16>, vector<8x16xf32> -> vector<8x16xf32>
    %30 = vector.extract_strided_slice %26 {offsets = [0, 0], sizes = [8, 40], strides = [1, 1]} : vector<8x48xf32> to vector<8x40xf32>
    %31 = vector.extract_strided_slice %26 {offsets = [0, 40], sizes = [8, 8], strides = [1, 1]} : vector<8x48xf32> to vector<8x8xf32>
    %32 = vector.extract_strided_slice %29 {offsets = [0, 0], sizes = [8, 8], strides = [1, 1]} : vector<8x16xf32> to vector<8x8xf32>
    %33 = vector.extract_strided_slice %29 {offsets = [0, 8], sizes = [8, 8], strides = [1, 1]} : vector<8x16xf32> to vector<8x8xf32>
    %34 = arith.addf %31, %32 : vector<8x8xf32>
    %cst_12 = arith.constant 0.000000e+00 : f32
    %35 = vector.broadcast %cst_12 : f32 to vector<8x8xf32>
    %36 = arith.cmpf ogt, %34, %35 : vector<8x8xf32>
    %cst_13 = arith.constant 2.000000e-01 : f32
    %37 = vector.broadcast %cst_13 : f32 to vector<8x8xf32>
    %38 = arith.mulf %37, %34 : vector<8x8xf32>
    %39 = arith.select %36, %34, %38 : vector<8x8xi1>, vector<8x8xf32>
    %40 = arith.subf %39, %33 : vector<8x8xf32>
    %41 = math.exp %40 : vector<8x8xf32>
    %42 = arith.truncf %41 : vector<8x8xf32> to vector<8x8xbf16>
    %c0_14 = arith.constant 0 : index
    %c0_15 = arith.constant 0 : index
    %43 = vector.load %arg6[%c0_14, %c0_15] : memref<8x40xbf16, #tpu.memory_space<vmem>>, vector<8x40xbf16>
    %cst_16 = arith.constant dense<0.000000e+00> : vector<8x40xf32>
    %44 = tpu.matmul %42, %43, %cst_16 {dimension_numbers = #tpu.dot_dimension_numbers<[1], [0], [0], [1], [0, 0, 1, 1], [], []>} : vector<8x8xbf16>, vector<8x40xbf16>, vector<8x40xf32> -> vector<8x40xf32>
    %45 = arith.mulf %30, %44 : vector<8x40xf32>
    %c0_17 = arith.constant 0 : index
    %c0_18 = arith.constant 0 : index
    %46 = vector.load %arg10[%c0_17, %c0_18] : memref<16x40xf32, #tpu.memory_space<vmem>>, vector<16x40xf32>
    %47 = arith.truncf %45 : vector<8x40xf32> to vector<8x40xbf16>
    %cst_19 = arith.constant dense<0.000000e+00> : vector<16x40xf32>
    %48 = tpu.matmul %23, %47, %cst_19 {dimension_numbers = #tpu.dot_dimension_numbers<[1], [0], [0], [1], [0, 0, 1, 1], [], []>} : vector<16x8xbf16>, vector<8x40xbf16>, vector<16x40xf32> -> vector<16x40xf32>
    %49 = arith.addf %46, %48 : vector<16x40xf32>
    %c0_20 = arith.constant 0 : index
    %c0_21 = arith.constant 0 : index
    %50 = vector.load %arg10[%c0_20, %c0_21] : memref<16x40xf32, #tpu.memory_space<vmem>>, vector<16x40xf32>
    tpu.vector_store %arg10[%c0_20, %c0_21], %49 {strides = array<i32>} : memref<16x40xf32, #tpu.memory_space<vmem>>, vector<16x40xf32>,
    %c4_i32 = arith.constant 4 : i32
    %51 = arith.cmpi eq, %arg0, %c4_i32 : i32
    %52 = arith.extui %51 : i1 to i32
    %c0_i32_22 = arith.constant 0 : i32
    %53 = arith.cmpi ne, %52, %c0_i32_22 : i32
    scf.if %53 {
      %c0_23 = arith.constant 0 : index
      %c32 = arith.constant 32 : index
      %54 = vector.load %arg10[%c0_23, %c32] : memref<16x40xf32, #tpu.memory_space<vmem>>, vector<16x8xf32>
      %cst_24 = arith.constant 9.99999997E-7 : f32
      %55 = vector.broadcast %cst_24 : f32 to vector<16x8xf32>
      %56 = arith.maximumf %54, %55 : vector<16x8xf32>
      %57 = tpu.reciprocal %56 {approx = true} : vector<16x8xf32> -> vector<16x8xf32>
      %58 = arith.truncf %57 : vector<16x8xf32> to vector<16x8xbf16>
      %c0_25 = arith.constant 0 : index
      %c0_26 = arith.constant 0 : index
      %59 = vector.load %arg7[%c0_25, %c0_26] : memref<8x32xbf16, #tpu.memory_space<vmem>>, vector<8x32xbf16>
      %cst_27 = arith.constant dense<0.000000e+00> : vector<16x32xf32>
      %60 = tpu.matmul %58, %59, %cst_27 {dimension_numbers = #tpu.dot_dimension_numbers<[1], [0], [0], [1], [0, 0, 1, 1], [], []>} : vector<16x8xbf16>, vector<8x32xbf16>, vector<16x32xf32> -> vector<16x32xf32>
      %c0_28 = arith.constant 0 : index
      %c0_29 = arith.constant 0 : index
      %61 = vector.load %arg10[%c0_28, %c0_29] : memref<16x40xf32, #tpu.memory_space<vmem>>, vector<16x32xf32>
      %62 = arith.mulf %61, %60 : vector<16x32xf32>
      %c0_30 = arith.constant 0 : index
      %c0_31 = arith.constant 0 : index
      %63 = vector.load %arg8[%c0_30, %c0_31] : memref<1x32xf32, #tpu.memory_space<vmem>>, vector<1x32xf32>
      %64 = vector.broadcast %63 : vector<1x32xf32> to vector<16x32xf32>
      %65 = arith.addf %62, %64 : vector<16x32xf32>
      %c0_32 = arith.constant 0 : index
      %c0_33 = arith.constant 0 : index
      %66 = vector.load %arg9[%c0_32, %c0_33] : memref<16x32xf32, #tpu.memory_space<vmem>>, vector<16x32xf32>
      tpu.vector_store %arg9[%c0_32, %c0_33], %65 {strides = array<i32>} : memref<16x32xf32, #tpu.memory_space<vmem>>, vector<16x32xf32>,
    } else {
    }
    return
  }
  func.func @transform_0(%arg0: i32) -> (i32, i32) {
    %c0_i32 = arith.constant 0 : i32
    %c0_i32_0 = arith.constant 0 : i32
    return %arg0, %c0_i32 : i32, i32
  }
  func.func @transform_1(%arg0: i32) -> (i32, i32) {
    %c0_i32 = arith.constant 0 : i32
    %c0_i32_0 = arith.constant 0 : i32
    return %arg0, %c0_i32 : i32, i32
  }
  func.func @transform_2(%arg0: i32) -> (i32, i32, i32) {
    %c0_i32 = arith.constant 0 : i32
    %c0_i32_0 = arith.constant 0 : i32
    %c0_i32_1 = arith.constant 0 : i32
    return %arg0, %c0_i32, %c0_i32_0 : i32, i32, i32
  }
  func.func @transform_3(%arg0: i32) -> (i32, i32) {
    %c0_i32 = arith.constant 0 : i32
    %c0_i32_0 = arith.constant 0 : i32
    %c0_i32_1 = arith.constant 0 : i32
    return %c0_i32, %c0_i32_0 : i32, i32
  }
  func.func @transform_4(%arg0: i32) -> (i32, i32) {
    %c0_i32 = arith.constant 0 : i32
    %c0_i32_0 = arith.constant 0 : i32
    %c0_i32_1 = arith.constant 0 : i32
    return %c0_i32, %c0_i32_0 : i32, i32
  }
  func.func @transform_5(%arg0: i32) -> (i32, i32) {
    %c0_i32 = arith.constant 0 : i32
    %c0_i32_0 = arith.constant 0 : i32
    %c0_i32_1 = arith.constant 0 : i32
    return %c0_i32, %c0_i32_0 : i32, i32
  }
  func.func @transform_6(%arg0: i32) -> (i32, i32) {
    %c0_i32 = arith.constant 0 : i32
    %c0_i32_0 = arith.constant 0 : i32
    %c0_i32_1 = arith.constant 0 : i32
    return %c0_i32, %c0_i32_0 : i32, i32
  }
  func.func @transform_7(%arg0: i32) -> (i32, i32) {
    %c0_i32 = arith.constant 0 : i32
    %c0_i32_0 = arith.constant 0 : i32
    %c0_i32_1 = arith.constant 0 : i32
    return %c0_i32, %c0_i32_0 : i32, i32
  }
  func.func @transform_8(%arg0: i32) -> (i32, i32) {
    %c0_i32 = arith.constant 0 : i32
    %c0_i32_0 = arith.constant 0 : i32
    %c0_i32_1 = arith.constant 0 : i32
    return %c0_i32, %c0_i32_0 : i32, i32
  }
}

module attributes {stable_mosaic.version = 11 : i64} {
  func.func @pool_output_kernel(%arg0: i32, %arg1: memref<8x32xf32, #tpu.memory_space<vmem>>, %arg2: memref<1x1x8xi32, #tpu.memory_space<vmem>>, %arg3: memref<8x1xf32, #tpu.memory_space<vmem>>, %arg4: memref<32x32xbf16, #tpu.memory_space<vmem>>, %arg5: memref<32x32xbf16, #tpu.memory_space<vmem>>, %arg6: memref<1x32xf32, #tpu.memory_space<vmem>>, %arg7: memref<1x32xf32, #tpu.memory_space<vmem>>, %arg8: memref<1x32xf32, #tpu.memory_space<vmem>>, %arg9: memref<1x32xf32, #tpu.memory_space<vmem>>, %arg10: memref<1x32xf32, #tpu.memory_space<vmem>>, %arg11: memref<32x16xbf16, #tpu.memory_space<vmem>>, %arg12: memref<1x16xf32, #tpu.memory_space<vmem>>, %arg13: memref<16x1xbf16, #tpu.memory_space<vmem>>, %arg14: memref<1x1xf32, #tpu.memory_space<vmem>>, %arg15: memref<8x1xf32, #tpu.memory_space<vmem>>, %arg16: memref<8x32xf32, #tpu.memory_space<vmem>>) attributes {dimension_semantics = [#tpu.dimension_semantics<arbitrary>], iteration_bounds = array<i64: 2>, scalar_prefetch = 0 : i64, scratch_operands = 1 : i64, tpu.core_type = #tpu.core_type<tc>, window_params = [{transform_indices = @transform_0, window_bounds = array<i64: 8, 32>}, {transform_indices = @transform_1, window_bounds = array<i64: 1, 1, 8>}, {pipeline_mode = #tpu.pipeline_mode<synchronous>, transform_indices = @transform_2, window_bounds = array<i64: 8, 1>}, {pipeline_mode = #tpu.pipeline_mode<synchronous>, transform_indices = @transform_3, window_bounds = array<i64: 32, 32>}, {pipeline_mode = #tpu.pipeline_mode<synchronous>, transform_indices = @transform_4, window_bounds = array<i64: 32, 32>}, {pipeline_mode = #tpu.pipeline_mode<synchronous>, transform_indices = @transform_5, window_bounds = array<i64: 1, 32>}, {pipeline_mode = #tpu.pipeline_mode<synchronous>, transform_indices = @transform_6, window_bounds = array<i64: 1, 32>}, {pipeline_mode = #tpu.pipeline_mode<synchronous>, transform_indices = @transform_7, window_bounds = array<i64: 1, 32>}, {pipeline_mode = #tpu.pipeline_mode<synchronous>, transform_indices = @transform_8, window_bounds = array<i64: 1, 32>}, {pipeline_mode = #tpu.pipeline_mode<synchronous>, transform_indices = @transform_9, window_bounds = array<i64: 1, 32>}, {pipeline_mode = #tpu.pipeline_mode<synchronous>, transform_indices = @transform_10, window_bounds = array<i64: 32, 16>}, {pipeline_mode = #tpu.pipeline_mode<synchronous>, transform_indices = @transform_11, window_bounds = array<i64: 1, 16>}, {pipeline_mode = #tpu.pipeline_mode<synchronous>, transform_indices = @transform_12, window_bounds = array<i64: 16, 1>}, {pipeline_mode = #tpu.pipeline_mode<synchronous>, transform_indices = @transform_13, window_bounds = array<i64: 1, 1>}, {pipeline_mode = #tpu.pipeline_mode<synchronous>, transform_indices = @transform_14, window_bounds = array<i64: 8, 1>}]} {
    %c0_i32 = arith.constant 0 : i32
    %0 = arith.cmpi eq, %arg0, %c0_i32 : i32
    %1 = arith.extui %0 : i1 to i32
    %c0_i32_0 = arith.constant 0 : i32
    %2 = arith.cmpi ne, %1, %c0_i32_0 : i32
    scf.if %2 {
      %cst_10 = arith.constant 0.000000e+00 : f32
      %20 = vector.broadcast %cst_10 : f32 to vector<8x32xf32>
      %c0_11 = arith.constant 0 : index
      %c0_12 = arith.constant 0 : index
      %21 = vector.load %arg16[%c0_11, %c0_12] : memref<8x32xf32, #tpu.memory_space<vmem>>, vector<8x32xf32>
      tpu.vector_store %arg16[%c0_11, %c0_12], %20 {strides = array<i32>} : memref<8x32xf32, #tpu.memory_space<vmem>>, vector<8x32xf32>,
    } else {
    }
    %3 = tpu.iota {dimensions = array<i32: 0>} : vector<8x8xi32>
    %c0 = arith.constant 0 : index
    %c0_1 = arith.constant 0 : index
    %c0_2 = arith.constant 0 : index
    %4 = vector.load %arg2[%c0, %c0_1, %c0_2] : memref<1x1x8xi32, #tpu.memory_space<vmem>>, vector<1x1x8xi32>
    %5 = vector.shape_cast %4 : vector<1x1x8xi32> to vector<1x8xi32>
    %6 = vector.broadcast %5 : vector<1x8xi32> to vector<8x8xi32>
    %7 = arith.cmpi eq, %6, %3 : vector<8x8xi32>
    %8 = arith.extui %7 : vector<8x8xi1> to vector<8x8xi32>
    %9 = arith.sitofp %8 : vector<8x8xi32> to vector<8x8xf32>
    %10 = arith.truncf %9 : vector<8x8xf32> to vector<8x8xbf16>
    %c0_3 = arith.constant 0 : index
    %c0_4 = arith.constant 0 : index
    %11 = vector.load %arg16[%c0_3, %c0_4] : memref<8x32xf32, #tpu.memory_space<vmem>>, vector<8x32xf32>
    %c0_5 = arith.constant 0 : index
    %c0_6 = arith.constant 0 : index
    %12 = vector.load %arg1[%c0_5, %c0_6] : memref<8x32xf32, #tpu.memory_space<vmem>>, vector<8x32xf32>
    %13 = arith.truncf %12 : vector<8x32xf32> to vector<8x32xbf16>
    %cst = arith.constant dense<0.000000e+00> : vector<8x32xf32>
    %14 = tpu.matmul %10, %13, %cst {dimension_numbers = #tpu.dot_dimension_numbers<[1], [0], [0], [1], [0, 0, 1, 1], [], []>} : vector<8x8xbf16>, vector<8x32xbf16>, vector<8x32xf32> -> vector<8x32xf32>
    %15 = arith.addf %11, %14 : vector<8x32xf32>
    %c0_7 = arith.constant 0 : index
    %c0_8 = arith.constant 0 : index
    %16 = vector.load %arg16[%c0_7, %c0_8] : memref<8x32xf32, #tpu.memory_space<vmem>>, vector<8x32xf32>
    tpu.vector_store %arg16[%c0_7, %c0_8], %15 {strides = array<i32>} : memref<8x32xf32, #tpu.memory_space<vmem>>, vector<8x32xf32>,
    %c1_i32 = arith.constant 1 : i32
    %17 = arith.cmpi eq, %arg0, %c1_i32 : i32
    %18 = arith.extui %17 : i1 to i32
    %c0_i32_9 = arith.constant 0 : i32
    %19 = arith.cmpi ne, %18, %c0_i32_9 : i32
    scf.if %19 {
      %c0_10 = arith.constant 0 : index
      %c0_11 = arith.constant 0 : index
      %20 = vector.load %arg16[%c0_10, %c0_11] : memref<8x32xf32, #tpu.memory_space<vmem>>, vector<8x32xf32>
      %c0_12 = arith.constant 0 : index
      %c0_13 = arith.constant 0 : index
      %21 = vector.load %arg3[%c0_12, %c0_13] : memref<8x1xf32, #tpu.memory_space<vmem>>, vector<8x1xf32>
      %22 = vector.broadcast %21 : vector<8x1xf32> to vector<8x32xf32>
      %23 = arith.mulf %20, %22 : vector<8x32xf32>
      %24 = arith.truncf %23 : vector<8x32xf32> to vector<8x32xbf16>
      %c0_14 = arith.constant 0 : index
      %c0_15 = arith.constant 0 : index
      %25 = vector.load %arg4[%c0_14, %c0_15] : memref<32x32xbf16, #tpu.memory_space<vmem>>, vector<32x32xbf16>
      %cst_16 = arith.constant dense<0.000000e+00> : vector<8x32xf32>
      %26 = tpu.matmul %24, %25, %cst_16 {dimension_numbers = #tpu.dot_dimension_numbers<[1], [0], [0], [1], [0, 0, 1, 1], [], []>} : vector<8x32xbf16>, vector<32x32xbf16>, vector<8x32xf32> -> vector<8x32xf32>
      %27 = arith.truncf %20 : vector<8x32xf32> to vector<8x32xbf16>
      %c0_17 = arith.constant 0 : index
      %c0_18 = arith.constant 0 : index
      %28 = vector.load %arg5[%c0_17, %c0_18] : memref<32x32xbf16, #tpu.memory_space<vmem>>, vector<32x32xbf16>
      %cst_19 = arith.constant dense<0.000000e+00> : vector<8x32xf32>
      %29 = tpu.matmul %27, %28, %cst_19 {dimension_numbers = #tpu.dot_dimension_numbers<[1], [0], [0], [1], [0, 0, 1, 1], [], []>} : vector<8x32xbf16>, vector<32x32xbf16>, vector<8x32xf32> -> vector<8x32xf32>
      %30 = arith.addf %26, %29 : vector<8x32xf32>
      %c0_20 = arith.constant 0 : index
      %c0_21 = arith.constant 0 : index
      %31 = vector.load %arg6[%c0_20, %c0_21] : memref<1x32xf32, #tpu.memory_space<vmem>>, vector<1x32xf32>
      %32 = vector.broadcast %31 : vector<1x32xf32> to vector<8x32xf32>
      %33 = arith.addf %30, %32 : vector<8x32xf32>
      %c0_22 = arith.constant 0 : index
      %c0_23 = arith.constant 0 : index
      %34 = vector.load %arg7[%c0_22, %c0_23] : memref<1x32xf32, #tpu.memory_space<vmem>>, vector<1x32xf32>
      %c0_24 = arith.constant 0 : index
      %c0_25 = arith.constant 0 : index
      %35 = vector.load %arg8[%c0_24, %c0_25] : memref<1x32xf32, #tpu.memory_space<vmem>>, vector<1x32xf32>
      %c0_26 = arith.constant 0 : index
      %c0_27 = arith.constant 0 : index
      %36 = vector.load %arg9[%c0_26, %c0_27] : memref<1x32xf32, #tpu.memory_space<vmem>>, vector<1x32xf32>
      %c0_28 = arith.constant 0 : index
      %c0_29 = arith.constant 0 : index
      %37 = vector.load %arg10[%c0_28, %c0_29] : memref<1x32xf32, #tpu.memory_space<vmem>>, vector<1x32xf32>
      %38 = vector.broadcast %36 : vector<1x32xf32> to vector<8x32xf32>
      %39 = arith.subf %33, %38 : vector<8x32xf32>
      %40 = vector.broadcast %34 : vector<1x32xf32> to vector<8x32xf32>
      %41 = arith.mulf %39, %40 : vector<8x32xf32>
      %cst_30 = arith.constant 9.99999974E-6 : f32
      %42 = vector.broadcast %cst_30 : f32 to vector<1x32xf32>
      %43 = arith.addf %37, %42 : vector<1x32xf32>
      %44 = math.rsqrt %43 : vector<1x32xf32>
      %45 = vector.broadcast %44 : vector<1x32xf32> to vector<8x32xf32>
      %46 = arith.mulf %41, %45 : vector<8x32xf32>
      %47 = vector.broadcast %35 : vector<1x32xf32> to vector<8x32xf32>
      %48 = arith.addf %46, %47 : vector<8x32xf32>
      %cst_31 = arith.constant 0.000000e+00 : f32
      %49 = vector.broadcast %cst_31 : f32 to vector<8x32xf32>
      %50 = arith.maximumf %48, %49 : vector<8x32xf32>
      %51 = arith.truncf %50 : vector<8x32xf32> to vector<8x32xbf16>
      %c0_32 = arith.constant 0 : index
      %c0_33 = arith.constant 0 : index
      %52 = vector.load %arg11[%c0_32, %c0_33] : memref<32x16xbf16, #tpu.memory_space<vmem>>, vector<32x16xbf16>
      %cst_34 = arith.constant dense<0.000000e+00> : vector<8x16xf32>
      %53 = tpu.matmul %51, %52, %cst_34 {dimension_numbers = #tpu.dot_dimension_numbers<[1], [0], [0], [1], [0, 0, 1, 1], [], []>} : vector<8x32xbf16>, vector<32x16xbf16>, vector<8x16xf32> -> vector<8x16xf32>
      %c0_35 = arith.constant 0 : index
      %c0_36 = arith.constant 0 : index
      %54 = vector.load %arg12[%c0_35, %c0_36] : memref<1x16xf32, #tpu.memory_space<vmem>>, vector<1x16xf32>
      %55 = vector.broadcast %54 : vector<1x16xf32> to vector<8x16xf32>
      %56 = arith.addf %53, %55 : vector<8x16xf32>
      %cst_37 = arith.constant 0.000000e+00 : f32
      %57 = vector.broadcast %cst_37 : f32 to vector<8x16xf32>
      %58 = arith.maximumf %56, %57 : vector<8x16xf32>
      %59 = arith.truncf %58 : vector<8x16xf32> to vector<8x16xbf16>
      %c0_38 = arith.constant 0 : index
      %c0_39 = arith.constant 0 : index
      %60 = vector.load %arg13[%c0_38, %c0_39] : memref<16x1xbf16, #tpu.memory_space<vmem>>, vector<16x1xbf16>
      %cst_40 = arith.constant dense<0.000000e+00> : vector<8x1xf32>
      %61 = tpu.matmul %59, %60, %cst_40 {dimension_numbers = #tpu.dot_dimension_numbers<[1], [0], [0], [1], [0, 0, 1, 1], [], []>} : vector<8x16xbf16>, vector<16x1xbf16>, vector<8x1xf32> -> vector<8x1xf32>
      %c0_41 = arith.constant 0 : index
      %c0_42 = arith.constant 0 : index
      %62 = vector.load %arg14[%c0_41, %c0_42] : memref<1x1xf32, #tpu.memory_space<vmem>>, vector<1x1xf32>
      %63 = vector.broadcast %62 : vector<1x1xf32> to vector<8x1xf32>
      %64 = arith.addf %61, %63 : vector<8x1xf32>
      %c0_43 = arith.constant 0 : index
      %c0_44 = arith.constant 0 : index
      %65 = vector.load %arg15[%c0_43, %c0_44] : memref<8x1xf32, #tpu.memory_space<vmem>>, vector<8x1xf32>
      tpu.vector_store %arg15[%c0_43, %c0_44], %64 {strides = array<i32>} : memref<8x1xf32, #tpu.memory_space<vmem>>, vector<8x1xf32>,
    } else {
    }
    return
  }
  func.func @transform_0(%arg0: i32) -> (i32, i32) {
    %c0_i32 = arith.constant 0 : i32
    %c0_i32_0 = arith.constant 0 : i32
    return %arg0, %c0_i32 : i32, i32
  }
  func.func @transform_1(%arg0: i32) -> (i32, i32, i32) {
    %c0_i32 = arith.constant 0 : i32
    %c0_i32_0 = arith.constant 0 : i32
    %c0_i32_1 = arith.constant 0 : i32
    return %arg0, %c0_i32, %c0_i32_0 : i32, i32, i32
  }
  func.func @transform_2(%arg0: i32) -> (i32, i32) {
    %c0_i32 = arith.constant 0 : i32
    %c0_i32_0 = arith.constant 0 : i32
    %c0_i32_1 = arith.constant 0 : i32
    return %c0_i32, %c0_i32_0 : i32, i32
  }
  func.func @transform_3(%arg0: i32) -> (i32, i32) {
    %c0_i32 = arith.constant 0 : i32
    %c0_i32_0 = arith.constant 0 : i32
    %c0_i32_1 = arith.constant 0 : i32
    return %c0_i32, %c0_i32_0 : i32, i32
  }
  func.func @transform_4(%arg0: i32) -> (i32, i32) {
    %c0_i32 = arith.constant 0 : i32
    %c0_i32_0 = arith.constant 0 : i32
    %c0_i32_1 = arith.constant 0 : i32
    return %c0_i32, %c0_i32_0 : i32, i32
  }
  func.func @transform_5(%arg0: i32) -> (i32, i32) {
    %c0_i32 = arith.constant 0 : i32
    %c0_i32_0 = arith.constant 0 : i32
    %c0_i32_1 = arith.constant 0 : i32
    return %c0_i32, %c0_i32_0 : i32, i32
  }
  func.func @transform_6(%arg0: i32) -> (i32, i32) {
    %c0_i32 = arith.constant 0 : i32
    %c0_i32_0 = arith.constant 0 : i32
    %c0_i32_1 = arith.constant 0 : i32
    return %c0_i32, %c0_i32_0 : i32, i32
  }
  func.func @transform_7(%arg0: i32) -> (i32, i32) {
    %c0_i32 = arith.constant 0 : i32
    %c0_i32_0 = arith.constant 0 : i32
    %c0_i32_1 = arith.constant 0 : i32
    return %c0_i32, %c0_i32_0 : i32, i32
  }
  func.func @transform_8(%arg0: i32) -> (i32, i32) {
    %c0_i32 = arith.constant 0 : i32
    %c0_i32_0 = arith.constant 0 : i32
    %c0_i32_1 = arith.constant 0 : i32
    return %c0_i32, %c0_i32_0 : i32, i32
  }
  func.func @transform_9(%arg0: i32) -> (i32, i32) {
    %c0_i32 = arith.constant 0 : i32
    %c0_i32_0 = arith.constant 0 : i32
    %c0_i32_1 = arith.constant 0 : i32
    return %c0_i32, %c0_i32_0 : i32, i32
  }
  func.func @transform_10(%arg0: i32) -> (i32, i32) {
    %c0_i32 = arith.constant 0 : i32
    %c0_i32_0 = arith.constant 0 : i32
    %c0_i32_1 = arith.constant 0 : i32
    return %c0_i32, %c0_i32_0 : i32, i32
  }
  func.func @transform_11(%arg0: i32) -> (i32, i32) {
    %c0_i32 = arith.constant 0 : i32
    %c0_i32_0 = arith.constant 0 : i32
    %c0_i32_1 = arith.constant 0 : i32
    return %c0_i32, %c0_i32_0 : i32, i32
  }
  func.func @transform_12(%arg0: i32) -> (i32, i32) {
    %c0_i32 = arith.constant 0 : i32
    %c0_i32_0 = arith.constant 0 : i32
    %c0_i32_1 = arith.constant 0 : i32
    return %c0_i32, %c0_i32_0 : i32, i32
  }
  func.func @transform_13(%arg0: i32) -> (i32, i32) {
    %c0_i32 = arith.constant 0 : i32
    %c0_i32_0 = arith.constant 0 : i32
    %c0_i32_1 = arith.constant 0 : i32
    return %c0_i32, %c0_i32_0 : i32, i32
  }
  func.func @transform_14(%arg0: i32) -> (i32, i32) {
    %c0_i32 = arith.constant 0 : i32
    %c0_i32_0 = arith.constant 0 : i32
    %c0_i32_1 = arith.constant 0 : i32
    return %c0_i32, %c0_i32_0 : i32, i32
  }
}

</mosaic_0001>

<llo_original>
// kernel: enhanced_molecular_graph_forward.6
$region0: #{enhanced_molecular_graph_forward.6}
  #allocation0 [shape = 'u32[]', space=smem, size = 0x4, offset = 0x4, fixed_abs, tag = 'smem constant byte address 0x4 - core index']
  #allocation1 [shape = 'u32[144,128]{1,0:T(1,128)}', space=vmem, size = 0x12000, scoped, tag = 'internal scratch']
  %s0 = inlined_call_operand.hbm [shape: f32[16,16], index: 0, kind: input, shape index: {}]
  %s1 = inlined_call_operand.hbm [shape: bf16[16,32], index: 1, kind: input, shape index: {}]
  %s2 = inlined_call_operand.hbm [shape: f32[1,32], index: 2, kind: input, shape index: {}]
  %s3 = inlined_call_operand.hbm [shape: f32[1,32], index: 3, kind: input, shape index: {}]
  %s4 = inlined_call_operand.hbm [shape: f32[1,32], index: 4, kind: input, shape index: {}]
  %s5 = inlined_call_operand.hbm [shape: f32[1,32], index: 5, kind: input, shape index: {}]
  %s6 = inlined_call_operand.hbm [shape: f32[1,32], index: 6, kind: input, shape index: {}]
  %s7 = inlined_call_operand.hbm [shape: bf16[32,32], index: 7, kind: input, shape index: {}]
  %s8 = inlined_call_operand.hbm [shape: f32[1,32], index: 8, kind: input, shape index: {}]
  %s9 = inlined_call_operand.hbm [shape: f32[16,32], index: 9, kind: output, shape index: {}]
  %s10 = sld [smem:[#allocation0]]
  $region105: #{enhanced_molecular_graph_forward.6} parent=0
    _
  %s12 = ssub.s32 1, %s10
  %s13 = scalar_select 0, %s12, %s10
  $region1: #{enhanced_molecular_graph_forward.6} parent=0
    #allocation2 [shape = 'u8[8192]{0}', space=vmem, size = 0x2000, scoped, tag = 'input window, operand 0']
    #allocation3 [shape = 's32[2]{0}', space=sflag, size = 0x8, scoped, tag = 'scoped memory for enhanced_molecular_graph_forward.6']
    #allocation4 [shape = 's32[2]{0}', space=sflag, size = 0x8, scoped, tag = 'scoped memory for enhanced_molecular_graph_forward.6']
    #allocation5 [shape = 'u8[4096]{0}', space=vmem, size = 0x1000, scoped, tag = 'input window, operand 1, single buffered']
    #allocation6 [shape = 's32[1]{0}', space=sflag, size = 0x4, scoped, tag = 'scoped memory for enhanced_molecular_graph_forward.6']
    #allocation7 [shape = 'u8[512]{0}', space=vmem, size = 0x400, scoped, tag = 'input window, operand 2, single buffered']
    #allocation8 [shape = 'u8[512]{0}', space=vmem, size = 0x400, scoped, tag = 'input window, operand 3, single buffered']
    #allocation9 [shape = 's32[1]{0}', space=sflag, size = 0x4, scoped, tag = 'scoped memory for enhanced_molecular_graph_forward.6']
    #allocation10 [shape = 'u8[512]{0}', space=vmem, size = 0x400, scoped, tag = 'input window, operand 4, single buffered']
    #allocation11 [shape = 'u8[512]{0}', space=vmem, size = 0x400, scoped, tag = 'input window, operand 5, single buffered']
    #allocation12 [shape = 's32[1]{0}', space=sflag, size = 0x4, scoped, tag = 'scoped memory for enhanced_molecular_graph_forward.6']
    #allocation13 [shape = 'u8[512]{0}', space=vmem, size = 0x400, scoped, tag = 'input window, operand 6, single buffered']
    #allocation14 [shape = 'u8[8192]{0}', space=vmem, size = 0x2000, scoped, tag = 'input window, operand 7, single buffered']
    #allocation15 [shape = 's32[1]{0}', space=sflag, size = 0x4, scoped, tag = 'scoped memory for enhanced_molecular_graph_forward.6']
    #allocation16 [shape = 'u8[512]{0}', space=vmem, size = 0x400, scoped, tag = 'input window, operand 8, single buffered']
    #allocation17 [shape = 'u8[8192]{0}', space=vmem, size = 0x2000, scoped, tag = 'output window, operand 0']
    %14 = vsyncpa [#allocation3], 0
    %s15 = scalar_lea.sflag [#allocation3], 1
    %16 = vsyncpa %s15, 0
    %17 = vsyncpa [#allocation6], 0
    %18 = vsyncpa [#allocation9], 0
    %19 = vsyncpa [#allocation12], 0
    %20 = vsyncpa [#allocation15], 0
    %21 = vsyncpa [#allocation4], 0
    %s22 = scalar_lea.sflag [#allocation4], 1
    %23 = vsyncpa %s22, 0
    loop: start=0, step=1, limit=4
    $region2: #{enhanced_molecular_graph_forward.6} parent=1 // loop_pre_header
      _
    $region3: #{enhanced_molecular_graph_forward.6} parent=1 // loop_header
      %s25 = sphi 0, %s29
      %p26 = scmp.ge.s32.totalorder %s25, 4
      %s35 = sphi 0, %s37
      %s38 = sphi 0, %s35
      %s39 = sphi 0, %s38
      %s55 = sphi 0, %s39
      %s59 = sphi 0, %s59
      %s61 = sphi 0, %s59
      %s62 = sphi 0, %s61
      %s76 = sphi 0, %s62
      %s80 = sphi 0, %s80
      %s82 = sphi 0, %s80
      %s83 = sphi 0, %s82
      %s97 = sphi 0, %s83
      %s101 = sphi 0, %s101
      %s103 = sphi 0, %s101
      %s104 = sphi 0, %s103
      %s118 = sphi 0, %s104
      %s122 = sphi 0, %s122
      %s124 = sphi 0, %s122
      %s125 = sphi 0, %s124
      %s139 = sphi 0, %s125
      %s143 = sphi 0, %s143
      %s145 = sphi 0, %s143
      %s146 = sphi 0, %s145
      %s160 = sphi 0, %s146
      %s164 = sphi 0, %s164
      %s166 = sphi 0, %s164
      %s167 = sphi 0, %s166
      %s181 = sphi 0, %s167
      %s185 = sphi 0, %s185
      %s187 = sphi 0, %s185
      %s188 = sphi 0, %s187
      %s202 = sphi 0, %s188
      %s206 = sphi 0, %s206
      %s208 = sphi 0, %s206
      %s209 = sphi 0, %s208
      %s223 = sphi 0, %s209
      %s229 = sphi 0, %s231
      %s232 = sphi 0, %s229
      %s233 = sphi 0, %s232
      %s249 = sphi 0, %s233
    $region4: #{enhanced_molecular_graph_forward.6} parent=1 // loop_header_branch
      %28 = sbr.rel (%p26) target = $region8
    $region5: #{enhanced_molecular_graph_forward.6} parent=1 // loop_body
      %s30 = ssub.s32 %s25, 1
      %s31 = ssub.s32 %s25, 2
      %s32 = sadd.s32 %s25, 1
      %s33 = ssub.s32 %s25, %s32
      %p34 = scmp.eq.s32.totalorder %s33, 0
      %s36 = sadd.s32 %s35, 1
      %s37 = scalar_select %p34, %s35, %s36
      %p40 = pneg %p34
      %p41 = scmp.eq.s32.totalorder %s25, 1
      %p42 = por %p40, %p41
      %p43 = scmp.ne.s32.totalorder %s35, %s38
      %p44 = scmp.eq.s32.totalorder %s25, 0
      %p45 = por %p43, %p44
      %p46 = scmp.ne.s32.totalorder %s35, %s38
      %p47 = scmp.eq.s32.totalorder %s30, 1
      %p48 = por %p46, %p47
      %p49 = scmp.ne.s32.totalorder %s38, %s39
      %p50 = scmp.eq.s32.totalorder %s30, 0
      %p51 = por %p49, %p50
      %p52 = scmp.ne.s32.totalorder %s38, %s39
      %p53 = scmp.eq.s32.totalorder %s31, 1
      %p54 = por %p52, %p53
      %p56 = scmp.ne.s32.totalorder %s39, %s55
      %p57 = scmp.eq.s32.totalorder %s31, 0
      %p58 = por %p56, %p57
      %s60 = sadd.s32 %s59, 1
      %p63 = scmp.eq.s32.totalorder %s25, 1
      %p64 = scmp.ne.s32.totalorder %s59, %s61
      %p65 = scmp.eq.s32.totalorder %s25, 0
      %p66 = por %p64, %p65
      %p67 = scmp.ne.s32.totalorder %s59, %s61
      %p68 = scmp.eq.s32.totalorder %s30, 1
      %p69 = por %p67, %p68
      %p70 = scmp.ne.s32.totalorder %s61, %s62
      %p71 = scmp.eq.s32.totalorder %s30, 0
      %p72 = por %p70, %p71
      %p73 = scmp.ne.s32.totalorder %s61, %s62
      %p74 = scmp.eq.s32.totalorder %s31, 1
      %p75 = por %p73, %p74
      %p77 = scmp.ne.s32.totalorder %s62, %s76
      %p78 = scmp.eq.s32.totalorder %s31, 0
      %p79 = por %p77, %p78
      %s81 = sadd.s32 %s80, 1
      %p84 = scmp.eq.s32.totalorder %s25, 1
      %p85 = scmp.ne.s32.totalorder %s80, %s82
      %p86 = scmp.eq.s32.totalorder %s25, 0
      %p87 = por %p85, %p86
      %p88 = scmp.ne.s32.totalorder %s80, %s82
      %p89 = scmp.eq.s32.totalorder %s30, 1
      %p90 = por %p88, %p89
      %p91 = scmp.ne.s32.totalorder %s82, %s83
      %p92 = scmp.eq.s32.totalorder %s30, 0
      %p93 = por %p91, %p92
      %p94 = scmp.ne.s32.totalorder %s82, %s83
      %p95 = scmp.eq.s32.totalorder %s31, 1
      %p96 = por %p94, %p95
      %p98 = scmp.ne.s32.totalorder %s83, %s97
      %p99 = scmp.eq.s32.totalorder %s31, 0
      %p100 = por %p98, %p99
      %s102 = sadd.s32 %s101, 1
      %p105 = scmp.eq.s32.totalorder %s25, 1
      %p106 = scmp.ne.s32.totalorder %s101, %s103
      %p107 = scmp.eq.s32.totalorder %s25, 0
      %p108 = por %p106, %p107
      %p109 = scmp.ne.s32.totalorder %s101, %s103
      %p110 = scmp.eq.s32.totalorder %s30, 1
      %p111 = por %p109, %p110
      %p112 = scmp.ne.s32.totalorder %s103, %s104
      %p113 = scmp.eq.s32.totalorder %s30, 0
      %p114 = por %p112, %p113
      %p115 = scmp.ne.s32.totalorder %s103, %s104
      %p116 = scmp.eq.s32.totalorder %s31, 1
      %p117 = por %p115, %p116
      %p119 = scmp.ne.s32.totalorder %s104, %s118
      %p120 = scmp.eq.s32.totalorder %s31, 0
      %p121 = por %p119, %p120
      %s123 = sadd.s32 %s122, 1
      %p126 = scmp.eq.s32.totalorder %s25, 1
      %p127 = scmp.ne.s32.totalorder %s122, %s124
      %p128 = scmp.eq.s32.totalorder %s25, 0
      %p129 = por %p127, %p128
      %p130 = scmp.ne.s32.totalorder %s122, %s124
      %p131 = scmp.eq.s32.totalorder %s30, 1
      %p132 = por %p130, %p131
      %p133 = scmp.ne.s32.totalorder %s124, %s125
      %p134 = scmp.eq.s32.totalorder %s30, 0
      %p135 = por %p133, %p134
      %p136 = scmp.ne.s32.totalorder %s124, %s125
      %p137 = scmp.eq.s32.totalorder %s31, 1
      %p138 = por %p136, %p137
      %p140 = scmp.ne.s32.totalorder %s125, %s139
      %p141 = scmp.eq.s32.totalorder %s31, 0
      %p142 = por %p140, %p141
      %s144 = sadd.s32 %s143, 1
      %p147 = scmp.eq.s32.totalorder %s25, 1
      %p148 = scmp.ne.s32.totalorder %s143, %s145
      %p149 = scmp.eq.s32.totalorder %s25, 0
      %p150 = por %p148, %p149
      %p151 = scmp.ne.s32.totalorder %s143, %s145
      %p152 = scmp.eq.s32.totalorder %s30, 1
      %p153 = por %p151, %p152
      %p154 = scmp.ne.s32.totalorder %s145, %s146
      %p155 = scmp.eq.s32.totalorder %s30, 0
      %p156 = por %p154, %p155
      %p157 = scmp.ne.s32.totalorder %s145, %s146
      %p158 = scmp.eq.s32.totalorder %s31, 1
      %p159 = por %p157, %p158
      %p161 = scmp.ne.s32.totalorder %s146, %s160
      %p162 = scmp.eq.s32.totalorder %s31, 0
      %p163 = por %p161, %p162
      %s165 = sadd.s32 %s164, 1
      %p168 = scmp.eq.s32.totalorder %s25, 1
      %p169 = scmp.ne.s32.totalorder %s164, %s166
      %p170 = scmp.eq.s32.totalorder %s25, 0
      %p171 = por %p169, %p170
      %p172 = scmp.ne.s32.totalorder %s164, %s166
      %p173 = scmp.eq.s32.totalorder %s30, 1
      %p174 = por %p172, %p173
      %p175 = scmp.ne.s32.totalorder %s166, %s167
      %p176 = scmp.eq.s32.totalorder %s30, 0
      %p177 = por %p175, %p176
      %p178 = scmp.ne.s32.totalorder %s166, %s167
      %p179 = scmp.eq.s32.totalorder %s31, 1
      %p180 = por %p178, %p179
      %p182 = scmp.ne.s32.totalorder %s167, %s181
      %p183 = scmp.eq.s32.totalorder %s31, 0
      %p184 = por %p182, %p183
      %s186 = sadd.s32 %s185, 1
      %p189 = scmp.eq.s32.totalorder %s25, 1
      %p190 = scmp.ne.s32.totalorder %s185, %s187
      %p191 = scmp.eq.s32.totalorder %s25, 0
      %p192 = por %p190, %p191
      %p193 = scmp.ne.s32.totalorder %s185, %s187
      %p194 = scmp.eq.s32.totalorder %s30, 1
      %p195 = por %p193, %p194
      %p196 = scmp.ne.s32.totalorder %s187, %s188
      %p197 = scmp.eq.s32.totalorder %s30, 0
      %p198 = por %p196, %p197
      %p199 = scmp.ne.s32.totalorder %s187, %s188
      %p200 = scmp.eq.s32.totalorder %s31, 1
      %p201 = por %p199, %p200
      %p203 = scmp.ne.s32.totalorder %s188, %s202
      %p204 = scmp.eq.s32.totalorder %s31, 0
      %p205 = por %p203, %p204
      %s207 = sadd.s32 %s206, 1
      %p210 = scmp.eq.s32.totalorder %s25, 1
      %p211 = scmp.ne.s32.totalorder %s206, %s208
      %p212 = scmp.eq.s32.totalorder %s25, 0
      %p213 = por %p211, %p212
      %p214 = scmp.ne.s32.totalorder %s206, %s208
      %p215 = scmp.eq.s32.totalorder %s30, 1
      %p216 = por %p214, %p215
      %p217 = scmp.ne.s32.totalorder %s208, %s209
      %p218 = scmp.eq.s32.totalorder %s30, 0
      %p219 = por %p217, %p218
      %p220 = scmp.ne.s32.totalorder %s208, %s209
      %p221 = scmp.eq.s32.totalorder %s31, 1
      %p222 = por %p220, %p221
      %p224 = scmp.ne.s32.totalorder %s209, %s223
      %p225 = scmp.eq.s32.totalorder %s31, 0
      %p226 = por %p224, %p225
      %s227 = ssub.s32 %s25, %s32
      %p228 = scmp.eq.s32.totalorder %s227, 0
      %s230 = sadd.s32 %s229, 1
      %s231 = scalar_select %p228, %s229, %s230
      %p234 = pneg %p228
      %p235 = scmp.eq.s32.totalorder %s25, 1
      %p236 = por %p234, %p235
      %p237 = scmp.ne.s32.totalorder %s229, %s232
      %p238 = scmp.eq.s32.totalorder %s25, 0
      %p239 = por %p237, %p238
      %p240 = scmp.ne.s32.totalorder %s229, %s232
      %p241 = scmp.eq.s32.totalorder %s30, 1
      %p242 = por %p240, %p241
      %p243 = scmp.ne.s32.totalorder %s232, %s233
      %p244 = scmp.eq.s32.totalorder %s30, 0
      %p245 = por %p243, %p244
      %p246 = scmp.ne.s32.totalorder %s232, %s233
      %p247 = scmp.eq.s32.totalorder %s31, 1
      %p248 = por %p246, %p247
      %p250 = scmp.ne.s32.totalorder %s233, %s249
      %p251 = scmp.eq.s32.totalorder %s31, 0
      %p252 = por %p250, %p251
      %p253 = scmp.le.s32.totalorder 1, %s25
      %p254 = scmp.lt.s32.totalorder %s25, 3
      %p255 = pnand %p253, %p254
      %p256 = pneg %p255
      // Predicated region
      $region9: #{enhanced_molecular_graph_forward.6} parent=5 // pred_check
        _
      $region10: #{enhanced_molecular_graph_forward.6} parent=5 // pred_check_branch
        %258 = sbr.rel (%p255) target = $region12
      $region11: #{enhanced_molecular_graph_forward.6} parent=5 // pred_region
        %s259 = ssub.s32 %s25, 1
        // Predicated region
        $region13: #{enhanced_molecular_graph_forward.6} parent=11 // pred_check
          %p260 = pneg %p72
        $region14: #{enhanced_molecular_graph_forward.6} parent=11 // pred_check_branch
          %262 = sbr.rel (%p260) target = $region16
        $region15: #{enhanced_molecular_graph_forward.6} parent=11 // pred_region
          %s264 = ssub.s32 128, 128
          %265 = vsyncadd [#allocation6], %s264
          %s266 = sshll.u32 [#allocation5], 4
          %s267 = int_to_ptr.vmem [resolvable:$true] %s266
          %272 = dma.hbm_to_vmem [thread:$0]  %s1, 128, %s267, [#allocation6], 64, 64, 4
        $region16: #{enhanced_molecular_graph_forward.6} parent=11 // pred_fallthru
          _
        // Predicated region
        $region17: #{enhanced_molecular_graph_forward.6} parent=11 // pred_check
          %p273 = pneg %p93
        $region18: #{enhanced_molecular_graph_forward.6} parent=11 // pred_check_branch
          %275 = sbr.rel (%p273) target = $region20
        $region19: #{enhanced_molecular_graph_forward.6} parent=11 // pred_region
          %s277 = ssub.s32 16, 16
          %278 = vsyncadd [#allocation6], %s277
          %s280 = sshll.u32 [#allocation7], 4
          %s281 = int_to_ptr.vmem [resolvable:$true] %s280
          %283 = dma.hbm_to_vmem [thread:$0]  %s2, 16, %s281, [#allocation6]
        $region20: #{enhanced_molecular_graph_forward.6} parent=11 // pred_fallthru
          _
        // Predicated region
        $region21: #{enhanced_molecular_graph_forward.6} parent=11 // pred_check
          %p284 = pneg %p114
        $region22: #{enhanced_molecular_graph_forward.6} parent=11 // pred_check_branch
          %286 = sbr.rel (%p284) target = $region24
        $region23: #{enhanced_molecular_graph_forward.6} parent=11 // pred_region
          %s288 = ssub.s32 16, 16
          %289 = vsyncadd [#allocation9], %s288
          %s291 = sshll.u32 [#allocation8], 4
          %s292 = int_to_ptr.vmem [resolvable:$true] %s291
          %294 = dma.hbm_to_vmem [thread:$0]  %s3, 16, %s292, [#allocation9]
        $region24: #{enhanced_molecular_graph_forward.6} parent=11 // pred_fallthru
          _
        // Predicated region
        $region25: #{enhanced_molecular_graph_forward.6} parent=11 // pred_check
          %p295 = pneg %p135
        $region26: #{enhanced_molecular_graph_forward.6} parent=11 // pred_check_branch
          %297 = sbr.rel (%p295) target = $region28
        $region27: #{enhanced_molecular_graph_forward.6} parent=11 // pred_region
          %s299 = ssub.s32 16, 16
          %300 = vsyncadd [#allocation9], %s299
          %s302 = sshll.u32 [#allocation10], 4
          %s303 = int_to_ptr.vmem [resolvable:$true] %s302
          %305 = dma.hbm_to_vmem [thread:$0]  %s4, 16, %s303, [#allocation9]
        $region28: #{enhanced_molecular_graph_forward.6} parent=11 // pred_fallthru
          _
        // Predicated region
        $region29: #{enhanced_molecular_graph_forward.6} parent=11 // pred_check
          %p306 = pneg %p156
        $region30: #{enhanced_molecular_graph_forward.6} parent=11 // pred_check_branch
          %308 = sbr.rel (%p306) target = $region32
        $region31: #{enhanced_molecular_graph_forward.6} parent=11 // pred_region
          %s310 = ssub.s32 16, 16
          %311 = vsyncadd [#allocation12], %s310
          %s313 = sshll.u32 [#allocation11], 4
          %s314 = int_to_ptr.vmem [resolvable:$true] %s313
          %316 = dma.hbm_to_vmem [thread:$0]  %s5, 16, %s314, [#allocation12]
        $region32: #{enhanced_molecular_graph_forward.6} parent=11 // pred_fallthru
          _
        // Predicated region
        $region33: #{enhanced_molecular_graph_forward.6} parent=11 // pred_check
          %p317 = pneg %p177
        $region34: #{enhanced_molecular_graph_forward.6} parent=11 // pred_check_branch
          %319 = sbr.rel (%p317) target = $region36
        $region35: #{enhanced_molecular_graph_forward.6} parent=11 // pred_region
          %s321 = ssub.s32 16, 16
          %322 = vsyncadd [#allocation12], %s321
          %s324 = sshll.u32 [#allocation13], 4
          %s325 = int_to_ptr.vmem [resolvable:$true] %s324
          %327 = dma.hbm_to_vmem [thread:$0]  %s6, 16, %s325, [#allocation12]
        $region36: #{enhanced_molecular_graph_forward.6} parent=11 // pred_fallthru
          _
        // Predicated region
        $region37: #{enhanced_molecular_graph_forward.6} parent=11 // pred_check
          %p328 = pneg %p198
        $region38: #{enhanced_molecular_graph_forward.6} parent=11 // pred_check_branch
          %330 = sbr.rel (%p328) target = $region40
        $region39: #{enhanced_molecular_graph_forward.6} parent=11 // pred_region
          %s332 = ssub.s32 256, 256
          %333 = vsyncadd [#allocation15], %s332
          %s334 = sshll.u32 [#allocation14], 4
          %s335 = int_to_ptr.vmem [resolvable:$true] %s334
          %340 = dma.hbm_to_vmem [thread:$0]  %s7, 256, %s335, [#allocation15], 64, 64, 4
        $region40: #{enhanced_molecular_graph_forward.6} parent=11 // pred_fallthru
          _
        // Predicated region
        $region41: #{enhanced_molecular_graph_forward.6} parent=11 // pred_check
          %p341 = pneg %p219
        $region42: #{enhanced_molecular_graph_forward.6} parent=11 // pred_check_branch
          %343 = sbr.rel (%p341) target = $region44
        $region43: #{enhanced_molecular_graph_forward.6} parent=11 // pred_region
          %s345 = ssub.s32 16, 16
          %346 = vsyncadd [#allocation15], %s345
          %s348 = sshll.u32 [#allocation16], 4
          %s349 = int_to_ptr.vmem [resolvable:$true] %s348
          %351 = dma.hbm_to_vmem [thread:$0]  %s8, 16, %s349, [#allocation15]
        $region44: #{enhanced_molecular_graph_forward.6} parent=11 // pred_fallthru
          _
      $region12: #{enhanced_molecular_graph_forward.6} parent=5 // pred_fallthru
        _
      %p352 = scmp.lt.s32.totalorder %s25, 2
      // Predicated region
      $region45: #{enhanced_molecular_graph_forward.6} parent=5 // pred_check
        %p353 = pneg %p352
      $region46: #{enhanced_molecular_graph_forward.6} parent=5 // pred_check_branch
        %355 = sbr.rel (%p353) target = $region48
      $region47: #{enhanced_molecular_graph_forward.6} parent=5 // pred_region
        // Predicated region
        $region49: #{enhanced_molecular_graph_forward.6} parent=47 // pred_check
          %p356 = pneg %p45
        $region50: #{enhanced_molecular_graph_forward.6} parent=47 // pred_check_branch
          %358 = sbr.rel (%p356) target = $region52
        $region51: #{enhanced_molecular_graph_forward.6} parent=47 // pred_region
          %s359 = sand.u32 %s35, 1
          %s360 = scalar_lea.sflag [#allocation3], %s359
          %s361 = sand.u32 %s35, 1
          %s362 = smul.addr %s361, 8
          %s363 = scalar_lea.vmem [#allocation2], %s362
          %s365 = ssub.s32 128, 128
          %366 = vsyncadd %s360, %s365
          %s367 = smul.addr %s25, 128
          %s368 = scalar_lea.hbm %s0, %s367
          %s370 = sshll.u32 %s363, 4
          %s371 = int_to_ptr.vmem [resolvable:$true] %s370
          %373 = dma.hbm_to_vmem [thread:$0]  %s368, 128, %s371, %s360
        $region52: #{enhanced_molecular_graph_forward.6} parent=47 // pred_fallthru
          _
      $region48: #{enhanced_molecular_graph_forward.6} parent=5 // pred_fallthru
        _
      %p374 = scmp.le.s32.totalorder 1, %s25
      %p375 = scmp.lt.s32.totalorder %s25, 3
      %p376 = pnand %p374, %p375
      %p377 = pneg %p376
      // Predicated region
      $region53: #{enhanced_molecular_graph_forward.6} parent=5 // pred_check
        _
      $region54: #{enhanced_molecular_graph_forward.6} parent=5 // pred_check_branch
        %379 = sbr.rel (%p376) target = $region56
      $region55: #{enhanced_molecular_graph_forward.6} parent=5 // pred_region
        %s380 = ssub.s32 %s25, 1
        %s381 = sand.u32 %s38, 1
        %s382 = scalar_lea.sflag [#allocation3], %s381
        %s383 = sand.u32 %s38, 1
        %s384 = smul.addr %s383, 8
        %s385 = scalar_lea.vmem [#allocation2], %s384
        // Predicated region
        $region57: #{enhanced_molecular_graph_forward.6} parent=55 // pred_check
          %p386 = pneg %p51
        $region58: #{enhanced_molecular_graph_forward.6} parent=55 // pred_check_branch
          %388 = sbr.rel (%p386) target = $region60
        $region59: #{enhanced_molecular_graph_forward.6} parent=55 // pred_region
          %389 = dma.done %s382, 128
        $region60: #{enhanced_molecular_graph_forward.6} parent=55 // pred_fallthru
          _
        // Predicated region
        $region61: #{enhanced_molecular_graph_forward.6} parent=55 // pred_check
          %p390 = pneg %p72
        $region62: #{enhanced_molecular_graph_forward.6} parent=55 // pred_check_branch
          %392 = sbr.rel (%p390) target = $region64
        $region63: #{enhanced_molecular_graph_forward.6} parent=55 // pred_region
          %393 = dma.done [#allocation6], 128
        $region64: #{enhanced_molecular_graph_forward.6} parent=55 // pred_fallthru
          _
        // Predicated region
        $region65: #{enhanced_molecular_graph_forward.6} parent=55 // pred_check
          %p394 = pneg %p93
        $region66: #{enhanced_molecular_graph_forward.6} parent=55 // pred_check_branch
          %396 = sbr.rel (%p394) target = $region68
        $region67: #{enhanced_molecular_graph_forward.6} parent=55 // pred_region
          %397 = dma.done [#allocation6], 16
        $region68: #{enhanced_molecular_graph_forward.6} parent=55 // pred_fallthru
          _
        // Predicated region
        $region69: #{enhanced_molecular_graph_forward.6} parent=55 // pred_check
          %p398 = pneg %p114
        $region70: #{enhanced_molecular_graph_forward.6} parent=55 // pred_check_branch
          %400 = sbr.rel (%p398) target = $region72
        $region71: #{enhanced_molecular_graph_forward.6} parent=55 // pred_region
          %401 = dma.done [#allocation9], 16
        $region72: #{enhanced_molecular_graph_forward.6} parent=55 // pred_fallthru
          _
        // Predicated region
        $region73: #{enhanced_molecular_graph_forward.6} parent=55 // pred_check
          %p402 = pneg %p135
        $region74: #{enhanced_molecular_graph_forward.6} parent=55 // pred_check_branch
          %404 = sbr.rel (%p402) target = $region76
        $region75: #{enhanced_molecular_graph_forward.6} parent=55 // pred_region
          %405 = dma.done [#allocation9], 16
        $region76: #{enhanced_molecular_graph_forward.6} parent=55 // pred_fallthru
          _
        // Predicated region
        $region77: #{enhanced_molecular_graph_forward.6} parent=55 // pred_check
          %p406 = pneg %p156
        $region78: #{enhanced_molecular_graph_forward.6} parent=55 // pred_check_branch
          %408 = sbr.rel (%p406) target = $region80
        $region79: #{enhanced_molecular_graph_forward.6} parent=55 // pred_region
          %409 = dma.done [#allocation12], 16
        $region80: #{enhanced_molecular_graph_forward.6} parent=55 // pred_fallthru
          _
        // Predicated region
        $region81: #{enhanced_molecular_graph_forward.6} parent=55 // pred_check
          %p410 = pneg %p177
        $region82: #{enhanced_molecular_graph_forward.6} parent=55 // pred_check_branch
          %412 = sbr.rel (%p410) target = $region84
        $region83: #{enhanced_molecular_graph_forward.6} parent=55 // pred_region
          %413 = dma.done [#allocation12], 16
        $region84: #{enhanced_molecular_graph_forward.6} parent=55 // pred_fallthru
          _
        // Predicated region
        $region85: #{enhanced_molecular_graph_forward.6} parent=55 // pred_check
          %p414 = pneg %p198
        $region86: #{enhanced_molecular_graph_forward.6} parent=55 // pred_check_branch
          %416 = sbr.rel (%p414) target = $region88
        $region87: #{enhanced_molecular_graph_forward.6} parent=55 // pred_region
          %417 = dma.done [#allocation15], 256
        $region88: #{enhanced_molecular_graph_forward.6} parent=55 // pred_fallthru
          _
        // Predicated region
        $region89: #{enhanced_molecular_graph_forward.6} parent=55 // pred_check
          %p418 = pneg %p219
        $region90: #{enhanced_molecular_graph_forward.6} parent=55 // pred_check_branch
          %420 = sbr.rel (%p418) target = $region92
        $region91: #{enhanced_molecular_graph_forward.6} parent=55 // pred_region
          %421 = dma.done [#allocation15], 16
        $region92: #{enhanced_molecular_graph_forward.6} parent=55 // pred_fallthru
          _
        %s422 = sand.u32 %s38, 1
        %s423 = scalar_lea.sflag [#allocation3], %s422
        %s424 = sand.u32 %s38, 1
        %s425 = smul.addr %s424, 8
        %s426 = scalar_lea.vmem [#allocation2], %s425
        %p427 = pneg %p51
        %p428 = pneg %p48
        %p429 = pneg %p72
        %p430 = pneg %p69
        %p431 = pneg %p93
        %p432 = pneg %p90
        %p433 = pneg %p114
        %p434 = pneg %p111
        %p435 = pneg %p135
        %p436 = pneg %p132
        %p437 = pneg %p156
        %p438 = pneg %p153
        %p439 = pneg %p177
        %p440 = pneg %p174
        %p441 = pneg %p198
        %p442 = pneg %p195
        %p443 = pneg %p219
        %p444 = pneg %p216
        %p445 = pneg %p245
        %p446 = pneg %p242
        %s447 = sand.u32 %s232, 1
        %s448 = scalar_lea.sflag [#allocation4], %s447
        %s449 = sand.u32 %s232, 1
        %s450 = smul.addr %s449, 8
        %s451 = scalar_lea.vmem [#allocation17], %s450
        %v453 = vld [vmem:[%s385] sm:$0xff]
        %v454 = vpack.c.bf16 %v453, %v453
        %v455 = vld [vmem:[#allocation5] sm:$0xf]
        %v456 = vld [vmem:[#allocation5 + $0x4] sm:$0xf]
        %v457 = vld [vmem:[#allocation7] sm:$0x1]
        %v459 = vlaneseq
        %v460 = vshrl.u32 %v459, 7
        %v461 = vsub.s32 0, %v460
        %v462 = vrot.slane %v457, %v461
        %v466 = vunpack.c.l.b16 %v455
        %v467 = vunpack.c.l.b16 %v456
        %v468 = vpack.c.b16 %v467, %v466
        %vm470 = vcmask 130048
        %v472 = vsel %vm470, %v454, 0
        %474 = vmatprep.subr.bf16.mxu0 0
        %475 = vmatpush1.bf16.msra.mxu0 %v468
        %476 = vmatprep.subr.bf16.mxu0 0
        %477 = vmatpush1.bf16.msra.mxu0 0
        %478 = vmatprep.subr.bf16.mxu0 0
        %479 = vmatpush1.bf16.msra.mxu0 0
        %480 = vmatprep.subr.bf16.mxu0 0
        %481 = vmatpush1.bf16.msra.mxu0 0
        %482 = vmatprep.subr.bf16.mxu0 0
        %483 = vmatpush1.bf16.msra.mxu0 0
        %484 = vmatprep.subr.bf16.mxu0 0
        %485 = vmatpush1.bf16.msra.mxu0 0
        %486 = vmatprep.subr.bf16.mxu0 0
        %487 = vmatpush1.bf16.msra.mxu0 0
        %488 = vmatprep.subr.bf16.mxu0 0
        %489 = vmatpush1.bf16.msra.mxu0 0
        %490 = vmatprep.subr.bf16.mxu0 0
        %491 = vmatpush1.bf16.msra.mxu0 0
        %492 = vmatprep.subr.bf16.mxu0 0
        %493 = vmatpush1.bf16.msra.mxu0 0
        %494 = vmatprep.subr.bf16.mxu0 0
        %495 = vmatpush1.bf16.msra.mxu0 0
        %496 = vmatprep.subr.bf16.mxu0 0
        %497 = vmatpush1.bf16.msra.mxu0 0
        %498 = vmatprep.subr.bf16.mxu0 0
        %499 = vmatpush1.bf16.msra.mxu0 0
        %500 = vmatprep.subr.bf16.mxu0 0
        %501 = vmatpush1.bf16.msra.mxu0 0
        %502 = vmatprep.subr.bf16.mxu0 0
        %503 = vmatpush1.bf16.msra.mxu0 0
        %504 = vmatprep.subr.bf16.mxu0 0
        %505 = vmatpush1.bf16.msra.mxu0 0
        %506 = vmatprep.mubr.bf16.mxu0 0
        %507 = vmatmul.mubr.bf16.gmra.mrb[0].mxu0 %v472
        %v508 = vpop.f32.mrb[0].mxu0
        %v509 = vadd.f32 %v462, %v508
        %v510 = vpop.f32.mrb[0].mxu0
        %v511 = vpop.f32.mrb[0].mxu0
        %v512 = vpop.f32.mrb[0].mxu0
        %513 = vdwg.mxu0
        %v514 = vld [vmem:[#allocation8] sm:$0x1]
        %v515 = vld [vmem:[#allocation10] sm:$0x1]
        %v516 = vld [vmem:[#allocation11] sm:$0x1]
        %v517 = vld [vmem:[#allocation13] sm:$0x1]
        %v519 = vlaneseq
        %v520 = vshrl.u32 %v519, 7
        %v521 = vsub.s32 0, %v520
        %v522 = vrot.slane %v516, %v521
        %v524 = vsub.f32 %v509, %v522
        %v526 = vlaneseq
        %v527 = vshrl.u32 %v526, 7
        %v528 = vsub.s32 0, %v527
        %v529 = vrot.slane %v514, %v528
        %v531 = vmul.f32 %v524, %v529
        %v532 = vadd.f32 %v517, 1e-05
        %v533 = vrsqrt.pop %v532
        %v535 = vlaneseq
        %v536 = vshrl.u32 %v535, 7
        %v537 = vsub.s32 0, %v536
        %v538 = vrot.slane %v533, %v537
        %v540 = vmul.f32 %v531, %v538
        %v542 = vlaneseq
        %v543 = vshrl.u32 %v542, 7
        %v544 = vsub.s32 0, %v543
        %v545 = vrot.slane %v515, %v544
        %v547 = vadd.f32 %v540, %v545
        %v548 = vmax.f32 %v547, 0.0
        %v549 = vpack.c.bf16 %v548, %v548
        %v550 = vld [vmem:[#allocation14] sm:$0xf]
        %v551 = vld [vmem:[#allocation14 + $0x4] sm:$0xf]
        %v552 = vld [vmem:[#allocation14 + $0x8] sm:$0xf]
        %v553 = vld [vmem:[#allocation14 + $0xc] sm:$0xf]
        %v554 = vld [vmem:[#allocation16] sm:$0x1]
        %v556 = vlaneseq
        %v557 = vshrl.u32 %v556, 7
        %v558 = vsub.s32 0, %v557
        %v559 = vrot.slane %v554, %v558
        %v565 = vunpack.c.l.b16 %v550
        %v566 = vunpack.c.l.b16 %v551
        %v567 = vunpack.c.l.b16 %v552
        %v568 = vunpack.c.l.b16 %v553
        %v569 = vpack.c.b16 %v566, %v565
        %v570 = vpack.c.b16 %v568, %v567
        %vm573 = vcmask 261120
        %v575 = vsel %vm573, %v549, 0
        %577 = vmatprep.subr.bf16.mxu0 0
        %578 = vmatpush1.bf16.msra.mxu0 %v569
        %579 = vmatprep.subr.bf16.mxu0 0
        %580 = vmatpush1.bf16.msra.mxu0 %v570
        %581 = vmatprep.subr.bf16.mxu0 0
        %582 = vmatpush1.bf16.msra.mxu0 0
        %583 = vmatprep.subr.bf16.mxu0 0
        %584 = vmatpush1.bf16.msra.mxu0 0
        %585 = vmatprep.subr.bf16.mxu0 0
        %586 = vmatpush1.bf16.msra.mxu0 0
        %587 = vmatprep.subr.bf16.mxu0 0
        %588 = vmatpush1.bf16.msra.mxu0 0
        %589 = vmatprep.subr.bf16.mxu0 0
        %590 = vmatpush1.bf16.msra.mxu0 0
        %591 = vmatprep.subr.bf16.mxu0 0
        %592 = vmatpush1.bf16.msra.mxu0 0
        %593 = vmatprep.subr.bf16.mxu0 0
        %594 = vmatpush1.bf16.msra.mxu0 0
        %595 = vmatprep.subr.bf16.mxu0 0
        %596 = vmatpush1.bf16.msra.mxu0 0
        %597 = vmatprep.subr.bf16.mxu0 0
        %598 = vmatpush1.bf16.msra.mxu0 0
        %599 = vmatprep.subr.bf16.mxu0 0
        %600 = vmatpush1.bf16.msra.mxu0 0
        %601 = vmatprep.subr.bf16.mxu0 0
        %602 = vmatpush1.bf16.msra.mxu0 0
        %603 = vmatprep.subr.bf16.mxu0 0
        %604 = vmatpush1.bf16.msra.mxu0 0
        %605 = vmatprep.subr.bf16.mxu0 0
        %606 = vmatpush1.bf16.msra.mxu0 0
        %607 = vmatprep.subr.bf16.mxu0 0
        %608 = vmatpush1.bf16.msra.mxu0 0
        %609 = vmatprep.mubr.bf16.mxu0 0
        %610 = vmatmul.mubr.bf16.gmra.mrb[0].mxu0 %v575
        %v611 = vpop.f32.mrb[0].mxu0
        %v612 = vadd.f32 %v559, %v611
        %v613 = vpop.f32.mrb[0].mxu0
        %v614 = vpop.f32.mrb[0].mxu0
        %v615 = vpop.f32.mrb[0].mxu0
        %616 = vdwg.mxu0
        %617 = vst.msk [vmem:[%s451] sm:$0xff] %vm573, %v612
        %s618 = sand.u32 %s232, 1
        %s619 = scalar_lea.sflag [#allocation4], %s618
        %s620 = sand.u32 %s232, 1
        %s621 = smul.addr %s620, 8
        %s622 = scalar_lea.vmem [#allocation17], %s621
        // Predicated region
        $region93: #{enhanced_molecular_graph_forward.6} parent=55 // pred_check
          %p623 = pneg %p242
        $region94: #{enhanced_molecular_graph_forward.6} parent=55 // pred_check_branch
          %625 = sbr.rel (%p623) target = $region96
        $region95: #{enhanced_molecular_graph_forward.6} parent=55 // pred_region
          %s627 = ssub.s32 128, 128
          %628 = vsyncadd %s619, %s627
          %s629 = smul.addr %s30, 128
          %s630 = scalar_lea.hbm %s9, %s629
          %s632 = sshll.u32 %s622, 4
          %s633 = int_to_ptr.vmem [resolvable:$true] %s632
          %635 = dma.vmem_to_hbm [thread:$0]  %s633, 128, %s630, %s619
        $region96: #{enhanced_molecular_graph_forward.6} parent=55 // pred_fallthru
          _
      $region56: #{enhanced_molecular_graph_forward.6} parent=5 // pred_fallthru
        _
      %p636 = scmp.le.s32.totalorder 2, %s25
      // Predicated region
      $region97: #{enhanced_molecular_graph_forward.6} parent=5 // pred_check
        %p637 = pneg %p636
      $region98: #{enhanced_molecular_graph_forward.6} parent=5 // pred_check_branch
        %639 = sbr.rel (%p637) target = $region100
      $region99: #{enhanced_molecular_graph_forward.6} parent=5 // pred_region
        %s640 = ssub.s32 %s25, 2
        // Predicated region
        $region101: #{enhanced_molecular_graph_forward.6} parent=99 // pred_check
          %p641 = pneg %p248
        $region102: #{enhanced_molecular_graph_forward.6} parent=99 // pred_check_branch
          %643 = sbr.rel (%p641) target = $region104
        $region103: #{enhanced_molecular_graph_forward.6} parent=99 // pred_region
          %s644 = sand.u32 %s233, 1
          %s645 = scalar_lea.sflag [#allocation4], %s644
          %s646 = sand.u32 %s233, 1
          %s647 = smul.addr %s646, 8
          %s648 = scalar_lea.vmem [#allocation17], %s647
          %649 = dma.done %s645, 128
        $region104: #{enhanced_molecular_graph_forward.6} parent=99 // pred_fallthru
          _
      $region100: #{enhanced_molecular_graph_forward.6} parent=5 // pred_fallthru
        _
    $region6: #{enhanced_molecular_graph_forward.6} parent=1 // loop_footer
      %s29 = sadd.s32 1, %s25
    $region7: #{enhanced_molecular_graph_forward.6} parent=1 // loop_footer_branch
      %24 = sbr.rel target = $region3
    $region8: #{enhanced_molecular_graph_forward.6} parent=1 // loop_exit
      _
    %650 = vsyncpa [#allocation3], 1
    %s651 = scalar_lea.sflag [#allocation3], 1
    %652 = vsyncpa %s651, 1
    %653 = vsyncpa [#allocation6], 1
    %654 = vsyncpa [#allocation9], 1
    %655 = vsyncpa [#allocation12], 1
    %656 = vsyncpa [#allocation15], 1
    %657 = vsyncpa [#allocation4], 1
    %s658 = scalar_lea.sflag [#allocation4], 1
    %659 = vsyncpa %s658, 1

// kernel: enhanced_molecular_graph_forward.7
$region0: #{enhanced_molecular_graph_forward.7}
  #allocation0 [shape = 'u32[]', space=smem, size = 0x4, offset = 0x4, fixed_abs, tag = 'smem constant byte address 0x4 - core index']
  #allocation1 [shape = 'u32[144,128]{1,0:T(1,128)}', space=vmem, size = 0x12000, scoped, tag = 'internal scratch']
  #allocation2 [shape = 'f32[16,32]{1,0:T(8,128)}', space=vmem, size = 0x2000, scoped, tag = 'scratch operand']
  %s0 = inlined_call_operand.hbm [shape: f32[24,8], index: 0, kind: input, shape index: {}]
  %s1 = inlined_call_operand.hbm [shape: s32[24,1], index: 1, kind: input, shape index: {}]
  %s2 = inlined_call_operand.hbm [shape: s32[3,1,8], index: 2, kind: input, shape index: {}]
  %s3 = inlined_call_operand.hbm [shape: f32[16,32], index: 3, kind: input, shape index: {}]
  %s4 = inlined_call_operand.hbm [shape: bf16[8,32], index: 4, kind: input, shape index: {}]
  %s5 = inlined_call_operand.hbm [shape: f32[1,32], index: 5, kind: input, shape index: {}]
  %s6 = inlined_call_operand.hbm [shape: f32[1,32], index: 6, kind: input, shape index: {}]
  %s7 = inlined_call_operand.hbm [shape: f32[1,32], index: 7, kind: input, shape index: {}]
  %s8 = inlined_call_operand.hbm [shape: f32[1,32], index: 8, kind: input, shape index: {}]
  %s9 = inlined_call_operand.hbm [shape: f32[1,32], index: 9, kind: input, shape index: {}]
  %s10 = inlined_call_operand.hbm [shape: bf16[32,32,32], index: 10, kind: input, shape index: {}]
  %s11 = inlined_call_operand.hbm [shape: bf16[32,32], index: 11, kind: input, shape index: {}]
  %s12 = inlined_call_operand.hbm [shape: bf16[32,32], index: 12, kind: input, shape index: {}]
  %s13 = inlined_call_operand.hbm [shape: f32[1,32], index: 13, kind: input, shape index: {}]
  %s14 = inlined_call_operand.hbm [shape: f32[1,32], index: 14, kind: input, shape index: {}]
  %s15 = inlined_call_operand.hbm [shape: f32[1,32], index: 15, kind: input, shape index: {}]
  %s16 = inlined_call_operand.hbm [shape: f32[1,32], index: 16, kind: input, shape index: {}]
  %s17 = inlined_call_operand.hbm [shape: f32[1,32], index: 17, kind: input, shape index: {}]
  %s18 = inlined_call_operand.hbm [shape: f32[16,1], index: 18, kind: input, shape index: {}]
  %s19 = inlined_call_operand.hbm [shape: bf16[32,32], index: 19, kind: input, shape index: {}]
  %s20 = inlined_call_operand.hbm [shape: bf16[32,8], index: 20, kind: input, shape index: {}]
  %s21 = inlined_call_operand.hbm [shape: bf16[32,8], index: 21, kind: input, shape index: {}]
  %s22 = inlined_call_operand.hbm [shape: f32[16,48], index: 22, kind: output, shape index: {0}]
  %s23 = inlined_call_operand.hbm [shape: f32[16,8], index: 23, kind: output, shape index: {1}]
  %24 = xla_tuple %s22, %s23
  %s25 = sld [smem:[#allocation0]]
  $region225: #{enhanced_molecular_graph_forward.7} parent=0
    _
  %s27 = ssub.s32 1, %s25
  %s28 = scalar_select 0, %s27, %s25
  $region1: #{enhanced_molecular_graph_forward.7} parent=0
    #allocation3 [shape = 'u8[8192]{0}', space=vmem, size = 0x2000, scoped, tag = 'input window, operand 0']
    #allocation4 [shape = 's32[2]{0}', space=sflag, size = 0x8, scoped, tag = 'scoped memory for enhanced_molecular_graph_forward.7']
    #allocation5 [shape = 's32[2]{0}', space=sflag, size = 0x8, scoped, tag = 'scoped memory for enhanced_molecular_graph_forward.7']
    #allocation6 [shape = 'u8[8192]{0}', space=vmem, size = 0x2000, scoped, tag = 'input window, operand 1']
    #allocation7 [shape = 's32[2]{0}', space=sflag, size = 0x8, scoped, tag = 'scoped memory for enhanced_molecular_graph_forward.7']
    #allocation8 [shape = 'u8[1024]{0}', space=vmem, size = 0x400, scoped, tag = 'input window, operand 2']
    #allocation9 [shape = 'u8[8192]{0}', space=vmem, size = 0x2000, scoped, tag = 'input window, operand 3, single buffered']
    #allocation10 [shape = 's32[1]{0}', space=sflag, size = 0x4, scoped, tag = 'scoped memory for enhanced_molecular_graph_forward.7']
    #allocation11 [shape = 'u8[2048]{0}', space=vmem, size = 0x800, scoped, tag = 'input window, operand 4, single buffered']
    #allocation12 [shape = 'u8[512]{0}', space=vmem, size = 0x400, scoped, tag = 'input window, operand 5, single buffered']
    #allocation13 [shape = 's32[1]{0}', space=sflag, size = 0x4, scoped, tag = 'scoped memory for enhanced_molecular_graph_forward.7']
    #allocation14 [shape = 'u8[512]{0}', space=vmem, size = 0x400, scoped, tag = 'input window, operand 6, single buffered']
    #allocation15 [shape = 'u8[512]{0}', space=vmem, size = 0x400, scoped, tag = 'input window, operand 7, single buffered']
    #allocation16 [shape = 's32[1]{0}', space=sflag, size = 0x4, scoped, tag = 'scoped memory for enhanced_molecular_graph_forward.7']
    #allocation17 [shape = 'u8[512]{0}', space=vmem, size = 0x400, scoped, tag = 'input window, operand 8, single buffered']
    #allocation18 [shape = 'u8[512]{0}', space=vmem, size = 0x400, scoped, tag = 'input window, operand 9, single buffered']
    #allocation19 [shape = 's32[1]{0}', space=sflag, size = 0x4, scoped, tag = 'scoped memory for enhanced_molecular_graph_forward.7']
    #allocation20 [shape = 'u8[262144]{0}', space=vmem, size = 0x40000, scoped, tag = 'input window, operand 10, single buffered']
    #allocation21 [shape = 'u8[8192]{0}', space=vmem, size = 0x2000, scoped, tag = 'input window, operand 11, single buffered']
    #allocation22 [shape = 's32[1]{0}', space=sflag, size = 0x4, scoped, tag = 'scoped memory for enhanced_molecular_graph_forward.7']
    #allocation23 [shape = 'u8[8192]{0}', space=vmem, size = 0x2000, scoped, tag = 'input window, operand 12, single buffered']
    #allocation24 [shape = 'u8[512]{0}', space=vmem, size = 0x400, scoped, tag = 'input window, operand 13, single buffered']
    #allocation25 [shape = 's32[1]{0}', space=sflag, size = 0x4, scoped, tag = 'scoped memory for enhanced_molecular_graph_forward.7']
    #allocation26 [shape = 'u8[512]{0}', space=vmem, size = 0x400, scoped, tag = 'input window, operand 14, single buffered']
    #allocation27 [shape = 'u8[512]{0}', space=vmem, size = 0x400, scoped, tag = 'input window, operand 15, single buffered']
    #allocation28 [shape = 's32[1]{0}', space=sflag, size = 0x4, scoped, tag = 'scoped memory for enhanced_molecular_graph_forward.7']
    #allocation29 [shape = 'u8[512]{0}', space=vmem, size = 0x400, scoped, tag = 'input window, operand 16, single buffered']
    #allocation30 [shape = 'u8[512]{0}', space=vmem, size = 0x400, scoped, tag = 'input window, operand 17, single buffered']
    #allocation31 [shape = 's32[1]{0}', space=sflag, size = 0x4, scoped, tag = 'scoped memory for enhanced_molecular_graph_forward.7']
    #allocation32 [shape = 'u8[8192]{0}', space=vmem, size = 0x2000, scoped, tag = 'input window, operand 18, single buffered']
    #allocation33 [shape = 'u8[8192]{0}', space=vmem, size = 0x2000, scoped, tag = 'input window, operand 19, single buffered']
    #allocation34 [shape = 's32[1]{0}', space=sflag, size = 0x4, scoped, tag = 'scoped memory for enhanced_molecular_graph_forward.7']
    #allocation35 [shape = 'u8[8192]{0}', space=vmem, size = 0x2000, scoped, tag = 'input window, operand 20, single buffered']
    #allocation36 [shape = 'u8[8192]{0}', space=vmem, size = 0x2000, scoped, tag = 'input window, operand 21, single buffered']
    #allocation37 [shape = 's32[1]{0}', space=sflag, size = 0x4, scoped, tag = 'scoped memory for enhanced_molecular_graph_forward.7']
    #allocation38 [shape = 'u8[8192]{0}', space=vmem, size = 0x2000, scoped, tag = 'output window, operand 0, single buffered']
    #allocation39 [shape = 'u8[8192]{0}', space=vmem, size = 0x2000, scoped, tag = 'output window, operand 1, single buffered']
    #allocation40 [shape = 's32[1]{0}', space=sflag, size = 0x4, scoped, tag = 'scoped memory for enhanced_molecular_graph_forward.7']
    %29 = vsyncpa [#allocation4], 0
    %s30 = scalar_lea.sflag [#allocation4], 1
    %31 = vsyncpa %s30, 0
    %32 = vsyncpa [#allocation7], 0
    %s33 = scalar_lea.sflag [#allocation7], 1
    %34 = vsyncpa %s33, 0
    %35 = vsyncpa [#allocation10], 0
    %36 = vsyncpa [#allocation13], 0
    %37 = vsyncpa [#allocation16], 0
    %38 = vsyncpa [#allocation19], 0
    %39 = vsyncpa [#allocation22], 0
    %40 = vsyncpa [#allocation25], 0
    %41 = vsyncpa [#allocation28], 0
    %42 = vsyncpa [#allocation31], 0
    %43 = vsyncpa [#allocation34], 0
    %44 = vsyncpa [#allocation37], 0
    %45 = vsyncpa [#allocation5], 0
    %46 = vsyncpa [#allocation40], 0
    loop: start=0, step=1, limit=5
    $region2: #{enhanced_molecular_graph_forward.7} parent=1 // loop_pre_header
      _
    $region3: #{enhanced_molecular_graph_forward.7} parent=1 // loop_header
      %s48 = sphi 0, %s52
      %p49 = scmp.ge.s32.totalorder %s48, 5
      %s58 = sphi 0, %s60
      %s61 = sphi 0, %s58
      %s62 = sphi 0, %s61
      %s78 = sphi 0, %s62
      %s84 = sphi 0, %s86
      %s87 = sphi 0, %s84
      %s88 = sphi 0, %s87
      %s104 = sphi 0, %s88
      %s110 = sphi 0, %s112
      %s113 = sphi 0, %s110
      %s114 = sphi 0, %s113
      %s130 = sphi 0, %s114
      %s134 = sphi 0, %s134
      %s136 = sphi 0, %s134
      %s137 = sphi 0, %s136
      %s151 = sphi 0, %s137
      %s155 = sphi 0, %s155
      %s157 = sphi 0, %s155
      %s158 = sphi 0, %s157
      %s172 = sphi 0, %s158
      %s176 = sphi 0, %s176
      %s178 = sphi 0, %s176
      %s179 = sphi 0, %s178
      %s193 = sphi 0, %s179
      %s197 = sphi 0, %s197
      %s199 = sphi 0, %s197
      %s200 = sphi 0, %s199
      %s214 = sphi 0, %s200
      %s218 = sphi 0, %s218
      %s220 = sphi 0, %s218
      %s221 = sphi 0, %s220
      %s235 = sphi 0, %s221
      %s239 = sphi 0, %s239
      %s241 = sphi 0, %s239
      %s242 = sphi 0, %s241
      %s256 = sphi 0, %s242
      %s260 = sphi 0, %s260
      %s262 = sphi 0, %s260
      %s263 = sphi 0, %s262
      %s277 = sphi 0, %s263
      %s281 = sphi 0, %s281
      %s283 = sphi 0, %s281
      %s284 = sphi 0, %s283
      %s298 = sphi 0, %s284
      %s302 = sphi 0, %s302
      %s304 = sphi 0, %s302
      %s305 = sphi 0, %s304
      %s319 = sphi 0, %s305
      %s323 = sphi 0, %s323
      %s325 = sphi 0, %s323
      %s326 = sphi 0, %s325
      %s340 = sphi 0, %s326
      %s344 = sphi 0, %s344
      %s346 = sphi 0, %s344
      %s347 = sphi 0, %s346
      %s361 = sphi 0, %s347
      %s365 = sphi 0, %s365
      %s367 = sphi 0, %s365
      %s368 = sphi 0, %s367
      %s382 = sphi 0, %s368
      %s386 = sphi 0, %s386
      %s388 = sphi 0, %s386
      %s389 = sphi 0, %s388
      %s403 = sphi 0, %s389
      %s407 = sphi 0, %s407
      %s409 = sphi 0, %s407
      %s410 = sphi 0, %s409
      %s424 = sphi 0, %s410
      %s428 = sphi 0, %s428
      %s430 = sphi 0, %s428
      %s431 = sphi 0, %s430
      %s445 = sphi 0, %s431
      %s449 = sphi 0, %s449
      %s451 = sphi 0, %s449
      %s452 = sphi 0, %s451
      %s466 = sphi 0, %s452
      %s470 = sphi 0, %s470
      %s472 = sphi 0, %s470
      %s473 = sphi 0, %s472
      %s487 = sphi 0, %s473
      %s491 = sphi 0, %s491
      %s493 = sphi 0, %s491
      %s494 = sphi 0, %s493
      %s508 = sphi 0, %s494
      %s512 = sphi 0, %s512
      %s514 = sphi 0, %s512
      %s515 = sphi 0, %s514
      %s529 = sphi 0, %s515
      %s533 = sphi 0, %s533
      %s535 = sphi 0, %s533
      %s536 = sphi 0, %s535
      %s550 = sphi 0, %s536
      %s554 = sphi 0, %s554
      %s556 = sphi 0, %s554
      %s557 = sphi 0, %s556
      %s571 = sphi 0, %s557
    $region4: #{enhanced_molecular_graph_forward.7} parent=1 // loop_header_branch
      %51 = sbr.rel (%p49) target = $region8
    $region5: #{enhanced_molecular_graph_forward.7} parent=1 // loop_body
      %s53 = ssub.s32 %s48, 1
      %s54 = ssub.s32 %s48, 2
      %s55 = sadd.s32 %s48, 1
      %s56 = ssub.s32 %s48, %s55
      %p57 = scmp.eq.s32.totalorder %s56, 0
      %s59 = sadd.s32 %s58, 1
      %s60 = scalar_select %p57, %s58, %s59
      %p63 = pneg %p57
      %p64 = scmp.eq.s32.totalorder %s48, 2
      %p65 = por %p63, %p64
      %p66 = scmp.ne.s32.totalorder %s58, %s61
      %p67 = scmp.eq.s32.totalorder %s48, 0
      %p68 = por %p66, %p67
      %p69 = scmp.ne.s32.totalorder %s58, %s61
      %p70 = scmp.eq.s32.totalorder %s53, 2
      %p71 = por %p69, %p70
      %p72 = scmp.ne.s32.totalorder %s61, %s62
      %p73 = scmp.eq.s32.totalorder %s53, 0
      %p74 = por %p72, %p73
      %p75 = scmp.ne.s32.totalorder %s61, %s62
      %p76 = scmp.eq.s32.totalorder %s54, 2
      %p77 = por %p75, %p76
      %p79 = scmp.ne.s32.totalorder %s62, %s78
      %p80 = scmp.eq.s32.totalorder %s54, 0
      %p81 = por %p79, %p80
      %s82 = ssub.s32 %s48, %s55
      %p83 = scmp.eq.s32.totalorder %s82, 0
      %s85 = sadd.s32 %s84, 1
      %s86 = scalar_select %p83, %s84, %s85
      %p89 = pneg %p83
      %p90 = scmp.eq.s32.totalorder %s48, 2
      %p91 = por %p89, %p90
      %p92 = scmp.ne.s32.totalorder %s84, %s87
      %p93 = scmp.eq.s32.totalorder %s48, 0
      %p94 = por %p92, %p93
      %p95 = scmp.ne.s32.totalorder %s84, %s87
      %p96 = scmp.eq.s32.totalorder %s53, 2
      %p97 = por %p95, %p96
      %p98 = scmp.ne.s32.totalorder %s87, %s88
      %p99 = scmp.eq.s32.totalorder %s53, 0
      %p100 = por %p98, %p99
      %p101 = scmp.ne.s32.totalorder %s87, %s88
      %p102 = scmp.eq.s32.totalorder %s54, 2
      %p103 = por %p101, %p102
      %p105 = scmp.ne.s32.totalorder %s88, %s104
      %p106 = scmp.eq.s32.totalorder %s54, 0
      %p107 = por %p105, %p106
      %s108 = ssub.s32 %s48, %s55
      %p109 = scmp.eq.s32.totalorder %s108, 0
      %s111 = sadd.s32 %s110, 1
      %s112 = scalar_select %p109, %s110, %s111
      %p115 = pneg %p109
      %p116 = scmp.eq.s32.totalorder %s48, 2
      %p117 = por %p115, %p116
      %p118 = scmp.ne.s32.totalorder %s110, %s113
      %p119 = scmp.eq.s32.totalorder %s48, 0
      %p120 = por %p118, %p119
      %p121 = scmp.ne.s32.totalorder %s110, %s113
      %p122 = scmp.eq.s32.totalorder %s53, 2
      %p123 = por %p121, %p122
      %p124 = scmp.ne.s32.totalorder %s113, %s114
      %p125 = scmp.eq.s32.totalorder %s53, 0
      %p126 = por %p124, %p125
      %p127 = scmp.ne.s32.totalorder %s113, %s114
      %p128 = scmp.eq.s32.totalorder %s54, 2
      %p129 = por %p127, %p128
      %p131 = scmp.ne.s32.totalorder %s114, %s130
      %p132 = scmp.eq.s32.totalorder %s54, 0
      %p133 = por %p131, %p132
      %s135 = sadd.s32 %s134, 1
      %p138 = scmp.eq.s32.totalorder %s48, 2
      %p139 = scmp.ne.s32.totalorder %s134, %s136
      %p140 = scmp.eq.s32.totalorder %s48, 0
      %p141 = por %p139, %p140
      %p142 = scmp.ne.s32.totalorder %s134, %s136
      %p143 = scmp.eq.s32.totalorder %s53, 2
      %p144 = por %p142, %p143
      %p145 = scmp.ne.s32.totalorder %s136, %s137
      %p146 = scmp.eq.s32.totalorder %s53, 0
      %p147 = por %p145, %p146
      %p148 = scmp.ne.s32.totalorder %s136, %s137
      %p149 = scmp.eq.s32.totalorder %s54, 2
      %p150 = por %p148, %p149
      %p152 = scmp.ne.s32.totalorder %s137, %s151
      %p153 = scmp.eq.s32.totalorder %s54, 0
      %p154 = por %p152, %p153
      %s156 = sadd.s32 %s155, 1
      %p159 = scmp.eq.s32.totalorder %s48, 2
      %p160 = scmp.ne.s32.totalorder %s155, %s157
      %p161 = scmp.eq.s32.totalorder %s48, 0
      %p162 = por %p160, %p161
      %p163 = scmp.ne.s32.totalorder %s155, %s157
      %p164 = scmp.eq.s32.totalorder %s53, 2
      %p165 = por %p163, %p164
      %p166 = scmp.ne.s32.totalorder %s157, %s158
      %p167 = scmp.eq.s32.totalorder %s53, 0
      %p168 = por %p166, %p167
      %p169 = scmp.ne.s32.totalorder %s157, %s158
      %p170 = scmp.eq.s32.totalorder %s54, 2
      %p171 = por %p169, %p170
      %p173 = scmp.ne.s32.totalorder %s158, %s172
      %p174 = scmp.eq.s32.totalorder %s54, 0
      %p175 = por %p173, %p174
      %s177 = sadd.s32 %s176, 1
      %p180 = scmp.eq.s32.totalorder %s48, 2
      %p181 = scmp.ne.s32.totalorder %s176, %s178
      %p182 = scmp.eq.s32.totalorder %s48, 0
      %p183 = por %p181, %p182
      %p184 = scmp.ne.s32.totalorder %s176, %s178
      %p185 = scmp.eq.s32.totalorder %s53, 2
      %p186 = por %p184, %p185
      %p187 = scmp.ne.s32.totalorder %s178, %s179
      %p188 = scmp.eq.s32.totalorder %s53, 0
      %p189 = por %p187, %p188
      %p190 = scmp.ne.s32.totalorder %s178, %s179
      %p191 = scmp.eq.s32.totalorder %s54, 2
      %p192 = por %p190, %p191
      %p194 = scmp.ne.s32.totalorder %s179, %s193
      %p195 = scmp.eq.s32.totalorder %s54, 0
      %p196 = por %p194, %p195
      %s198 = sadd.s32 %s197, 1
      %p201 = scmp.eq.s32.totalorder %s48, 2
      %p202 = scmp.ne.s32.totalorder %s197, %s199
      %p203 = scmp.eq.s32.totalorder %s48, 0
      %p204 = por %p202, %p203
      %p205 = scmp.ne.s32.totalorder %s197, %s199
      %p206 = scmp.eq.s32.totalorder %s53, 2
      %p207 = por %p205, %p206
      %p208 = scmp.ne.s32.totalorder %s199, %s200
      %p209 = scmp.eq.s32.totalorder %s53, 0
      %p210 = por %p208, %p209
      %p211 = scmp.ne.s32.totalorder %s199, %s200
      %p212 = scmp.eq.s32.totalorder %s54, 2
      %p213 = por %p211, %p212
      %p215 = scmp.ne.s32.totalorder %s200, %s214
      %p216 = scmp.eq.s32.totalorder %s54, 0
      %p217 = por %p215, %p216
      %s219 = sadd.s32 %s218, 1
      %p222 = scmp.eq.s32.totalorder %s48, 2
      %p223 = scmp.ne.s32.totalorder %s218, %s220
      %p224 = scmp.eq.s32.totalorder %s48, 0
      %p225 = por %p223, %p224
      %p226 = scmp.ne.s32.totalorder %s218, %s220
      %p227 = scmp.eq.s32.totalorder %s53, 2
      %p228 = por %p226, %p227
      %p229 = scmp.ne.s32.totalorder %s220, %s221
      %p230 = scmp.eq.s32.totalorder %s53, 0
      %p231 = por %p229, %p230
      %p232 = scmp.ne.s32.totalorder %s220, %s221
      %p233 = scmp.eq.s32.totalorder %s54, 2
      %p234 = por %p232, %p233
      %p236 = scmp.ne.s32.totalorder %s221, %s235
      %p237 = scmp.eq.s32.totalorder %s54, 0
      %p238 = por %p236, %p237
      %s240 = sadd.s32 %s239, 1
      %p243 = scmp.eq.s32.totalorder %s48, 2
      %p244 = scmp.ne.s32.totalorder %s239, %s241
      %p245 = scmp.eq.s32.totalorder %s48, 0
      %p246 = por %p244, %p245
      %p247 = scmp.ne.s32.totalorder %s239, %s241
      %p248 = scmp.eq.s32.totalorder %s53, 2
      %p249 = por %p247, %p248
      %p250 = scmp.ne.s32.totalorder %s241, %s242
      %p251 = scmp.eq.s32.totalorder %s53, 0
      %p252 = por %p250, %p251
      %p253 = scmp.ne.s32.totalorder %s241, %s242
      %p254 = scmp.eq.s32.totalorder %s54, 2
      %p255 = por %p253, %p254
      %p257 = scmp.ne.s32.totalorder %s242, %s256
      %p258 = scmp.eq.s32.totalorder %s54, 0
      %p259 = por %p257, %p258
      %s261 = sadd.s32 %s260, 1
      %p264 = scmp.eq.s32.totalorder %s48, 2
      %p265 = scmp.ne.s32.totalorder %s260, %s262
      %p266 = scmp.eq.s32.totalorder %s48, 0
      %p267 = por %p265, %p266
      %p268 = scmp.ne.s32.totalorder %s260, %s262
      %p269 = scmp.eq.s32.totalorder %s53, 2
      %p270 = por %p268, %p269
      %p271 = scmp.ne.s32.totalorder %s262, %s263
      %p272 = scmp.eq.s32.totalorder %s53, 0
      %p273 = por %p271, %p272
      %p274 = scmp.ne.s32.totalorder %s262, %s263
      %p275 = scmp.eq.s32.totalorder %s54, 2
      %p276 = por %p274, %p275
      %p278 = scmp.ne.s32.totalorder %s263, %s277
      %p279 = scmp.eq.s32.totalorder %s54, 0
      %p280 = por %p278, %p279
      %s282 = sadd.s32 %s281, 1
      %p285 = scmp.eq.s32.totalorder %s48, 2
      %p286 = scmp.ne.s32.totalorder %s281, %s283
      %p287 = scmp.eq.s32.totalorder %s48, 0
      %p288 = por %p286, %p287
      %p289 = scmp.ne.s32.totalorder %s281, %s283
      %p290 = scmp.eq.s32.totalorder %s53, 2
      %p291 = por %p289, %p290
      %p292 = scmp.ne.s32.totalorder %s283, %s284
      %p293 = scmp.eq.s32.totalorder %s53, 0
      %p294 = por %p292, %p293
      %p295 = scmp.ne.s32.totalorder %s283, %s284
      %p296 = scmp.eq.s32.totalorder %s54, 2
      %p297 = por %p295, %p296
      %p299 = scmp.ne.s32.totalorder %s284, %s298
      %p300 = scmp.eq.s32.totalorder %s54, 0
      %p301 = por %p299, %p300
      %s303 = sadd.s32 %s302, 1
      %p306 = scmp.eq.s32.totalorder %s48, 2
      %p307 = scmp.ne.s32.totalorder %s302, %s304
      %p308 = scmp.eq.s32.totalorder %s48, 0
      %p309 = por %p307, %p308
      %p310 = scmp.ne.s32.totalorder %s302, %s304
      %p311 = scmp.eq.s32.totalorder %s53, 2
      %p312 = por %p310, %p311
      %p313 = scmp.ne.s32.totalorder %s304, %s305
      %p314 = scmp.eq.s32.totalorder %s53, 0
      %p315 = por %p313, %p314
      %p316 = scmp.ne.s32.totalorder %s304, %s305
      %p317 = scmp.eq.s32.totalorder %s54, 2
      %p318 = por %p316, %p317
      %p320 = scmp.ne.s32.totalorder %s305, %s319
      %p321 = scmp.eq.s32.totalorder %s54, 0
      %p322 = por %p320, %p321
      %s324 = sadd.s32 %s323, 1
      %p327 = scmp.eq.s32.totalorder %s48, 2
      %p328 = scmp.ne.s32.totalorder %s323, %s325
      %p329 = scmp.eq.s32.totalorder %s48, 0
      %p330 = por %p328, %p329
      %p331 = scmp.ne.s32.totalorder %s323, %s325
      %p332 = scmp.eq.s32.totalorder %s53, 2
      %p333 = por %p331, %p332
      %p334 = scmp.ne.s32.totalorder %s325, %s326
      %p335 = scmp.eq.s32.totalorder %s53, 0
      %p336 = por %p334, %p335
      %p337 = scmp.ne.s32.totalorder %s325, %s326
      %p338 = scmp.eq.s32.totalorder %s54, 2
      %p339 = por %p337, %p338
      %p341 = scmp.ne.s32.totalorder %s326, %s340
      %p342 = scmp.eq.s32.totalorder %s54, 0
      %p343 = por %p341, %p342
      %s345 = sadd.s32 %s344, 1
      %p348 = scmp.eq.s32.totalorder %s48, 2
      %p349 = scmp.ne.s32.totalorder %s344, %s346
      %p350 = scmp.eq.s32.totalorder %s48, 0
      %p351 = por %p349, %p350
      %p352 = scmp.ne.s32.totalorder %s344, %s346
      %p353 = scmp.eq.s32.totalorder %s53, 2
      %p354 = por %p352, %p353
      %p355 = scmp.ne.s32.totalorder %s346, %s347
      %p356 = scmp.eq.s32.totalorder %s53, 0
      %p357 = por %p355, %p356
      %p358 = scmp.ne.s32.totalorder %s346, %s347
      %p359 = scmp.eq.s32.totalorder %s54, 2
      %p360 = por %p358, %p359
      %p362 = scmp.ne.s32.totalorder %s347, %s361
      %p363 = scmp.eq.s32.totalorder %s54, 0
      %p364 = por %p362, %p363
      %s366 = sadd.s32 %s365, 1
      %p369 = scmp.eq.s32.totalorder %s48, 2
      %p370 = scmp.ne.s32.totalorder %s365, %s367
      %p371 = scmp.eq.s32.totalorder %s48, 0
      %p372 = por %p370, %p371
      %p373 = scmp.ne.s32.totalorder %s365, %s367
      %p374 = scmp.eq.s32.totalorder %s53, 2
      %p375 = por %p373, %p374
      %p376 = scmp.ne.s32.totalorder %s367, %s368
      %p377 = scmp.eq.s32.totalorder %s53, 0
      %p378 = por %p376, %p377
      %p379 = scmp.ne.s32.totalorder %s367, %s368
      %p380 = scmp.eq.s32.totalorder %s54, 2
      %p381 = por %p379, %p380
      %p383 = scmp.ne.s32.totalorder %s368, %s382
      %p384 = scmp.eq.s32.totalorder %s54, 0
      %p385 = por %p383, %p384
      %s387 = sadd.s32 %s386, 1
      %p390 = scmp.eq.s32.totalorder %s48, 2
      %p391 = scmp.ne.s32.totalorder %s386, %s388
      %p392 = scmp.eq.s32.totalorder %s48, 0
      %p393 = por %p391, %p392
      %p394 = scmp.ne.s32.totalorder %s386, %s388
      %p395 = scmp.eq.s32.totalorder %s53, 2
      %p396 = por %p394, %p395
      %p397 = scmp.ne.s32.totalorder %s388, %s389
      %p398 = scmp.eq.s32.totalorder %s53, 0
      %p399 = por %p397, %p398
      %p400 = scmp.ne.s32.totalorder %s388, %s389
      %p401 = scmp.eq.s32.totalorder %s54, 2
      %p402 = por %p400, %p401
      %p404 = scmp.ne.s32.totalorder %s389, %s403
      %p405 = scmp.eq.s32.totalorder %s54, 0
      %p406 = por %p404, %p405
      %s408 = sadd.s32 %s407, 1
      %p411 = scmp.eq.s32.totalorder %s48, 2
      %p412 = scmp.ne.s32.totalorder %s407, %s409
      %p413 = scmp.eq.s32.totalorder %s48, 0
      %p414 = por %p412, %p413
      %p415 = scmp.ne.s32.totalorder %s407, %s409
      %p416 = scmp.eq.s32.totalorder %s53, 2
      %p417 = por %p415, %p416
      %p418 = scmp.ne.s32.totalorder %s409, %s410
      %p419 = scmp.eq.s32.totalorder %s53, 0
      %p420 = por %p418, %p419
      %p421 = scmp.ne.s32.totalorder %s409, %s410
      %p422 = scmp.eq.s32.totalorder %s54, 2
      %p423 = por %p421, %p422
      %p425 = scmp.ne.s32.totalorder %s410, %s424
      %p426 = scmp.eq.s32.totalorder %s54, 0
      %p427 = por %p425, %p426
      %s429 = sadd.s32 %s428, 1
      %p432 = scmp.eq.s32.totalorder %s48, 2
      %p433 = scmp.ne.s32.totalorder %s428, %s430
      %p434 = scmp.eq.s32.totalorder %s48, 0
      %p435 = por %p433, %p434
      %p436 = scmp.ne.s32.totalorder %s428, %s430
      %p437 = scmp.eq.s32.totalorder %s53, 2
      %p438 = por %p436, %p437
      %p439 = scmp.ne.s32.totalorder %s430, %s431
      %p440 = scmp.eq.s32.totalorder %s53, 0
      %p441 = por %p439, %p440
      %p442 = scmp.ne.s32.totalorder %s430, %s431
      %p443 = scmp.eq.s32.totalorder %s54, 2
      %p444 = por %p442, %p443
      %p446 = scmp.ne.s32.totalorder %s431, %s445
      %p447 = scmp.eq.s32.totalorder %s54, 0
      %p448 = por %p446, %p447
      %s450 = sadd.s32 %s449, 1
      %p453 = scmp.eq.s32.totalorder %s48, 2
      %p454 = scmp.ne.s32.totalorder %s449, %s451
      %p455 = scmp.eq.s32.totalorder %s48, 0
      %p456 = por %p454, %p455
      %p457 = scmp.ne.s32.totalorder %s449, %s451
      %p458 = scmp.eq.s32.totalorder %s53, 2
      %p459 = por %p457, %p458
      %p460 = scmp.ne.s32.totalorder %s451, %s452
      %p461 = scmp.eq.s32.totalorder %s53, 0
      %p462 = por %p460, %p461
      %p463 = scmp.ne.s32.totalorder %s451, %s452
      %p464 = scmp.eq.s32.totalorder %s54, 2
      %p465 = por %p463, %p464
      %p467 = scmp.ne.s32.totalorder %s452, %s466
      %p468 = scmp.eq.s32.totalorder %s54, 0
      %p469 = por %p467, %p468
      %s471 = sadd.s32 %s470, 1
      %p474 = scmp.eq.s32.totalorder %s48, 2
      %p475 = scmp.ne.s32.totalorder %s470, %s472
      %p476 = scmp.eq.s32.totalorder %s48, 0
      %p477 = por %p475, %p476
      %p478 = scmp.ne.s32.totalorder %s470, %s472
      %p479 = scmp.eq.s32.totalorder %s53, 2
      %p480 = por %p478, %p479
      %p481 = scmp.ne.s32.totalorder %s472, %s473
      %p482 = scmp.eq.s32.totalorder %s53, 0
      %p483 = por %p481, %p482
      %p484 = scmp.ne.s32.totalorder %s472, %s473
      %p485 = scmp.eq.s32.totalorder %s54, 2
      %p486 = por %p484, %p485
      %p488 = scmp.ne.s32.totalorder %s473, %s487
      %p489 = scmp.eq.s32.totalorder %s54, 0
      %p490 = por %p488, %p489
      %s492 = sadd.s32 %s491, 1
      %p495 = scmp.eq.s32.totalorder %s48, 2
      %p496 = scmp.ne.s32.totalorder %s491, %s493
      %p497 = scmp.eq.s32.totalorder %s48, 0
      %p498 = por %p496, %p497
      %p499 = scmp.ne.s32.totalorder %s491, %s493
      %p500 = scmp.eq.s32.totalorder %s53, 2
      %p501 = por %p499, %p500
      %p502 = scmp.ne.s32.totalorder %s493, %s494
      %p503 = scmp.eq.s32.totalorder %s53, 0
      %p504 = por %p502, %p503
      %p505 = scmp.ne.s32.totalorder %s493, %s494
      %p506 = scmp.eq.s32.totalorder %s54, 2
      %p507 = por %p505, %p506
      %p509 = scmp.ne.s32.totalorder %s494, %s508
      %p510 = scmp.eq.s32.totalorder %s54, 0
      %p511 = por %p509, %p510
      %s513 = sadd.s32 %s512, 1
      %p516 = scmp.eq.s32.totalorder %s48, 2
      %p517 = scmp.ne.s32.totalorder %s512, %s514
      %p518 = scmp.eq.s32.totalorder %s48, 0
      %p519 = por %p517, %p518
      %p520 = scmp.ne.s32.totalorder %s512, %s514
      %p521 = scmp.eq.s32.totalorder %s53, 2
      %p522 = por %p520, %p521
      %p523 = scmp.ne.s32.totalorder %s514, %s515
      %p524 = scmp.eq.s32.totalorder %s53, 0
      %p525 = por %p523, %p524
      %p526 = scmp.ne.s32.totalorder %s514, %s515
      %p527 = scmp.eq.s32.totalorder %s54, 2
      %p528 = por %p526, %p527
      %p530 = scmp.ne.s32.totalorder %s515, %s529
      %p531 = scmp.eq.s32.totalorder %s54, 0
      %p532 = por %p530, %p531
      %s534 = sadd.s32 %s533, 1
      %p537 = scmp.eq.s32.totalorder %s48, 2
      %p538 = scmp.ne.s32.totalorder %s533, %s535
      %p539 = scmp.eq.s32.totalorder %s48, 0
      %p540 = por %p538, %p539
      %p541 = scmp.ne.s32.totalorder %s533, %s535
      %p542 = scmp.eq.s32.totalorder %s53, 2
      %p543 = por %p541, %p542
      %p544 = scmp.ne.s32.totalorder %s535, %s536
      %p545 = scmp.eq.s32.totalorder %s53, 0
      %p546 = por %p544, %p545
      %p547 = scmp.ne.s32.totalorder %s535, %s536
      %p548 = scmp.eq.s32.totalorder %s54, 2
      %p549 = por %p547, %p548
      %p551 = scmp.ne.s32.totalorder %s536, %s550
      %p552 = scmp.eq.s32.totalorder %s54, 0
      %p553 = por %p551, %p552
      %s555 = sadd.s32 %s554, 1
      %p558 = scmp.eq.s32.totalorder %s48, 2
      %p559 = scmp.ne.s32.totalorder %s554, %s556
      %p560 = scmp.eq.s32.totalorder %s48, 0
      %p561 = por %p559, %p560
      %p562 = scmp.ne.s32.totalorder %s554, %s556
      %p563 = scmp.eq.s32.totalorder %s53, 2
      %p564 = por %p562, %p563
      %p565 = scmp.ne.s32.totalorder %s556, %s557
      %p566 = scmp.eq.s32.totalorder %s53, 0
      %p567 = por %p565, %p566
      %p568 = scmp.ne.s32.totalorder %s556, %s557
      %p569 = scmp.eq.s32.totalorder %s54, 2
      %p570 = por %p568, %p569
      %p572 = scmp.ne.s32.totalorder %s557, %s571
      %p573 = scmp.eq.s32.totalorder %s54, 0
      %p574 = por %p572, %p573
      %p575 = scmp.le.s32.totalorder 1, %s48
      %p576 = scmp.lt.s32.totalorder %s48, 4
      %p577 = pnand %p575, %p576
      %p578 = pneg %p577
      // Predicated region
      $region9: #{enhanced_molecular_graph_forward.7} parent=5 // pred_check
        _
      $region10: #{enhanced_molecular_graph_forward.7} parent=5 // pred_check_branch
        %580 = sbr.rel (%p577) target = $region12
      $region11: #{enhanced_molecular_graph_forward.7} parent=5 // pred_region
        %s581 = ssub.s32 %s48, 1
        // Predicated region
        $region13: #{enhanced_molecular_graph_forward.7} parent=11 // pred_check
          %p582 = pneg %p147
        $region14: #{enhanced_molecular_graph_forward.7} parent=11 // pred_check_branch
          %584 = sbr.rel (%p582) target = $region16
        $region15: #{enhanced_molecular_graph_forward.7} parent=11 // pred_region
          %s586 = ssub.s32 256, 256
          %587 = vsyncadd [#allocation10], %s586
          %s588 = sshll.u32 [#allocation9], 4
          %s589 = int_to_ptr.vmem [resolvable:$true] %s588
          %594 = dma.hbm_to_vmem [thread:$0]  %s3, 256, %s589, [#allocation10], 128, 128, 8
        $region16: #{enhanced_molecular_graph_forward.7} parent=11 // pred_fallthru
          _
        // Predicated region
        $region17: #{enhanced_molecular_graph_forward.7} parent=11 // pred_check
          %p595 = pneg %p168
        $region18: #{enhanced_molecular_graph_forward.7} parent=11 // pred_check_branch
          %597 = sbr.rel (%p595) target = $region20
        $region19: #{enhanced_molecular_graph_forward.7} parent=11 // pred_region
          %s599 = ssub.s32 64, 64
          %600 = vsyncadd [#allocation10], %s599
          %s602 = sshll.u32 [#allocation11], 4
          %s603 = int_to_ptr.vmem [resolvable:$true] %s602
          %605 = dma.hbm_to_vmem [thread:$0]  %s4, 64, %s603, [#allocation10]
        $region20: #{enhanced_molecular_graph_forward.7} parent=11 // pred_fallthru
          _
        // Predicated region
        $region21: #{enhanced_molecular_graph_forward.7} parent=11 // pred_check
          %p606 = pneg %p189
        $region22: #{enhanced_molecular_graph_forward.7} parent=11 // pred_check_branch
          %608 = sbr.rel (%p606) target = $region24
        $region23: #{enhanced_molecular_graph_forward.7} parent=11 // pred_region
          %s610 = ssub.s32 16, 16
          %611 = vsyncadd [#allocation13], %s610
          %s613 = sshll.u32 [#allocation12], 4
          %s614 = int_to_ptr.vmem [resolvable:$true] %s613
          %616 = dma.hbm_to_vmem [thread:$0]  %s5, 16, %s614, [#allocation13]
        $region24: #{enhanced_molecular_graph_forward.7} parent=11 // pred_fallthru
          _
        // Predicated region
        $region25: #{enhanced_molecular_graph_forward.7} parent=11 // pred_check
          %p617 = pneg %p210
        $region26: #{enhanced_molecular_graph_forward.7} parent=11 // pred_check_branch
          %619 = sbr.rel (%p617) target = $region28
        $region27: #{enhanced_molecular_graph_forward.7} parent=11 // pred_region
          %s621 = ssub.s32 16, 16
          %622 = vsyncadd [#allocation13], %s621
          %s624 = sshll.u32 [#allocation14], 4
          %s625 = int_to_ptr.vmem [resolvable:$true] %s624
          %627 = dma.hbm_to_vmem [thread:$0]  %s6, 16, %s625, [#allocation13]
        $region28: #{enhanced_molecular_graph_forward.7} parent=11 // pred_fallthru
          _
        // Predicated region
        $region29: #{enhanced_molecular_graph_forward.7} parent=11 // pred_check
          %p628 = pneg %p231
        $region30: #{enhanced_molecular_graph_forward.7} parent=11 // pred_check_branch
          %630 = sbr.rel (%p628) target = $region32
        $region31: #{enhanced_molecular_graph_forward.7} parent=11 // pred_region
          %s632 = ssub.s32 16, 16
          %633 = vsyncadd [#allocation16], %s632
          %s635 = sshll.u32 [#allocation15], 4
          %s636 = int_to_ptr.vmem [resolvable:$true] %s635
          %638 = dma.hbm_to_vmem [thread:$0]  %s7, 16, %s636, [#allocation16]
        $region32: #{enhanced_molecular_graph_forward.7} parent=11 // pred_fallthru
          _
        // Predicated region
        $region33: #{enhanced_molecular_graph_forward.7} parent=11 // pred_check
          %p639 = pneg %p252
        $region34: #{enhanced_molecular_graph_forward.7} parent=11 // pred_check_branch
          %641 = sbr.rel (%p639) target = $region36
        $region35: #{enhanced_molecular_graph_forward.7} parent=11 // pred_region
          %s643 = ssub.s32 16, 16
          %644 = vsyncadd [#allocation16], %s643
          %s646 = sshll.u32 [#allocation17], 4
          %s647 = int_to_ptr.vmem [resolvable:$true] %s646
          %649 = dma.hbm_to_vmem [thread:$0]  %s8, 16, %s647, [#allocation16]
        $region36: #{enhanced_molecular_graph_forward.7} parent=11 // pred_fallthru
          _
        // Predicated region
        $region37: #{enhanced_molecular_graph_forward.7} parent=11 // pred_check
          %p650 = pneg %p273
        $region38: #{enhanced_molecular_graph_forward.7} parent=11 // pred_check_branch
          %652 = sbr.rel (%p650) target = $region40
        $region39: #{enhanced_molecular_graph_forward.7} parent=11 // pred_region
          %s654 = ssub.s32 16, 16
          %655 = vsyncadd [#allocation19], %s654
          %s657 = sshll.u32 [#allocation18], 4
          %s658 = int_to_ptr.vmem [resolvable:$true] %s657
          %660 = dma.hbm_to_vmem [thread:$0]  %s9, 16, %s658, [#allocation19]
        $region40: #{enhanced_molecular_graph_forward.7} parent=11 // pred_fallthru
          _
        // Predicated region
        $region41: #{enhanced_molecular_graph_forward.7} parent=11 // pred_check
          %p661 = pneg %p294
        $region42: #{enhanced_molecular_graph_forward.7} parent=11 // pred_check_branch
          %663 = sbr.rel (%p661) target = $region44
        $region43: #{enhanced_molecular_graph_forward.7} parent=11 // pred_region
          %s665 = ssub.s32 8192, 8192
          %666 = vsyncadd [#allocation19], %s665
          %s667 = sshll.u32 [#allocation20], 4
          %s668 = int_to_ptr.vmem [resolvable:$true] %s667
          %673 = dma.hbm_to_vmem [thread:$0]  %s10, 8192, %s668, [#allocation19], 64, 64, 4
        $region44: #{enhanced_molecular_graph_forward.7} parent=11 // pred_fallthru
          _
        // Predicated region
        $region45: #{enhanced_molecular_graph_forward.7} parent=11 // pred_check
          %p674 = pneg %p315
        $region46: #{enhanced_molecular_graph_forward.7} parent=11 // pred_check_branch
          %676 = sbr.rel (%p674) target = $region48
        $region47: #{enhanced_molecular_graph_forward.7} parent=11 // pred_region
          %s678 = ssub.s32 256, 256
          %679 = vsyncadd [#allocation22], %s678
          %s680 = sshll.u32 [#allocation21], 4
          %s681 = int_to_ptr.vmem [resolvable:$true] %s680
          %686 = dma.hbm_to_vmem [thread:$0]  %s11, 256, %s681, [#allocation22], 64, 64, 4
        $region48: #{enhanced_molecular_graph_forward.7} parent=11 // pred_fallthru
          _
        // Predicated region
        $region49: #{enhanced_molecular_graph_forward.7} parent=11 // pred_check
          %p687 = pneg %p336
        $region50: #{enhanced_molecular_graph_forward.7} parent=11 // pred_check_branch
          %689 = sbr.rel (%p687) target = $region52
        $region51: #{enhanced_molecular_graph_forward.7} parent=11 // pred_region
          %s691 = ssub.s32 256, 256
          %692 = vsyncadd [#allocation22], %s691
          %s693 = sshll.u32 [#allocation23], 4
          %s694 = int_to_ptr.vmem [resolvable:$true] %s693
          %699 = dma.hbm_to_vmem [thread:$0]  %s12, 256, %s694, [#allocation22], 64, 64, 4
        $region52: #{enhanced_molecular_graph_forward.7} parent=11 // pred_fallthru
          _
        // Predicated region
        $region53: #{enhanced_molecular_graph_forward.7} parent=11 // pred_check
          %p700 = pneg %p357
        $region54: #{enhanced_molecular_graph_forward.7} parent=11 // pred_check_branch
          %702 = sbr.rel (%p700) target = $region56
        $region55: #{enhanced_molecular_graph_forward.7} parent=11 // pred_region
          %s704 = ssub.s32 16, 16
          %705 = vsyncadd [#allocation25], %s704
          %s707 = sshll.u32 [#allocation24], 4
          %s708 = int_to_ptr.vmem [resolvable:$true] %s707
          %710 = dma.hbm_to_vmem [thread:$0]  %s13, 16, %s708, [#allocation25]
        $region56: #{enhanced_molecular_graph_forward.7} parent=11 // pred_fallthru
          _
        // Predicated region
        $region57: #{enhanced_molecular_graph_forward.7} parent=11 // pred_check
          %p711 = pneg %p378
        $region58: #{enhanced_molecular_graph_forward.7} parent=11 // pred_check_branch
          %713 = sbr.rel (%p711) target = $region60
        $region59: #{enhanced_molecular_graph_forward.7} parent=11 // pred_region
          %s715 = ssub.s32 16, 16
          %716 = vsyncadd [#allocation25], %s715
          %s718 = sshll.u32 [#allocation26], 4
          %s719 = int_to_ptr.vmem [resolvable:$true] %s718
          %721 = dma.hbm_to_vmem [thread:$0]  %s14, 16, %s719, [#allocation25]
        $region60: #{enhanced_molecular_graph_forward.7} parent=11 // pred_fallthru
          _
        // Predicated region
        $region61: #{enhanced_molecular_graph_forward.7} parent=11 // pred_check
          %p722 = pneg %p399
        $region62: #{enhanced_molecular_graph_forward.7} parent=11 // pred_check_branch
          %724 = sbr.rel (%p722) target = $region64
        $region63: #{enhanced_molecular_graph_forward.7} parent=11 // pred_region
          %s726 = ssub.s32 16, 16
          %727 = vsyncadd [#allocation28], %s726
          %s729 = sshll.u32 [#allocation27], 4
          %s730 = int_to_ptr.vmem [resolvable:$true] %s729
          %732 = dma.hbm_to_vmem [thread:$0]  %s15, 16, %s730, [#allocation28]
        $region64: #{enhanced_molecular_graph_forward.7} parent=11 // pred_fallthru
          _
        // Predicated region
        $region65: #{enhanced_molecular_graph_forward.7} parent=11 // pred_check
          %p733 = pneg %p420
        $region66: #{enhanced_molecular_graph_forward.7} parent=11 // pred_check_branch
          %735 = sbr.rel (%p733) target = $region68
        $region67: #{enhanced_molecular_graph_forward.7} parent=11 // pred_region
          %s737 = ssub.s32 16, 16
          %738 = vsyncadd [#allocation28], %s737
          %s740 = sshll.u32 [#allocation29], 4
          %s741 = int_to_ptr.vmem [resolvable:$true] %s740
          %743 = dma.hbm_to_vmem [thread:$0]  %s16, 16, %s741, [#allocation28]
        $region68: #{enhanced_molecular_graph_forward.7} parent=11 // pred_fallthru
          _
        // Predicated region
        $region69: #{enhanced_molecular_graph_forward.7} parent=11 // pred_check
          %p744 = pneg %p441
        $region70: #{enhanced_molecular_graph_forward.7} parent=11 // pred_check_branch
          %746 = sbr.rel (%p744) target = $region72
        $region71: #{enhanced_molecular_graph_forward.7} parent=11 // pred_region
          %s748 = ssub.s32 16, 16
          %749 = vsyncadd [#allocation31], %s748
          %s751 = sshll.u32 [#allocation30], 4
          %s752 = int_to_ptr.vmem [resolvable:$true] %s751
          %754 = dma.hbm_to_vmem [thread:$0]  %s17, 16, %s752, [#allocation31]
        $region72: #{enhanced_molecular_graph_forward.7} parent=11 // pred_fallthru
          _
        // Predicated region
        $region73: #{enhanced_molecular_graph_forward.7} parent=11 // pred_check
          %p755 = pneg %p462
        $region74: #{enhanced_molecular_graph_forward.7} parent=11 // pred_check_branch
          %757 = sbr.rel (%p755) target = $region76
        $region75: #{enhanced_molecular_graph_forward.7} parent=11 // pred_region
          %s759 = ssub.s32 256, 256
          %760 = vsyncadd [#allocation31], %s759
          %s761 = sshll.u32 [#allocation32], 4
          %s762 = int_to_ptr.vmem [resolvable:$true] %s761
          %767 = dma.hbm_to_vmem [thread:$0]  %s18, 256, %s762, [#allocation31], 128, 128, 8
        $region76: #{enhanced_molecular_graph_forward.7} parent=11 // pred_fallthru
          _
        // Predicated region
        $region77: #{enhanced_molecular_graph_forward.7} parent=11 // pred_check
          %p768 = pneg %p483
        $region78: #{enhanced_molecular_graph_forward.7} parent=11 // pred_check_branch
          %770 = sbr.rel (%p768) target = $region80
        $region79: #{enhanced_molecular_graph_forward.7} parent=11 // pred_region
          %s772 = ssub.s32 256, 256
          %773 = vsyncadd [#allocation34], %s772
          %s774 = sshll.u32 [#allocation33], 4
          %s775 = int_to_ptr.vmem [resolvable:$true] %s774
          %780 = dma.hbm_to_vmem [thread:$0]  %s19, 256, %s775, [#allocation34], 64, 64, 4
        $region80: #{enhanced_molecular_graph_forward.7} parent=11 // pred_fallthru
          _
        // Predicated region
        $region81: #{enhanced_molecular_graph_forward.7} parent=11 // pred_check
          %p781 = pneg %p504
        $region82: #{enhanced_molecular_graph_forward.7} parent=11 // pred_check_branch
          %783 = sbr.rel (%p781) target = $region84
        $region83: #{enhanced_molecular_graph_forward.7} parent=11 // pred_region
          %s785 = ssub.s32 256, 256
          %786 = vsyncadd [#allocation34], %s785
          %s787 = sshll.u32 [#allocation35], 4
          %s788 = int_to_ptr.vmem [resolvable:$true] %s787
          %793 = dma.hbm_to_vmem [thread:$0]  %s20, 256, %s788, [#allocation34], 64, 64, 4
        $region84: #{enhanced_molecular_graph_forward.7} parent=11 // pred_fallthru
          _
        // Predicated region
        $region85: #{enhanced_molecular_graph_forward.7} parent=11 // pred_check
          %p794 = pneg %p525
        $region86: #{enhanced_molecular_graph_forward.7} parent=11 // pred_check_branch
          %796 = sbr.rel (%p794) target = $region88
        $region87: #{enhanced_molecular_graph_forward.7} parent=11 // pred_region
          %s798 = ssub.s32 256, 256
          %799 = vsyncadd [#allocation37], %s798
          %s800 = sshll.u32 [#allocation36], 4
          %s801 = int_to_ptr.vmem [resolvable:$true] %s800
          %806 = dma.hbm_to_vmem [thread:$0]  %s21, 256, %s801, [#allocation37], 64, 64, 4
        $region88: #{enhanced_molecular_graph_forward.7} parent=11 // pred_fallthru
          _
      $region12: #{enhanced_molecular_graph_forward.7} parent=5 // pred_fallthru
        _
      %p807 = scmp.lt.s32.totalorder %s48, 3
      // Predicated region
      $region89: #{enhanced_molecular_graph_forward.7} parent=5 // pred_check
        %p808 = pneg %p807
      $region90: #{enhanced_molecular_graph_forward.7} parent=5 // pred_check_branch
        %810 = sbr.rel (%p808) target = $region92
      $region91: #{enhanced_molecular_graph_forward.7} parent=5 // pred_region
        // Predicated region
        $region93: #{enhanced_molecular_graph_forward.7} parent=91 // pred_check
          %p811 = pneg %p68
        $region94: #{enhanced_molecular_graph_forward.7} parent=91 // pred_check_branch
          %813 = sbr.rel (%p811) target = $region96
        $region95: #{enhanced_molecular_graph_forward.7} parent=91 // pred_region
          %s814 = sand.u32 %s58, 1
          %s815 = scalar_lea.sflag [#allocation4], %s814
          %s816 = sand.u32 %s58, 1
          %s817 = smul.addr %s816, 8
          %s818 = scalar_lea.vmem [#allocation3], %s817
          %s820 = ssub.s32 128, 128
          %821 = vsyncadd %s815, %s820
          %s822 = smul.addr %s48, 128
          %s823 = scalar_lea.hbm %s0, %s822
          %s825 = sshll.u32 %s818, 4
          %s826 = int_to_ptr.vmem [resolvable:$true] %s825
          %828 = dma.hbm_to_vmem [thread:$0]  %s823, 128, %s826, %s815
        $region96: #{enhanced_molecular_graph_forward.7} parent=91 // pred_fallthru
          _
        // Predicated region
        $region97: #{enhanced_molecular_graph_forward.7} parent=91 // pred_check
          %p829 = pneg %p94
        $region98: #{enhanced_molecular_graph_forward.7} parent=91 // pred_check_branch
          %831 = sbr.rel (%p829) target = $region100
        $region99: #{enhanced_molecular_graph_forward.7} parent=91 // pred_region
          %s832 = sand.u32 %s48, 1
          %s833 = scalar_lea.sflag [#allocation7], %s832
          %s834 = sand.u32 %s84, 1
          %s835 = smul.addr %s834, 8
          %s836 = scalar_lea.vmem [#allocation6], %s835
          %s838 = ssub.s32 128, 128
          %839 = vsyncadd %s833, %s838
          %s840 = smul.addr %s48, 128
          %s841 = scalar_lea.hbm %s1, %s840
          %s843 = sshll.u32 %s836, 4
          %s844 = int_to_ptr.vmem [resolvable:$true] %s843
          %846 = dma.hbm_to_vmem [thread:$0]  %s841, 128, %s844, %s833
        $region100: #{enhanced_molecular_graph_forward.7} parent=91 // pred_fallthru
          _
        // Predicated region
        $region101: #{enhanced_molecular_graph_forward.7} parent=91 // pred_check
          %p847 = pneg %p120
        $region102: #{enhanced_molecular_graph_forward.7} parent=91 // pred_check_branch
          %849 = sbr.rel (%p847) target = $region104
        $region103: #{enhanced_molecular_graph_forward.7} parent=91 // pred_region
          %s850 = sand.u32 %s48, 1
          %s851 = scalar_lea.sflag [#allocation7], %s850
          %s852 = sand.u32 %s110, 1
          %s853 = scalar_lea.vmem [#allocation8], %s852
          %s855 = ssub.s32 16, 16
          %856 = vsyncadd %s851, %s855
          %s857 = smul.addr %s48, 16
          %s858 = scalar_lea.hbm %s2, %s857
          %s860 = sshll.u32 %s853, 4
          %s861 = int_to_ptr.vmem [resolvable:$true] %s860
          %863 = dma.hbm_to_vmem [thread:$0]  %s858, 16, %s861, %s851
        $region104: #{enhanced_molecular_graph_forward.7} parent=91 // pred_fallthru
          _
      $region92: #{enhanced_molecular_graph_forward.7} parent=5 // pred_fallthru
        _
      %p864 = scmp.le.s32.totalorder 1, %s48
      %p865 = scmp.lt.s32.totalorder %s48, 4
      %p866 = pnand %p864, %p865
      %p867 = pneg %p866
      // Predicated region
      $region105: #{enhanced_molecular_graph_forward.7} parent=5 // pred_check
        _
      $region106: #{enhanced_molecular_graph_forward.7} parent=5 // pred_check_branch
        %869 = sbr.rel (%p866) target = $region108
      $region107: #{enhanced_molecular_graph_forward.7} parent=5 // pred_region
        %s870 = ssub.s32 %s48, 1
        %s871 = sand.u32 %s61, 1
        %s872 = scalar_lea.sflag [#allocation4], %s871
        %s873 = sand.u32 %s61, 1
        %s874 = smul.addr %s873, 8
        %s875 = scalar_lea.vmem [#allocation3], %s874
        // Predicated region
        $region109: #{enhanced_molecular_graph_forward.7} parent=107 // pred_check
          %p876 = pneg %p74
        $region110: #{enhanced_molecular_graph_forward.7} parent=107 // pred_check_branch
          %878 = sbr.rel (%p876) target = $region112
        $region111: #{enhanced_molecular_graph_forward.7} parent=107 // pred_region
          %879 = dma.done %s872, 128
        $region112: #{enhanced_molecular_graph_forward.7} parent=107 // pred_fallthru
          _
        %s880 = sand.u32 %s53, 1
        %s881 = scalar_lea.sflag [#allocation7], %s880
        %s882 = sand.u32 %s87, 1
        %s883 = smul.addr %s882, 8
        %s884 = scalar_lea.vmem [#allocation6], %s883
        // Predicated region
        $region113: #{enhanced_molecular_graph_forward.7} parent=107 // pred_check
          %p885 = pneg %p100
        $region114: #{enhanced_molecular_graph_forward.7} parent=107 // pred_check_branch
          %887 = sbr.rel (%p885) target = $region116
        $region115: #{enhanced_molecular_graph_forward.7} parent=107 // pred_region
          %888 = dma.done %s881, 128
        $region116: #{enhanced_molecular_graph_forward.7} parent=107 // pred_fallthru
          _
        %s889 = sand.u32 %s53, 1
        %s890 = scalar_lea.sflag [#allocation7], %s889
        %s891 = sand.u32 %s113, 1
        %s892 = scalar_lea.vmem [#allocation8], %s891
        // Predicated region
        $region117: #{enhanced_molecular_graph_forward.7} parent=107 // pred_check
          %p893 = pneg %p126
        $region118: #{enhanced_molecular_graph_forward.7} parent=107 // pred_check_branch
          %895 = sbr.rel (%p893) target = $region120
        $region119: #{enhanced_molecular_graph_forward.7} parent=107 // pred_region
          %896 = dma.done %s890, 16
        $region120: #{enhanced_molecular_graph_forward.7} parent=107 // pred_fallthru
          _
        // Predicated region
        $region121: #{enhanced_molecular_graph_forward.7} parent=107 // pred_check
          %p897 = pneg %p147
        $region122: #{enhanced_molecular_graph_forward.7} parent=107 // pred_check_branch
          %899 = sbr.rel (%p897) target = $region124
        $region123: #{enhanced_molecular_graph_forward.7} parent=107 // pred_region
          %900 = dma.done [#allocation10], 256
        $region124: #{enhanced_molecular_graph_forward.7} parent=107 // pred_fallthru
          _
        // Predicated region
        $region125: #{enhanced_molecular_graph_forward.7} parent=107 // pred_check
          %p901 = pneg %p168
        $region126: #{enhanced_molecular_graph_forward.7} parent=107 // pred_check_branch
          %903 = sbr.rel (%p901) target = $region128
        $region127: #{enhanced_molecular_graph_forward.7} parent=107 // pred_region
          %904 = dma.done [#allocation10], 64
        $region128: #{enhanced_molecular_graph_forward.7} parent=107 // pred_fallthru
          _
        // Predicated region
        $region129: #{enhanced_molecular_graph_forward.7} parent=107 // pred_check
          %p905 = pneg %p189
        $region130: #{enhanced_molecular_graph_forward.7} parent=107 // pred_check_branch
          %907 = sbr.rel (%p905) target = $region132
        $region131: #{enhanced_molecular_graph_forward.7} parent=107 // pred_region
          %908 = dma.done [#allocation13], 16
        $region132: #{enhanced_molecular_graph_forward.7} parent=107 // pred_fallthru
          _
        // Predicated region
        $region133: #{enhanced_molecular_graph_forward.7} parent=107 // pred_check
          %p909 = pneg %p210
        $region134: #{enhanced_molecular_graph_forward.7} parent=107 // pred_check_branch
          %911 = sbr.rel (%p909) target = $region136
        $region135: #{enhanced_molecular_graph_forward.7} parent=107 // pred_region
          %912 = dma.done [#allocation13], 16
        $region136: #{enhanced_molecular_graph_forward.7} parent=107 // pred_fallthru
          _
        // Predicated region
        $region137: #{enhanced_molecular_graph_forward.7} parent=107 // pred_check
          %p913 = pneg %p231
        $region138: #{enhanced_molecular_graph_forward.7} parent=107 // pred_check_branch
          %915 = sbr.rel (%p913) target = $region140
        $region139: #{enhanced_molecular_graph_forward.7} parent=107 // pred_region
          %916 = dma.done [#allocation16], 16
        $region140: #{enhanced_molecular_graph_forward.7} parent=107 // pred_fallthru
          _
        // Predicated region
        $region141: #{enhanced_molecular_graph_forward.7} parent=107 // pred_check
          %p917 = pneg %p252
        $region142: #{enhanced_molecular_graph_forward.7} parent=107 // pred_check_branch
          %919 = sbr.rel (%p917) target = $region144
        $region143: #{enhanced_molecular_graph_forward.7} parent=107 // pred_region
          %920 = dma.done [#allocation16], 16
        $region144: #{enhanced_molecular_graph_forward.7} parent=107 // pred_fallthru
          _
        // Predicated region
        $region145: #{enhanced_molecular_graph_forward.7} parent=107 // pred_check
          %p921 = pneg %p273
        $region146: #{enhanced_molecular_graph_forward.7} parent=107 // pred_check_branch
          %923 = sbr.rel (%p921) target = $region148
        $region147: #{enhanced_molecular_graph_forward.7} parent=107 // pred_region
          %924 = dma.done [#allocation19], 16
        $region148: #{enhanced_molecular_graph_forward.7} parent=107 // pred_fallthru
          _
        // Predicated region
        $region149: #{enhanced_molecular_graph_forward.7} parent=107 // pred_check
          %p925 = pneg %p294
        $region150: #{enhanced_molecular_graph_forward.7} parent=107 // pred_check_branch
          %927 = sbr.rel (%p925) target = $region152
        $region151: #{enhanced_molecular_graph_forward.7} parent=107 // pred_region
          %928 = dma.done [#allocation19], 8192
        $region152: #{enhanced_molecular_graph_forward.7} parent=107 // pred_fallthru
          _
        // Predicated region
        $region153: #{enhanced_molecular_graph_forward.7} parent=107 // pred_check
          %p929 = pneg %p315
        $region154: #{enhanced_molecular_graph_forward.7} parent=107 // pred_check_branch
          %931 = sbr.rel (%p929) target = $region156
        $region155: #{enhanced_molecular_graph_forward.7} parent=107 // pred_region
          %932 = dma.done [#allocation22], 256
        $region156: #{enhanced_molecular_graph_forward.7} parent=107 // pred_fallthru
          _
        // Predicated region
        $region157: #{enhanced_molecular_graph_forward.7} parent=107 // pred_check
          %p933 = pneg %p336
        $region158: #{enhanced_molecular_graph_forward.7} parent=107 // pred_check_branch
          %935 = sbr.rel (%p933) target = $region160
        $region159: #{enhanced_molecular_graph_forward.7} parent=107 // pred_region
          %936 = dma.done [#allocation22], 256
        $region160: #{enhanced_molecular_graph_forward.7} parent=107 // pred_fallthru
          _
        // Predicated region
        $region161: #{enhanced_molecular_graph_forward.7} parent=107 // pred_check
          %p937 = pneg %p357
        $region162: #{enhanced_molecular_graph_forward.7} parent=107 // pred_check_branch
          %939 = sbr.rel (%p937) target = $region164
        $region163: #{enhanced_molecular_graph_forward.7} parent=107 // pred_region
          %940 = dma.done [#allocation25], 16
        $region164: #{enhanced_molecular_graph_forward.7} parent=107 // pred_fallthru
          _
        // Predicated region
        $region165: #{enhanced_molecular_graph_forward.7} parent=107 // pred_check
          %p941 = pneg %p378
        $region166: #{enhanced_molecular_graph_forward.7} parent=107 // pred_check_branch
          %943 = sbr.rel (%p941) target = $region168
        $region167: #{enhanced_molecular_graph_forward.7} parent=107 // pred_region
          %944 = dma.done [#allocation25], 16
        $region168: #{enhanced_molecular_graph_forward.7} parent=107 // pred_fallthru
          _
        // Predicated region
        $region169: #{enhanced_molecular_graph_forward.7} parent=107 // pred_check
          %p945 = pneg %p399
        $region170: #{enhanced_molecular_graph_forward.7} parent=107 // pred_check_branch
          %947 = sbr.rel (%p945) target = $region172
        $region171: #{enhanced_molecular_graph_forward.7} parent=107 // pred_region
          %948 = dma.done [#allocation28], 16
        $region172: #{enhanced_molecular_graph_forward.7} parent=107 // pred_fallthru
          _
        // Predicated region
        $region173: #{enhanced_molecular_graph_forward.7} parent=107 // pred_check
          %p949 = pneg %p420
        $region174: #{enhanced_molecular_graph_forward.7} parent=107 // pred_check_branch
          %951 = sbr.rel (%p949) target = $region176
        $region175: #{enhanced_molecular_graph_forward.7} parent=107 // pred_region
          %952 = dma.done [#allocation28], 16
        $region176: #{enhanced_molecular_graph_forward.7} parent=107 // pred_fallthru
          _
        // Predicated region
        $region177: #{enhanced_molecular_graph_forward.7} parent=107 // pred_check
          %p953 = pneg %p441
        $region178: #{enhanced_molecular_graph_forward.7} parent=107 // pred_check_branch
          %955 = sbr.rel (%p953) target = $region180
        $region179: #{enhanced_molecular_graph_forward.7} parent=107 // pred_region
          %956 = dma.done [#allocation31], 16
        $region180: #{enhanced_molecular_graph_forward.7} parent=107 // pred_fallthru
          _
        // Predicated region
        $region181: #{enhanced_molecular_graph_forward.7} parent=107 // pred_check
          %p957 = pneg %p462
        $region182: #{enhanced_molecular_graph_forward.7} parent=107 // pred_check_branch
          %959 = sbr.rel (%p957) target = $region184
        $region183: #{enhanced_molecular_graph_forward.7} parent=107 // pred_region
          %960 = dma.done [#allocation31], 256
        $region184: #{enhanced_molecular_graph_forward.7} parent=107 // pred_fallthru
          _
        // Predicated region
        $region185: #{enhanced_molecular_graph_forward.7} parent=107 // pred_check
          %p961 = pneg %p483
        $region186: #{enhanced_molecular_graph_forward.7} parent=107 // pred_check_branch
          %963 = sbr.rel (%p961) target = $region188
        $region187: #{enhanced_molecular_graph_forward.7} parent=107 // pred_region
          %964 = dma.done [#allocation34], 256
        $region188: #{enhanced_molecular_graph_forward.7} parent=107 // pred_fallthru
          _
        // Predicated region
        $region189: #{enhanced_molecular_graph_forward.7} parent=107 // pred_check
          %p965 = pneg %p504
        $region190: #{enhanced_molecular_graph_forward.7} parent=107 // pred_check_branch
          %967 = sbr.rel (%p965) target = $region192
        $region191: #{enhanced_molecular_graph_forward.7} parent=107 // pred_region
          %968 = dma.done [#allocation34], 256
        $region192: #{enhanced_molecular_graph_forward.7} parent=107 // pred_fallthru
          _
        // Predicated region
        $region193: #{enhanced_molecular_graph_forward.7} parent=107 // pred_check
          %p969 = pneg %p525
        $region194: #{enhanced_molecular_graph_forward.7} parent=107 // pred_check_branch
          %971 = sbr.rel (%p969) target = $region196
        $region195: #{enhanced_molecular_graph_forward.7} parent=107 // pred_region
          %972 = dma.done [#allocation37], 256
        $region196: #{enhanced_molecular_graph_forward.7} parent=107 // pred_fallthru
          _
        %s973 = sand.u32 %s61, 1
        %s974 = scalar_lea.sflag [#allocation4], %s973
        %s975 = sand.u32 %s61, 1
        %s976 = smul.addr %s975, 8
        %s977 = scalar_lea.vmem [#allocation3], %s976
        %p978 = pneg %p74
        %p979 = pneg %p71
        %s980 = sand.u32 %s53, 1
        %s981 = scalar_lea.sflag [#allocation7], %s980
        %s982 = sand.u32 %s87, 1
        %s983 = smul.addr %s982, 8
        %s984 = scalar_lea.vmem [#allocation6], %s983
        %p985 = pneg %p100
        %p986 = pneg %p97
        %s987 = sand.u32 %s53, 1
        %s988 = scalar_lea.sflag [#allocation7], %s987
        %s989 = sand.u32 %s113, 1
        %s990 = scalar_lea.vmem [#allocation8], %s989
        %p991 = pneg %p126
        %p992 = pneg %p123
        %p993 = pneg %p147
        %p994 = pneg %p144
        %p995 = pneg %p168
        %p996 = pneg %p165
        %p997 = pneg %p189
        %p998 = pneg %p186
        %p999 = pneg %p210
        %p1000 = pneg %p207
        %p1001 = pneg %p231
        %p1002 = pneg %p228
        %p1003 = pneg %p252
        %p1004 = pneg %p249
        %p1005 = pneg %p273
        %p1006 = pneg %p270
        %p1007 = pneg %p294
        %p1008 = pneg %p291
        %p1009 = pneg %p315
        %p1010 = pneg %p312
        %p1011 = pneg %p336
        %p1012 = pneg %p333
        %p1013 = pneg %p357
        %p1014 = pneg %p354
        %p1015 = pneg %p378
        %p1016 = pneg %p375
        %p1017 = pneg %p399
        %p1018 = pneg %p396
        %p1019 = pneg %p420
        %p1020 = pneg %p417
        %p1021 = pneg %p441
        %p1022 = pneg %p438
        %p1023 = pneg %p462
        %p1024 = pneg %p459
        %p1025 = pneg %p483
        %p1026 = pneg %p480
        %p1027 = pneg %p504
        %p1028 = pneg %p501
        %p1029 = pneg %p525
        %p1030 = pneg %p522
        %p1031 = pneg %p546
        %p1032 = pneg %p543
        %p1033 = pneg %p567
        %p1034 = pneg %p564
        %p1036 = scmp.eq.s32.totalorder %s53, 0
        // Predicated region
        $region197: #{enhanced_molecular_graph_forward.7} parent=107 // pred_check
          %p1037 = pneg %p1036
        $region198: #{enhanced_molecular_graph_forward.7} parent=107 // pred_check_branch
          %1039 = sbr.rel (%p1037) target = $region200
        $region199: #{enhanced_molecular_graph_forward.7} parent=107 // pred_region
          %vm1040 = vcmask 261120
          %1041 = vst.msk [vmem:[#allocation2] sm:$0xff] %vm1040, 0.0
          %1042 = vst.msk [vmem:[#allocation2 + $0x8] sm:$0xff] %vm1040, 0.0
        $region200: #{enhanced_molecular_graph_forward.7} parent=107 // pred_fallthru
          _
        %v1043 = vlaneseq
        %v1044 = vand.u32 %v1043, 127
        %v1045 = vld [vmem:[%s884] sm:$0xff]
        %1046 = vset.pattern.permute.xlu0 0
        %1047 = vperm.xlu0 %1046, %v1045
        %v1048 = vpop.permute.xlu0 %1047
        %vm1049 = vcmp.eq.s32.totalorder %v1048, %v1044
        %v1050 = vsel %vm1049, 1, 0
        %v1051 = vcvt.s32.f32 %v1050
        %v1052 = vpack.c.bf16 %v1051, %v1051
        %v1053 = vld [vmem:[#allocation9] sm:$0xff]
        %v1054 = vld [vmem:[#allocation9 + $0x8] sm:$0xff]
        %v1055 = vpack.c.bf16 %v1054, %v1053
        %vm1056 = vcmask 130048
        %v1058 = vsel %vm1056, %v1052, 0
        %1060 = vmatprep.subr.bf16.mxu0 0
        %1061 = vmatpush1.bf16.msra.mxu0 %v1055
        %1062 = vmatprep.subr.bf16.mxu0 0
        %1063 = vmatpush1.bf16.msra.mxu0 0
        %1064 = vmatprep.subr.bf16.mxu0 0
        %1065 = vmatpush1.bf16.msra.mxu0 0
        %1066 = vmatprep.subr.bf16.mxu0 0
        %1067 = vmatpush1.bf16.msra.mxu0 0
        %1068 = vmatprep.subr.bf16.mxu0 0
        %1069 = vmatpush1.bf16.msra.mxu0 0
        %1070 = vmatprep.subr.bf16.mxu0 0
        %1071 = vmatpush1.bf16.msra.mxu0 0
        %1072 = vmatprep.subr.bf16.mxu0 0
        %1073 = vmatpush1.bf16.msra.mxu0 0
        %1074 = vmatprep.subr.bf16.mxu0 0
        %1075 = vmatpush1.bf16.msra.mxu0 0
        %1076 = vmatprep.subr.bf16.mxu0 0
        %1077 = vmatpush1.bf16.msra.mxu0 0
        %1078 = vmatprep.subr.bf16.mxu0 0
        %1079 = vmatpush1.bf16.msra.mxu0 0
        %1080 = vmatprep.subr.bf16.mxu0 0
        %1081 = vmatpush1.bf16.msra.mxu0 0
        %1082 = vmatprep.subr.bf16.mxu0 0
        %1083 = vmatpush1.bf16.msra.mxu0 0
        %1084 = vmatprep.subr.bf16.mxu0 0
        %1085 = vmatpush1.bf16.msra.mxu0 0
        %1086 = vmatprep.subr.bf16.mxu0 0
        %1087 = vmatpush1.bf16.msra.mxu0 0
        %1088 = vmatprep.subr.bf16.mxu0 0
        %1089 = vmatpush1.bf16.msra.mxu0 0
        %1090 = vmatprep.subr.bf16.mxu0 0
        %1091 = vmatpush1.bf16.msra.mxu0 0
        %1092 = vmatprep.mubr.bf16.mxu0 0
        %1093 = vmatmul.mubr.bf16.gmra.mrb[0].mxu0 %v1058
        %v1094 = vpop.f32.mrb[0].mxu0
        %v1095 = vadd.f32 0.0, %v1094
        %v1096 = vpop.f32.mrb[0].mxu0
        %v1097 = vpop.f32.mrb[0].mxu0
        %v1098 = vpop.f32.mrb[0].mxu0
        %1099 = vdwg.mxu0
        %v1100 = vld [vmem:[%s875] sm:$0xff]
        %v1101 = vpack.c.bf16 %v1100, %v1100
        %v1102 = vld [vmem:[#allocation11] sm:$0xf]
        %v1103 = vld [vmem:[#allocation12] sm:$0x1]
        %v1105 = vlaneseq
        %v1106 = vshrl.u32 %v1105, 7
        %v1107 = vsub.s32 0, %v1106
        %v1108 = vrot.slane %v1103, %v1107
        %vm1110 = vcmask 64512
        %v1112 = vsel %vm1110, %v1101, 0
        %vm1114 = vcmask 1043456
        %v1116 = vsel %vm1114, %v1102, 0
        %1118 = vmatprep.subr.bf16.mxu0 0
        %1119 = vmatpush1.bf16.msra.mxu0 %v1116
        %1120 = vmatprep.subr.bf16.mxu0 0
        %1121 = vmatpush1.bf16.msra.mxu0 0
        %1122 = vmatprep.subr.bf16.mxu0 0
        %1123 = vmatpush1.bf16.msra.mxu0 0
        %1124 = vmatprep.subr.bf16.mxu0 0
        %1125 = vmatpush1.bf16.msra.mxu0 0
        %1126 = vmatprep.subr.bf16.mxu0 0
        %1127 = vmatpush1.bf16.msra.mxu0 0
        %1128 = vmatprep.subr.bf16.mxu0 0
        %1129 = vmatpush1.bf16.msra.mxu0 0
        %1130 = vmatprep.subr.bf16.mxu0 0
        %1131 = vmatpush1.bf16.msra.mxu0 0
        %1132 = vmatprep.subr.bf16.mxu0 0
        %1133 = vmatpush1.bf16.msra.mxu0 0
        %1134 = vmatprep.subr.bf16.mxu0 0
        %1135 = vmatpush1.bf16.msra.mxu0 0
        %1136 = vmatprep.subr.bf16.mxu0 0
        %1137 = vmatpush1.bf16.msra.mxu0 0
        %1138 = vmatprep.subr.bf16.mxu0 0
        %1139 = vmatpush1.bf16.msra.mxu0 0
        %1140 = vmatprep.subr.bf16.mxu0 0
        %1141 = vmatpush1.bf16.msra.mxu0 0
        %1142 = vmatprep.subr.bf16.mxu0 0
        %1143 = vmatpush1.bf16.msra.mxu0 0
        %1144 = vmatprep.subr.bf16.mxu0 0
        %1145 = vmatpush1.bf16.msra.mxu0 0
        %1146 = vmatprep.subr.bf16.mxu0 0
        %1147 = vmatpush1.bf16.msra.mxu0 0
        %1148 = vmatprep.subr.bf16.mxu0 0
        %1149 = vmatpush1.bf16.msra.mxu0 0
        %1150 = vmatprep.mubr.bf16.mxu0 0
        %1151 = vmatmul.mubr.bf16.gmra.mrb[0].mxu0 %v1112
        %v1152 = vpop.f32.mrb[0].mxu0
        %v1153 = vadd.f32 %v1108, %v1152
        %v1154 = vpop.f32.mrb[0].mxu0
        %v1155 = vpop.f32.mrb[0].mxu0
        %v1156 = vpop.f32.mrb[0].mxu0
        %1157 = vdwg.mxu0
        %v1158 = vld [vmem:[#allocation14] sm:$0x1]
        %v1159 = vld [vmem:[#allocation15] sm:$0x1]
        %v1160 = vld [vmem:[#allocation17] sm:$0x1]
        %v1161 = vld [vmem:[#allocation18] sm:$0x1]
        %v1163 = vlaneseq
        %v1164 = vshrl.u32 %v1163, 7
        %v1165 = vsub.s32 0, %v1164
        %v1166 = vrot.slane %v1160, %v1165
        %v1168 = vsub.f32 %v1153, %v1166
        %v1170 = vlaneseq
        %v1171 = vshrl.u32 %v1170, 7
        %v1172 = vsub.s32 0, %v1171
        %v1173 = vrot.slane %v1158, %v1172
        %v1175 = vmul.f32 %v1168, %v1173
        %v1176 = vadd.f32 %v1161, 1e-05
        %v1177 = vrsqrt.pop %v1176
        %v1179 = vlaneseq
        %v1180 = vshrl.u32 %v1179, 7
        %v1181 = vsub.s32 0, %v1180
        %v1182 = vrot.slane %v1177, %v1181
        %v1184 = vmul.f32 %v1175, %v1182
        %v1186 = vlaneseq
        %v1187 = vshrl.u32 %v1186, 7
        %v1188 = vsub.s32 0, %v1187
        %v1189 = vrot.slane %v1159, %v1188
        %v1191 = vadd.f32 %v1184, %v1189
        %v1192 = vmax.f32 %v1191, 0.0
        %v1193 = vpack.c.bf16 %v1192, %v1192
        %v1194 = vpack.c.bf16 %v1095, %v1095
        %v1195 = vld [vmem:[#allocation21] sm:$0xf]
        %v1196 = vld [vmem:[#allocation21 + $0x4] sm:$0xf]
        %v1197 = vld [vmem:[#allocation21 + $0x8] sm:$0xf]
        %v1198 = vld [vmem:[#allocation21 + $0xc] sm:$0xf]
        %v1199 = vld [vmem:[#allocation20] sm:$0xf]
        %v1200 = vld [vmem:[#allocation20 + $0x4] sm:$0xf]
        %v1201 = vld [vmem:[#allocation20 + $0x8] sm:$0xf]
        %v1202 = vld [vmem:[#allocation20 + $0xc] sm:$0xf]
        %v1207 = vunpack.c.l.b16 %v1199
        %v1208 = vunpack.c.l.b16 %v1200
        %v1209 = vunpack.c.l.b16 %v1201
        %v1210 = vunpack.c.l.b16 %v1202
        %v1211 = vpack.c.b16 %v1208, %v1207
        %v1212 = vpack.c.b16 %v1210, %v1209
        %vm1215 = vcmask 261120
        %v1217 = vsel %vm1215, %v1193, 0
        %1219 = vmatprep.subr.bf16.mxu0 0
        %1220 = vmatpush1.bf16.msra.mxu0 %v1211
        %1221 = vmatprep.subr.bf16.mxu0 0
        %1222 = vmatpush1.bf16.msra.mxu0 %v1212
        %1223 = vmatprep.subr.bf16.mxu0 0
        %1224 = vmatpush1.bf16.msra.mxu0 0
        %1225 = vmatprep.subr.bf16.mxu0 0
        %1226 = vmatpush1.bf16.msra.mxu0 0
        %1227 = vmatprep.subr.bf16.mxu0 0
        %1228 = vmatpush1.bf16.msra.mxu0 0
        %1229 = vmatprep.subr.bf16.mxu0 0
        %1230 = vmatpush1.bf16.msra.mxu0 0
        %1231 = vmatprep.subr.bf16.mxu0 0
        %1232 = vmatpush1.bf16.msra.mxu0 0
        %1233 = vmatprep.subr.bf16.mxu0 0
        %1234 = vmatpush1.bf16.msra.mxu0 0
        %1235 = vmatprep.subr.bf16.mxu0 0
        %1236 = vmatpush1.bf16.msra.mxu0 0
        %1237 = vmatprep.subr.bf16.mxu0 0
        %1238 = vmatpush1.bf16.msra.mxu0 0
        %1239 = vmatprep.subr.bf16.mxu0 0
        %1240 = vmatpush1.bf16.msra.mxu0 0
        %1241 = vmatprep.subr.bf16.mxu0 0
        %1242 = vmatpush1.bf16.msra.mxu0 0
        %1243 = vmatprep.subr.bf16.mxu0 0
        %1244 = vmatpush1.bf16.msra.mxu0 0
        %1245 = vmatprep.subr.bf16.mxu0 0
        %1246 = vmatpush1.bf16.msra.mxu0 0
        %1247 = vmatprep.subr.bf16.mxu0 0
        %1248 = vmatpush1.bf16.msra.mxu0 0
        %1249 = vmatprep.subr.bf16.mxu0 0
        %1250 = vmatpush1.bf16.msra.mxu0 0
        %1251 = vmatprep.mubr.bf16.mxu0 0
        %1252 = vmatmul.mubr.bf16.gmra.mrb[0].mxu0 %v1217
        %v1253 = vpop.f32.mrb[0].mxu0
        %v1254 = vadd.f32 0.0, %v1253
        %v1255 = vpop.f32.mrb[0].mxu0
        %v1256 = vpop.f32.mrb[0].mxu0
        %v1257 = vpop.f32.mrb[0].mxu0
        %1258 = vdwg.mxu0
        %1260 = vset.pattern.permute.xlu0 0
        %1261 = vperm.xlu0 %1260, %v1095
        %v1262 = vpop.permute.xlu0 %1261
        %v1264 = vmul.f32 %v1262, %v1254
        %v1269 = vunpack.c.l.b16 %v1195
        %v1270 = vunpack.c.l.b16 %v1196
        %v1271 = vunpack.c.l.b16 %v1197
        %v1272 = vunpack.c.l.b16 %v1198
        %v1273 = vpack.c.b16 %v1270, %v1269
        %v1274 = vpack.c.b16 %v1272, %v1271
        %v1278 = vsel %vm1215, %v1194, 0
        %1280 = vmatprep.subr.bf16.mxu0 0
        %1281 = vmatpush1.bf16.msra.mxu0 %v1273
        %1282 = vmatprep.subr.bf16.mxu0 0
        %1283 = vmatpush1.bf16.msra.mxu0 %v1274
        %1284 = vmatprep.subr.bf16.mxu0 0
        %1285 = vmatpush1.bf16.msra.mxu0 0
        %1286 = vmatprep.subr.bf16.mxu0 0
        %1287 = vmatpush1.bf16.msra.mxu0 0
        %1288 = vmatprep.subr.bf16.mxu0 0
        %1289 = vmatpush1.bf16.msra.mxu0 0
        %1290 = vmatprep.subr.bf16.mxu0 0
        %1291 = vmatpush1.bf16.msra.mxu0 0
        %1292 = vmatprep.subr.bf16.mxu0 0
        %1293 = vmatpush1.bf16.msra.mxu0 0
        %1294 = vmatprep.subr.bf16.mxu0 0
        %1295 = vmatpush1.bf16.msra.mxu0 0
        %1296 = vmatprep.subr.bf16.mxu0 0
        %1297 = vmatpush1.bf16.msra.mxu0 0
        %1298 = vmatprep.subr.bf16.mxu0 0
        %1299 = vmatpush1.bf16.msra.mxu0 0
        %1300 = vmatprep.subr.bf16.mxu0 0
        %1301 = vmatpush1.bf16.msra.mxu0 0
        %1302 = vmatprep.subr.bf16.mxu0 0
        %1303 = vmatpush1.bf16.msra.mxu0 0
        %1304 = vmatprep.subr.bf16.mxu0 0
        %1305 = vmatpush1.bf16.msra.mxu0 0
        %1306 = vmatprep.subr.bf16.mxu0 0
        %1307 = vmatpush1.bf16.msra.mxu0 0
        %1308 = vmatprep.subr.bf16.mxu0 0
        %1309 = vmatpush1.bf16.msra.mxu0 0
        %1310 = vmatprep.subr.bf16.mxu0 0
        %1311 = vmatpush1.bf16.msra.mxu0 0
        %1312 = vmatprep.mubr.bf16.mxu0 0
        %1313 = vmatmul.mubr.bf16.gmra.mrb[0].mxu0 %v1278
        %v1314 = vpop.f32.mrb[0].mxu0
        %v1315 = vadd.f32 %v1264, %v1314
        %v1316 = vpop.f32.mrb[0].mxu0
        %v1317 = vpop.f32.mrb[0].mxu0
        %v1318 = vpop.f32.mrb[0].mxu0
        %1319 = vdwg.mxu0
        %s1320 = scalar_lea.vmem [#allocation20], 16
        %v1321 = vld [vmem:[%s1320] sm:$0xf]
        %v1322 = vld [vmem:[%s1320 + $0x4] sm:$0xf]
        %v1323 = vld [vmem:[%s1320 + $0x8] sm:$0xf]
        %v1324 = vld [vmem:[%s1320 + $0xc] sm:$0xf]
        %v1329 = vunpack.c.l.b16 %v1321
        %v1330 = vunpack.c.l.b16 %v1322
        %v1331 = vunpack.c.l.b16 %v1323
        %v1332 = vunpack.c.l.b16 %v1324
        %v1333 = vpack.c.b16 %v1330, %v1329
        %v1334 = vpack.c.b16 %v1332, %v1331
        %1337 = vmatprep.subr.bf16.mxu0 0
        %1338 = vmatpush1.bf16.msra.mxu0 %v1333
        %1339 = vmatprep.subr.bf16.mxu0 0
        %1340 = vmatpush1.bf16.msra.mxu0 %v1334
        %1341 = vmatprep.subr.bf16.mxu0 0
        %1342 = vmatpush1.bf16.msra.mxu0 0
        %1343 = vmatprep.subr.bf16.mxu0 0
        %1344 = vmatpush1.bf16.msra.mxu0 0
        %1345 = vmatprep.subr.bf16.mxu0 0
        %1346 = vmatpush1.bf16.msra.mxu0 0
        %1347 = vmatprep.subr.bf16.mxu0 0
        %1348 = vmatpush1.bf16.msra.mxu0 0
        %1349 = vmatprep.subr.bf16.mxu0 0
        %1350 = vmatpush1.bf16.msra.mxu0 0
        %1351 = vmatprep.subr.bf16.mxu0 0
        %1352 = vmatpush1.bf16.msra.mxu0 0
        %1353 = vmatprep.subr.bf16.mxu0 0
        %1354 = vmatpush1.bf16.msra.mxu0 0
        %1355 = vmatprep.subr.bf16.mxu0 0
        %1356 = vmatpush1.bf16.msra.mxu0 0
        %1357 = vmatprep.subr.bf16.mxu0 0
        %1358 = vmatpush1.bf16.msra.mxu0 0
        %1359 = vmatprep.subr.bf16.mxu0 0
        %1360 = vmatpush1.bf16.msra.mxu0 0
        %1361 = vmatprep.subr.bf16.mxu0 0
        %1362 = vmatpush1.bf16.msra.mxu0 0
        %1363 = vmatprep.subr.bf16.mxu0 0
        %1364 = vmatpush1.bf16.msra.mxu0 0
        %1365 = vmatprep.subr.bf16.mxu0 0
        %1366 = vmatpush1.bf16.msra.mxu0 0
        %1367 = vmatprep.subr.bf16.mxu0 0
        %1368 = vmatpush1.bf16.msra.mxu0 0
        %1369 = vmatprep.mubr.bf16.mxu0 0
        %1370 = vmatmul.mubr.bf16.gmra.mrb[0].mxu0 %v1217
        %v1371 = vpop.f32.mrb[0].mxu0
        %v1372 = vadd.f32 0.0, %v1371
        %v1373 = vpop.f32.mrb[0].mxu0
        %v1374 = vpop.f32.mrb[0].mxu0
        %v1375 = vpop.f32.mrb[0].mxu0
        %1376 = vdwg.mxu0
        %1377 = vset.pattern.permute.xlu0 1
        %1378 = vperm.xlu0 %1377, %v1095
        %v1379 = vpop.permute.xlu0 %1378
        %v1381 = vmul.f32 %v1379, %v1372
        %v1382 = vadd.f32 %v1315, %v1381
        %s1383 = scalar_lea.vmem [#allocation20], 32
        %v1384 = vld [vmem:[%s1383] sm:$0xf]
        %v1385 = vld [vmem:[%s1383 + $0x4] sm:$0xf]
        %v1386 = vld [vmem:[%s1383 + $0x8] sm:$0xf]
        %v1387 = vld [vmem:[%s1383 + $0xc] sm:$0xf]
        %v1392 = vunpack.c.l.b16 %v1384
        %v1393 = vunpack.c.l.b16 %v1385
        %v1394 = vunpack.c.l.b16 %v1386
        %v1395 = vunpack.c.l.b16 %v1387
        %v1396 = vpack.c.b16 %v1393, %v1392
        %v1397 = vpack.c.b16 %v1395, %v1394
        %1400 = vmatprep.subr.bf16.mxu0 0
        %1401 = vmatpush1.bf16.msra.mxu0 %v1396
        %1402 = vmatprep.subr.bf16.mxu0 0
        %1403 = vmatpush1.bf16.msra.mxu0 %v1397
        %1404 = vmatprep.subr.bf16.mxu0 0
        %1405 = vmatpush1.bf16.msra.mxu0 0
        %1406 = vmatprep.subr.bf16.mxu0 0
        %1407 = vmatpush1.bf16.msra.mxu0 0
        %1408 = vmatprep.subr.bf16.mxu0 0
        %1409 = vmatpush1.bf16.msra.mxu0 0
        %1410 = vmatprep.subr.bf16.mxu0 0
        %1411 = vmatpush1.bf16.msra.mxu0 0
        %1412 = vmatprep.subr.bf16.mxu0 0
        %1413 = vmatpush1.bf16.msra.mxu0 0
        %1414 = vmatprep.subr.bf16.mxu0 0
        %1415 = vmatpush1.bf16.msra.mxu0 0
        %1416 = vmatprep.subr.bf16.mxu0 0
        %1417 = vmatpush1.bf16.msra.mxu0 0
        %1418 = vmatprep.subr.bf16.mxu0 0
        %1419 = vmatpush1.bf16.msra.mxu0 0
        %1420 = vmatprep.subr.bf16.mxu0 0
        %1421 = vmatpush1.bf16.msra.mxu0 0
        %1422 = vmatprep.subr.bf16.mxu0 0
        %1423 = vmatpush1.bf16.msra.mxu0 0
        %1424 = vmatprep.subr.bf16.mxu0 0
        %1425 = vmatpush1.bf16.msra.mxu0 0
        %1426 = vmatprep.subr.bf16.mxu0 0
        %1427 = vmatpush1.bf16.msra.mxu0 0
        %1428 = vmatprep.subr.bf16.mxu0 0
        %1429 = vmatpush1.bf16.msra.mxu0 0
        %1430 = vmatprep.subr.bf16.mxu0 0
        %1431 = vmatpush1.bf16.msra.mxu0 0
        %1432 = vmatprep.mubr.bf16.mxu0 0
        %1433 = vmatmul.mubr.bf16.gmra.mrb[0].mxu0 %v1217
        %v1434 = vpop.f32.mrb[0].mxu0
        %v1435 = vadd.f32 0.0, %v1434
        %v1436 = vpop.f32.mrb[0].mxu0
        %v1437 = vpop.f32.mrb[0].mxu0
        %v1438 = vpop.f32.mrb[0].mxu0
        %1439 = vdwg.mxu0
        %1440 = vset.pattern.permute.xlu0 2
        %1441 = vperm.xlu0 %1440, %v1095
        %v1442 = vpop.permute.xlu0 %1441
        %v1444 = vmul.f32 %v1442, %v1435
        %v1445 = vadd.f32 %v1382, %v1444
        %s1446 = scalar_lea.vmem [#allocation20], 48
        %v1447 = vld [vmem:[%s1446] sm:$0xf]
        %v1448 = vld [vmem:[%s1446 + $0x4] sm:$0xf]
        %v1449 = vld [vmem:[%s1446 + $0x8] sm:$0xf]
        %v1450 = vld [vmem:[%s1446 + $0xc] sm:$0xf]
        %v1455 = vunpack.c.l.b16 %v1447
        %v1456 = vunpack.c.l.b16 %v1448
        %v1457 = vunpack.c.l.b16 %v1449
        %v1458 = vunpack.c.l.b16 %v1450
        %v1459 = vpack.c.b16 %v1456, %v1455
        %v1460 = vpack.c.b16 %v1458, %v1457
        %1463 = vmatprep.subr.bf16.mxu0 0
        %1464 = vmatpush1.bf16.msra.mxu0 %v1459
        %1465 = vmatprep.subr.bf16.mxu0 0
        %1466 = vmatpush1.bf16.msra.mxu0 %v1460
        %1467 = vmatprep.subr.bf16.mxu0 0
        %1468 = vmatpush1.bf16.msra.mxu0 0
        %1469 = vmatprep.subr.bf16.mxu0 0
        %1470 = vmatpush1.bf16.msra.mxu0 0
        %1471 = vmatprep.subr.bf16.mxu0 0
        %1472 = vmatpush1.bf16.msra.mxu0 0
        %1473 = vmatprep.subr.bf16.mxu0 0
        %1474 = vmatpush1.bf16.msra.mxu0 0
        %1475 = vmatprep.subr.bf16.mxu0 0
        %1476 = vmatpush1.bf16.msra.mxu0 0
        %1477 = vmatprep.subr.bf16.mxu0 0
        %1478 = vmatpush1.bf16.msra.mxu0 0
        %1479 = vmatprep.subr.bf16.mxu0 0
        %1480 = vmatpush1.bf16.msra.mxu0 0
        %1481 = vmatprep.subr.bf16.mxu0 0
        %1482 = vmatpush1.bf16.msra.mxu0 0
        %1483 = vmatprep.subr.bf16.mxu0 0
        %1484 = vmatpush1.bf16.msra.mxu0 0
        %1485 = vmatprep.subr.bf16.mxu0 0
        %1486 = vmatpush1.bf16.msra.mxu0 0
        %1487 = vmatprep.subr.bf16.mxu0 0
        %1488 = vmatpush1.bf16.msra.mxu0 0
        %1489 = vmatprep.subr.bf16.mxu0 0
        %1490 = vmatpush1.bf16.msra.mxu0 0
        %1491 = vmatprep.subr.bf16.mxu0 0
        %1492 = vmatpush1.bf16.msra.mxu0 0
        %1493 = vmatprep.subr.bf16.mxu0 0
        %1494 = vmatpush1.bf16.msra.mxu0 0
        %1495 = vmatprep.mubr.bf16.mxu0 0
        %1496 = vmatmul.mubr.bf16.gmra.mrb[0].mxu0 %v1217
        %v1497 = vpop.f32.mrb[0].mxu0
        %v1498 = vadd.f32 0.0, %v1497
        %v1499 = vpop.f32.mrb[0].mxu0
        %v1500 = vpop.f32.mrb[0].mxu0
        %v1501 = vpop.f32.mrb[0].mxu0
        %1502 = vdwg.mxu0
        %1503 = vset.pattern.permute.xlu0 3
        %1504 = vperm.xlu0 %1503, %v1095
        %v1505 = vpop.permute.xlu0 %1504
        %v1507 = vmul.f32 %v1505, %v1498
        %v1508 = vadd.f32 %v1445, %v1507
        %s1509 = scalar_lea.vmem [#allocation20], 64
        %v1510 = vld [vmem:[%s1509] sm:$0xf]
        %v1511 = vld [vmem:[%s1509 + $0x4] sm:$0xf]
        %v1512 = vld [vmem:[%s1509 + $0x8] sm:$0xf]
        %v1513 = vld [vmem:[%s1509 + $0xc] sm:$0xf]
        %v1518 = vunpack.c.l.b16 %v1510
        %v1519 = vunpack.c.l.b16 %v1511
        %v1520 = vunpack.c.l.b16 %v1512
        %v1521 = vunpack.c.l.b16 %v1513
        %v1522 = vpack.c.b16 %v1519, %v1518
        %v1523 = vpack.c.b16 %v1521, %v1520
        %1526 = vmatprep.subr.bf16.mxu0 0
        %1527 = vmatpush1.bf16.msra.mxu0 %v1522
        %1528 = vmatprep.subr.bf16.mxu0 0
        %1529 = vmatpush1.bf16.msra.mxu0 %v1523
        %1530 = vmatprep.subr.bf16.mxu0 0
        %1531 = vmatpush1.bf16.msra.mxu0 0
        %1532 = vmatprep.subr.bf16.mxu0 0
        %1533 = vmatpush1.bf16.msra.mxu0 0
        %1534 = vmatprep.subr.bf16.mxu0 0
        %1535 = vmatpush1.bf16.msra.mxu0 0
        %1536 = vmatprep.subr.bf16.mxu0 0
        %1537 = vmatpush1.bf16.msra.mxu0 0
        %1538 = vmatprep.subr.bf16.mxu0 0
        %1539 = vmatpush1.bf16.msra.mxu0 0
        %1540 = vmatprep.subr.bf16.mxu0 0
        %1541 = vmatpush1.bf16.msra.mxu0 0
        %1542 = vmatprep.subr.bf16.mxu0 0
        %1543 = vmatpush1.bf16.msra.mxu0 0
        %1544 = vmatprep.subr.bf16.mxu0 0
        %1545 = vmatpush1.bf16.msra.mxu0 0
        %1546 = vmatprep.subr.bf16.mxu0 0
        %1547 = vmatpush1.bf16.msra.mxu0 0
        %1548 = vmatprep.subr.bf16.mxu0 0
        %1549 = vmatpush1.bf16.msra.mxu0 0
        %1550 = vmatprep.subr.bf16.mxu0 0
        %1551 = vmatpush1.bf16.msra.mxu0 0
        %1552 = vmatprep.subr.bf16.mxu0 0
        %1553 = vmatpush1.bf16.msra.mxu0 0
        %1554 = vmatprep.subr.bf16.mxu0 0
        %1555 = vmatpush1.bf16.msra.mxu0 0
        %1556 = vmatprep.subr.bf16.mxu0 0
        %1557 = vmatpush1.bf16.msra.mxu0 0
        %1558 = vmatprep.mubr.bf16.mxu0 0
        %1559 = vmatmul.mubr.bf16.gmra.mrb[0].mxu0 %v1217
        %v1560 = vpop.f32.mrb[0].mxu0
        %v1561 = vadd.f32 0.0, %v1560
        %v1562 = vpop.f32.mrb[0].mxu0
        %v1563 = vpop.f32.mrb[0].mxu0
        %v1564 = vpop.f32.mrb[0].mxu0
        %1565 = vdwg.mxu0
        %1566 = vset.pattern.permute.xlu0 4
        %1567 = vperm.xlu0 %1566, %v1095
        %v1568 = vpop.permute.xlu0 %1567
        %v1570 = vmul.f32 %v1568, %v1561
        %v1571 = vadd.f32 %v1508, %v1570
        %s1572 = scalar_lea.vmem [#allocation20], 80
        %v1573 = vld [vmem:[%s1572] sm:$0xf]
        %v1574 = vld [vmem:[%s1572 + $0x4] sm:$0xf]
        %v1575 = vld [vmem:[%s1572 + $0x8] sm:$0xf]
        %v1576 = vld [vmem:[%s1572 + $0xc] sm:$0xf]
        %v1581 = vunpack.c.l.b16 %v1573
        %v1582 = vunpack.c.l.b16 %v1574
        %v1583 = vunpack.c.l.b16 %v1575
        %v1584 = vunpack.c.l.b16 %v1576
        %v1585 = vpack.c.b16 %v1582, %v1581
        %v1586 = vpack.c.b16 %v1584, %v1583
        %1589 = vmatprep.subr.bf16.mxu0 0
        %1590 = vmatpush1.bf16.msra.mxu0 %v1585
        %1591 = vmatprep.subr.bf16.mxu0 0
        %1592 = vmatpush1.bf16.msra.mxu0 %v1586
        %1593 = vmatprep.subr.bf16.mxu0 0
        %1594 = vmatpush1.bf16.msra.mxu0 0
        %1595 = vmatprep.subr.bf16.mxu0 0
        %1596 = vmatpush1.bf16.msra.mxu0 0
        %1597 = vmatprep.subr.bf16.mxu0 0
        %1598 = vmatpush1.bf16.msra.mxu0 0
        %1599 = vmatprep.subr.bf16.mxu0 0
        %1600 = vmatpush1.bf16.msra.mxu0 0
        %1601 = vmatprep.subr.bf16.mxu0 0
        %1602 = vmatpush1.bf16.msra.mxu0 0
        %1603 = vmatprep.subr.bf16.mxu0 0
        %1604 = vmatpush1.bf16.msra.mxu0 0
        %1605 = vmatprep.subr.bf16.mxu0 0
        %1606 = vmatpush1.bf16.msra.mxu0 0
        %1607 = vmatprep.subr.bf16.mxu0 0
        %1608 = vmatpush1.bf16.msra.mxu0 0
        %1609 = vmatprep.subr.bf16.mxu0 0
        %1610 = vmatpush1.bf16.msra.mxu0 0
        %1611 = vmatprep.subr.bf16.mxu0 0
        %1612 = vmatpush1.bf16.msra.mxu0 0
        %1613 = vmatprep.subr.bf16.mxu0 0
        %1614 = vmatpush1.bf16.msra.mxu0 0
        %1615 = vmatprep.subr.bf16.mxu0 0
        %1616 = vmatpush1.bf16.msra.mxu0 0
        %1617 = vmatprep.subr.bf16.mxu0 0
        %1618 = vmatpush1.bf16.msra.mxu0 0
        %1619 = vmatprep.subr.bf16.mxu0 0
        %1620 = vmatpush1.bf16.msra.mxu0 0
        %1621 = vmatprep.mubr.bf16.mxu0 0
        %1622 = vmatmul.mubr.bf16.gmra.mrb[0].mxu0 %v1217
        %v1623 = vpop.f32.mrb[0].mxu0
        %v1624 = vadd.f32 0.0, %v1623
        %v1625 = vpop.f32.mrb[0].mxu0
        %v1626 = vpop.f32.mrb[0].mxu0
        %v1627 = vpop.f32.mrb[0].mxu0
        %1628 = vdwg.mxu0
        %1629 = vset.pattern.permute.xlu0 5
        %1630 = vperm.xlu0 %1629, %v1095
        %v1631 = vpop.permute.xlu0 %1630
        %v1633 = vmul.f32 %v1631, %v1624
        %v1634 = vadd.f32 %v1571, %v1633
        %s1635 = scalar_lea.vmem [#allocation20], 96
        %v1636 = vld [vmem:[%s1635] sm:$0xf]
        %v1637 = vld [vmem:[%s1635 + $0x4] sm:$0xf]
        %v1638 = vld [vmem:[%s1635 + $0x8] sm:$0xf]
        %v1639 = vld [vmem:[%s1635 + $0xc] sm:$0xf]
        %v1644 = vunpack.c.l.b16 %v1636
        %v1645 = vunpack.c.l.b16 %v1637
        %v1646 = vunpack.c.l.b16 %v1638
        %v1647 = vunpack.c.l.b16 %v1639
        %v1648 = vpack.c.b16 %v1645, %v1644
        %v1649 = vpack.c.b16 %v1647, %v1646
        %1652 = vmatprep.subr.bf16.mxu0 0
        %1653 = vmatpush1.bf16.msra.mxu0 %v1648
        %1654 = vmatprep.subr.bf16.mxu0 0
        %1655 = vmatpush1.bf16.msra.mxu0 %v1649
        %1656 = vmatprep.subr.bf16.mxu0 0
        %1657 = vmatpush1.bf16.msra.mxu0 0
        %1658 = vmatprep.subr.bf16.mxu0 0
        %1659 = vmatpush1.bf16.msra.mxu0 0
        %1660 = vmatprep.subr.bf16.mxu0 0
        %1661 = vmatpush1.bf16.msra.mxu0 0
        %1662 = vmatprep.subr.bf16.mxu0 0
        %1663 = vmatpush1.bf16.msra.mxu0 0
        %1664 = vmatprep.subr.bf16.mxu0 0
        %1665 = vmatpush1.bf16.msra.mxu0 0
        %1666 = vmatprep.subr.bf16.mxu0 0
        %1667 = vmatpush1.bf16.msra.mxu0 0
        %1668 = vmatprep.subr.bf16.mxu0 0
        %1669 = vmatpush1.bf16.msra.mxu0 0
        %1670 = vmatprep.subr.bf16.mxu0 0
        %1671 = vmatpush1.bf16.msra.mxu0 0
        %1672 = vmatprep.subr.bf16.mxu0 0
        %1673 = vmatpush1.bf16.msra.mxu0 0
        %1674 = vmatprep.subr.bf16.mxu0 0
        %1675 = vmatpush1.bf16.msra.mxu0 0
        %1676 = vmatprep.subr.bf16.mxu0 0
        %1677 = vmatpush1.bf16.msra.mxu0 0
        %1678 = vmatprep.subr.bf16.mxu0 0
        %1679 = vmatpush1.bf16.msra.mxu0 0
        %1680 = vmatprep.subr.bf16.mxu0 0
        %1681 = vmatpush1.bf16.msra.mxu0 0
        %1682 = vmatprep.subr.bf16.mxu0 0
        %1683 = vmatpush1.bf16.msra.mxu0 0
        %1684 = vmatprep.mubr.bf16.mxu0 0
        %1685 = vmatmul.mubr.bf16.gmra.mrb[0].mxu0 %v1217
        %v1686 = vpop.f32.mrb[0].mxu0
        %v1687 = vadd.f32 0.0, %v1686
        %v1688 = vpop.f32.mrb[0].mxu0
        %v1689 = vpop.f32.mrb[0].mxu0
        %v1690 = vpop.f32.mrb[0].mxu0
        %1691 = vdwg.mxu0
        %1692 = vset.pattern.permute.xlu0 6
        %1693 = vperm.xlu0 %1692, %v1095
        %v1694 = vpop.permute.xlu0 %1693
        %v1696 = vmul.f32 %v1694, %v1687
        %v1697 = vadd.f32 %v1634, %v1696
        %s1698 = scalar_lea.vmem [#allocation20], 112
        %v1699 = vld [vmem:[%s1698] sm:$0xf]
        %v1700 = vld [vmem:[%s1698 + $0x4] sm:$0xf]
        %v1701 = vld [vmem:[%s1698 + $0x8] sm:$0xf]
        %v1702 = vld [vmem:[%s1698 + $0xc] sm:$0xf]
        %v1707 = vunpack.c.l.b16 %v1699
        %v1708 = vunpack.c.l.b16 %v1700
        %v1709 = vunpack.c.l.b16 %v1701
        %v1710 = vunpack.c.l.b16 %v1702
        %v1711 = vpack.c.b16 %v1708, %v1707
        %v1712 = vpack.c.b16 %v1710, %v1709
        %1715 = vmatprep.subr.bf16.mxu0 0
        %1716 = vmatpush1.bf16.msra.mxu0 %v1711
        %1717 = vmatprep.subr.bf16.mxu0 0
        %1718 = vmatpush1.bf16.msra.mxu0 %v1712
        %1719 = vmatprep.subr.bf16.mxu0 0
        %1720 = vmatpush1.bf16.msra.mxu0 0
        %1721 = vmatprep.subr.bf16.mxu0 0
        %1722 = vmatpush1.bf16.msra.mxu0 0
        %1723 = vmatprep.subr.bf16.mxu0 0
        %1724 = vmatpush1.bf16.msra.mxu0 0
        %1725 = vmatprep.subr.bf16.mxu0 0
        %1726 = vmatpush1.bf16.msra.mxu0 0
        %1727 = vmatprep.subr.bf16.mxu0 0
        %1728 = vmatpush1.bf16.msra.mxu0 0
        %1729 = vmatprep.subr.bf16.mxu0 0
        %1730 = vmatpush1.bf16.msra.mxu0 0
        %1731 = vmatprep.subr.bf16.mxu0 0
        %1732 = vmatpush1.bf16.msra.mxu0 0
        %1733 = vmatprep.subr.bf16.mxu0 0
        %1734 = vmatpush1.bf16.msra.mxu0 0
        %1735 = vmatprep.subr.bf16.mxu0 0
        %1736 = vmatpush1.bf16.msra.mxu0 0
        %1737 = vmatprep.subr.bf16.mxu0 0
        %1738 = vmatpush1.bf16.msra.mxu0 0
        %1739 = vmatprep.subr.bf16.mxu0 0
        %1740 = vmatpush1.bf16.msra.mxu0 0
        %1741 = vmatprep.subr.bf16.mxu0 0
        %1742 = vmatpush1.bf16.msra.mxu0 0
        %1743 = vmatprep.subr.bf16.mxu0 0
        %1744 = vmatpush1.bf16.msra.mxu0 0
        %1745 = vmatprep.subr.bf16.mxu0 0
        %1746 = vmatpush1.bf16.msra.mxu0 0
        %1747 = vmatprep.mubr.bf16.mxu0 0
        %1748 = vmatmul.mubr.bf16.gmra.mrb[0].mxu0 %v1217
        %v1749 = vpop.f32.mrb[0].mxu0
        %v1750 = vadd.f32 0.0, %v1749
        %v1751 = vpop.f32.mrb[0].mxu0
        %v1752 = vpop.f32.mrb[0].mxu0
        %v1753 = vpop.f32.mrb[0].mxu0
        %1754 = vdwg.mxu0
        %1755 = vset.pattern.permute.xlu0 7
        %1756 = vperm.xlu0 %1755, %v1095
        %v1757 = vpop.permute.xlu0 %1756
        %v1759 = vmul.f32 %v1757, %v1750
        %v1760 = vadd.f32 %v1697, %v1759
        %s1761 = scalar_lea.vmem [#allocation20], 128
        %v1762 = vld [vmem:[%s1761] sm:$0xf]
        %v1763 = vld [vmem:[%s1761 + $0x4] sm:$0xf]
        %v1764 = vld [vmem:[%s1761 + $0x8] sm:$0xf]
        %v1765 = vld [vmem:[%s1761 + $0xc] sm:$0xf]
        %v1770 = vunpack.c.l.b16 %v1762
        %v1771 = vunpack.c.l.b16 %v1763
        %v1772 = vunpack.c.l.b16 %v1764
        %v1773 = vunpack.c.l.b16 %v1765
        %v1774 = vpack.c.b16 %v1771, %v1770
        %v1775 = vpack.c.b16 %v1773, %v1772
        %1778 = vmatprep.subr.bf16.mxu0 0
        %1779 = vmatpush1.bf16.msra.mxu0 %v1774
        %1780 = vmatprep.subr.bf16.mxu0 0
        %1781 = vmatpush1.bf16.msra.mxu0 %v1775
        %1782 = vmatprep.subr.bf16.mxu0 0
        %1783 = vmatpush1.bf16.msra.mxu0 0
        %1784 = vmatprep.subr.bf16.mxu0 0
        %1785 = vmatpush1.bf16.msra.mxu0 0
        %1786 = vmatprep.subr.bf16.mxu0 0
        %1787 = vmatpush1.bf16.msra.mxu0 0
        %1788 = vmatprep.subr.bf16.mxu0 0
        %1789 = vmatpush1.bf16.msra.mxu0 0
        %1790 = vmatprep.subr.bf16.mxu0 0
        %1791 = vmatpush1.bf16.msra.mxu0 0
        %1792 = vmatprep.subr.bf16.mxu0 0
        %1793 = vmatpush1.bf16.msra.mxu0 0
        %1794 = vmatprep.subr.bf16.mxu0 0
        %1795 = vmatpush1.bf16.msra.mxu0 0
        %1796 = vmatprep.subr.bf16.mxu0 0
        %1797 = vmatpush1.bf16.msra.mxu0 0
        %1798 = vmatprep.subr.bf16.mxu0 0
        %1799 = vmatpush1.bf16.msra.mxu0 0
        %1800 = vmatprep.subr.bf16.mxu0 0
        %1801 = vmatpush1.bf16.msra.mxu0 0
        %1802 = vmatprep.subr.bf16.mxu0 0
        %1803 = vmatpush1.bf16.msra.mxu0 0
        %1804 = vmatprep.subr.bf16.mxu0 0
        %1805 = vmatpush1.bf16.msra.mxu0 0
        %1806 = vmatprep.subr.bf16.mxu0 0
        %1807 = vmatpush1.bf16.msra.mxu0 0
        %1808 = vmatprep.subr.bf16.mxu0 0
        %1809 = vmatpush1.bf16.msra.mxu0 0
        %1810 = vmatprep.mubr.bf16.mxu0 0
        %1811 = vmatmul.mubr.bf16.gmra.mrb[0].mxu0 %v1217
        %v1812 = vpop.f32.mrb[0].mxu0
        %v1813 = vadd.f32 0.0, %v1812
        %v1814 = vpop.f32.mrb[0].mxu0
        %v1815 = vpop.f32.mrb[0].mxu0
        %v1816 = vpop.f32.mrb[0].mxu0
        %1817 = vdwg.mxu0
        %1818 = vset.pattern.permute.xlu0 8
        %1819 = vperm.xlu0 %1818, %v1095
        %v1820 = vpop.permute.xlu0 %1819
        %v1822 = vmul.f32 %v1820, %v1813
        %v1823 = vadd.f32 %v1760, %v1822
        %s1824 = scalar_lea.vmem [#allocation20], 144
        %v1825 = vld [vmem:[%s1824] sm:$0xf]
        %v1826 = vld [vmem:[%s1824 + $0x4] sm:$0xf]
        %v1827 = vld [vmem:[%s1824 + $0x8] sm:$0xf]
        %v1828 = vld [vmem:[%s1824 + $0xc] sm:$0xf]
        %v1833 = vunpack.c.l.b16 %v1825
        %v1834 = vunpack.c.l.b16 %v1826
        %v1835 = vunpack.c.l.b16 %v1827
        %v1836 = vunpack.c.l.b16 %v1828
        %v1837 = vpack.c.b16 %v1834, %v1833
        %v1838 = vpack.c.b16 %v1836, %v1835
        %1841 = vmatprep.subr.bf16.mxu0 0
        %1842 = vmatpush1.bf16.msra.mxu0 %v1837
        %1843 = vmatprep.subr.bf16.mxu0 0
        %1844 = vmatpush1.bf16.msra.mxu0 %v1838
        %1845 = vmatprep.subr.bf16.mxu0 0
        %1846 = vmatpush1.bf16.msra.mxu0 0
        %1847 = vmatprep.subr.bf16.mxu0 0
        %1848 = vmatpush1.bf16.msra.mxu0 0
        %1849 = vmatprep.subr.bf16.mxu0 0
        %1850 = vmatpush1.bf16.msra.mxu0 0
        %1851 = vmatprep.subr.bf16.mxu0 0
        %1852 = vmatpush1.bf16.msra.mxu0 0
        %1853 = vmatprep.subr.bf16.mxu0 0
        %1854 = vmatpush1.bf16.msra.mxu0 0
        %1855 = vmatprep.subr.bf16.mxu0 0
        %1856 = vmatpush1.bf16.msra.mxu0 0
        %1857 = vmatprep.subr.bf16.mxu0 0
        %1858 = vmatpush1.bf16.msra.mxu0 0
        %1859 = vmatprep.subr.bf16.mxu0 0
        %1860 = vmatpush1.bf16.msra.mxu0 0
        %1861 = vmatprep.subr.bf16.mxu0 0
        %1862 = vmatpush1.bf16.msra.mxu0 0
        %1863 = vmatprep.subr.bf16.mxu0 0
        %1864 = vmatpush1.bf16.msra.mxu0 0
        %1865 = vmatprep.subr.bf16.mxu0 0
        %1866 = vmatpush1.bf16.msra.mxu0 0
        %1867 = vmatprep.subr.bf16.mxu0 0
        %1868 = vmatpush1.bf16.msra.mxu0 0
        %1869 = vmatprep.subr.bf16.mxu0 0
        %1870 = vmatpush1.bf16.msra.mxu0 0
        %1871 = vmatprep.subr.bf16.mxu0 0
        %1872 = vmatpush1.bf16.msra.mxu0 0
        %1873 = vmatprep.mubr.bf16.mxu0 0
        %1874 = vmatmul.mubr.bf16.gmra.mrb[0].mxu0 %v1217
        %v1875 = vpop.f32.mrb[0].mxu0
        %v1876 = vadd.f32 0.0, %v1875
        %v1877 = vpop.f32.mrb[0].mxu0
        %v1878 = vpop.f32.mrb[0].mxu0
        %v1879 = vpop.f32.mrb[0].mxu0
        %1880 = vdwg.mxu0
        %1881 = vset.pattern.permute.xlu0 9
        %1882 = vperm.xlu0 %1881, %v1095
        %v1883 = vpop.permute.xlu0 %1882
        %v1885 = vmul.f32 %v1883, %v1876
        %v1886 = vadd.f32 %v1823, %v1885
        %s1887 = scalar_lea.vmem [#allocation20], 160
        %v1888 = vld [vmem:[%s1887] sm:$0xf]
        %v1889 = vld [vmem:[%s1887 + $0x4] sm:$0xf]
        %v1890 = vld [vmem:[%s1887 + $0x8] sm:$0xf]
        %v1891 = vld [vmem:[%s1887 + $0xc] sm:$0xf]
        %v1896 = vunpack.c.l.b16 %v1888
        %v1897 = vunpack.c.l.b16 %v1889
        %v1898 = vunpack.c.l.b16 %v1890
        %v1899 = vunpack.c.l.b16 %v1891
        %v1900 = vpack.c.b16 %v1897, %v1896
        %v1901 = vpack.c.b16 %v1899, %v1898
        %1904 = vmatprep.subr.bf16.mxu0 0
        %1905 = vmatpush1.bf16.msra.mxu0 %v1900
        %1906 = vmatprep.subr.bf16.mxu0 0
        %1907 = vmatpush1.bf16.msra.mxu0 %v1901
        %1908 = vmatprep.subr.bf16.mxu0 0
        %1909 = vmatpush1.bf16.msra.mxu0 0
        %1910 = vmatprep.subr.bf16.mxu0 0
        %1911 = vmatpush1.bf16.msra.mxu0 0
        %1912 = vmatprep.subr.bf16.mxu0 0
        %1913 = vmatpush1.bf16.msra.mxu0 0
        %1914 = vmatprep.subr.bf16.mxu0 0
        %1915 = vmatpush1.bf16.msra.mxu0 0
        %1916 = vmatprep.subr.bf16.mxu0 0
        %1917 = vmatpush1.bf16.msra.mxu0 0
        %1918 = vmatprep.subr.bf16.mxu0 0
        %1919 = vmatpush1.bf16.msra.mxu0 0
        %1920 = vmatprep.subr.bf16.mxu0 0
        %1921 = vmatpush1.bf16.msra.mxu0 0
        %1922 = vmatprep.subr.bf16.mxu0 0
        %1923 = vmatpush1.bf16.msra.mxu0 0
        %1924 = vmatprep.subr.bf16.mxu0 0
        %1925 = vmatpush1.bf16.msra.mxu0 0
        %1926 = vmatprep.subr.bf16.mxu0 0
        %1927 = vmatpush1.bf16.msra.mxu0 0
        %1928 = vmatprep.subr.bf16.mxu0 0
        %1929 = vmatpush1.bf16.msra.mxu0 0
        %1930 = vmatprep.subr.bf16.mxu0 0
        %1931 = vmatpush1.bf16.msra.mxu0 0
        %1932 = vmatprep.subr.bf16.mxu0 0
        %1933 = vmatpush1.bf16.msra.mxu0 0
        %1934 = vmatprep.subr.bf16.mxu0 0
        %1935 = vmatpush1.bf16.msra.mxu0 0
        %1936 = vmatprep.mubr.bf16.mxu0 0
        %1937 = vmatmul.mubr.bf16.gmra.mrb[0].mxu0 %v1217
        %v1938 = vpop.f32.mrb[0].mxu0
        %v1939 = vadd.f32 0.0, %v1938
        %v1940 = vpop.f32.mrb[0].mxu0
        %v1941 = vpop.f32.mrb[0].mxu0
        %v1942 = vpop.f32.mrb[0].mxu0
        %1943 = vdwg.mxu0
        %1944 = vset.pattern.permute.xlu0 10
        %1945 = vperm.xlu0 %1944, %v1095
        %v1946 = vpop.permute.xlu0 %1945
        %v1948 = vmul.f32 %v1946, %v1939
        %v1949 = vadd.f32 %v1886, %v1948
        %s1950 = scalar_lea.vmem [#allocation20], 176
        %v1951 = vld [vmem:[%s1950] sm:$0xf]
        %v1952 = vld [vmem:[%s1950 + $0x4] sm:$0xf]
        %v1953 = vld [vmem:[%s1950 + $0x8] sm:$0xf]
        %v1954 = vld [vmem:[%s1950 + $0xc] sm:$0xf]
        %v1959 = vunpack.c.l.b16 %v1951
        %v1960 = vunpack.c.l.b16 %v1952
        %v1961 = vunpack.c.l.b16 %v1953
        %v1962 = vunpack.c.l.b16 %v1954
        %v1963 = vpack.c.b16 %v1960, %v1959
        %v1964 = vpack.c.b16 %v1962, %v1961
        %1967 = vmatprep.subr.bf16.mxu0 0
        %1968 = vmatpush1.bf16.msra.mxu0 %v1963
        %1969 = vmatprep.subr.bf16.mxu0 0
        %1970 = vmatpush1.bf16.msra.mxu0 %v1964
        %1971 = vmatprep.subr.bf16.mxu0 0
        %1972 = vmatpush1.bf16.msra.mxu0 0
        %1973 = vmatprep.subr.bf16.mxu0 0
        %1974 = vmatpush1.bf16.msra.mxu0 0
        %1975 = vmatprep.subr.bf16.mxu0 0
        %1976 = vmatpush1.bf16.msra.mxu0 0
        %1977 = vmatprep.subr.bf16.mxu0 0
        %1978 = vmatpush1.bf16.msra.mxu0 0
        %1979 = vmatprep.subr.bf16.mxu0 0
        %1980 = vmatpush1.bf16.msra.mxu0 0
        %1981 = vmatprep.subr.bf16.mxu0 0
        %1982 = vmatpush1.bf16.msra.mxu0 0
        %1983 = vmatprep.subr.bf16.mxu0 0
        %1984 = vmatpush1.bf16.msra.mxu0 0
        %1985 = vmatprep.subr.bf16.mxu0 0
        %1986 = vmatpush1.bf16.msra.mxu0 0
        %1987 = vmatprep.subr.bf16.mxu0 0
        %1988 = vmatpush1.bf16.msra.mxu0 0
        %1989 = vmatprep.subr.bf16.mxu0 0
        %1990 = vmatpush1.bf16.msra.mxu0 0
        %1991 = vmatprep.subr.bf16.mxu0 0
        %1992 = vmatpush1.bf16.msra.mxu0 0
        %1993 = vmatprep.subr.bf16.mxu0 0
        %1994 = vmatpush1.bf16.msra.mxu0 0
        %1995 = vmatprep.subr.bf16.mxu0 0
        %1996 = vmatpush1.bf16.msra.mxu0 0
        %1997 = vmatprep.subr.bf16.mxu0 0
        %1998 = vmatpush1.bf16.msra.mxu0 0
        %1999 = vmatprep.mubr.bf16.mxu0 0
        %2000 = vmatmul.mubr.bf16.gmra.mrb[0].mxu0 %v1217
        %v2001 = vpop.f32.mrb[0].mxu0
        %v2002 = vadd.f32 0.0, %v2001
        %v2003 = vpop.f32.mrb[0].mxu0
        %v2004 = vpop.f32.mrb[0].mxu0
        %v2005 = vpop.f32.mrb[0].mxu0
        %2006 = vdwg.mxu0
        %2007 = vset.pattern.permute.xlu0 11
        %2008 = vperm.xlu0 %2007, %v1095
        %v2009 = vpop.permute.xlu0 %2008
        %v2011 = vmul.f32 %v2009, %v2002
        %v2012 = vadd.f32 %v1949, %v2011
        %s2013 = scalar_lea.vmem [#allocation20], 192
        %v2014 = vld [vmem:[%s2013] sm:$0xf]
        %v2015 = vld [vmem:[%s2013 + $0x4] sm:$0xf]
        %v2016 = vld [vmem:[%s2013 + $0x8] sm:$0xf]
        %v2017 = vld [vmem:[%s2013 + $0xc] sm:$0xf]
        %v2022 = vunpack.c.l.b16 %v2014
        %v2023 = vunpack.c.l.b16 %v2015
        %v2024 = vunpack.c.l.b16 %v2016
        %v2025 = vunpack.c.l.b16 %v2017
        %v2026 = vpack.c.b16 %v2023, %v2022
        %v2027 = vpack.c.b16 %v2025, %v2024
        %2030 = vmatprep.subr.bf16.mxu0 0
        %2031 = vmatpush1.bf16.msra.mxu0 %v2026
        %2032 = vmatprep.subr.bf16.mxu0 0
        %2033 = vmatpush1.bf16.msra.mxu0 %v2027
        %2034 = vmatprep.subr.bf16.mxu0 0
        %2035 = vmatpush1.bf16.msra.mxu0 0
        %2036 = vmatprep.subr.bf16.mxu0 0
        %2037 = vmatpush1.bf16.msra.mxu0 0
        %2038 = vmatprep.subr.bf16.mxu0 0
        %2039 = vmatpush1.bf16.msra.mxu0 0
        %2040 = vmatprep.subr.bf16.mxu0 0
        %2041 = vmatpush1.bf16.msra.mxu0 0
        %2042 = vmatprep.subr.bf16.mxu0 0
        %2043 = vmatpush1.bf16.msra.mxu0 0
        %2044 = vmatprep.subr.bf16.mxu0 0
        %2045 = vmatpush1.bf16.msra.mxu0 0
        %2046 = vmatprep.subr.bf16.mxu0 0
        %2047 = vmatpush1.bf16.msra.mxu0 0
        %2048 = vmatprep.subr.bf16.mxu0 0
        %2049 = vmatpush1.bf16.msra.mxu0 0
        %2050 = vmatprep.subr.bf16.mxu0 0
        %2051 = vmatpush1.bf16.msra.mxu0 0
        %2052 = vmatprep.subr.bf16.mxu0 0
        %2053 = vmatpush1.bf16.msra.mxu0 0
        %2054 = vmatprep.subr.bf16.mxu0 0
        %2055 = vmatpush1.bf16.msra.mxu0 0
        %2056 = vmatprep.subr.bf16.mxu0 0
        %2057 = vmatpush1.bf16.msra.mxu0 0
        %2058 = vmatprep.subr.bf16.mxu0 0
        %2059 = vmatpush1.bf16.msra.mxu0 0
        %2060 = vmatprep.subr.bf16.mxu0 0
        %2061 = vmatpush1.bf16.msra.mxu0 0
        %2062 = vmatprep.mubr.bf16.mxu0 0
        %2063 = vmatmul.mubr.bf16.gmra.mrb[0].mxu0 %v1217
        %v2064 = vpop.f32.mrb[0].mxu0
        %v2065 = vadd.f32 0.0, %v2064
        %v2066 = vpop.f32.mrb[0].mxu0
        %v2067 = vpop.f32.mrb[0].mxu0
        %v2068 = vpop.f32.mrb[0].mxu0
        %2069 = vdwg.mxu0
        %2070 = vset.pattern.permute.xlu0 12
        %2071 = vperm.xlu0 %2070, %v1095
        %v2072 = vpop.permute.xlu0 %2071
        %v2074 = vmul.f32 %v2072, %v2065
        %v2075 = vadd.f32 %v2012, %v2074
        %s2076 = scalar_lea.vmem [#allocation20], 208
        %v2077 = vld [vmem:[%s2076] sm:$0xf]
        %v2078 = vld [vmem:[%s2076 + $0x4] sm:$0xf]
        %v2079 = vld [vmem:[%s2076 + $0x8] sm:$0xf]
        %v2080 = vld [vmem:[%s2076 + $0xc] sm:$0xf]
        %v2085 = vunpack.c.l.b16 %v2077
        %v2086 = vunpack.c.l.b16 %v2078
        %v2087 = vunpack.c.l.b16 %v2079
        %v2088 = vunpack.c.l.b16 %v2080
        %v2089 = vpack.c.b16 %v2086, %v2085
        %v2090 = vpack.c.b16 %v2088, %v2087
        %2093 = vmatprep.subr.bf16.mxu0 0
        %2094 = vmatpush1.bf16.msra.mxu0 %v2089
        %2095 = vmatprep.subr.bf16.mxu0 0
        %2096 = vmatpush1.bf16.msra.mxu0 %v2090
        %2097 = vmatprep.subr.bf16.mxu0 0
        %2098 = vmatpush1.bf16.msra.mxu0 0
        %2099 = vmatprep.subr.bf16.mxu0 0
        %2100 = vmatpush1.bf16.msra.mxu0 0
        %2101 = vmatprep.subr.bf16.mxu0 0
        %2102 = vmatpush1.bf16.msra.mxu0 0
        %2103 = vmatprep.subr.bf16.mxu0 0
        %2104 = vmatpush1.bf16.msra.mxu0 0
        %2105 = vmatprep.subr.bf16.mxu0 0
        %2106 = vmatpush1.bf16.msra.mxu0 0
        %2107 = vmatprep.subr.bf16.mxu0 0
        %2108 = vmatpush1.bf16.msra.mxu0 0
        %2109 = vmatprep.subr.bf16.mxu0 0
        %2110 = vmatpush1.bf16.msra.mxu0 0
        %2111 = vmatprep.subr.bf16.mxu0 0
        %2112 = vmatpush1.bf16.msra.mxu0 0
        %2113 = vmatprep.subr.bf16.mxu0 0
        %2114 = vmatpush1.bf16.msra.mxu0 0
        %2115 = vmatprep.subr.bf16.mxu0 0
        %2116 = vmatpush1.bf16.msra.mxu0 0
        %2117 = vmatprep.subr.bf16.mxu0 0
        %2118 = vmatpush1.bf16.msra.mxu0 0
        %2119 = vmatprep.subr.bf16.mxu0 0
        %2120 = vmatpush1.bf16.msra.mxu0 0
        %2121 = vmatprep.subr.bf16.mxu0 0
        %2122 = vmatpush1.bf16.msra.mxu0 0
        %2123 = vmatprep.subr.bf16.mxu0 0
        %2124 = vmatpush1.bf16.msra.mxu0 0
        %2125 = vmatprep.mubr.bf16.mxu0 0
        %2126 = vmatmul.mubr.bf16.gmra.mrb[0].mxu0 %v1217
        %v2127 = vpop.f32.mrb[0].mxu0
        %v2128 = vadd.f32 0.0, %v2127
        %v2129 = vpop.f32.mrb[0].mxu0
        %v2130 = vpop.f32.mrb[0].mxu0
        %v2131 = vpop.f32.mrb[0].mxu0
        %2132 = vdwg.mxu0
        %2133 = vset.pattern.permute.xlu0 13
        %2134 = vperm.xlu0 %2133, %v1095
        %v2135 = vpop.permute.xlu0 %2134
        %v2137 = vmul.f32 %v2135, %v2128
        %v2138 = vadd.f32 %v2075, %v2137
        %s2139 = scalar_lea.vmem [#allocation20], 224
        %v2140 = vld [vmem:[%s2139] sm:$0xf]
        %v2141 = vld [vmem:[%s2139 + $0x4] sm:$0xf]
        %v2142 = vld [vmem:[%s2139 + $0x8] sm:$0xf]
        %v2143 = vld [vmem:[%s2139 + $0xc] sm:$0xf]
        %v2148 = vunpack.c.l.b16 %v2140
        %v2149 = vunpack.c.l.b16 %v2141
        %v2150 = vunpack.c.l.b16 %v2142
        %v2151 = vunpack.c.l.b16 %v2143
        %v2152 = vpack.c.b16 %v2149, %v2148
        %v2153 = vpack.c.b16 %v2151, %v2150
        %2156 = vmatprep.subr.bf16.mxu0 0
        %2157 = vmatpush1.bf16.msra.mxu0 %v2152
        %2158 = vmatprep.subr.bf16.mxu0 0
        %2159 = vmatpush1.bf16.msra.mxu0 %v2153
        %2160 = vmatprep.subr.bf16.mxu0 0
        %2161 = vmatpush1.bf16.msra.mxu0 0
        %2162 = vmatprep.subr.bf16.mxu0 0
        %2163 = vmatpush1.bf16.msra.mxu0 0
        %2164 = vmatprep.subr.bf16.mxu0 0
        %2165 = vmatpush1.bf16.msra.mxu0 0
        %2166 = vmatprep.subr.bf16.mxu0 0
        %2167 = vmatpush1.bf16.msra.mxu0 0
        %2168 = vmatprep.subr.bf16.mxu0 0
        %2169 = vmatpush1.bf16.msra.mxu0 0
        %2170 = vmatprep.subr.bf16.mxu0 0
        %2171 = vmatpush1.bf16.msra.mxu0 0
        %2172 = vmatprep.subr.bf16.mxu0 0
        %2173 = vmatpush1.bf16.msra.mxu0 0
        %2174 = vmatprep.subr.bf16.mxu0 0
        %2175 = vmatpush1.bf16.msra.mxu0 0
        %2176 = vmatprep.subr.bf16.mxu0 0
        %2177 = vmatpush1.bf16.msra.mxu0 0
        %2178 = vmatprep.subr.bf16.mxu0 0
        %2179 = vmatpush1.bf16.msra.mxu0 0
        %2180 = vmatprep.subr.bf16.mxu0 0
        %2181 = vmatpush1.bf16.msra.mxu0 0
        %2182 = vmatprep.subr.bf16.mxu0 0
        %2183 = vmatpush1.bf16.msra.mxu0 0
        %2184 = vmatprep.subr.bf16.mxu0 0
        %2185 = vmatpush1.bf16.msra.mxu0 0
        %2186 = vmatprep.subr.bf16.mxu0 0
        %2187 = vmatpush1.bf16.msra.mxu0 0
        %2188 = vmatprep.mubr.bf16.mxu0 0
        %2189 = vmatmul.mubr.bf16.gmra.mrb[0].mxu0 %v1217
        %v2190 = vpop.f32.mrb[0].mxu0
        %v2191 = vadd.f32 0.0, %v2190
        %v2192 = vpop.f32.mrb[0].mxu0
        %v2193 = vpop.f32.mrb[0].mxu0
        %v2194 = vpop.f32.mrb[0].mxu0
        %2195 = vdwg.mxu0
        %2196 = vset.pattern.permute.xlu0 14
        %2197 = vperm.xlu0 %2196, %v1095
        %v2198 = vpop.permute.xlu0 %2197
        %v2200 = vmul.f32 %v2198, %v2191
        %v2201 = vadd.f32 %v2138, %v2200
        %s2202 = scalar_lea.vmem [#allocation20], 240
        %v2203 = vld [vmem:[%s2202] sm:$0xf]
        %v2204 = vld [vmem:[%s2202 + $0x4] sm:$0xf]
        %v2205 = vld [vmem:[%s2202 + $0x8] sm:$0xf]
        %v2206 = vld [vmem:[%s2202 + $0xc] sm:$0xf]
        %v2211 = vunpack.c.l.b16 %v2203
        %v2212 = vunpack.c.l.b16 %v2204
        %v2213 = vunpack.c.l.b16 %v2205
        %v2214 = vunpack.c.l.b16 %v2206
        %v2215 = vpack.c.b16 %v2212, %v2211
        %v2216 = vpack.c.b16 %v2214, %v2213
        %2219 = vmatprep.subr.bf16.mxu0 0
        %2220 = vmatpush1.bf16.msra.mxu0 %v2215
        %2221 = vmatprep.subr.bf16.mxu0 0
        %2222 = vmatpush1.bf16.msra.mxu0 %v2216
        %2223 = vmatprep.subr.bf16.mxu0 0
        %2224 = vmatpush1.bf16.msra.mxu0 0
        %2225 = vmatprep.subr.bf16.mxu0 0
        %2226 = vmatpush1.bf16.msra.mxu0 0
        %2227 = vmatprep.subr.bf16.mxu0 0
        %2228 = vmatpush1.bf16.msra.mxu0 0
        %2229 = vmatprep.subr.bf16.mxu0 0
        %2230 = vmatpush1.bf16.msra.mxu0 0
        %2231 = vmatprep.subr.bf16.mxu0 0
        %2232 = vmatpush1.bf16.msra.mxu0 0
        %2233 = vmatprep.subr.bf16.mxu0 0
        %2234 = vmatpush1.bf16.msra.mxu0 0
        %2235 = vmatprep.subr.bf16.mxu0 0
        %2236 = vmatpush1.bf16.msra.mxu0 0
        %2237 = vmatprep.subr.bf16.mxu0 0
        %2238 = vmatpush1.bf16.msra.mxu0 0
        %2239 = vmatprep.subr.bf16.mxu0 0
        %2240 = vmatpush1.bf16.msra.mxu0 0
        %2241 = vmatprep.subr.bf16.mxu0 0
        %2242 = vmatpush1.bf16.msra.mxu0 0
        %2243 = vmatprep.subr.bf16.mxu0 0
        %2244 = vmatpush1.bf16.msra.mxu0 0
        %2245 = vmatprep.subr.bf16.mxu0 0
        %2246 = vmatpush1.bf16.msra.mxu0 0
        %2247 = vmatprep.subr.bf16.mxu0 0
        %2248 = vmatpush1.bf16.msra.mxu0 0
        %2249 = vmatprep.subr.bf16.mxu0 0
        %2250 = vmatpush1.bf16.msra.mxu0 0
        %2251 = vmatprep.mubr.bf16.mxu0 0
        %2252 = vmatmul.mubr.bf16.gmra.mrb[0].mxu0 %v1217
        %v2253 = vpop.f32.mrb[0].mxu0
        %v2254 = vadd.f32 0.0, %v2253
        %v2255 = vpop.f32.mrb[0].mxu0
        %v2256 = vpop.f32.mrb[0].mxu0
        %v2257 = vpop.f32.mrb[0].mxu0
        %2258 = vdwg.mxu0
        %2259 = vset.pattern.permute.xlu0 15
        %2260 = vperm.xlu0 %2259, %v1095
        %v2261 = vpop.permute.xlu0 %2260
        %v2263 = vmul.f32 %v2261, %v2254
        %v2264 = vadd.f32 %v2201, %v2263
        %s2265 = scalar_lea.vmem [#allocation20], 256
        %v2266 = vld [vmem:[%s2265] sm:$0xf]
        %v2267 = vld [vmem:[%s2265 + $0x4] sm:$0xf]
        %v2268 = vld [vmem:[%s2265 + $0x8] sm:$0xf]
        %v2269 = vld [vmem:[%s2265 + $0xc] sm:$0xf]
        %v2274 = vunpack.c.l.b16 %v2266
        %v2275 = vunpack.c.l.b16 %v2267
        %v2276 = vunpack.c.l.b16 %v2268
        %v2277 = vunpack.c.l.b16 %v2269
        %v2278 = vpack.c.b16 %v2275, %v2274
        %v2279 = vpack.c.b16 %v2277, %v2276
        %2282 = vmatprep.subr.bf16.mxu0 0
        %2283 = vmatpush1.bf16.msra.mxu0 %v2278
        %2284 = vmatprep.subr.bf16.mxu0 0
        %2285 = vmatpush1.bf16.msra.mxu0 %v2279
        %2286 = vmatprep.subr.bf16.mxu0 0
        %2287 = vmatpush1.bf16.msra.mxu0 0
        %2288 = vmatprep.subr.bf16.mxu0 0
        %2289 = vmatpush1.bf16.msra.mxu0 0
        %2290 = vmatprep.subr.bf16.mxu0 0
        %2291 = vmatpush1.bf16.msra.mxu0 0
        %2292 = vmatprep.subr.bf16.mxu0 0
        %2293 = vmatpush1.bf16.msra.mxu0 0
        %2294 = vmatprep.subr.bf16.mxu0 0
        %2295 = vmatpush1.bf16.msra.mxu0 0
        %2296 = vmatprep.subr.bf16.mxu0 0
        %2297 = vmatpush1.bf16.msra.mxu0 0
        %2298 = vmatprep.subr.bf16.mxu0 0
        %2299 = vmatpush1.bf16.msra.mxu0 0
        %2300 = vmatprep.subr.bf16.mxu0 0
        %2301 = vmatpush1.bf16.msra.mxu0 0
        %2302 = vmatprep.subr.bf16.mxu0 0
        %2303 = vmatpush1.bf16.msra.mxu0 0
        %2304 = vmatprep.subr.bf16.mxu0 0
        %2305 = vmatpush1.bf16.msra.mxu0 0
        %2306 = vmatprep.subr.bf16.mxu0 0
        %2307 = vmatpush1.bf16.msra.mxu0 0
        %2308 = vmatprep.subr.bf16.mxu0 0
        %2309 = vmatpush1.bf16.msra.mxu0 0
        %2310 = vmatprep.subr.bf16.mxu0 0
        %2311 = vmatpush1.bf16.msra.mxu0 0
        %2312 = vmatprep.subr.bf16.mxu0 0
        %2313 = vmatpush1.bf16.msra.mxu0 0
        %2314 = vmatprep.mubr.bf16.mxu0 0
        %2315 = vmatmul.mubr.bf16.gmra.mrb[0].mxu0 %v1217
        %v2316 = vpop.f32.mrb[0].mxu0
        %v2317 = vadd.f32 0.0, %v2316
        %v2318 = vpop.f32.mrb[0].mxu0
        %v2319 = vpop.f32.mrb[0].mxu0
        %v2320 = vpop.f32.mrb[0].mxu0
        %2321 = vdwg.mxu0
        %2322 = vset.pattern.permute.xlu0 16
        %2323 = vperm.xlu0 %2322, %v1095
        %v2324 = vpop.permute.xlu0 %2323
        %v2326 = vmul.f32 %v2324, %v2317
        %v2327 = vadd.f32 %v2264, %v2326
        %s2328 = scalar_lea.vmem [#allocation20], 272
        %v2329 = vld [vmem:[%s2328] sm:$0xf]
        %v2330 = vld [vmem:[%s2328 + $0x4] sm:$0xf]
        %v2331 = vld [vmem:[%s2328 + $0x8] sm:$0xf]
        %v2332 = vld [vmem:[%s2328 + $0xc] sm:$0xf]
        %v2337 = vunpack.c.l.b16 %v2329
        %v2338 = vunpack.c.l.b16 %v2330
        %v2339 = vunpack.c.l.b16 %v2331
        %v2340 = vunpack.c.l.b16 %v2332
        %v2341 = vpack.c.b16 %v2338, %v2337
        %v2342 = vpack.c.b16 %v2340, %v2339
        %2345 = vmatprep.subr.bf16.mxu0 0
        %2346 = vmatpush1.bf16.msra.mxu0 %v2341
        %2347 = vmatprep.subr.bf16.mxu0 0
        %2348 = vmatpush1.bf16.msra.mxu0 %v2342
        %2349 = vmatprep.subr.bf16.mxu0 0
        %2350 = vmatpush1.bf16.msra.mxu0 0
        %2351 = vmatprep.subr.bf16.mxu0 0
        %2352 = vmatpush1.bf16.msra.mxu0 0
        %2353 = vmatprep.subr.bf16.mxu0 0
        %2354 = vmatpush1.bf16.msra.mxu0 0
        %2355 = vmatprep.subr.bf16.mxu0 0
        %2356 = vmatpush1.bf16.msra.mxu0 0
        %2357 = vmatprep.subr.bf16.mxu0 0
        %2358 = vmatpush1.bf16.msra.mxu0 0
        %2359 = vmatprep.subr.bf16.mxu0 0
        %2360 = vmatpush1.bf16.msra.mxu0 0
        %2361 = vmatprep.subr.bf16.mxu0 0
        %2362 = vmatpush1.bf16.msra.mxu0 0
        %2363 = vmatprep.subr.bf16.mxu0 0
        %2364 = vmatpush1.bf16.msra.mxu0 0
        %2365 = vmatprep.subr.bf16.mxu0 0
        %2366 = vmatpush1.bf16.msra.mxu0 0
        %2367 = vmatprep.subr.bf16.mxu0 0
        %2368 = vmatpush1.bf16.msra.mxu0 0
        %2369 = vmatprep.subr.bf16.mxu0 0
        %2370 = vmatpush1.bf16.msra.mxu0 0
        %2371 = vmatprep.subr.bf16.mxu0 0
        %2372 = vmatpush1.bf16.msra.mxu0 0
        %2373 = vmatprep.subr.bf16.mxu0 0
        %2374 = vmatpush1.bf16.msra.mxu0 0
        %2375 = vmatprep.subr.bf16.mxu0 0
        %2376 = vmatpush1.bf16.msra.mxu0 0
        %2377 = vmatprep.mubr.bf16.mxu0 0
        %2378 = vmatmul.mubr.bf16.gmra.mrb[0].mxu0 %v1217
        %v2379 = vpop.f32.mrb[0].mxu0
        %v2380 = vadd.f32 0.0, %v2379
        %v2381 = vpop.f32.mrb[0].mxu0
        %v2382 = vpop.f32.mrb[0].mxu0
        %v2383 = vpop.f32.mrb[0].mxu0
        %2384 = vdwg.mxu0
        %2385 = vset.pattern.permute.xlu0 17
        %2386 = vperm.xlu0 %2385, %v1095
        %v2387 = vpop.permute.xlu0 %2386
        %v2389 = vmul.f32 %v2387, %v2380
        %v2390 = vadd.f32 %v2327, %v2389
        %s2391 = scalar_lea.vmem [#allocation20], 288
        %v2392 = vld [vmem:[%s2391] sm:$0xf]
        %v2393 = vld [vmem:[%s2391 + $0x4] sm:$0xf]
        %v2394 = vld [vmem:[%s2391 + $0x8] sm:$0xf]
        %v2395 = vld [vmem:[%s2391 + $0xc] sm:$0xf]
        %v2400 = vunpack.c.l.b16 %v2392
        %v2401 = vunpack.c.l.b16 %v2393
        %v2402 = vunpack.c.l.b16 %v2394
        %v2403 = vunpack.c.l.b16 %v2395
        %v2404 = vpack.c.b16 %v2401, %v2400
        %v2405 = vpack.c.b16 %v2403, %v2402
        %2408 = vmatprep.subr.bf16.mxu0 0
        %2409 = vmatpush1.bf16.msra.mxu0 %v2404
        %2410 = vmatprep.subr.bf16.mxu0 0
        %2411 = vmatpush1.bf16.msra.mxu0 %v2405
        %2412 = vmatprep.subr.bf16.mxu0 0
        %2413 = vmatpush1.bf16.msra.mxu0 0
        %2414 = vmatprep.subr.bf16.mxu0 0
        %2415 = vmatpush1.bf16.msra.mxu0 0
        %2416 = vmatprep.subr.bf16.mxu0 0
        %2417 = vmatpush1.bf16.msra.mxu0 0
        %2418 = vmatprep.subr.bf16.mxu0 0
        %2419 = vmatpush1.bf16.msra.mxu0 0
        %2420 = vmatprep.subr.bf16.mxu0 0
        %2421 = vmatpush1.bf16.msra.mxu0 0
        %2422 = vmatprep.subr.bf16.mxu0 0
        %2423 = vmatpush1.bf16.msra.mxu0 0
        %2424 = vmatprep.subr.bf16.mxu0 0
        %2425 = vmatpush1.bf16.msra.mxu0 0
        %2426 = vmatprep.subr.bf16.mxu0 0
        %2427 = vmatpush1.bf16.msra.mxu0 0
        %2428 = vmatprep.subr.bf16.mxu0 0
        %2429 = vmatpush1.bf16.msra.mxu0 0
        %2430 = vmatprep.subr.bf16.mxu0 0
        %2431 = vmatpush1.bf16.msra.mxu0 0
        %2432 = vmatprep.subr.bf16.mxu0 0
        %2433 = vmatpush1.bf16.msra.mxu0 0
        %2434 = vmatprep.subr.bf16.mxu0 0
        %2435 = vmatpush1.bf16.msra.mxu0 0
        %2436 = vmatprep.subr.bf16.mxu0 0
        %2437 = vmatpush1.bf16.msra.mxu0 0
        %2438 = vmatprep.subr.bf16.mxu0 0
        %2439 = vmatpush1.bf16.msra.mxu0 0
        %2440 = vmatprep.mubr.bf16.mxu0 0
        %2441 = vmatmul.mubr.bf16.gmra.mrb[0].mxu0 %v1217
        %v2442 = vpop.f32.mrb[0].mxu0
        %v2443 = vadd.f32 0.0, %v2442
        %v2444 = vpop.f32.mrb[0].mxu0
        %v2445 = vpop.f32.mrb[0].mxu0
        %v2446 = vpop.f32.mrb[0].mxu0
        %2447 = vdwg.mxu0
        %2448 = vset.pattern.permute.xlu0 18
        %2449 = vperm.xlu0 %2448, %v1095
        %v2450 = vpop.permute.xlu0 %2449
        %v2452 = vmul.f32 %v2450, %v2443
        %v2453 = vadd.f32 %v2390, %v2452
        %s2454 = scalar_lea.vmem [#allocation20], 304
        %v2455 = vld [vmem:[%s2454] sm:$0xf]
        %v2456 = vld [vmem:[%s2454 + $0x4] sm:$0xf]
        %v2457 = vld [vmem:[%s2454 + $0x8] sm:$0xf]
        %v2458 = vld [vmem:[%s2454 + $0xc] sm:$0xf]
        %v2463 = vunpack.c.l.b16 %v2455
        %v2464 = vunpack.c.l.b16 %v2456
        %v2465 = vunpack.c.l.b16 %v2457
        %v2466 = vunpack.c.l.b16 %v2458
        %v2467 = vpack.c.b16 %v2464, %v2463
        %v2468 = vpack.c.b16 %v2466, %v2465
        %2471 = vmatprep.subr.bf16.mxu0 0
        %2472 = vmatpush1.bf16.msra.mxu0 %v2467
        %2473 = vmatprep.subr.bf16.mxu0 0
        %2474 = vmatpush1.bf16.msra.mxu0 %v2468
        %2475 = vmatprep.subr.bf16.mxu0 0
        %2476 = vmatpush1.bf16.msra.mxu0 0
        %2477 = vmatprep.subr.bf16.mxu0 0
        %2478 = vmatpush1.bf16.msra.mxu0 0
        %2479 = vmatprep.subr.bf16.mxu0 0
        %2480 = vmatpush1.bf16.msra.mxu0 0
        %2481 = vmatprep.subr.bf16.mxu0 0
        %2482 = vmatpush1.bf16.msra.mxu0 0
        %2483 = vmatprep.subr.bf16.mxu0 0
        %2484 = vmatpush1.bf16.msra.mxu0 0
        %2485 = vmatprep.subr.bf16.mxu0 0
        %2486 = vmatpush1.bf16.msra.mxu0 0
        %2487 = vmatprep.subr.bf16.mxu0 0
        %2488 = vmatpush1.bf16.msra.mxu0 0
        %2489 = vmatprep.subr.bf16.mxu0 0
        %2490 = vmatpush1.bf16.msra.mxu0 0
        %2491 = vmatprep.subr.bf16.mxu0 0
        %2492 = vmatpush1.bf16.msra.mxu0 0
        %2493 = vmatprep.subr.bf16.mxu0 0
        %2494 = vmatpush1.bf16.msra.mxu0 0
        %2495 = vmatprep.subr.bf16.mxu0 0
        %2496 = vmatpush1.bf16.msra.mxu0 0
        %2497 = vmatprep.subr.bf16.mxu0 0
        %2498 = vmatpush1.bf16.msra.mxu0 0
        %2499 = vmatprep.subr.bf16.mxu0 0
        %2500 = vmatpush1.bf16.msra.mxu0 0
        %2501 = vmatprep.subr.bf16.mxu0 0
        %2502 = vmatpush1.bf16.msra.mxu0 0
        %2503 = vmatprep.mubr.bf16.mxu0 0
        %2504 = vmatmul.mubr.bf16.gmra.mrb[0].mxu0 %v1217
        %v2505 = vpop.f32.mrb[0].mxu0
        %v2506 = vadd.f32 0.0, %v2505
        %v2507 = vpop.f32.mrb[0].mxu0
        %v2508 = vpop.f32.mrb[0].mxu0
        %v2509 = vpop.f32.mrb[0].mxu0
        %2510 = vdwg.mxu0
        %2511 = vset.pattern.permute.xlu0 19
        %2512 = vperm.xlu0 %2511, %v1095
        %v2513 = vpop.permute.xlu0 %2512
        %v2515 = vmul.f32 %v2513, %v2506
        %v2516 = vadd.f32 %v2453, %v2515
        %s2517 = scalar_lea.vmem [#allocation20], 320
        %v2518 = vld [vmem:[%s2517] sm:$0xf]
        %v2519 = vld [vmem:[%s2517 + $0x4] sm:$0xf]
        %v2520 = vld [vmem:[%s2517 + $0x8] sm:$0xf]
        %v2521 = vld [vmem:[%s2517 + $0xc] sm:$0xf]
        %v2526 = vunpack.c.l.b16 %v2518
        %v2527 = vunpack.c.l.b16 %v2519
        %v2528 = vunpack.c.l.b16 %v2520
        %v2529 = vunpack.c.l.b16 %v2521
        %v2530 = vpack.c.b16 %v2527, %v2526
        %v2531 = vpack.c.b16 %v2529, %v2528
        %2534 = vmatprep.subr.bf16.mxu0 0
        %2535 = vmatpush1.bf16.msra.mxu0 %v2530
        %2536 = vmatprep.subr.bf16.mxu0 0
        %2537 = vmatpush1.bf16.msra.mxu0 %v2531
        %2538 = vmatprep.subr.bf16.mxu0 0
        %2539 = vmatpush1.bf16.msra.mxu0 0
        %2540 = vmatprep.subr.bf16.mxu0 0
        %2541 = vmatpush1.bf16.msra.mxu0 0
        %2542 = vmatprep.subr.bf16.mxu0 0
        %2543 = vmatpush1.bf16.msra.mxu0 0
        %2544 = vmatprep.subr.bf16.mxu0 0
        %2545 = vmatpush1.bf16.msra.mxu0 0
        %2546 = vmatprep.subr.bf16.mxu0 0
        %2547 = vmatpush1.bf16.msra.mxu0 0
        %2548 = vmatprep.subr.bf16.mxu0 0
        %2549 = vmatpush1.bf16.msra.mxu0 0
        %2550 = vmatprep.subr.bf16.mxu0 0
        %2551 = vmatpush1.bf16.msra.mxu0 0
        %2552 = vmatprep.subr.bf16.mxu0 0
        %2553 = vmatpush1.bf16.msra.mxu0 0
        %2554 = vmatprep.subr.bf16.mxu0 0
        %2555 = vmatpush1.bf16.msra.mxu0 0
        %2556 = vmatprep.subr.bf16.mxu0 0
        %2557 = vmatpush1.bf16.msra.mxu0 0
        %2558 = vmatprep.subr.bf16.mxu0 0
        %2559 = vmatpush1.bf16.msra.mxu0 0
        %2560 = vmatprep.subr.bf16.mxu0 0
        %2561 = vmatpush1.bf16.msra.mxu0 0
        %2562 = vmatprep.subr.bf16.mxu0 0
        %2563 = vmatpush1.bf16.msra.mxu0 0
        %2564 = vmatprep.subr.bf16.mxu0 0
        %2565 = vmatpush1.bf16.msra.mxu0 0
        %2566 = vmatprep.mubr.bf16.mxu0 0
        %2567 = vmatmul.mubr.bf16.gmra.mrb[0].mxu0 %v1217
        %v2568 = vpop.f32.mrb[0].mxu0
        %v2569 = vadd.f32 0.0, %v2568
        %v2570 = vpop.f32.mrb[0].mxu0
        %v2571 = vpop.f32.mrb[0].mxu0
        %v2572 = vpop.f32.mrb[0].mxu0
        %2573 = vdwg.mxu0
        %2574 = vset.pattern.permute.xlu0 20
        %2575 = vperm.xlu0 %2574, %v1095
        %v2576 = vpop.permute.xlu0 %2575
        %v2578 = vmul.f32 %v2576, %v2569
        %v2579 = vadd.f32 %v2516, %v2578
        %s2580 = scalar_lea.vmem [#allocation20], 336
        %v2581 = vld [vmem:[%s2580] sm:$0xf]
        %v2582 = vld [vmem:[%s2580 + $0x4] sm:$0xf]
        %v2583 = vld [vmem:[%s2580 + $0x8] sm:$0xf]
        %v2584 = vld [vmem:[%s2580 + $0xc] sm:$0xf]
        %v2589 = vunpack.c.l.b16 %v2581
        %v2590 = vunpack.c.l.b16 %v2582
        %v2591 = vunpack.c.l.b16 %v2583
        %v2592 = vunpack.c.l.b16 %v2584
        %v2593 = vpack.c.b16 %v2590, %v2589
        %v2594 = vpack.c.b16 %v2592, %v2591
        %2597 = vmatprep.subr.bf16.mxu0 0
        %2598 = vmatpush1.bf16.msra.mxu0 %v2593
        %2599 = vmatprep.subr.bf16.mxu0 0
        %2600 = vmatpush1.bf16.msra.mxu0 %v2594
        %2601 = vmatprep.subr.bf16.mxu0 0
        %2602 = vmatpush1.bf16.msra.mxu0 0
        %2603 = vmatprep.subr.bf16.mxu0 0
        %2604 = vmatpush1.bf16.msra.mxu0 0
        %2605 = vmatprep.subr.bf16.mxu0 0
        %2606 = vmatpush1.bf16.msra.mxu0 0
        %2607 = vmatprep.subr.bf16.mxu0 0
        %2608 = vmatpush1.bf16.msra.mxu0 0
        %2609 = vmatprep.subr.bf16.mxu0 0
        %2610 = vmatpush1.bf16.msra.mxu0 0
        %2611 = vmatprep.subr.bf16.mxu0 0
        %2612 = vmatpush1.bf16.msra.mxu0 0
        %2613 = vmatprep.subr.bf16.mxu0 0
        %2614 = vmatpush1.bf16.msra.mxu0 0
        %2615 = vmatprep.subr.bf16.mxu0 0
        %2616 = vmatpush1.bf16.msra.mxu0 0
        %2617 = vmatprep.subr.bf16.mxu0 0
        %2618 = vmatpush1.bf16.msra.mxu0 0
        %2619 = vmatprep.subr.bf16.mxu0 0
        %2620 = vmatpush1.bf16.msra.mxu0 0
        %2621 = vmatprep.subr.bf16.mxu0 0
        %2622 = vmatpush1.bf16.msra.mxu0 0
        %2623 = vmatprep.subr.bf16.mxu0 0
        %2624 = vmatpush1.bf16.msra.mxu0 0
        %2625 = vmatprep.subr.bf16.mxu0 0
        %2626 = vmatpush1.bf16.msra.mxu0 0
        %2627 = vmatprep.subr.bf16.mxu0 0
        %2628 = vmatpush1.bf16.msra.mxu0 0
        %2629 = vmatprep.mubr.bf16.mxu0 0
        %2630 = vmatmul.mubr.bf16.gmra.mrb[0].mxu0 %v1217
        %v2631 = vpop.f32.mrb[0].mxu0
        %v2632 = vadd.f32 0.0, %v2631
        %v2633 = vpop.f32.mrb[0].mxu0
        %v2634 = vpop.f32.mrb[0].mxu0
        %v2635 = vpop.f32.mrb[0].mxu0
        %2636 = vdwg.mxu0
        %2637 = vset.pattern.permute.xlu0 21
        %2638 = vperm.xlu0 %2637, %v1095
        %v2639 = vpop.permute.xlu0 %2638
        %v2641 = vmul.f32 %v2639, %v2632
        %v2642 = vadd.f32 %v2579, %v2641
        %s2643 = scalar_lea.vmem [#allocation20], 352
        %v2644 = vld [vmem:[%s2643] sm:$0xf]
        %v2645 = vld [vmem:[%s2643 + $0x4] sm:$0xf]
        %v2646 = vld [vmem:[%s2643 + $0x8] sm:$0xf]
        %v2647 = vld [vmem:[%s2643 + $0xc] sm:$0xf]
        %v2652 = vunpack.c.l.b16 %v2644
        %v2653 = vunpack.c.l.b16 %v2645
        %v2654 = vunpack.c.l.b16 %v2646
        %v2655 = vunpack.c.l.b16 %v2647
        %v2656 = vpack.c.b16 %v2653, %v2652
        %v2657 = vpack.c.b16 %v2655, %v2654
        %2660 = vmatprep.subr.bf16.mxu0 0
        %2661 = vmatpush1.bf16.msra.mxu0 %v2656
        %2662 = vmatprep.subr.bf16.mxu0 0
        %2663 = vmatpush1.bf16.msra.mxu0 %v2657
        %2664 = vmatprep.subr.bf16.mxu0 0
        %2665 = vmatpush1.bf16.msra.mxu0 0
        %2666 = vmatprep.subr.bf16.mxu0 0
        %2667 = vmatpush1.bf16.msra.mxu0 0
        %2668 = vmatprep.subr.bf16.mxu0 0
        %2669 = vmatpush1.bf16.msra.mxu0 0
        %2670 = vmatprep.subr.bf16.mxu0 0
        %2671 = vmatpush1.bf16.msra.mxu0 0
        %2672 = vmatprep.subr.bf16.mxu0 0
        %2673 = vmatpush1.bf16.msra.mxu0 0
        %2674 = vmatprep.subr.bf16.mxu0 0
        %2675 = vmatpush1.bf16.msra.mxu0 0
        %2676 = vmatprep.subr.bf16.mxu0 0
        %2677 = vmatpush1.bf16.msra.mxu0 0
        %2678 = vmatprep.subr.bf16.mxu0 0
        %2679 = vmatpush1.bf16.msra.mxu0 0
        %2680 = vmatprep.subr.bf16.mxu0 0
        %2681 = vmatpush1.bf16.msra.mxu0 0
        %2682 = vmatprep.subr.bf16.mxu0 0
        %2683 = vmatpush1.bf16.msra.mxu0 0
        %2684 = vmatprep.subr.bf16.mxu0 0
        %2685 = vmatpush1.bf16.msra.mxu0 0
        %2686 = vmatprep.subr.bf16.mxu0 0
        %2687 = vmatpush1.bf16.msra.mxu0 0
        %2688 = vmatprep.subr.bf16.mxu0 0
        %2689 = vmatpush1.bf16.msra.mxu0 0
        %2690 = vmatprep.subr.bf16.mxu0 0
        %2691 = vmatpush1.bf16.msra.mxu0 0
        %2692 = vmatprep.mubr.bf16.mxu0 0
        %2693 = vmatmul.mubr.bf16.gmra.mrb[0].mxu0 %v1217
        %v2694 = vpop.f32.mrb[0].mxu0
        %v2695 = vadd.f32 0.0, %v2694
        %v2696 = vpop.f32.mrb[0].mxu0
        %v2697 = vpop.f32.mrb[0].mxu0
        %v2698 = vpop.f32.mrb[0].mxu0
        %2699 = vdwg.mxu0
        %2700 = vset.pattern.permute.xlu0 22
        %2701 = vperm.xlu0 %2700, %v1095
        %v2702 = vpop.permute.xlu0 %2701
        %v2704 = vmul.f32 %v2702, %v2695
        %v2705 = vadd.f32 %v2642, %v2704
        %s2706 = scalar_lea.vmem [#allocation20], 368
        %v2707 = vld [vmem:[%s2706] sm:$0xf]
        %v2708 = vld [vmem:[%s2706 + $0x4] sm:$0xf]
        %v2709 = vld [vmem:[%s2706 + $0x8] sm:$0xf]
        %v2710 = vld [vmem:[%s2706 + $0xc] sm:$0xf]
        %v2715 = vunpack.c.l.b16 %v2707
        %v2716 = vunpack.c.l.b16 %v2708
        %v2717 = vunpack.c.l.b16 %v2709
        %v2718 = vunpack.c.l.b16 %v2710
        %v2719 = vpack.c.b16 %v2716, %v2715
        %v2720 = vpack.c.b16 %v2718, %v2717
        %2723 = vmatprep.subr.bf16.mxu0 0
        %2724 = vmatpush1.bf16.msra.mxu0 %v2719
        %2725 = vmatprep.subr.bf16.mxu0 0
        %2726 = vmatpush1.bf16.msra.mxu0 %v2720
        %2727 = vmatprep.subr.bf16.mxu0 0
        %2728 = vmatpush1.bf16.msra.mxu0 0
        %2729 = vmatprep.subr.bf16.mxu0 0
        %2730 = vmatpush1.bf16.msra.mxu0 0
        %2731 = vmatprep.subr.bf16.mxu0 0
        %2732 = vmatpush1.bf16.msra.mxu0 0
        %2733 = vmatprep.subr.bf16.mxu0 0
        %2734 = vmatpush1.bf16.msra.mxu0 0
        %2735 = vmatprep.subr.bf16.mxu0 0
        %2736 = vmatpush1.bf16.msra.mxu0 0
        %2737 = vmatprep.subr.bf16.mxu0 0
        %2738 = vmatpush1.bf16.msra.mxu0 0
        %2739 = vmatprep.subr.bf16.mxu0 0
        %2740 = vmatpush1.bf16.msra.mxu0 0
        %2741 = vmatprep.subr.bf16.mxu0 0
        %2742 = vmatpush1.bf16.msra.mxu0 0
        %2743 = vmatprep.subr.bf16.mxu0 0
        %2744 = vmatpush1.bf16.msra.mxu0 0
        %2745 = vmatprep.subr.bf16.mxu0 0
        %2746 = vmatpush1.bf16.msra.mxu0 0
        %2747 = vmatprep.subr.bf16.mxu0 0
        %2748 = vmatpush1.bf16.msra.mxu0 0
        %2749 = vmatprep.subr.bf16.mxu0 0
        %2750 = vmatpush1.bf16.msra.mxu0 0
        %2751 = vmatprep.subr.bf16.mxu0 0
        %2752 = vmatpush1.bf16.msra.mxu0 0
        %2753 = vmatprep.subr.bf16.mxu0 0
        %2754 = vmatpush1.bf16.msra.mxu0 0
        %2755 = vmatprep.mubr.bf16.mxu0 0
        %2756 = vmatmul.mubr.bf16.gmra.mrb[0].mxu0 %v1217
        %v2757 = vpop.f32.mrb[0].mxu0
        %v2758 = vadd.f32 0.0, %v2757
        %v2759 = vpop.f32.mrb[0].mxu0
        %v2760 = vpop.f32.mrb[0].mxu0
        %v2761 = vpop.f32.mrb[0].mxu0
        %2762 = vdwg.mxu0
        %2763 = vset.pattern.permute.xlu0 23
        %2764 = vperm.xlu0 %2763, %v1095
        %v2765 = vpop.permute.xlu0 %2764
        %v2767 = vmul.f32 %v2765, %v2758
        %v2768 = vadd.f32 %v2705, %v2767
        %s2769 = scalar_lea.vmem [#allocation20], 384
        %v2770 = vld [vmem:[%s2769] sm:$0xf]
        %v2771 = vld [vmem:[%s2769 + $0x4] sm:$0xf]
        %v2772 = vld [vmem:[%s2769 + $0x8] sm:$0xf]
        %v2773 = vld [vmem:[%s2769 + $0xc] sm:$0xf]
        %v2778 = vunpack.c.l.b16 %v2770
        %v2779 = vunpack.c.l.b16 %v2771
        %v2780 = vunpack.c.l.b16 %v2772
        %v2781 = vunpack.c.l.b16 %v2773
        %v2782 = vpack.c.b16 %v2779, %v2778
        %v2783 = vpack.c.b16 %v2781, %v2780
        %2786 = vmatprep.subr.bf16.mxu0 0
        %2787 = vmatpush1.bf16.msra.mxu0 %v2782
        %2788 = vmatprep.subr.bf16.mxu0 0
        %2789 = vmatpush1.bf16.msra.mxu0 %v2783
        %2790 = vmatprep.subr.bf16.mxu0 0
        %2791 = vmatpush1.bf16.msra.mxu0 0
        %2792 = vmatprep.subr.bf16.mxu0 0
        %2793 = vmatpush1.bf16.msra.mxu0 0
        %2794 = vmatprep.subr.bf16.mxu0 0
        %2795 = vmatpush1.bf16.msra.mxu0 0
        %2796 = vmatprep.subr.bf16.mxu0 0
        %2797 = vmatpush1.bf16.msra.mxu0 0
        %2798 = vmatprep.subr.bf16.mxu0 0
        %2799 = vmatpush1.bf16.msra.mxu0 0
        %2800 = vmatprep.subr.bf16.mxu0 0
        %2801 = vmatpush1.bf16.msra.mxu0 0
        %2802 = vmatprep.subr.bf16.mxu0 0
        %2803 = vmatpush1.bf16.msra.mxu0 0
        %2804 = vmatprep.subr.bf16.mxu0 0
        %2805 = vmatpush1.bf16.msra.mxu0 0
        %2806 = vmatprep.subr.bf16.mxu0 0
        %2807 = vmatpush1.bf16.msra.mxu0 0
        %2808 = vmatprep.subr.bf16.mxu0 0
        %2809 = vmatpush1.bf16.msra.mxu0 0
        %2810 = vmatprep.subr.bf16.mxu0 0
        %2811 = vmatpush1.bf16.msra.mxu0 0
        %2812 = vmatprep.subr.bf16.mxu0 0
        %2813 = vmatpush1.bf16.msra.mxu0 0
        %2814 = vmatprep.subr.bf16.mxu0 0
        %2815 = vmatpush1.bf16.msra.mxu0 0
        %2816 = vmatprep.subr.bf16.mxu0 0
        %2817 = vmatpush1.bf16.msra.mxu0 0
        %2818 = vmatprep.mubr.bf16.mxu0 0
        %2819 = vmatmul.mubr.bf16.gmra.mrb[0].mxu0 %v1217
        %v2820 = vpop.f32.mrb[0].mxu0
        %v2821 = vadd.f32 0.0, %v2820
        %v2822 = vpop.f32.mrb[0].mxu0
        %v2823 = vpop.f32.mrb[0].mxu0
        %v2824 = vpop.f32.mrb[0].mxu0
        %2825 = vdwg.mxu0
        %2826 = vset.pattern.permute.xlu0 24
        %2827 = vperm.xlu0 %2826, %v1095
        %v2828 = vpop.permute.xlu0 %2827
        %v2830 = vmul.f32 %v2828, %v2821
        %v2831 = vadd.f32 %v2768, %v2830
        %s2832 = scalar_lea.vmem [#allocation20], 400
        %v2833 = vld [vmem:[%s2832] sm:$0xf]
        %v2834 = vld [vmem:[%s2832 + $0x4] sm:$0xf]
        %v2835 = vld [vmem:[%s2832 + $0x8] sm:$0xf]
        %v2836 = vld [vmem:[%s2832 + $0xc] sm:$0xf]
        %v2841 = vunpack.c.l.b16 %v2833
        %v2842 = vunpack.c.l.b16 %v2834
        %v2843 = vunpack.c.l.b16 %v2835
        %v2844 = vunpack.c.l.b16 %v2836
        %v2845 = vpack.c.b16 %v2842, %v2841
        %v2846 = vpack.c.b16 %v2844, %v2843
        %2849 = vmatprep.subr.bf16.mxu0 0
        %2850 = vmatpush1.bf16.msra.mxu0 %v2845
        %2851 = vmatprep.subr.bf16.mxu0 0
        %2852 = vmatpush1.bf16.msra.mxu0 %v2846
        %2853 = vmatprep.subr.bf16.mxu0 0
        %2854 = vmatpush1.bf16.msra.mxu0 0
        %2855 = vmatprep.subr.bf16.mxu0 0
        %2856 = vmatpush1.bf16.msra.mxu0 0
        %2857 = vmatprep.subr.bf16.mxu0 0
        %2858 = vmatpush1.bf16.msra.mxu0 0
        %2859 = vmatprep.subr.bf16.mxu0 0
        %2860 = vmatpush1.bf16.msra.mxu0 0
        %2861 = vmatprep.subr.bf16.mxu0 0
        %2862 = vmatpush1.bf16.msra.mxu0 0
        %2863 = vmatprep.subr.bf16.mxu0 0
        %2864 = vmatpush1.bf16.msra.mxu0 0
        %2865 = vmatprep.subr.bf16.mxu0 0
        %2866 = vmatpush1.bf16.msra.mxu0 0
        %2867 = vmatprep.subr.bf16.mxu0 0
        %2868 = vmatpush1.bf16.msra.mxu0 0
        %2869 = vmatprep.subr.bf16.mxu0 0
        %2870 = vmatpush1.bf16.msra.mxu0 0
        %2871 = vmatprep.subr.bf16.mxu0 0
        %2872 = vmatpush1.bf16.msra.mxu0 0
        %2873 = vmatprep.subr.bf16.mxu0 0
        %2874 = vmatpush1.bf16.msra.mxu0 0
        %2875 = vmatprep.subr.bf16.mxu0 0
        %2876 = vmatpush1.bf16.msra.mxu0 0
        %2877 = vmatprep.subr.bf16.mxu0 0
        %2878 = vmatpush1.bf16.msra.mxu0 0
        %2879 = vmatprep.subr.bf16.mxu0 0
        %2880 = vmatpush1.bf16.msra.mxu0 0
        %2881 = vmatprep.mubr.bf16.mxu0 0
        %2882 = vmatmul.mubr.bf16.gmra.mrb[0].mxu0 %v1217
        %v2883 = vpop.f32.mrb[0].mxu0
        %v2884 = vadd.f32 0.0, %v2883
        %v2885 = vpop.f32.mrb[0].mxu0
        %v2886 = vpop.f32.mrb[0].mxu0
        %v2887 = vpop.f32.mrb[0].mxu0
        %2888 = vdwg.mxu0
        %2889 = vset.pattern.permute.xlu0 25
        %2890 = vperm.xlu0 %2889, %v1095
        %v2891 = vpop.permute.xlu0 %2890
        %v2893 = vmul.f32 %v2891, %v2884
        %v2894 = vadd.f32 %v2831, %v2893
        %s2895 = scalar_lea.vmem [#allocation20], 416
        %v2896 = vld [vmem:[%s2895] sm:$0xf]
        %v2897 = vld [vmem:[%s2895 + $0x4] sm:$0xf]
        %v2898 = vld [vmem:[%s2895 + $0x8] sm:$0xf]
        %v2899 = vld [vmem:[%s2895 + $0xc] sm:$0xf]
        %v2904 = vunpack.c.l.b16 %v2896
        %v2905 = vunpack.c.l.b16 %v2897
        %v2906 = vunpack.c.l.b16 %v2898
        %v2907 = vunpack.c.l.b16 %v2899
        %v2908 = vpack.c.b16 %v2905, %v2904
        %v2909 = vpack.c.b16 %v2907, %v2906
        %2912 = vmatprep.subr.bf16.mxu0 0
        %2913 = vmatpush1.bf16.msra.mxu0 %v2908
        %2914 = vmatprep.subr.bf16.mxu0 0
        %2915 = vmatpush1.bf16.msra.mxu0 %v2909
        %2916 = vmatprep.subr.bf16.mxu0 0
        %2917 = vmatpush1.bf16.msra.mxu0 0
        %2918 = vmatprep.subr.bf16.mxu0 0
        %2919 = vmatpush1.bf16.msra.mxu0 0
        %2920 = vmatprep.subr.bf16.mxu0 0
        %2921 = vmatpush1.bf16.msra.mxu0 0
        %2922 = vmatprep.subr.bf16.mxu0 0
        %2923 = vmatpush1.bf16.msra.mxu0 0
        %2924 = vmatprep.subr.bf16.mxu0 0
        %2925 = vmatpush1.bf16.msra.mxu0 0
        %2926 = vmatprep.subr.bf16.mxu0 0
        %2927 = vmatpush1.bf16.msra.mxu0 0
        %2928 = vmatprep.subr.bf16.mxu0 0
        %2929 = vmatpush1.bf16.msra.mxu0 0
        %2930 = vmatprep.subr.bf16.mxu0 0
        %2931 = vmatpush1.bf16.msra.mxu0 0
        %2932 = vmatprep.subr.bf16.mxu0 0
        %2933 = vmatpush1.bf16.msra.mxu0 0
        %2934 = vmatprep.subr.bf16.mxu0 0
        %2935 = vmatpush1.bf16.msra.mxu0 0
        %2936 = vmatprep.subr.bf16.mxu0 0
        %2937 = vmatpush1.bf16.msra.mxu0 0
        %2938 = vmatprep.subr.bf16.mxu0 0
        %2939 = vmatpush1.bf16.msra.mxu0 0
        %2940 = vmatprep.subr.bf16.mxu0 0
        %2941 = vmatpush1.bf16.msra.mxu0 0
        %2942 = vmatprep.subr.bf16.mxu0 0
        %2943 = vmatpush1.bf16.msra.mxu0 0
        %2944 = vmatprep.mubr.bf16.mxu0 0
        %2945 = vmatmul.mubr.bf16.gmra.mrb[0].mxu0 %v1217
        %v2946 = vpop.f32.mrb[0].mxu0
        %v2947 = vadd.f32 0.0, %v2946
        %v2948 = vpop.f32.mrb[0].mxu0
        %v2949 = vpop.f32.mrb[0].mxu0
        %v2950 = vpop.f32.mrb[0].mxu0
        %2951 = vdwg.mxu0
        %2952 = vset.pattern.permute.xlu0 26
        %2953 = vperm.xlu0 %2952, %v1095
        %v2954 = vpop.permute.xlu0 %2953
        %v2956 = vmul.f32 %v2954, %v2947
        %v2957 = vadd.f32 %v2894, %v2956
        %s2958 = scalar_lea.vmem [#allocation20], 432
        %v2959 = vld [vmem:[%s2958] sm:$0xf]
        %v2960 = vld [vmem:[%s2958 + $0x4] sm:$0xf]
        %v2961 = vld [vmem:[%s2958 + $0x8] sm:$0xf]
        %v2962 = vld [vmem:[%s2958 + $0xc] sm:$0xf]
        %v2967 = vunpack.c.l.b16 %v2959
        %v2968 = vunpack.c.l.b16 %v2960
        %v2969 = vunpack.c.l.b16 %v2961
        %v2970 = vunpack.c.l.b16 %v2962
        %v2971 = vpack.c.b16 %v2968, %v2967
        %v2972 = vpack.c.b16 %v2970, %v2969
        %2975 = vmatprep.subr.bf16.mxu0 0
        %2976 = vmatpush1.bf16.msra.mxu0 %v2971
        %2977 = vmatprep.subr.bf16.mxu0 0
        %2978 = vmatpush1.bf16.msra.mxu0 %v2972
        %2979 = vmatprep.subr.bf16.mxu0 0
        %2980 = vmatpush1.bf16.msra.mxu0 0
        %2981 = vmatprep.subr.bf16.mxu0 0
        %2982 = vmatpush1.bf16.msra.mxu0 0
        %2983 = vmatprep.subr.bf16.mxu0 0
        %2984 = vmatpush1.bf16.msra.mxu0 0
        %2985 = vmatprep.subr.bf16.mxu0 0
        %2986 = vmatpush1.bf16.msra.mxu0 0
        %2987 = vmatprep.subr.bf16.mxu0 0
        %2988 = vmatpush1.bf16.msra.mxu0 0
        %2989 = vmatprep.subr.bf16.mxu0 0
        %2990 = vmatpush1.bf16.msra.mxu0 0
        %2991 = vmatprep.subr.bf16.mxu0 0
        %2992 = vmatpush1.bf16.msra.mxu0 0
        %2993 = vmatprep.subr.bf16.mxu0 0
        %2994 = vmatpush1.bf16.msra.mxu0 0
        %2995 = vmatprep.subr.bf16.mxu0 0
        %2996 = vmatpush1.bf16.msra.mxu0 0
        %2997 = vmatprep.subr.bf16.mxu0 0
        %2998 = vmatpush1.bf16.msra.mxu0 0
        %2999 = vmatprep.subr.bf16.mxu0 0
        %3000 = vmatpush1.bf16.msra.mxu0 0
        %3001 = vmatprep.subr.bf16.mxu0 0
        %3002 = vmatpush1.bf16.msra.mxu0 0
        %3003 = vmatprep.subr.bf16.mxu0 0
        %3004 = vmatpush1.bf16.msra.mxu0 0
        %3005 = vmatprep.subr.bf16.mxu0 0
        %3006 = vmatpush1.bf16.msra.mxu0 0
        %3007 = vmatprep.mubr.bf16.mxu0 0
        %3008 = vmatmul.mubr.bf16.gmra.mrb[0].mxu0 %v1217
        %v3009 = vpop.f32.mrb[0].mxu0
        %v3010 = vadd.f32 0.0, %v3009
        %v3011 = vpop.f32.mrb[0].mxu0
        %v3012 = vpop.f32.mrb[0].mxu0
        %v3013 = vpop.f32.mrb[0].mxu0
        %3014 = vdwg.mxu0
        %3015 = vset.pattern.permute.xlu0 27
        %3016 = vperm.xlu0 %3015, %v1095
        %v3017 = vpop.permute.xlu0 %3016
        %v3019 = vmul.f32 %v3017, %v3010
        %v3020 = vadd.f32 %v2957, %v3019
        %s3021 = scalar_lea.vmem [#allocation20], 448
        %v3022 = vld [vmem:[%s3021] sm:$0xf]
        %v3023 = vld [vmem:[%s3021 + $0x4] sm:$0xf]
        %v3024 = vld [vmem:[%s3021 + $0x8] sm:$0xf]
        %v3025 = vld [vmem:[%s3021 + $0xc] sm:$0xf]
        %v3030 = vunpack.c.l.b16 %v3022
        %v3031 = vunpack.c.l.b16 %v3023
        %v3032 = vunpack.c.l.b16 %v3024
        %v3033 = vunpack.c.l.b16 %v3025
        %v3034 = vpack.c.b16 %v3031, %v3030
        %v3035 = vpack.c.b16 %v3033, %v3032
        %3038 = vmatprep.subr.bf16.mxu0 0
        %3039 = vmatpush1.bf16.msra.mxu0 %v3034
        %3040 = vmatprep.subr.bf16.mxu0 0
        %3041 = vmatpush1.bf16.msra.mxu0 %v3035
        %3042 = vmatprep.subr.bf16.mxu0 0
        %3043 = vmatpush1.bf16.msra.mxu0 0
        %3044 = vmatprep.subr.bf16.mxu0 0
        %3045 = vmatpush1.bf16.msra.mxu0 0
        %3046 = vmatprep.subr.bf16.mxu0 0
        %3047 = vmatpush1.bf16.msra.mxu0 0
        %3048 = vmatprep.subr.bf16.mxu0 0
        %3049 = vmatpush1.bf16.msra.mxu0 0
        %3050 = vmatprep.subr.bf16.mxu0 0
        %3051 = vmatpush1.bf16.msra.mxu0 0
        %3052 = vmatprep.subr.bf16.mxu0 0
        %3053 = vmatpush1.bf16.msra.mxu0 0
        %3054 = vmatprep.subr.bf16.mxu0 0
        %3055 = vmatpush1.bf16.msra.mxu0 0
        %3056 = vmatprep.subr.bf16.mxu0 0
        %3057 = vmatpush1.bf16.msra.mxu0 0
        %3058 = vmatprep.subr.bf16.mxu0 0
        %3059 = vmatpush1.bf16.msra.mxu0 0
        %3060 = vmatprep.subr.bf16.mxu0 0
        %3061 = vmatpush1.bf16.msra.mxu0 0
        %3062 = vmatprep.subr.bf16.mxu0 0
        %3063 = vmatpush1.bf16.msra.mxu0 0
        %3064 = vmatprep.subr.bf16.mxu0 0
        %3065 = vmatpush1.bf16.msra.mxu0 0
        %3066 = vmatprep.subr.bf16.mxu0 0
        %3067 = vmatpush1.bf16.msra.mxu0 0
        %3068 = vmatprep.subr.bf16.mxu0 0
        %3069 = vmatpush1.bf16.msra.mxu0 0
        %3070 = vmatprep.mubr.bf16.mxu0 0
        %3071 = vmatmul.mubr.bf16.gmra.mrb[0].mxu0 %v1217
        %v3072 = vpop.f32.mrb[0].mxu0
        %v3073 = vadd.f32 0.0, %v3072
        %v3074 = vpop.f32.mrb[0].mxu0
        %v3075 = vpop.f32.mrb[0].mxu0
        %v3076 = vpop.f32.mrb[0].mxu0
        %3077 = vdwg.mxu0
        %3078 = vset.pattern.permute.xlu0 28
        %3079 = vperm.xlu0 %3078, %v1095
        %v3080 = vpop.permute.xlu0 %3079
        %v3082 = vmul.f32 %v3080, %v3073
        %v3083 = vadd.f32 %v3020, %v3082
        %s3084 = scalar_lea.vmem [#allocation20], 464
        %v3085 = vld [vmem:[%s3084] sm:$0xf]
        %v3086 = vld [vmem:[%s3084 + $0x4] sm:$0xf]
        %v3087 = vld [vmem:[%s3084 + $0x8] sm:$0xf]
        %v3088 = vld [vmem:[%s3084 + $0xc] sm:$0xf]
        %v3093 = vunpack.c.l.b16 %v3085
        %v3094 = vunpack.c.l.b16 %v3086
        %v3095 = vunpack.c.l.b16 %v3087
        %v3096 = vunpack.c.l.b16 %v3088
        %v3097 = vpack.c.b16 %v3094, %v3093
        %v3098 = vpack.c.b16 %v3096, %v3095
        %3101 = vmatprep.subr.bf16.mxu0 0
        %3102 = vmatpush1.bf16.msra.mxu0 %v3097
        %3103 = vmatprep.subr.bf16.mxu0 0
        %3104 = vmatpush1.bf16.msra.mxu0 %v3098
        %3105 = vmatprep.subr.bf16.mxu0 0
        %3106 = vmatpush1.bf16.msra.mxu0 0
        %3107 = vmatprep.subr.bf16.mxu0 0
        %3108 = vmatpush1.bf16.msra.mxu0 0
        %3109 = vmatprep.subr.bf16.mxu0 0
        %3110 = vmatpush1.bf16.msra.mxu0 0
        %3111 = vmatprep.subr.bf16.mxu0 0
        %3112 = vmatpush1.bf16.msra.mxu0 0
        %3113 = vmatprep.subr.bf16.mxu0 0
        %3114 = vmatpush1.bf16.msra.mxu0 0
        %3115 = vmatprep.subr.bf16.mxu0 0
        %3116 = vmatpush1.bf16.msra.mxu0 0
        %3117 = vmatprep.subr.bf16.mxu0 0
        %3118 = vmatpush1.bf16.msra.mxu0 0
        %3119 = vmatprep.subr.bf16.mxu0 0
        %3120 = vmatpush1.bf16.msra.mxu0 0
        %3121 = vmatprep.subr.bf16.mxu0 0
        %3122 = vmatpush1.bf16.msra.mxu0 0
        %3123 = vmatprep.subr.bf16.mxu0 0
        %3124 = vmatpush1.bf16.msra.mxu0 0
        %3125 = vmatprep.subr.bf16.mxu0 0
        %3126 = vmatpush1.bf16.msra.mxu0 0
        %3127 = vmatprep.subr.bf16.mxu0 0
        %3128 = vmatpush1.bf16.msra.mxu0 0
        %3129 = vmatprep.subr.bf16.mxu0 0
        %3130 = vmatpush1.bf16.msra.mxu0 0
        %3131 = vmatprep.subr.bf16.mxu0 0
        %3132 = vmatpush1.bf16.msra.mxu0 0
        %3133 = vmatprep.mubr.bf16.mxu0 0
        %3134 = vmatmul.mubr.bf16.gmra.mrb[0].mxu0 %v1217
        %v3135 = vpop.f32.mrb[0].mxu0
        %v3136 = vadd.f32 0.0, %v3135
        %v3137 = vpop.f32.mrb[0].mxu0
        %v3138 = vpop.f32.mrb[0].mxu0
        %v3139 = vpop.f32.mrb[0].mxu0
        %3140 = vdwg.mxu0
        %3141 = vset.pattern.permute.xlu0 29
        %3142 = vperm.xlu0 %3141, %v1095
        %v3143 = vpop.permute.xlu0 %3142
        %v3145 = vmul.f32 %v3143, %v3136
        %v3146 = vadd.f32 %v3083, %v3145
        %s3147 = scalar_lea.vmem [#allocation20], 480
        %v3148 = vld [vmem:[%s3147] sm:$0xf]
        %v3149 = vld [vmem:[%s3147 + $0x4] sm:$0xf]
        %v3150 = vld [vmem:[%s3147 + $0x8] sm:$0xf]
        %v3151 = vld [vmem:[%s3147 + $0xc] sm:$0xf]
        %v3156 = vunpack.c.l.b16 %v3148
        %v3157 = vunpack.c.l.b16 %v3149
        %v3158 = vunpack.c.l.b16 %v3150
        %v3159 = vunpack.c.l.b16 %v3151
        %v3160 = vpack.c.b16 %v3157, %v3156
        %v3161 = vpack.c.b16 %v3159, %v3158
        %3164 = vmatprep.subr.bf16.mxu0 0
        %3165 = vmatpush1.bf16.msra.mxu0 %v3160
        %3166 = vmatprep.subr.bf16.mxu0 0
        %3167 = vmatpush1.bf16.msra.mxu0 %v3161
        %3168 = vmatprep.subr.bf16.mxu0 0
        %3169 = vmatpush1.bf16.msra.mxu0 0
        %3170 = vmatprep.subr.bf16.mxu0 0
        %3171 = vmatpush1.bf16.msra.mxu0 0
        %3172 = vmatprep.subr.bf16.mxu0 0
        %3173 = vmatpush1.bf16.msra.mxu0 0
        %3174 = vmatprep.subr.bf16.mxu0 0
        %3175 = vmatpush1.bf16.msra.mxu0 0
        %3176 = vmatprep.subr.bf16.mxu0 0
        %3177 = vmatpush1.bf16.msra.mxu0 0
        %3178 = vmatprep.subr.bf16.mxu0 0
        %3179 = vmatpush1.bf16.msra.mxu0 0
        %3180 = vmatprep.subr.bf16.mxu0 0
        %3181 = vmatpush1.bf16.msra.mxu0 0
        %3182 = vmatprep.subr.bf16.mxu0 0
        %3183 = vmatpush1.bf16.msra.mxu0 0
        %3184 = vmatprep.subr.bf16.mxu0 0
        %3185 = vmatpush1.bf16.msra.mxu0 0
        %3186 = vmatprep.subr.bf16.mxu0 0
        %3187 = vmatpush1.bf16.msra.mxu0 0
        %3188 = vmatprep.subr.bf16.mxu0 0
        %3189 = vmatpush1.bf16.msra.mxu0 0
        %3190 = vmatprep.subr.bf16.mxu0 0
        %3191 = vmatpush1.bf16.msra.mxu0 0
        %3192 = vmatprep.subr.bf16.mxu0 0
        %3193 = vmatpush1.bf16.msra.mxu0 0
        %3194 = vmatprep.subr.bf16.mxu0 0
        %3195 = vmatpush1.bf16.msra.mxu0 0
        %3196 = vmatprep.mubr.bf16.mxu0 0
        %3197 = vmatmul.mubr.bf16.gmra.mrb[0].mxu0 %v1217
        %v3198 = vpop.f32.mrb[0].mxu0
        %v3199 = vadd.f32 0.0, %v3198
        %v3200 = vpop.f32.mrb[0].mxu0
        %v3201 = vpop.f32.mrb[0].mxu0
        %v3202 = vpop.f32.mrb[0].mxu0
        %3203 = vdwg.mxu0
        %3204 = vset.pattern.permute.xlu0 30
        %3205 = vperm.xlu0 %3204, %v1095
        %v3206 = vpop.permute.xlu0 %3205
        %v3208 = vmul.f32 %v3206, %v3199
        %v3209 = vadd.f32 %v3146, %v3208
        %s3210 = scalar_lea.vmem [#allocation20], 496
        %v3211 = vld [vmem:[%s3210] sm:$0xf]
        %v3212 = vld [vmem:[%s3210 + $0x4] sm:$0xf]
        %v3213 = vld [vmem:[%s3210 + $0x8] sm:$0xf]
        %v3214 = vld [vmem:[%s3210 + $0xc] sm:$0xf]
        %v3219 = vunpack.c.l.b16 %v3211
        %v3220 = vunpack.c.l.b16 %v3212
        %v3221 = vunpack.c.l.b16 %v3213
        %v3222 = vunpack.c.l.b16 %v3214
        %v3223 = vpack.c.b16 %v3220, %v3219
        %v3224 = vpack.c.b16 %v3222, %v3221
        %3227 = vmatprep.subr.bf16.mxu0 0
        %3228 = vmatpush1.bf16.msra.mxu0 %v3223
        %3229 = vmatprep.subr.bf16.mxu0 0
        %3230 = vmatpush1.bf16.msra.mxu0 %v3224
        %3231 = vmatprep.subr.bf16.mxu0 0
        %3232 = vmatpush1.bf16.msra.mxu0 0
        %3233 = vmatprep.subr.bf16.mxu0 0
        %3234 = vmatpush1.bf16.msra.mxu0 0
        %3235 = vmatprep.subr.bf16.mxu0 0
        %3236 = vmatpush1.bf16.msra.mxu0 0
        %3237 = vmatprep.subr.bf16.mxu0 0
        %3238 = vmatpush1.bf16.msra.mxu0 0
        %3239 = vmatprep.subr.bf16.mxu0 0
        %3240 = vmatpush1.bf16.msra.mxu0 0
        %3241 = vmatprep.subr.bf16.mxu0 0
        %3242 = vmatpush1.bf16.msra.mxu0 0
        %3243 = vmatprep.subr.bf16.mxu0 0
        %3244 = vmatpush1.bf16.msra.mxu0 0
        %3245 = vmatprep.subr.bf16.mxu0 0
        %3246 = vmatpush1.bf16.msra.mxu0 0
        %3247 = vmatprep.subr.bf16.mxu0 0
        %3248 = vmatpush1.bf16.msra.mxu0 0
        %3249 = vmatprep.subr.bf16.mxu0 0
        %3250 = vmatpush1.bf16.msra.mxu0 0
        %3251 = vmatprep.subr.bf16.mxu0 0
        %3252 = vmatpush1.bf16.msra.mxu0 0
        %3253 = vmatprep.subr.bf16.mxu0 0
        %3254 = vmatpush1.bf16.msra.mxu0 0
        %3255 = vmatprep.subr.bf16.mxu0 0
        %3256 = vmatpush1.bf16.msra.mxu0 0
        %3257 = vmatprep.subr.bf16.mxu0 0
        %3258 = vmatpush1.bf16.msra.mxu0 0
        %3259 = vmatprep.mubr.bf16.mxu0 0
        %3260 = vmatmul.mubr.bf16.gmra.mrb[0].mxu0 %v1217
        %v3261 = vpop.f32.mrb[0].mxu0
        %v3262 = vadd.f32 0.0, %v3261
        %v3263 = vpop.f32.mrb[0].mxu0
        %v3264 = vpop.f32.mrb[0].mxu0
        %v3265 = vpop.f32.mrb[0].mxu0
        %3266 = vdwg.mxu0
        %3267 = vset.pattern.permute.xlu0 31
        %3268 = vperm.xlu0 %3267, %v1095
        %v3269 = vpop.permute.xlu0 %3268
        %v3271 = vmul.f32 %v3269, %v3262
        %v3272 = vadd.f32 %v3209, %v3271
        %v3273 = vlaneseq
        %v3274 = vshrl.u32 %v3273, 7
        %v3275 = vadd.s32 %v3274, 8
        %v3276 = vld [vmem:[%s892] sm:$0x1]
        %v3277 = vlaneseq
        %v3278 = vshrl.u32 %v3277, 7
        %v3279 = vsub.s32 0, %v3278
        %v3280 = vrot.slane %v3276, %v3279
        %vm3281 = vcmp.eq.s32.totalorder %v3280, %v3274
        %vm3282 = vcmp.eq.s32.totalorder %v3280, %v3275
        %v3283 = vsel %vm3281, 1, 0
        %v3284 = vsel %vm3282, 1, 0
        %v3285 = vcvt.s32.f32 %v3283
        %v3286 = vcvt.s32.f32 %v3284
        %v3287 = vpack.c.bf16 %v3286, %v3285
        %v3288 = vld [vmem:[#allocation2] sm:$0xff]
        %v3289 = vld [vmem:[#allocation2 + $0x8] sm:$0xff]
        %v3290 = vpack.c.bf16 %v3272, %v3272
        %v3292 = vsel %vm1110, %v3287, 0
        %v3295 = vsel %vm1114, %v3290, 0
        %3297 = vmatprep.subr.bf16.mxu0 0
        %3298 = vmatpush1.bf16.msra.mxu0 %v3295
        %3299 = vmatprep.subr.bf16.mxu0 0
        %3300 = vmatpush1.bf16.msra.mxu0 0
        %3301 = vmatprep.subr.bf16.mxu0 0
        %3302 = vmatpush1.bf16.msra.mxu0 0
        %3303 = vmatprep.subr.bf16.mxu0 0
        %3304 = vmatpush1.bf16.msra.mxu0 0
        %3305 = vmatprep.subr.bf16.mxu0 0
        %3306 = vmatpush1.bf16.msra.mxu0 0
        %3307 = vmatprep.subr.bf16.mxu0 0
        %3308 = vmatpush1.bf16.msra.mxu0 0
        %3309 = vmatprep.subr.bf16.mxu0 0
        %3310 = vmatpush1.bf16.msra.mxu0 0
        %3311 = vmatprep.subr.bf16.mxu0 0
        %3312 = vmatpush1.bf16.msra.mxu0 0
        %3313 = vmatprep.subr.bf16.mxu0 0
        %3314 = vmatpush1.bf16.msra.mxu0 0
        %3315 = vmatprep.subr.bf16.mxu0 0
        %3316 = vmatpush1.bf16.msra.mxu0 0
        %3317 = vmatprep.subr.bf16.mxu0 0
        %3318 = vmatpush1.bf16.msra.mxu0 0
        %3319 = vmatprep.subr.bf16.mxu0 0
        %3320 = vmatpush1.bf16.msra.mxu0 0
        %3321 = vmatprep.subr.bf16.mxu0 0
        %3322 = vmatpush1.bf16.msra.mxu0 0
        %3323 = vmatprep.subr.bf16.mxu0 0
        %3324 = vmatpush1.bf16.msra.mxu0 0
        %3325 = vmatprep.subr.bf16.mxu0 0
        %3326 = vmatpush1.bf16.msra.mxu0 0
        %3327 = vmatprep.subr.bf16.mxu0 0
        %3328 = vmatpush1.bf16.msra.mxu0 0
        %3329 = vmatprep.mubr.bf16.mxu0 0
        %3330 = vmatmul.mubr.bf16.gmra.mrb[0].mxu0 %v3292
        %v3331 = vpop.f32.mrb[0].mxu0
        %v3332 = vadd.f32 0.0, %v3331
        %v3333 = vpop.f32.mrb[0].mxu0
        %v3334 = vpop.f32.mrb[0].mxu0
        %v3335 = vadd.f32 0.0, %v3334
        %v3336 = vpop.f32.mrb[0].mxu0
        %3337 = vdwg.mxu0
        %v3338 = vadd.f32 %v3288, %v3332
        %v3339 = vadd.f32 %v3289, %v3335
        %3340 = vst.msk [vmem:[#allocation2] sm:$0xff] %vm1215, %v3338
        %3341 = vst.msk [vmem:[#allocation2 + $0x8] sm:$0xff] %vm1215, %v3339
        %p3342 = scmp.eq.s32.totalorder %s53, 2
        // Predicated region
        $region201: #{enhanced_molecular_graph_forward.7} parent=107 // pred_check
          %p3343 = pneg %p3342
        $region202: #{enhanced_molecular_graph_forward.7} parent=107 // pred_check_branch
          %3345 = sbr.rel (%p3343) target = $region204
        $region203: #{enhanced_molecular_graph_forward.7} parent=107 // pred_region
          %v3346 = vld [vmem:[#allocation2] sm:$0xff]
          %v3347 = vld [vmem:[#allocation2 + $0x8] sm:$0xff]
          %v3348 = vld [vmem:[#allocation32] sm:$0xff]
          %v3349 = vld [vmem:[#allocation32 + $0x8] sm:$0xff]
          %3351 = vset.pattern.permute.xlu0 0
          %3352 = vperm.xlu0 %3351, %v3348
          %v3353 = vpop.permute.xlu0 %3352
          %3356 = vset.pattern.permute.xlu0 0
          %3357 = vperm.xlu0 %3356, %v3349
          %v3358 = vpop.permute.xlu0 %3357
          %v3360 = vmul.f32 %v3346, %v3353
          %v3361 = vmul.f32 %v3347, %v3358
          %v3362 = vld [vmem:[#allocation23] sm:$0xf]
          %v3363 = vld [vmem:[#allocation23 + $0x4] sm:$0xf]
          %v3364 = vld [vmem:[#allocation23 + $0x8] sm:$0xf]
          %v3365 = vld [vmem:[#allocation23 + $0xc] sm:$0xf]
          %v3370 = vunpack.c.l.b16 %v3362
          %v3371 = vunpack.c.l.b16 %v3363
          %v3372 = vunpack.c.l.b16 %v3364
          %v3373 = vunpack.c.l.b16 %v3365
          %v3374 = vpack.c.b16 %v3371, %v3370
          %v3375 = vpack.c.b16 %v3373, %v3372
          %v3379 = vsel %vm1215, %v1055, 0
          %3381 = vmatprep.subr.bf16.mxu0 0
          %3382 = vmatpush1.bf16.msra.mxu0 %v3374
          %3383 = vmatprep.subr.bf16.mxu0 0
          %3384 = vmatpush1.bf16.msra.mxu0 %v3375
          %3385 = vmatprep.subr.bf16.mxu0 0
          %3386 = vmatpush1.bf16.msra.mxu0 0
          %3387 = vmatprep.subr.bf16.mxu0 0
          %3388 = vmatpush1.bf16.msra.mxu0 0
          %3389 = vmatprep.subr.bf16.mxu0 0
          %3390 = vmatpush1.bf16.msra.mxu0 0
          %3391 = vmatprep.subr.bf16.mxu0 0
          %3392 = vmatpush1.bf16.msra.mxu0 0
          %3393 = vmatprep.subr.bf16.mxu0 0
          %3394 = vmatpush1.bf16.msra.mxu0 0
          %3395 = vmatprep.subr.bf16.mxu0 0
          %3396 = vmatpush1.bf16.msra.mxu0 0
          %3397 = vmatprep.subr.bf16.mxu0 0
          %3398 = vmatpush1.bf16.msra.mxu0 0
          %3399 = vmatprep.subr.bf16.mxu0 0
          %3400 = vmatpush1.bf16.msra.mxu0 0
          %3401 = vmatprep.subr.bf16.mxu0 0
          %3402 = vmatpush1.bf16.msra.mxu0 0
          %3403 = vmatprep.subr.bf16.mxu0 0
          %3404 = vmatpush1.bf16.msra.mxu0 0
          %3405 = vmatprep.subr.bf16.mxu0 0
          %3406 = vmatpush1.bf16.msra.mxu0 0
          %3407 = vmatprep.subr.bf16.mxu0 0
          %3408 = vmatpush1.bf16.msra.mxu0 0
          %3409 = vmatprep.subr.bf16.mxu0 0
          %3410 = vmatpush1.bf16.msra.mxu0 0
          %3411 = vmatprep.subr.bf16.mxu0 0
          %3412 = vmatpush1.bf16.msra.mxu0 0
          %3413 = vmatprep.mubr.bf16.mxu0 0
          %3414 = vmatmul.mubr.bf16.gmra.mrb[0].mxu0 %v3379
          %v3415 = vpop.f32.mrb[0].mxu0
          %v3416 = vadd.f32 0.0, %v3415
          %v3417 = vpop.f32.mrb[0].mxu0
          %v3418 = vpop.f32.mrb[0].mxu0
          %v3419 = vadd.f32 0.0, %v3418
          %v3420 = vpop.f32.mrb[0].mxu0
          %3421 = vdwg.mxu0
          %v3422 = vadd.f32 %v3360, %v3416
          %v3423 = vadd.f32 %v3361, %v3419
          %v3424 = vld [vmem:[#allocation24] sm:$0x1]
          %v3426 = vlaneseq
          %v3427 = vshrl.u32 %v3426, 7
          %v3428 = vsub.s32 0, %v3427
          %v3429 = vrot.slane %v3424, %v3428
          %v3431 = vadd.f32 %v3422, %v3429
          %v3432 = vadd.f32 %v3423, %v3429
          %vm3433 = vcmp.gt.f32.partialorder %v3431, 0.0
          %vm3434 = vcmp.gt.f32.partialorder %v3432, 0.0
          %v3435 = vmin.f32 %v3431, 0.0
          %v3436 = vmin.f32 %v3432, 0.0
          %v3437 = vmul.f32 %v3435, 1.442695
          %v3438 = vpow.pop %v3437
          %v3439 = vmul.f32 %v3436, 1.442695
          %v3440 = vpow.pop %v3439
          %v3441 = vsub.f32 %v3438, 1.0
          %v3442 = vsub.f32 %v3440, 1.0
          %v3443 = vsel %vm3433, %v3431, %v3441
          %v3444 = vsel %vm3434, %v3432, %v3442
          %v3445 = vld [vmem:[#allocation26] sm:$0x1]
          %v3446 = vld [vmem:[#allocation27] sm:$0x1]
          %v3447 = vld [vmem:[#allocation29] sm:$0x1]
          %v3448 = vld [vmem:[#allocation30] sm:$0x1]
          %v3450 = vlaneseq
          %v3451 = vshrl.u32 %v3450, 7
          %v3452 = vsub.s32 0, %v3451
          %v3453 = vrot.slane %v3447, %v3452
          %v3455 = vsub.f32 %v3443, %v3453
          %v3456 = vsub.f32 %v3444, %v3453
          %v3458 = vlaneseq
          %v3459 = vshrl.u32 %v3458, 7
          %v3460 = vsub.s32 0, %v3459
          %v3461 = vrot.slane %v3445, %v3460
          %v3463 = vmul.f32 %v3455, %v3461
          %v3464 = vmul.f32 %v3456, %v3461
          %v3465 = vadd.f32 %v3448, 1e-05
          %v3466 = vrsqrt.pop %v3465
          %v3468 = vlaneseq
          %v3469 = vshrl.u32 %v3468, 7
          %v3470 = vsub.s32 0, %v3469
          %v3471 = vrot.slane %v3466, %v3470
          %v3473 = vmul.f32 %v3463, %v3471
          %v3474 = vmul.f32 %v3464, %v3471
          %v3476 = vlaneseq
          %v3477 = vshrl.u32 %v3476, 7
          %v3478 = vsub.s32 0, %v3477
          %v3479 = vrot.slane %v3446, %v3478
          %v3481 = vadd.f32 %v3473, %v3479
          %v3482 = vadd.f32 %v3474, %v3479
          %v3483 = vpack.c.bf16 %v3482, %v3481
          %v3484 = vld [vmem:[#allocation33] sm:$0xf]
          %v3485 = vld [vmem:[#allocation33 + $0x4] sm:$0xf]
          %v3486 = vld [vmem:[#allocation33 + $0x8] sm:$0xf]
          %v3487 = vld [vmem:[#allocation33 + $0xc] sm:$0xf]
          %v3492 = vunpack.c.l.b16 %v3484
          %v3493 = vunpack.c.l.b16 %v3485
          %v3494 = vunpack.c.l.b16 %v3486
          %v3495 = vunpack.c.l.b16 %v3487
          %v3496 = vpack.c.b16 %v3493, %v3492
          %v3497 = vpack.c.b16 %v3495, %v3494
          %v3501 = vsel %vm1215, %v3483, 0
          %3503 = vmatprep.subr.bf16.mxu0 0
          %3504 = vmatpush1.bf16.msra.mxu0 %v3496
          %3505 = vmatprep.subr.bf16.mxu0 0
          %3506 = vmatpush1.bf16.msra.mxu0 %v3497
          %3507 = vmatprep.subr.bf16.mxu0 0
          %3508 = vmatpush1.bf16.msra.mxu0 0
          %3509 = vmatprep.subr.bf16.mxu0 0
          %3510 = vmatpush1.bf16.msra.mxu0 0
          %3511 = vmatprep.subr.bf16.mxu0 0
          %3512 = vmatpush1.bf16.msra.mxu0 0
          %3513 = vmatprep.subr.bf16.mxu0 0
          %3514 = vmatpush1.bf16.msra.mxu0 0
          %3515 = vmatprep.subr.bf16.mxu0 0
          %3516 = vmatpush1.bf16.msra.mxu0 0
          %3517 = vmatprep.subr.bf16.mxu0 0
          %3518 = vmatpush1.bf16.msra.mxu0 0
          %3519 = vmatprep.subr.bf16.mxu0 0
          %3520 = vmatpush1.bf16.msra.mxu0 0
          %3521 = vmatprep.subr.bf16.mxu0 0
          %3522 = vmatpush1.bf16.msra.mxu0 0
          %3523 = vmatprep.subr.bf16.mxu0 0
          %3524 = vmatpush1.bf16.msra.mxu0 0
          %3525 = vmatprep.subr.bf16.mxu0 0
          %3526 = vmatpush1.bf16.msra.mxu0 0
          %3527 = vmatprep.subr.bf16.mxu0 0
          %3528 = vmatpush1.bf16.msra.mxu0 0
          %3529 = vmatprep.subr.bf16.mxu0 0
          %3530 = vmatpush1.bf16.msra.mxu0 0
          %3531 = vmatprep.subr.bf16.mxu0 0
          %3532 = vmatpush1.bf16.msra.mxu0 0
          %3533 = vmatprep.subr.bf16.mxu0 0
          %3534 = vmatpush1.bf16.msra.mxu0 0
          %3535 = vmatprep.mubr.bf16.mxu0 0
          %3536 = vmatmul.mubr.bf16.gmra.mrb[0].mxu0 %v3501
          %v3537 = vpop.f32.mrb[0].mxu0
          %v3538 = vadd.f32 0.0, %v3537
          %v3539 = vpop.f32.mrb[0].mxu0
          %v3540 = vpop.f32.mrb[0].mxu0
          %v3541 = vadd.f32 0.0, %v3540
          %v3542 = vpop.f32.mrb[0].mxu0
          %3543 = vdwg.mxu0
          %v3544 = vpack.c.bf16 %v3541, %v3538
          %3545 = vst.msk [vmem:[#allocation38] sm:$0xff] %vm1215, %v3538
          %3546 = vst.msk [vmem:[#allocation38 + $0x8] sm:$0xff] %vm1215, %v3541
          %vm3547 = vcmask 326912
          %3548 = vst.msk [vmem:[#allocation38] sm:$0xff] %vm3547, 1.0
          %3549 = vst.msk [vmem:[#allocation38 + $0x8] sm:$0xff] %vm3547, 1.0
          %v3550 = vld [vmem:[#allocation35] sm:$0xf]
          %v3551 = vld [vmem:[#allocation35 + $0x4] sm:$0xf]
          %v3552 = vld [vmem:[#allocation35 + $0x8] sm:$0xf]
          %v3553 = vld [vmem:[#allocation35 + $0xc] sm:$0xf]
          %v3558 = vunpack.c.l.b16 %v3550
          %v3559 = vunpack.c.l.b16 %v3551
          %v3560 = vunpack.c.l.b16 %v3552
          %v3561 = vunpack.c.l.b16 %v3553
          %v3562 = vpack.c.b16 %v3559, %v3558
          %v3563 = vpack.c.b16 %v3561, %v3560
          %v3567 = vsel %vm1215, %v3544, 0
          %3569 = vmatprep.subr.bf16.mxu0 0
          %3570 = vmatpush1.bf16.msra.mxu0 %v3562
          %3571 = vmatprep.subr.bf16.mxu0 0
          %3572 = vmatpush1.bf16.msra.mxu0 %v3563
          %3573 = vmatprep.subr.bf16.mxu0 0
          %3574 = vmatpush1.bf16.msra.mxu0 0
          %3575 = vmatprep.subr.bf16.mxu0 0
          %3576 = vmatpush1.bf16.msra.mxu0 0
          %3577 = vmatprep.subr.bf16.mxu0 0
          %3578 = vmatpush1.bf16.msra.mxu0 0
          %3579 = vmatprep.subr.bf16.mxu0 0
          %3580 = vmatpush1.bf16.msra.mxu0 0
          %3581 = vmatprep.subr.bf16.mxu0 0
          %3582 = vmatpush1.bf16.msra.mxu0 0
          %3583 = vmatprep.subr.bf16.mxu0 0
          %3584 = vmatpush1.bf16.msra.mxu0 0
          %3585 = vmatprep.subr.bf16.mxu0 0
          %3586 = vmatpush1.bf16.msra.mxu0 0
          %3587 = vmatprep.subr.bf16.mxu0 0
          %3588 = vmatpush1.bf16.msra.mxu0 0
          %3589 = vmatprep.subr.bf16.mxu0 0
          %3590 = vmatpush1.bf16.msra.mxu0 0
          %3591 = vmatprep.subr.bf16.mxu0 0
          %3592 = vmatpush1.bf16.msra.mxu0 0
          %3593 = vmatprep.subr.bf16.mxu0 0
          %3594 = vmatpush1.bf16.msra.mxu0 0
          %3595 = vmatprep.subr.bf16.mxu0 0
          %3596 = vmatpush1.bf16.msra.mxu0 0
          %3597 = vmatprep.subr.bf16.mxu0 0
          %3598 = vmatpush1.bf16.msra.mxu0 0
          %3599 = vmatprep.subr.bf16.mxu0 0
          %3600 = vmatpush1.bf16.msra.mxu0 0
          %3601 = vmatprep.mubr.bf16.mxu0 0
          %3602 = vmatmul.mubr.bf16.gmra.mrb[0].mxu0 %v3567
          %v3603 = vpop.f32.mrb[0].mxu0
          %v3604 = vadd.f32 0.0, %v3603
          %v3605 = vpop.f32.mrb[0].mxu0
          %v3606 = vpop.f32.mrb[0].mxu0
          %v3607 = vadd.f32 0.0, %v3606
          %v3608 = vpop.f32.mrb[0].mxu0
          %3609 = vdwg.mxu0
          %3612 = vrot.lane.b32.xlu0 %v3604, 40
          %v3613 = vpop.permute.xlu0 %3612
          %3614 = vrot.lane.b32.xlu0 %v3607, 40
          %v3615 = vpop.permute.xlu0 %3614
          %vm3618 = vcmask 392512
          %3619 = vst.msk [vmem:[#allocation38] sm:$0xff] %vm3618, %v3613
          %3620 = vst.msk [vmem:[#allocation38 + $0x8] sm:$0xff] %vm3618, %v3615
          %v3621 = vld [vmem:[#allocation36] sm:$0xf]
          %v3622 = vld [vmem:[#allocation36 + $0x4] sm:$0xf]
          %v3623 = vld [vmem:[#allocation36 + $0x8] sm:$0xf]
          %v3624 = vld [vmem:[#allocation36 + $0xc] sm:$0xf]
          %v3629 = vunpack.c.l.b16 %v3621
          %v3630 = vunpack.c.l.b16 %v3622
          %v3631 = vunpack.c.l.b16 %v3623
          %v3632 = vunpack.c.l.b16 %v3624
          %v3633 = vpack.c.b16 %v3630, %v3629
          %v3634 = vpack.c.b16 %v3632, %v3631
          %3637 = vmatprep.subr.bf16.mxu0 0
          %3638 = vmatpush1.bf16.msra.mxu0 %v3633
          %3639 = vmatprep.subr.bf16.mxu0 0
          %3640 = vmatpush1.bf16.msra.mxu0 %v3634
          %3641 = vmatprep.subr.bf16.mxu0 0
          %3642 = vmatpush1.bf16.msra.mxu0 0
          %3643 = vmatprep.subr.bf16.mxu0 0
          %3644 = vmatpush1.bf16.msra.mxu0 0
          %3645 = vmatprep.subr.bf16.mxu0 0
          %3646 = vmatpush1.bf16.msra.mxu0 0
          %3647 = vmatprep.subr.bf16.mxu0 0
          %3648 = vmatpush1.bf16.msra.mxu0 0
          %3649 = vmatprep.subr.bf16.mxu0 0
          %3650 = vmatpush1.bf16.msra.mxu0 0
          %3651 = vmatprep.subr.bf16.mxu0 0
          %3652 = vmatpush1.bf16.msra.mxu0 0
          %3653 = vmatprep.subr.bf16.mxu0 0
          %3654 = vmatpush1.bf16.msra.mxu0 0
          %3655 = vmatprep.subr.bf16.mxu0 0
          %3656 = vmatpush1.bf16.msra.mxu0 0
          %3657 = vmatprep.subr.bf16.mxu0 0
          %3658 = vmatpush1.bf16.msra.mxu0 0
          %3659 = vmatprep.subr.bf16.mxu0 0
          %3660 = vmatpush1.bf16.msra.mxu0 0
          %3661 = vmatprep.subr.bf16.mxu0 0
          %3662 = vmatpush1.bf16.msra.mxu0 0
          %3663 = vmatprep.subr.bf16.mxu0 0
          %3664 = vmatpush1.bf16.msra.mxu0 0
          %3665 = vmatprep.subr.bf16.mxu0 0
          %3666 = vmatpush1.bf16.msra.mxu0 0
          %3667 = vmatprep.subr.bf16.mxu0 0
          %3668 = vmatpush1.bf16.msra.mxu0 0
          %3669 = vmatprep.mubr.bf16.mxu0 0
          %3670 = vmatmul.mubr.bf16.gmra.mrb[0].mxu0 %v3567
          %v3671 = vpop.f32.mrb[0].mxu0
          %v3672 = vadd.f32 0.0, %v3671
          %v3673 = vpop.f32.mrb[0].mxu0
          %v3674 = vpop.f32.mrb[0].mxu0
          %v3675 = vadd.f32 0.0, %v3674
          %v3676 = vpop.f32.mrb[0].mxu0
          %3677 = vdwg.mxu0
          %3678 = vst.msk [vmem:[#allocation39] sm:$0xff] %vm1110, %v3672
          %3679 = vst.msk [vmem:[#allocation39 + $0x8] sm:$0xff] %vm1110, %v3675
        $region204: #{enhanced_molecular_graph_forward.7} parent=107 // pred_fallthru
          _
        // Predicated region
        $region205: #{enhanced_molecular_graph_forward.7} parent=107 // pred_check
          %p3680 = pneg %p543
        $region206: #{enhanced_molecular_graph_forward.7} parent=107 // pred_check_branch
          %3682 = sbr.rel (%p3680) target = $region208
        $region207: #{enhanced_molecular_graph_forward.7} parent=107 // pred_region
          %s3684 = ssub.s32 256, 256
          %3685 = vsyncadd [#allocation5], %s3684
          %s3686 = sshll.u32 [#allocation38], 4
          %s3687 = int_to_ptr.vmem [resolvable:$true] %s3686
          %3692 = dma.vmem_to_hbm [thread:$0]  %s3687, 256, %s22, [#allocation5], 128, 128, 8
        $region208: #{enhanced_molecular_graph_forward.7} parent=107 // pred_fallthru
          _
        // Predicated region
        $region209: #{enhanced_molecular_graph_forward.7} parent=107 // pred_check
          %p3693 = pneg %p564
        $region210: #{enhanced_molecular_graph_forward.7} parent=107 // pred_check_branch
          %3695 = sbr.rel (%p3693) target = $region212
        $region211: #{enhanced_molecular_graph_forward.7} parent=107 // pred_region
          %s3697 = ssub.s32 256, 256
          %3698 = vsyncadd [#allocation40], %s3697
          %s3699 = sshll.u32 [#allocation39], 4
          %s3700 = int_to_ptr.vmem [resolvable:$true] %s3699
          %3705 = dma.vmem_to_hbm [thread:$0]  %s3700, 256, %s23, [#allocation40], 128, 128, 8
        $region212: #{enhanced_molecular_graph_forward.7} parent=107 // pred_fallthru
          _
        // Predicated region
        $region213: #{enhanced_molecular_graph_forward.7} parent=107 // pred_check
          %p3706 = pneg %p543
        $region214: #{enhanced_molecular_graph_forward.7} parent=107 // pred_check_branch
          %3708 = sbr.rel (%p3706) target = $region216
        $region215: #{enhanced_molecular_graph_forward.7} parent=107 // pred_region
          %3709 = dma.done [#allocation5], 256
        $region216: #{enhanced_molecular_graph_forward.7} parent=107 // pred_fallthru
          _
        // Predicated region
        $region217: #{enhanced_molecular_graph_forward.7} parent=107 // pred_check
          %p3710 = pneg %p564
        $region218: #{enhanced_molecular_graph_forward.7} parent=107 // pred_check_branch
          %3712 = sbr.rel (%p3710) target = $region220
        $region219: #{enhanced_molecular_graph_forward.7} parent=107 // pred_region
          %3713 = dma.done [#allocation40], 256
        $region220: #{enhanced_molecular_graph_forward.7} parent=107 // pred_fallthru
          _
      $region108: #{enhanced_molecular_graph_forward.7} parent=5 // pred_fallthru
        _
      %p3714 = scmp.le.s32.totalorder 2, %s48
      // Predicated region
      $region221: #{enhanced_molecular_graph_forward.7} parent=5 // pred_check
        %p3715 = pneg %p3714
      $region222: #{enhanced_molecular_graph_forward.7} parent=5 // pred_check_branch
        %3717 = sbr.rel (%p3715) target = $region224
      $region223: #{enhanced_molecular_graph_forward.7} parent=5 // pred_region
        %s3718 = ssub.s32 %s48, 2
      $region224: #{enhanced_molecular_graph_forward.7} parent=5 // pred_fallthru
        _
    $region6: #{enhanced_molecular_graph_forward.7} parent=1 // loop_footer
      %s52 = sadd.s32 1, %s48
    $region7: #{enhanced_molecular_graph_forward.7} parent=1 // loop_footer_branch
      %47 = sbr.rel target = $region3
    $region8: #{enhanced_molecular_graph_forward.7} parent=1 // loop_exit
      _
    %3719 = vsyncpa [#allocation4], 1
    %s3720 = scalar_lea.sflag [#allocation4], 1
    %3721 = vsyncpa %s3720, 1
    %3722 = vsyncpa [#allocation7], 1
    %s3723 = scalar_lea.sflag [#allocation7], 1
    %3724 = vsyncpa %s3723, 1
    %3725 = vsyncpa [#allocation10], 1
    %3726 = vsyncpa [#allocation13], 1
    %3727 = vsyncpa [#allocation16], 1
    %3728 = vsyncpa [#allocation19], 1
    %3729 = vsyncpa [#allocation22], 1
    %3730 = vsyncpa [#allocation25], 1
    %3731 = vsyncpa [#allocation28], 1
    %3732 = vsyncpa [#allocation31], 1
    %3733 = vsyncpa [#allocation34], 1
    %3734 = vsyncpa [#allocation37], 1
    %3735 = vsyncpa [#allocation5], 1
    %s3736 = scalar_lea.sflag [#allocation5], 1
    %3737 = vsyncpa %s3736, 1
    %3738 = vsyncpa [#allocation40], 1

// kernel: enhanced_molecular_graph_forward.8
$region0: #{enhanced_molecular_graph_forward.8}
  #allocation0 [shape = 'u32[]', space=smem, size = 0x4, offset = 0x4, fixed_abs, tag = 'smem constant byte address 0x4 - core index']
  #allocation1 [shape = 'u32[144,128]{1,0:T(1,128)}', space=vmem, size = 0x12000, scoped, tag = 'internal scratch']
  #allocation2 [shape = 'f32[16,40]{1,0:T(8,128)}', space=vmem, size = 0x2000, scoped, tag = 'scratch operand']
  %s0 = inlined_call_operand.hbm [shape: s32[40,1], index: 0, kind: input, shape index: {}]
  %s1 = inlined_call_operand.hbm [shape: s32[40,1], index: 1, kind: input, shape index: {}]
  %s2 = inlined_call_operand.hbm [shape: s32[5,1,8], index: 2, kind: input, shape index: {}]
  %s3 = inlined_call_operand.hbm [shape: f32[16,48], index: 3, kind: input, shape index: {}]
  %s4 = inlined_call_operand.hbm [shape: f32[16,16], index: 4, kind: input, shape index: {}]
  %s5 = inlined_call_operand.hbm [shape: bf16[8,40], index: 5, kind: input, shape index: {}]
  %s6 = inlined_call_operand.hbm [shape: bf16[8,32], index: 6, kind: input, shape index: {}]
  %s7 = inlined_call_operand.hbm [shape: f32[1,32], index: 7, kind: input, shape index: {}]
  %s8 = inlined_call_operand.hbm [shape: f32[16,32], index: 8, kind: output, shape index: {}]
  %s9 = sld [smem:[#allocation0]]
  $region105: #{enhanced_molecular_graph_forward.8} parent=0
    _
  %s11 = ssub.s32 1, %s9
  %s12 = scalar_select 0, %s11, %s9
  $region1: #{enhanced_molecular_graph_forward.8} parent=0
    #allocation3 [shape = 'u8[8192]{0}', space=vmem, size = 0x2000, scoped, tag = 'input window, operand 0']
    #allocation4 [shape = 's32[2]{0}', space=sflag, size = 0x8, scoped, tag = 'scoped memory for enhanced_molecular_graph_forward.8']
    #allocation5 [shape = 's32[2]{0}', space=sflag, size = 0x8, scoped, tag = 'scoped memory for enhanced_molecular_graph_forward.8']
    #allocation6 [shape = 'u8[8192]{0}', space=vmem, size = 0x2000, scoped, tag = 'input window, operand 1']
    #allocation7 [shape = 's32[2]{0}', space=sflag, size = 0x8, scoped, tag = 'scoped memory for enhanced_molecular_graph_forward.8']
    #allocation8 [shape = 'u8[1024]{0}', space=vmem, size = 0x400, scoped, tag = 'input window, operand 2']
    #allocation9 [shape = 'u8[8192]{0}', space=vmem, size = 0x2000, scoped, tag = 'input window, operand 3, single buffered']
    #allocation10 [shape = 's32[1]{0}', space=sflag, size = 0x4, scoped, tag = 'scoped memory for enhanced_molecular_graph_forward.8']
    #allocation11 [shape = 'u8[8192]{0}', space=vmem, size = 0x2000, scoped, tag = 'input window, operand 4, single buffered']
    #allocation12 [shape = 'u8[2048]{0}', space=vmem, size = 0x800, scoped, tag = 'input window, operand 5, single buffered']
    #allocation13 [shape = 's32[1]{0}', space=sflag, size = 0x4, scoped, tag = 'scoped memory for enhanced_molecular_graph_forward.8']
    #allocation14 [shape = 'u8[2048]{0}', space=vmem, size = 0x800, scoped, tag = 'input window, operand 6, single buffered']
    #allocation15 [shape = 'u8[512]{0}', space=vmem, size = 0x400, scoped, tag = 'input window, operand 7, single buffered']
    #allocation16 [shape = 's32[1]{0}', space=sflag, size = 0x4, scoped, tag = 'scoped memory for enhanced_molecular_graph_forward.8']
    #allocation17 [shape = 'u8[8192]{0}', space=vmem, size = 0x2000, scoped, tag = 'output window, operand 0, single buffered']
    %13 = vsyncpa [#allocation4], 0
    %s14 = scalar_lea.sflag [#allocation4], 1
    %15 = vsyncpa %s14, 0
    %16 = vsyncpa [#allocation7], 0
    %s17 = scalar_lea.sflag [#allocation7], 1
    %18 = vsyncpa %s17, 0
    %19 = vsyncpa [#allocation10], 0
    %20 = vsyncpa [#allocation13], 0
    %21 = vsyncpa [#allocation16], 0
    %22 = vsyncpa [#allocation5], 0
    loop: start=0, step=1, limit=7
    $region2: #{enhanced_molecular_graph_forward.8} parent=1 // loop_pre_header
      _
    $region3: #{enhanced_molecular_graph_forward.8} parent=1 // loop_header
      %s24 = sphi 0, %s28
      %p25 = scmp.ge.s32.totalorder %s24, 7
      %s34 = sphi 0, %s36
      %s37 = sphi 0, %s34
      %s38 = sphi 0, %s37
      %s54 = sphi 0, %s38
      %s60 = sphi 0, %s62
      %s63 = sphi 0, %s60
      %s64 = sphi 0, %s63
      %s80 = sphi 0, %s64
      %s86 = sphi 0, %s88
      %s89 = sphi 0, %s86
      %s90 = sphi 0, %s89
      %s106 = sphi 0, %s90
      %s110 = sphi 0, %s110
      %s112 = sphi 0, %s110
      %s113 = sphi 0, %s112
      %s127 = sphi 0, %s113
      %s131 = sphi 0, %s131
      %s133 = sphi 0, %s131
      %s134 = sphi 0, %s133
      %s148 = sphi 0, %s134
      %s152 = sphi 0, %s152
      %s154 = sphi 0, %s152
      %s155 = sphi 0, %s154
      %s169 = sphi 0, %s155
      %s173 = sphi 0, %s173
      %s175 = sphi 0, %s173
      %s176 = sphi 0, %s175
      %s190 = sphi 0, %s176
      %s194 = sphi 0, %s194
      %s196 = sphi 0, %s194
      %s197 = sphi 0, %s196
      %s211 = sphi 0, %s197
      %s215 = sphi 0, %s215
      %s217 = sphi 0, %s215
      %s218 = sphi 0, %s217
      %s232 = sphi 0, %s218
    $region4: #{enhanced_molecular_graph_forward.8} parent=1 // loop_header_branch
      %27 = sbr.rel (%p25) target = $region8
    $region5: #{enhanced_molecular_graph_forward.8} parent=1 // loop_body
      %s29 = ssub.s32 %s24, 1
      %s30 = ssub.s32 %s24, 2
      %s31 = sadd.s32 %s24, 1
      %s32 = ssub.s32 %s24, %s31
      %p33 = scmp.eq.s32.totalorder %s32, 0
      %s35 = sadd.s32 %s34, 1
      %s36 = scalar_select %p33, %s34, %s35
      %p39 = pneg %p33
      %p40 = scmp.eq.s32.totalorder %s24, 4
      %p41 = por %p39, %p40
      %p42 = scmp.ne.s32.totalorder %s34, %s37
      %p43 = scmp.eq.s32.totalorder %s24, 0
      %p44 = por %p42, %p43
      %p45 = scmp.ne.s32.totalorder %s34, %s37
      %p46 = scmp.eq.s32.totalorder %s29, 4
      %p47 = por %p45, %p46
      %p48 = scmp.ne.s32.totalorder %s37, %s38
      %p49 = scmp.eq.s32.totalorder %s29, 0
      %p50 = por %p48, %p49
      %p51 = scmp.ne.s32.totalorder %s37, %s38
      %p52 = scmp.eq.s32.totalorder %s30, 4
      %p53 = por %p51, %p52
      %p55 = scmp.ne.s32.totalorder %s38, %s54
      %p56 = scmp.eq.s32.totalorder %s30, 0
      %p57 = por %p55, %p56
      %s58 = ssub.s32 %s24, %s31
      %p59 = scmp.eq.s32.totalorder %s58, 0
      %s61 = sadd.s32 %s60, 1
      %s62 = scalar_select %p59, %s60, %s61
      %p65 = pneg %p59
      %p66 = scmp.eq.s32.totalorder %s24, 4
      %p67 = por %p65, %p66
      %p68 = scmp.ne.s32.totalorder %s60, %s63
      %p69 = scmp.eq.s32.totalorder %s24, 0
      %p70 = por %p68, %p69
      %p71 = scmp.ne.s32.totalorder %s60, %s63
      %p72 = scmp.eq.s32.totalorder %s29, 4
      %p73 = por %p71, %p72
      %p74 = scmp.ne.s32.totalorder %s63, %s64
      %p75 = scmp.eq.s32.totalorder %s29, 0
      %p76 = por %p74, %p75
      %p77 = scmp.ne.s32.totalorder %s63, %s64
      %p78 = scmp.eq.s32.totalorder %s30, 4
      %p79 = por %p77, %p78
      %p81 = scmp.ne.s32.totalorder %s64, %s80
      %p82 = scmp.eq.s32.totalorder %s30, 0
      %p83 = por %p81, %p82
      %s84 = ssub.s32 %s24, %s31
      %p85 = scmp.eq.s32.totalorder %s84, 0
      %s87 = sadd.s32 %s86, 1
      %s88 = scalar_select %p85, %s86, %s87
      %p91 = pneg %p85
      %p92 = scmp.eq.s32.totalorder %s24, 4
      %p93 = por %p91, %p92
      %p94 = scmp.ne.s32.totalorder %s86, %s89
      %p95 = scmp.eq.s32.totalorder %s24, 0
      %p96 = por %p94, %p95
      %p97 = scmp.ne.s32.totalorder %s86, %s89
      %p98 = scmp.eq.s32.totalorder %s29, 4
      %p99 = por %p97, %p98
      %p100 = scmp.ne.s32.totalorder %s89, %s90
      %p101 = scmp.eq.s32.totalorder %s29, 0
      %p102 = por %p100, %p101
      %p103 = scmp.ne.s32.totalorder %s89, %s90
      %p104 = scmp.eq.s32.totalorder %s30, 4
      %p105 = por %p103, %p104
      %p107 = scmp.ne.s32.totalorder %s90, %s106
      %p108 = scmp.eq.s32.totalorder %s30, 0
      %p109 = por %p107, %p108
      %s111 = sadd.s32 %s110, 1
      %p114 = scmp.eq.s32.totalorder %s24, 4
      %p115 = scmp.ne.s32.totalorder %s110, %s112
      %p116 = scmp.eq.s32.totalorder %s24, 0
      %p117 = por %p115, %p116
      %p118 = scmp.ne.s32.totalorder %s110, %s112
      %p119 = scmp.eq.s32.totalorder %s29, 4
      %p120 = por %p118, %p119
      %p121 = scmp.ne.s32.totalorder %s112, %s113
      %p122 = scmp.eq.s32.totalorder %s29, 0
      %p123 = por %p121, %p122
      %p124 = scmp.ne.s32.totalorder %s112, %s113
      %p125 = scmp.eq.s32.totalorder %s30, 4
      %p126 = por %p124, %p125
      %p128 = scmp.ne.s32.totalorder %s113, %s127
      %p129 = scmp.eq.s32.totalorder %s30, 0
      %p130 = por %p128, %p129
      %s132 = sadd.s32 %s131, 1
      %p135 = scmp.eq.s32.totalorder %s24, 4
      %p136 = scmp.ne.s32.totalorder %s131, %s133
      %p137 = scmp.eq.s32.totalorder %s24, 0
      %p138 = por %p136, %p137
      %p139 = scmp.ne.s32.totalorder %s131, %s133
      %p140 = scmp.eq.s32.totalorder %s29, 4
      %p141 = por %p139, %p140
      %p142 = scmp.ne.s32.totalorder %s133, %s134
      %p143 = scmp.eq.s32.totalorder %s29, 0
      %p144 = por %p142, %p143
      %p145 = scmp.ne.s32.totalorder %s133, %s134
      %p146 = scmp.eq.s32.totalorder %s30, 4
      %p147 = por %p145, %p146
      %p149 = scmp.ne.s32.totalorder %s134, %s148
      %p150 = scmp.eq.s32.totalorder %s30, 0
      %p151 = por %p149, %p150
      %s153 = sadd.s32 %s152, 1
      %p156 = scmp.eq.s32.totalorder %s24, 4
      %p157 = scmp.ne.s32.totalorder %s152, %s154
      %p158 = scmp.eq.s32.totalorder %s24, 0
      %p159 = por %p157, %p158
      %p160 = scmp.ne.s32.totalorder %s152, %s154
      %p161 = scmp.eq.s32.totalorder %s29, 4
      %p162 = por %p160, %p161
      %p163 = scmp.ne.s32.totalorder %s154, %s155
      %p164 = scmp.eq.s32.totalorder %s29, 0
      %p165 = por %p163, %p164
      %p166 = scmp.ne.s32.totalorder %s154, %s155
      %p167 = scmp.eq.s32.totalorder %s30, 4
      %p168 = por %p166, %p167
      %p170 = scmp.ne.s32.totalorder %s155, %s169
      %p171 = scmp.eq.s32.totalorder %s30, 0
      %p172 = por %p170, %p171
      %s174 = sadd.s32 %s173, 1
      %p177 = scmp.eq.s32.totalorder %s24, 4
      %p178 = scmp.ne.s32.totalorder %s173, %s175
      %p179 = scmp.eq.s32.totalorder %s24, 0
      %p180 = por %p178, %p179
      %p181 = scmp.ne.s32.totalorder %s173, %s175
      %p182 = scmp.eq.s32.totalorder %s29, 4
      %p183 = por %p181, %p182
      %p184 = scmp.ne.s32.totalorder %s175, %s176
      %p185 = scmp.eq.s32.totalorder %s29, 0
      %p186 = por %p184, %p185
      %p187 = scmp.ne.s32.totalorder %s175, %s176
      %p188 = scmp.eq.s32.totalorder %s30, 4
      %p189 = por %p187, %p188
      %p191 = scmp.ne.s32.totalorder %s176, %s190
      %p192 = scmp.eq.s32.totalorder %s30, 0
      %p193 = por %p191, %p192
      %s195 = sadd.s32 %s194, 1
      %p198 = scmp.eq.s32.totalorder %s24, 4
      %p199 = scmp.ne.s32.totalorder %s194, %s196
      %p200 = scmp.eq.s32.totalorder %s24, 0
      %p201 = por %p199, %p200
      %p202 = scmp.ne.s32.totalorder %s194, %s196
      %p203 = scmp.eq.s32.totalorder %s29, 4
      %p204 = por %p202, %p203
      %p205 = scmp.ne.s32.totalorder %s196, %s197
      %p206 = scmp.eq.s32.totalorder %s29, 0
      %p207 = por %p205, %p206
      %p208 = scmp.ne.s32.totalorder %s196, %s197
      %p209 = scmp.eq.s32.totalorder %s30, 4
      %p210 = por %p208, %p209
      %p212 = scmp.ne.s32.totalorder %s197, %s211
      %p213 = scmp.eq.s32.totalorder %s30, 0
      %p214 = por %p212, %p213
      %s216 = sadd.s32 %s215, 1
      %p219 = scmp.eq.s32.totalorder %s24, 4
      %p220 = scmp.ne.s32.totalorder %s215, %s217
      %p221 = scmp.eq.s32.totalorder %s24, 0
      %p222 = por %p220, %p221
      %p223 = scmp.ne.s32.totalorder %s215, %s217
      %p224 = scmp.eq.s32.totalorder %s29, 4
      %p225 = por %p223, %p224
      %p226 = scmp.ne.s32.totalorder %s217, %s218
      %p227 = scmp.eq.s32.totalorder %s29, 0
      %p228 = por %p226, %p227
      %p229 = scmp.ne.s32.totalorder %s217, %s218
      %p230 = scmp.eq.s32.totalorder %s30, 4
      %p231 = por %p229, %p230
      %p233 = scmp.ne.s32.totalorder %s218, %s232
      %p234 = scmp.eq.s32.totalorder %s30, 0
      %p235 = por %p233, %p234
      %p236 = scmp.le.s32.totalorder 1, %s24
      %p237 = scmp.lt.s32.totalorder %s24, 6
      %p238 = pnand %p236, %p237
      %p239 = pneg %p238
      // Predicated region
      $region9: #{enhanced_molecular_graph_forward.8} parent=5 // pred_check
        _
      $region10: #{enhanced_molecular_graph_forward.8} parent=5 // pred_check_branch
        %241 = sbr.rel (%p238) target = $region12
      $region11: #{enhanced_molecular_graph_forward.8} parent=5 // pred_region
        %s242 = ssub.s32 %s24, 1
        // Predicated region
        $region13: #{enhanced_molecular_graph_forward.8} parent=11 // pred_check
          %p243 = pneg %p123
        $region14: #{enhanced_molecular_graph_forward.8} parent=11 // pred_check_branch
          %245 = sbr.rel (%p243) target = $region16
        $region15: #{enhanced_molecular_graph_forward.8} parent=11 // pred_region
          %s247 = ssub.s32 256, 256
          %248 = vsyncadd [#allocation10], %s247
          %s249 = sshll.u32 [#allocation9], 4
          %s250 = int_to_ptr.vmem [resolvable:$true] %s249
          %255 = dma.hbm_to_vmem [thread:$0]  %s3, 256, %s250, [#allocation10], 128, 128, 8
        $region16: #{enhanced_molecular_graph_forward.8} parent=11 // pred_fallthru
          _
        // Predicated region
        $region17: #{enhanced_molecular_graph_forward.8} parent=11 // pred_check
          %p256 = pneg %p144
        $region18: #{enhanced_molecular_graph_forward.8} parent=11 // pred_check_branch
          %258 = sbr.rel (%p256) target = $region20
        $region19: #{enhanced_molecular_graph_forward.8} parent=11 // pred_region
          %s260 = ssub.s32 256, 256
          %261 = vsyncadd [#allocation10], %s260
          %s262 = sshll.u32 [#allocation11], 4
          %s263 = int_to_ptr.vmem [resolvable:$true] %s262
          %268 = dma.hbm_to_vmem [thread:$0]  %s4, 256, %s263, [#allocation10], 128, 128, 8
        $region20: #{enhanced_molecular_graph_forward.8} parent=11 // pred_fallthru
          _
        // Predicated region
        $region21: #{enhanced_molecular_graph_forward.8} parent=11 // pred_check
          %p269 = pneg %p165
        $region22: #{enhanced_molecular_graph_forward.8} parent=11 // pred_check_branch
          %271 = sbr.rel (%p269) target = $region24
        $region23: #{enhanced_molecular_graph_forward.8} parent=11 // pred_region
          %s273 = ssub.s32 64, 64
          %274 = vsyncadd [#allocation13], %s273
          %s276 = sshll.u32 [#allocation12], 4
          %s277 = int_to_ptr.vmem [resolvable:$true] %s276
          %279 = dma.hbm_to_vmem [thread:$0]  %s5, 64, %s277, [#allocation13]
        $region24: #{enhanced_molecular_graph_forward.8} parent=11 // pred_fallthru
          _
        // Predicated region
        $region25: #{enhanced_molecular_graph_forward.8} parent=11 // pred_check
          %p280 = pneg %p186
        $region26: #{enhanced_molecular_graph_forward.8} parent=11 // pred_check_branch
          %282 = sbr.rel (%p280) target = $region28
        $region27: #{enhanced_molecular_graph_forward.8} parent=11 // pred_region
          %s284 = ssub.s32 64, 64
          %285 = vsyncadd [#allocation13], %s284
          %s287 = sshll.u32 [#allocation14], 4
          %s288 = int_to_ptr.vmem [resolvable:$true] %s287
          %290 = dma.hbm_to_vmem [thread:$0]  %s6, 64, %s288, [#allocation13]
        $region28: #{enhanced_molecular_graph_forward.8} parent=11 // pred_fallthru
          _
        // Predicated region
        $region29: #{enhanced_molecular_graph_forward.8} parent=11 // pred_check
          %p291 = pneg %p207
        $region30: #{enhanced_molecular_graph_forward.8} parent=11 // pred_check_branch
          %293 = sbr.rel (%p291) target = $region32
        $region31: #{enhanced_molecular_graph_forward.8} parent=11 // pred_region
          %s295 = ssub.s32 16, 16
          %296 = vsyncadd [#allocation16], %s295
          %s298 = sshll.u32 [#allocation15], 4
          %s299 = int_to_ptr.vmem [resolvable:$true] %s298
          %301 = dma.hbm_to_vmem [thread:$0]  %s7, 16, %s299, [#allocation16]
        $region32: #{enhanced_molecular_graph_forward.8} parent=11 // pred_fallthru
          _
      $region12: #{enhanced_molecular_graph_forward.8} parent=5 // pred_fallthru
        _
      %p302 = scmp.lt.s32.totalorder %s24, 5
      // Predicated region
      $region33: #{enhanced_molecular_graph_forward.8} parent=5 // pred_check
        %p303 = pneg %p302
      $region34: #{enhanced_molecular_graph_forward.8} parent=5 // pred_check_branch
        %305 = sbr.rel (%p303) target = $region36
      $region35: #{enhanced_molecular_graph_forward.8} parent=5 // pred_region
        // Predicated region
        $region37: #{enhanced_molecular_graph_forward.8} parent=35 // pred_check
          %p306 = pneg %p44
        $region38: #{enhanced_molecular_graph_forward.8} parent=35 // pred_check_branch
          %308 = sbr.rel (%p306) target = $region40
        $region39: #{enhanced_molecular_graph_forward.8} parent=35 // pred_region
          %s309 = sand.u32 %s34, 1
          %s310 = scalar_lea.sflag [#allocation4], %s309
          %s311 = sand.u32 %s34, 1
          %s312 = smul.addr %s311, 8
          %s313 = scalar_lea.vmem [#allocation3], %s312
          %s315 = ssub.s32 128, 128
          %316 = vsyncadd %s310, %s315
          %s317 = smul.addr %s24, 128
          %s318 = scalar_lea.hbm %s0, %s317
          %s320 = sshll.u32 %s313, 4
          %s321 = int_to_ptr.vmem [resolvable:$true] %s320
          %323 = dma.hbm_to_vmem [thread:$0]  %s318, 128, %s321, %s310
        $region40: #{enhanced_molecular_graph_forward.8} parent=35 // pred_fallthru
          _
        // Predicated region
        $region41: #{enhanced_molecular_graph_forward.8} parent=35 // pred_check
          %p324 = pneg %p70
        $region42: #{enhanced_molecular_graph_forward.8} parent=35 // pred_check_branch
          %326 = sbr.rel (%p324) target = $region44
        $region43: #{enhanced_molecular_graph_forward.8} parent=35 // pred_region
          %s327 = sand.u32 %s24, 1
          %s328 = scalar_lea.sflag [#allocation7], %s327
          %s329 = sand.u32 %s60, 1
          %s330 = smul.addr %s329, 8
          %s331 = scalar_lea.vmem [#allocation6], %s330
          %s333 = ssub.s32 128, 128
          %334 = vsyncadd %s328, %s333
          %s335 = smul.addr %s24, 128
          %s336 = scalar_lea.hbm %s1, %s335
          %s338 = sshll.u32 %s331, 4
          %s339 = int_to_ptr.vmem [resolvable:$true] %s338
          %341 = dma.hbm_to_vmem [thread:$0]  %s336, 128, %s339, %s328
        $region44: #{enhanced_molecular_graph_forward.8} parent=35 // pred_fallthru
          _
        // Predicated region
        $region45: #{enhanced_molecular_graph_forward.8} parent=35 // pred_check
          %p342 = pneg %p96
        $region46: #{enhanced_molecular_graph_forward.8} parent=35 // pred_check_branch
          %344 = sbr.rel (%p342) target = $region48
        $region47: #{enhanced_molecular_graph_forward.8} parent=35 // pred_region
          %s345 = sand.u32 %s24, 1
          %s346 = scalar_lea.sflag [#allocation7], %s345
          %s347 = sand.u32 %s86, 1
          %s348 = scalar_lea.vmem [#allocation8], %s347
          %s350 = ssub.s32 16, 16
          %351 = vsyncadd %s346, %s350
          %s352 = smul.addr %s24, 16
          %s353 = scalar_lea.hbm %s2, %s352
          %s355 = sshll.u32 %s348, 4
          %s356 = int_to_ptr.vmem [resolvable:$true] %s355
          %358 = dma.hbm_to_vmem [thread:$0]  %s353, 16, %s356, %s346
        $region48: #{enhanced_molecular_graph_forward.8} parent=35 // pred_fallthru
          _
      $region36: #{enhanced_molecular_graph_forward.8} parent=5 // pred_fallthru
        _
      %p359 = scmp.le.s32.totalorder 1, %s24
      %p360 = scmp.lt.s32.totalorder %s24, 6
      %p361 = pnand %p359, %p360
      %p362 = pneg %p361
      // Predicated region
      $region49: #{enhanced_molecular_graph_forward.8} parent=5 // pred_check
        _
      $region50: #{enhanced_molecular_graph_forward.8} parent=5 // pred_check_branch
        %364 = sbr.rel (%p361) target = $region52
      $region51: #{enhanced_molecular_graph_forward.8} parent=5 // pred_region
        %s365 = ssub.s32 %s24, 1
        %s366 = sand.u32 %s37, 1
        %s367 = scalar_lea.sflag [#allocation4], %s366
        %s368 = sand.u32 %s37, 1
        %s369 = smul.addr %s368, 8
        %s370 = scalar_lea.vmem [#allocation3], %s369
        // Predicated region
        $region53: #{enhanced_molecular_graph_forward.8} parent=51 // pred_check
          %p371 = pneg %p50
        $region54: #{enhanced_molecular_graph_forward.8} parent=51 // pred_check_branch
          %373 = sbr.rel (%p371) target = $region56
        $region55: #{enhanced_molecular_graph_forward.8} parent=51 // pred_region
          %374 = dma.done %s367, 128
        $region56: #{enhanced_molecular_graph_forward.8} parent=51 // pred_fallthru
          _
        %s375 = sand.u32 %s29, 1
        %s376 = scalar_lea.sflag [#allocation7], %s375
        %s377 = sand.u32 %s63, 1
        %s378 = smul.addr %s377, 8
        %s379 = scalar_lea.vmem [#allocation6], %s378
        // Predicated region
        $region57: #{enhanced_molecular_graph_forward.8} parent=51 // pred_check
          %p380 = pneg %p76
        $region58: #{enhanced_molecular_graph_forward.8} parent=51 // pred_check_branch
          %382 = sbr.rel (%p380) target = $region60
        $region59: #{enhanced_molecular_graph_forward.8} parent=51 // pred_region
          %383 = dma.done %s376, 128
        $region60: #{enhanced_molecular_graph_forward.8} parent=51 // pred_fallthru
          _
        %s384 = sand.u32 %s29, 1
        %s385 = scalar_lea.sflag [#allocation7], %s384
        %s386 = sand.u32 %s89, 1
        %s387 = scalar_lea.vmem [#allocation8], %s386
        // Predicated region
        $region61: #{enhanced_molecular_graph_forward.8} parent=51 // pred_check
          %p388 = pneg %p102
        $region62: #{enhanced_molecular_graph_forward.8} parent=51 // pred_check_branch
          %390 = sbr.rel (%p388) target = $region64
        $region63: #{enhanced_molecular_graph_forward.8} parent=51 // pred_region
          %391 = dma.done %s385, 16
        $region64: #{enhanced_molecular_graph_forward.8} parent=51 // pred_fallthru
          _
        // Predicated region
        $region65: #{enhanced_molecular_graph_forward.8} parent=51 // pred_check
          %p392 = pneg %p123
        $region66: #{enhanced_molecular_graph_forward.8} parent=51 // pred_check_branch
          %394 = sbr.rel (%p392) target = $region68
        $region67: #{enhanced_molecular_graph_forward.8} parent=51 // pred_region
          %395 = dma.done [#allocation10], 256
        $region68: #{enhanced_molecular_graph_forward.8} parent=51 // pred_fallthru
          _
        // Predicated region
        $region69: #{enhanced_molecular_graph_forward.8} parent=51 // pred_check
          %p396 = pneg %p144
        $region70: #{enhanced_molecular_graph_forward.8} parent=51 // pred_check_branch
          %398 = sbr.rel (%p396) target = $region72
        $region71: #{enhanced_molecular_graph_forward.8} parent=51 // pred_region
          %399 = dma.done [#allocation10], 256
        $region72: #{enhanced_molecular_graph_forward.8} parent=51 // pred_fallthru
          _
        // Predicated region
        $region73: #{enhanced_molecular_graph_forward.8} parent=51 // pred_check
          %p400 = pneg %p165
        $region74: #{enhanced_molecular_graph_forward.8} parent=51 // pred_check_branch
          %402 = sbr.rel (%p400) target = $region76
        $region75: #{enhanced_molecular_graph_forward.8} parent=51 // pred_region
          %403 = dma.done [#allocation13], 64
        $region76: #{enhanced_molecular_graph_forward.8} parent=51 // pred_fallthru
          _
        // Predicated region
        $region77: #{enhanced_molecular_graph_forward.8} parent=51 // pred_check
          %p404 = pneg %p186
        $region78: #{enhanced_molecular_graph_forward.8} parent=51 // pred_check_branch
          %406 = sbr.rel (%p404) target = $region80
        $region79: #{enhanced_molecular_graph_forward.8} parent=51 // pred_region
          %407 = dma.done [#allocation13], 64
        $region80: #{enhanced_molecular_graph_forward.8} parent=51 // pred_fallthru
          _
        // Predicated region
        $region81: #{enhanced_molecular_graph_forward.8} parent=51 // pred_check
          %p408 = pneg %p207
        $region82: #{enhanced_molecular_graph_forward.8} parent=51 // pred_check_branch
          %410 = sbr.rel (%p408) target = $region84
        $region83: #{enhanced_molecular_graph_forward.8} parent=51 // pred_region
          %411 = dma.done [#allocation16], 16
        $region84: #{enhanced_molecular_graph_forward.8} parent=51 // pred_fallthru
          _
        %s412 = sand.u32 %s37, 1
        %s413 = scalar_lea.sflag [#allocation4], %s412
        %s414 = sand.u32 %s37, 1
        %s415 = smul.addr %s414, 8
        %s416 = scalar_lea.vmem [#allocation3], %s415
        %p417 = pneg %p50
        %p418 = pneg %p47
        %s419 = sand.u32 %s29, 1
        %s420 = scalar_lea.sflag [#allocation7], %s419
        %s421 = sand.u32 %s63, 1
        %s422 = smul.addr %s421, 8
        %s423 = scalar_lea.vmem [#allocation6], %s422
        %p424 = pneg %p76
        %p425 = pneg %p73
        %s426 = sand.u32 %s29, 1
        %s427 = scalar_lea.sflag [#allocation7], %s426
        %s428 = sand.u32 %s89, 1
        %s429 = scalar_lea.vmem [#allocation8], %s428
        %p430 = pneg %p102
        %p431 = pneg %p99
        %p432 = pneg %p123
        %p433 = pneg %p120
        %p434 = pneg %p144
        %p435 = pneg %p141
        %p436 = pneg %p165
        %p437 = pneg %p162
        %p438 = pneg %p186
        %p439 = pneg %p183
        %p440 = pneg %p207
        %p441 = pneg %p204
        %p442 = pneg %p228
        %p443 = pneg %p225
        %p445 = scmp.eq.s32.totalorder %s29, 0
        // Predicated region
        $region85: #{enhanced_molecular_graph_forward.8} parent=51 // pred_check
          %p446 = pneg %p445
        $region86: #{enhanced_molecular_graph_forward.8} parent=51 // pred_check_branch
          %448 = sbr.rel (%p446) target = $region88
        $region87: #{enhanced_molecular_graph_forward.8} parent=51 // pred_region
          %vm449 = vcmask 326656
          %450 = vst.msk [vmem:[#allocation2] sm:$0xff] %vm449, 0.0
          %451 = vst.msk [vmem:[#allocation2 + $0x8] sm:$0xff] %vm449, 0.0
        $region88: #{enhanced_molecular_graph_forward.8} parent=51 // pred_fallthru
          _
        %v452 = vlaneseq
        %v453 = vand.u32 %v452, 127
        %v454 = vld [vmem:[%s370] sm:$0xff]
        %455 = vset.pattern.permute.xlu0 0
        %456 = vperm.xlu0 %455, %v454
        %v457 = vpop.permute.xlu0 %456
        %vm458 = vcmp.eq.s32.totalorder %v457, %v453
        %v459 = vsel %vm458, 1, 0
        %v460 = vcvt.s32.f32 %v459
        %v461 = vpack.c.bf16 %v460, %v460
        %v462 = vld [vmem:[%s379] sm:$0xff]
        %463 = vset.pattern.permute.xlu0 0
        %464 = vperm.xlu0 %463, %v462
        %v465 = vpop.permute.xlu0 %464
        %vm466 = vcmp.eq.s32.totalorder %v465, %v453
        %v467 = vsel %vm466, 1, 0
        %v468 = vcvt.s32.f32 %v467
        %v469 = vpack.c.bf16 %v468, %v468
        %v470 = vlaneseq
        %v471 = vshrl.u32 %v470, 7
        %v472 = vadd.s32 %v471, 8
        %v473 = vld [vmem:[%s387] sm:$0x1]
        %v474 = vlaneseq
        %v475 = vshrl.u32 %v474, 7
        %v476 = vsub.s32 0, %v475
        %v477 = vrot.slane %v473, %v476
        %vm478 = vcmp.eq.s32.totalorder %v477, %v471
        %vm479 = vcmp.eq.s32.totalorder %v477, %v472
        %v480 = vsel %vm478, 1, 0
        %v481 = vsel %vm479, 1, 0
        %v482 = vcvt.s32.f32 %v480
        %v483 = vcvt.s32.f32 %v481
        %v484 = vpack.c.bf16 %v483, %v482
        %v485 = vld [vmem:[#allocation9] sm:$0xff]
        %v486 = vld [vmem:[#allocation9 + $0x8] sm:$0xff]
        %v487 = vpack.c.bf16 %v486, %v485
        %vm488 = vcmask 130048
        %v490 = vsel %vm488, %v461, 0
        %492 = vmatprep.subr.bf16.mxu0 0
        %493 = vmatpush1.bf16.msra.mxu0 %v487
        %494 = vmatprep.subr.bf16.mxu0 0
        %495 = vmatpush1.bf16.msra.mxu0 0
        %496 = vmatprep.subr.bf16.mxu0 0
        %497 = vmatpush1.bf16.msra.mxu0 0
        %498 = vmatprep.subr.bf16.mxu0 0
        %499 = vmatpush1.bf16.msra.mxu0 0
        %500 = vmatprep.subr.bf16.mxu0 0
        %501 = vmatpush1.bf16.msra.mxu0 0
        %502 = vmatprep.subr.bf16.mxu0 0
        %503 = vmatpush1.bf16.msra.mxu0 0
        %504 = vmatprep.subr.bf16.mxu0 0
        %505 = vmatpush1.bf16.msra.mxu0 0
        %506 = vmatprep.subr.bf16.mxu0 0
        %507 = vmatpush1.bf16.msra.mxu0 0
        %508 = vmatprep.subr.bf16.mxu0 0
        %509 = vmatpush1.bf16.msra.mxu0 0
        %510 = vmatprep.subr.bf16.mxu0 0
        %511 = vmatpush1.bf16.msra.mxu0 0
        %512 = vmatprep.subr.bf16.mxu0 0
        %513 = vmatpush1.bf16.msra.mxu0 0
        %514 = vmatprep.subr.bf16.mxu0 0
        %515 = vmatpush1.bf16.msra.mxu0 0
        %516 = vmatprep.subr.bf16.mxu0 0
        %517 = vmatpush1.bf16.msra.mxu0 0
        %518 = vmatprep.subr.bf16.mxu0 0
        %519 = vmatpush1.bf16.msra.mxu0 0
        %520 = vmatprep.subr.bf16.mxu0 0
        %521 = vmatpush1.bf16.msra.mxu0 0
        %522 = vmatprep.subr.bf16.mxu0 0
        %523 = vmatpush1.bf16.msra.mxu0 0
        %524 = vmatprep.mubr.bf16.mxu0 0
        %525 = vmatmul.mubr.bf16.gmra.mrb[0].mxu0 %v490
        %v526 = vpop.f32.mrb[0].mxu0
        %v527 = vadd.f32 0.0, %v526
        %v528 = vpop.f32.mrb[0].mxu0
        %v529 = vpop.f32.mrb[0].mxu0
        %v530 = vpop.f32.mrb[0].mxu0
        %531 = vdwg.mxu0
        %v532 = vld [vmem:[#allocation11] sm:$0xff]
        %v533 = vld [vmem:[#allocation11 + $0x8] sm:$0xff]
        %v534 = vpack.c.bf16 %v533, %v532
        %v536 = vsel %vm488, %v469, 0
        %538 = vmatprep.subr.bf16.mxu0 0
        %539 = vmatpush1.bf16.msra.mxu0 %v534
        %540 = vmatprep.subr.bf16.mxu0 0
        %541 = vmatpush1.bf16.msra.mxu0 0
        %542 = vmatprep.subr.bf16.mxu0 0
        %543 = vmatpush1.bf16.msra.mxu0 0
        %544 = vmatprep.subr.bf16.mxu0 0
        %545 = vmatpush1.bf16.msra.mxu0 0
        %546 = vmatprep.subr.bf16.mxu0 0
        %547 = vmatpush1.bf16.msra.mxu0 0
        %548 = vmatprep.subr.bf16.mxu0 0
        %549 = vmatpush1.bf16.msra.mxu0 0
        %550 = vmatprep.subr.bf16.mxu0 0
        %551 = vmatpush1.bf16.msra.mxu0 0
        %552 = vmatprep.subr.bf16.mxu0 0
        %553 = vmatpush1.bf16.msra.mxu0 0
        %554 = vmatprep.subr.bf16.mxu0 0
        %555 = vmatpush1.bf16.msra.mxu0 0
        %556 = vmatprep.subr.bf16.mxu0 0
        %557 = vmatpush1.bf16.msra.mxu0 0
        %558 = vmatprep.subr.bf16.mxu0 0
        %559 = vmatpush1.bf16.msra.mxu0 0
        %560 = vmatprep.subr.bf16.mxu0 0
        %561 = vmatpush1.bf16.msra.mxu0 0
        %562 = vmatprep.subr.bf16.mxu0 0
        %563 = vmatpush1.bf16.msra.mxu0 0
        %564 = vmatprep.subr.bf16.mxu0 0
        %565 = vmatpush1.bf16.msra.mxu0 0
        %566 = vmatprep.subr.bf16.mxu0 0
        %567 = vmatpush1.bf16.msra.mxu0 0
        %568 = vmatprep.subr.bf16.mxu0 0
        %569 = vmatpush1.bf16.msra.mxu0 0
        %570 = vmatprep.mubr.bf16.mxu0 0
        %571 = vmatmul.mubr.bf16.gmra.mrb[0].mxu0 %v536
        %v572 = vpop.f32.mrb[0].mxu0
        %v573 = vadd.f32 0.0, %v572
        %v574 = vpop.f32.mrb[0].mxu0
        %v575 = vpop.f32.mrb[0].mxu0
        %v576 = vpop.f32.mrb[0].mxu0
        %577 = vdwg.mxu0
        %579 = vrot.lane.b32.xlu0 %v573, 40
        %v580 = vpop.permute.xlu0 %579
        %v582 = vadd.f32 %v527, %v580
        %vm583 = vcmp.gt.f32.partialorder %v582, 0.0
        %v584 = vmul.f32 %v582, 0.2
        %v585 = vsel %vm583, %v582, %v584
        %586 = vrot.lane.b32.xlu0 %v573, 32
        %v587 = vpop.permute.xlu0 %586
        %v589 = vsub.f32 %v585, %v587
        %v590 = vmul.f32 %v589, 1.442695
        %v591 = vpow.pop %v590
        %v592 = vpack.c.bf16 %v591, %v591
        %v593 = vld [vmem:[#allocation12] sm:$0xf]
        %595 = vrot.lane.b32.xlu0 %v592, 88
        %v596 = vpop.permute.xlu0 %595
        %vm597 = vcmask 64512
        %v599 = vsel %vm597, %v596, 0
        %vm601 = vcmask 1043456
        %v603 = vsel %vm601, %v593, 0
        %605 = vmatprep.subr.bf16.mxu0 0
        %606 = vmatpush1.bf16.msra.mxu0 %v603
        %607 = vmatprep.subr.bf16.mxu0 0
        %608 = vmatpush1.bf16.msra.mxu0 0
        %609 = vmatprep.subr.bf16.mxu0 0
        %610 = vmatpush1.bf16.msra.mxu0 0
        %611 = vmatprep.subr.bf16.mxu0 0
        %612 = vmatpush1.bf16.msra.mxu0 0
        %613 = vmatprep.subr.bf16.mxu0 0
        %614 = vmatpush1.bf16.msra.mxu0 0
        %615 = vmatprep.subr.bf16.mxu0 0
        %616 = vmatpush1.bf16.msra.mxu0 0
        %617 = vmatprep.subr.bf16.mxu0 0
        %618 = vmatpush1.bf16.msra.mxu0 0
        %619 = vmatprep.subr.bf16.mxu0 0
        %620 = vmatpush1.bf16.msra.mxu0 0
        %621 = vmatprep.subr.bf16.mxu0 0
        %622 = vmatpush1.bf16.msra.mxu0 0
        %623 = vmatprep.subr.bf16.mxu0 0
        %624 = vmatpush1.bf16.msra.mxu0 0
        %625 = vmatprep.subr.bf16.mxu0 0
        %626 = vmatpush1.bf16.msra.mxu0 0
        %627 = vmatprep.subr.bf16.mxu0 0
        %628 = vmatpush1.bf16.msra.mxu0 0
        %629 = vmatprep.subr.bf16.mxu0 0
        %630 = vmatpush1.bf16.msra.mxu0 0
        %631 = vmatprep.subr.bf16.mxu0 0
        %632 = vmatpush1.bf16.msra.mxu0 0
        %633 = vmatprep.subr.bf16.mxu0 0
        %634 = vmatpush1.bf16.msra.mxu0 0
        %635 = vmatprep.subr.bf16.mxu0 0
        %636 = vmatpush1.bf16.msra.mxu0 0
        %637 = vmatprep.mubr.bf16.mxu0 0
        %638 = vmatmul.mubr.bf16.gmra.mrb[0].mxu0 %v599
        %v639 = vpop.f32.mrb[0].mxu0
        %v640 = vadd.f32 0.0, %v639
        %v641 = vpop.f32.mrb[0].mxu0
        %v642 = vpop.f32.mrb[0].mxu0
        %v643 = vpop.f32.mrb[0].mxu0
        %644 = vdwg.mxu0
        %v645 = vmul.f32 %v527, %v640
        %v646 = vld [vmem:[#allocation2] sm:$0xff]
        %v647 = vld [vmem:[#allocation2 + $0x8] sm:$0xff]
        %v648 = vpack.c.bf16 %v645, %v645
        %v650 = vsel %vm597, %v484, 0
        %v653 = vsel %vm601, %v648, 0
        %655 = vmatprep.subr.bf16.mxu0 0
        %656 = vmatpush1.bf16.msra.mxu0 %v653
        %657 = vmatprep.subr.bf16.mxu0 0
        %658 = vmatpush1.bf16.msra.mxu0 0
        %659 = vmatprep.subr.bf16.mxu0 0
        %660 = vmatpush1.bf16.msra.mxu0 0
        %661 = vmatprep.subr.bf16.mxu0 0
        %662 = vmatpush1.bf16.msra.mxu0 0
        %663 = vmatprep.subr.bf16.mxu0 0
        %664 = vmatpush1.bf16.msra.mxu0 0
        %665 = vmatprep.subr.bf16.mxu0 0
        %666 = vmatpush1.bf16.msra.mxu0 0
        %667 = vmatprep.subr.bf16.mxu0 0
        %668 = vmatpush1.bf16.msra.mxu0 0
        %669 = vmatprep.subr.bf16.mxu0 0
        %670 = vmatpush1.bf16.msra.mxu0 0
        %671 = vmatprep.subr.bf16.mxu0 0
        %672 = vmatpush1.bf16.msra.mxu0 0
        %673 = vmatprep.subr.bf16.mxu0 0
        %674 = vmatpush1.bf16.msra.mxu0 0
        %675 = vmatprep.subr.bf16.mxu0 0
        %676 = vmatpush1.bf16.msra.mxu0 0
        %677 = vmatprep.subr.bf16.mxu0 0
        %678 = vmatpush1.bf16.msra.mxu0 0
        %679 = vmatprep.subr.bf16.mxu0 0
        %680 = vmatpush1.bf16.msra.mxu0 0
        %681 = vmatprep.subr.bf16.mxu0 0
        %682 = vmatpush1.bf16.msra.mxu0 0
        %683 = vmatprep.subr.bf16.mxu0 0
        %684 = vmatpush1.bf16.msra.mxu0 0
        %685 = vmatprep.subr.bf16.mxu0 0
        %686 = vmatpush1.bf16.msra.mxu0 0
        %687 = vmatprep.mubr.bf16.mxu0 0
        %688 = vmatmul.mubr.bf16.gmra.mrb[0].mxu0 %v650
        %v689 = vpop.f32.mrb[0].mxu0
        %v690 = vadd.f32 0.0, %v689
        %v691 = vpop.f32.mrb[0].mxu0
        %v692 = vpop.f32.mrb[0].mxu0
        %v693 = vadd.f32 0.0, %v692
        %v694 = vpop.f32.mrb[0].mxu0
        %695 = vdwg.mxu0
        %v696 = vadd.f32 %v646, %v690
        %v697 = vadd.f32 %v647, %v693
        %vm698 = vcmask 326656
        %699 = vst.msk [vmem:[#allocation2] sm:$0xff] %vm698, %v696
        %700 = vst.msk [vmem:[#allocation2 + $0x8] sm:$0xff] %vm698, %v697
        %p701 = scmp.eq.s32.totalorder %s29, 4
        // Predicated region
        $region89: #{enhanced_molecular_graph_forward.8} parent=51 // pred_check
          %p702 = pneg %p701
        $region90: #{enhanced_molecular_graph_forward.8} parent=51 // pred_check_branch
          %704 = sbr.rel (%p702) target = $region92
        $region91: #{enhanced_molecular_graph_forward.8} parent=51 // pred_region
          %v705 = vld [vmem:[#allocation2] sm:$0xff]
          %v706 = vld [vmem:[#allocation2 + $0x8] sm:$0xff]
          %v707 = vmax.f32 %v705, 1e-06
          %v708 = vmax.f32 %v706, 1e-06
          %v709 = vrcp.pop %v707
          %v710 = vrcp.pop %v708
          %v711 = vpack.c.bf16 %v710, %v709
          %v712 = vld [vmem:[#allocation14] sm:$0xf]
          %714 = vrot.lane.b32.xlu0 %v711, 96
          %v715 = vpop.permute.xlu0 %714
          %v717 = vsel %vm597, %v715, 0
          %v720 = vsel %vm601, %v712, 0
          %722 = vmatprep.subr.bf16.mxu0 0
          %723 = vmatpush1.bf16.msra.mxu0 %v720
          %724 = vmatprep.subr.bf16.mxu0 0
          %725 = vmatpush1.bf16.msra.mxu0 0
          %726 = vmatprep.subr.bf16.mxu0 0
          %727 = vmatpush1.bf16.msra.mxu0 0
          %728 = vmatprep.subr.bf16.mxu0 0
          %729 = vmatpush1.bf16.msra.mxu0 0
          %730 = vmatprep.subr.bf16.mxu0 0
          %731 = vmatpush1.bf16.msra.mxu0 0
          %732 = vmatprep.subr.bf16.mxu0 0
          %733 = vmatpush1.bf16.msra.mxu0 0
          %734 = vmatprep.subr.bf16.mxu0 0
          %735 = vmatpush1.bf16.msra.mxu0 0
          %736 = vmatprep.subr.bf16.mxu0 0
          %737 = vmatpush1.bf16.msra.mxu0 0
          %738 = vmatprep.subr.bf16.mxu0 0
          %739 = vmatpush1.bf16.msra.mxu0 0
          %740 = vmatprep.subr.bf16.mxu0 0
          %741 = vmatpush1.bf16.msra.mxu0 0
          %742 = vmatprep.subr.bf16.mxu0 0
          %743 = vmatpush1.bf16.msra.mxu0 0
          %744 = vmatprep.subr.bf16.mxu0 0
          %745 = vmatpush1.bf16.msra.mxu0 0
          %746 = vmatprep.subr.bf16.mxu0 0
          %747 = vmatpush1.bf16.msra.mxu0 0
          %748 = vmatprep.subr.bf16.mxu0 0
          %749 = vmatpush1.bf16.msra.mxu0 0
          %750 = vmatprep.subr.bf16.mxu0 0
          %751 = vmatpush1.bf16.msra.mxu0 0
          %752 = vmatprep.subr.bf16.mxu0 0
          %753 = vmatpush1.bf16.msra.mxu0 0
          %754 = vmatprep.mubr.bf16.mxu0 0
          %755 = vmatmul.mubr.bf16.gmra.mrb[0].mxu0 %v717
          %v756 = vpop.f32.mrb[0].mxu0
          %v757 = vadd.f32 0.0, %v756
          %v758 = vpop.f32.mrb[0].mxu0
          %v759 = vpop.f32.mrb[0].mxu0
          %v760 = vadd.f32 0.0, %v759
          %v761 = vpop.f32.mrb[0].mxu0
          %762 = vdwg.mxu0
          %v763 = vmul.f32 %v705, %v757
          %v764 = vmul.f32 %v706, %v760
          %v765 = vld [vmem:[#allocation15] sm:$0x1]
          %v767 = vlaneseq
          %v768 = vshrl.u32 %v767, 7
          %v769 = vsub.s32 0, %v768
          %v770 = vrot.slane %v765, %v769
          %v772 = vadd.f32 %v763, %v770
          %v773 = vadd.f32 %v764, %v770
          %vm774 = vcmask 261120
          %775 = vst.msk [vmem:[#allocation17] sm:$0xff] %vm774, %v772
          %776 = vst.msk [vmem:[#allocation17 + $0x8] sm:$0xff] %vm774, %v773
        $region92: #{enhanced_molecular_graph_forward.8} parent=51 // pred_fallthru
          _
        // Predicated region
        $region93: #{enhanced_molecular_graph_forward.8} parent=51 // pred_check
          %p777 = pneg %p225
        $region94: #{enhanced_molecular_graph_forward.8} parent=51 // pred_check_branch
          %779 = sbr.rel (%p777) target = $region96
        $region95: #{enhanced_molecular_graph_forward.8} parent=51 // pred_region
          %s781 = ssub.s32 256, 256
          %782 = vsyncadd [#allocation5], %s781
          %s783 = sshll.u32 [#allocation17], 4
          %s784 = int_to_ptr.vmem [resolvable:$true] %s783
          %789 = dma.vmem_to_hbm [thread:$0]  %s784, 256, %s8, [#allocation5], 128, 128, 8
        $region96: #{enhanced_molecular_graph_forward.8} parent=51 // pred_fallthru
          _
        // Predicated region
        $region97: #{enhanced_molecular_graph_forward.8} parent=51 // pred_check
          %p790 = pneg %p225
        $region98: #{enhanced_molecular_graph_forward.8} parent=51 // pred_check_branch
          %792 = sbr.rel (%p790) target = $region100
        $region99: #{enhanced_molecular_graph_forward.8} parent=51 // pred_region
          %793 = dma.done [#allocation5], 256
        $region100: #{enhanced_molecular_graph_forward.8} parent=51 // pred_fallthru
          _
      $region52: #{enhanced_molecular_graph_forward.8} parent=5 // pred_fallthru
        _
      %p794 = scmp.le.s32.totalorder 2, %s24
      // Predicated region
      $region101: #{enhanced_molecular_graph_forward.8} parent=5 // pred_check
        %p795 = pneg %p794
      $region102: #{enhanced_molecular_graph_forward.8} parent=5 // pred_check_branch
        %797 = sbr.rel (%p795) target = $region104
      $region103: #{enhanced_molecular_graph_forward.8} parent=5 // pred_region
        %s798 = ssub.s32 %s24, 2
      $region104: #{enhanced_molecular_graph_forward.8} parent=5 // pred_fallthru
        _
    $region6: #{enhanced_molecular_graph_forward.8} parent=1 // loop_footer
      %s28 = sadd.s32 1, %s24
    $region7: #{enhanced_molecular_graph_forward.8} parent=1 // loop_footer_branch
      %23 = sbr.rel target = $region3
    $region8: #{enhanced_molecular_graph_forward.8} parent=1 // loop_exit
      _
    %799 = vsyncpa [#allocation4], 1
    %s800 = scalar_lea.sflag [#allocation4], 1
    %801 = vsyncpa %s800, 1
    %802 = vsyncpa [#allocation7], 1
    %s803 = scalar_lea.sflag [#allocation7], 1
    %804 = vsyncpa %s803, 1
    %805 = vsyncpa [#allocation10], 1
    %806 = vsyncpa [#allocation13], 1
    %807 = vsyncpa [#allocation16], 1
    %808 = vsyncpa [#allocation5], 1
    %s809 = scalar_lea.sflag [#allocation5], 1
    %810 = vsyncpa %s809, 1

// kernel: enhanced_molecular_graph_forward.11
$region0: #{enhanced_molecular_graph_forward.11}
  #allocation0 [shape = 'u32[]', space=smem, size = 0x4, offset = 0x4, fixed_abs, tag = 'smem constant byte address 0x4 - core index']
  #allocation1 [shape = 'u32[144,128]{1,0:T(1,128)}', space=vmem, size = 0x12000, scoped, tag = 'internal scratch']
  #allocation2 [shape = 'f32[8,32]{1,0:T(8,128)}', space=vmem, size = 0x1000, scoped, tag = 'scratch operand']
  #allocation3 [shape = 'f32[1,1]{1,0:T(1,128)S(1)}', space=vmem, size = 0x200, scoped, tag = 'scoped memory for enhanced_molecular_graph_forward.11']
  %s0 = inlined_call_operand.hbm [shape: f32[16,32], index: 0, kind: input, shape index: {}]
  %s1 = inlined_call_operand.hbm [shape: s32[2,1,8], index: 1, kind: input, shape index: {}]
  %s2 = inlined_call_operand.hbm [shape: f32[8,1], index: 2, kind: input, shape index: {}]
  %s3 = inlined_call_operand.hbm [shape: bf16[32,32], index: 3, kind: input, shape index: {}]
  %s4 = inlined_call_operand.hbm [shape: bf16[32,32], index: 4, kind: input, shape index: {}]
  %s5 = inlined_call_operand.hbm [shape: f32[1,32], index: 5, kind: input, shape index: {}]
  %s6 = inlined_call_operand.hbm [shape: f32[1,32], index: 6, kind: input, shape index: {}]
  %s7 = inlined_call_operand.hbm [shape: f32[1,32], index: 7, kind: input, shape index: {}]
  %s8 = inlined_call_operand.hbm [shape: f32[1,32], index: 8, kind: input, shape index: {}]
  %s9 = inlined_call_operand.hbm [shape: f32[1,32], index: 9, kind: input, shape index: {}]
  %s10 = inlined_call_operand.hbm [shape: bf16[32,16], index: 10, kind: input, shape index: {}]
  %s11 = inlined_call_operand.hbm [shape: f32[1,16], index: 11, kind: input, shape index: {}]
  %s12 = inlined_call_operand.hbm [shape: bf16[16,1], index: 12, kind: input, shape index: {}]
  %s13 = inlined_call_operand.<no memory space> [shape: f32[1,1], index: 13, kind: input, shape index: {}]
  %s14 = inlined_call_operand.hbm [shape: f32[8,1], index: 14, kind: output, shape index: {}]
  %s15 = sld [smem:[#allocation0]]
  $region149: #{enhanced_molecular_graph_forward.11} parent=0
    _
  %s17 = ssub.s32 1, %s15
  %s18 = scalar_select 0, %s17, %s15
  %v19 = vstv %s13
  %20 = vst [vmem:[#allocation3] sm:$0x1] %v19
  $region1: #{enhanced_molecular_graph_forward.11} parent=0
    #allocation4 [shape = 'u8[8192]{0}', space=vmem, size = 0x2000, scoped, tag = 'input window, operand 0']
    #allocation5 [shape = 's32[2]{0}', space=sflag, size = 0x8, scoped, tag = 'scoped memory for enhanced_molecular_graph_forward.11']
    #allocation6 [shape = 's32[2]{0}', space=sflag, size = 0x8, scoped, tag = 'scoped memory for enhanced_molecular_graph_forward.11']
    #allocation7 [shape = 'u8[1024]{0}', space=vmem, size = 0x400, scoped, tag = 'input window, operand 1']
    #allocation8 [shape = 's32[2]{0}', space=sflag, size = 0x8, scoped, tag = 'scoped memory for enhanced_molecular_graph_forward.11']
    #allocation9 [shape = 'u8[4096]{0}', space=vmem, size = 0x1000, scoped, tag = 'input window, operand 2, single buffered']
    #allocation10 [shape = 'u8[8192]{0}', space=vmem, size = 0x2000, scoped, tag = 'input window, operand 3, single buffered']
    #allocation11 [shape = 's32[1]{0}', space=sflag, size = 0x4, scoped, tag = 'scoped memory for enhanced_molecular_graph_forward.11']
    #allocation12 [shape = 'u8[8192]{0}', space=vmem, size = 0x2000, scoped, tag = 'input window, operand 4, single buffered']
    #allocation13 [shape = 'u8[512]{0}', space=vmem, size = 0x400, scoped, tag = 'input window, operand 5, single buffered']
    #allocation14 [shape = 's32[1]{0}', space=sflag, size = 0x4, scoped, tag = 'scoped memory for enhanced_molecular_graph_forward.11']
    #allocation15 [shape = 'u8[512]{0}', space=vmem, size = 0x400, scoped, tag = 'input window, operand 6, single buffered']
    #allocation16 [shape = 'u8[512]{0}', space=vmem, size = 0x400, scoped, tag = 'input window, operand 7, single buffered']
    #allocation17 [shape = 's32[1]{0}', space=sflag, size = 0x4, scoped, tag = 'scoped memory for enhanced_molecular_graph_forward.11']
    #allocation18 [shape = 'u8[512]{0}', space=vmem, size = 0x400, scoped, tag = 'input window, operand 8, single buffered']
    #allocation19 [shape = 'u8[512]{0}', space=vmem, size = 0x400, scoped, tag = 'input window, operand 9, single buffered']
    #allocation20 [shape = 's32[1]{0}', space=sflag, size = 0x4, scoped, tag = 'scoped memory for enhanced_molecular_graph_forward.11']
    #allocation21 [shape = 'u8[8192]{0}', space=vmem, size = 0x2000, scoped, tag = 'input window, operand 10, single buffered']
    #allocation22 [shape = 'u8[512]{0}', space=vmem, size = 0x400, scoped, tag = 'input window, operand 11, single buffered']
    #allocation23 [shape = 's32[1]{0}', space=sflag, size = 0x4, scoped, tag = 'scoped memory for enhanced_molecular_graph_forward.11']
    #allocation24 [shape = 'u8[4096]{0}', space=vmem, size = 0x1000, scoped, tag = 'input window, operand 12, single buffered']
    #allocation25 [shape = 'u8[4096]{0}', space=vmem, size = 0x1000, scoped, tag = 'output window, operand 0, single buffered']
    %21 = vsyncpa [#allocation5], 0
    %s22 = scalar_lea.sflag [#allocation5], 1
    %23 = vsyncpa %s22, 0
    %24 = vsyncpa [#allocation8], 0
    %s25 = scalar_lea.sflag [#allocation8], 1
    %26 = vsyncpa %s25, 0
    %27 = vsyncpa [#allocation11], 0
    %28 = vsyncpa [#allocation14], 0
    %29 = vsyncpa [#allocation17], 0
    %30 = vsyncpa [#allocation20], 0
    %31 = vsyncpa [#allocation23], 0
    %32 = vsyncpa [#allocation6], 0
    loop: start=0, step=1, limit=4
    $region2: #{enhanced_molecular_graph_forward.11} parent=1 // loop_pre_header
      _
    $region3: #{enhanced_molecular_graph_forward.11} parent=1 // loop_header
      %s34 = sphi 0, %s38
      %p35 = scmp.ge.s32.totalorder %s34, 4
      %s44 = sphi 0, %s46
      %s47 = sphi 0, %s44
      %s48 = sphi 0, %s47
      %s64 = sphi 0, %s48
      %s70 = sphi 0, %s72
      %s73 = sphi 0, %s70
      %s74 = sphi 0, %s73
      %s90 = sphi 0, %s74
      %s94 = sphi 0, %s94
      %s96 = sphi 0, %s94
      %s97 = sphi 0, %s96
      %s111 = sphi 0, %s97
      %s115 = sphi 0, %s115
      %s117 = sphi 0, %s115
      %s118 = sphi 0, %s117
      %s132 = sphi 0, %s118
      %s136 = sphi 0, %s136
      %s138 = sphi 0, %s136
      %s139 = sphi 0, %s138
      %s153 = sphi 0, %s139
      %s157 = sphi 0, %s157
      %s159 = sphi 0, %s157
      %s160 = sphi 0, %s159
      %s174 = sphi 0, %s160
      %s178 = sphi 0, %s178
      %s180 = sphi 0, %s178
      %s181 = sphi 0, %s180
      %s195 = sphi 0, %s181
      %s199 = sphi 0, %s199
      %s201 = sphi 0, %s199
      %s202 = sphi 0, %s201
      %s216 = sphi 0, %s202
      %s220 = sphi 0, %s220
      %s222 = sphi 0, %s220
      %s223 = sphi 0, %s222
      %s237 = sphi 0, %s223
      %s241 = sphi 0, %s241
      %s243 = sphi 0, %s241
      %s244 = sphi 0, %s243
      %s258 = sphi 0, %s244
      %s262 = sphi 0, %s262
      %s264 = sphi 0, %s262
      %s265 = sphi 0, %s264
      %s279 = sphi 0, %s265
      %s283 = sphi 0, %s283
      %s285 = sphi 0, %s283
      %s286 = sphi 0, %s285
      %s300 = sphi 0, %s286
      %s304 = sphi 0, %s304
      %s306 = sphi 0, %s304
      %s307 = sphi 0, %s306
      %s321 = sphi 0, %s307
      %s325 = sphi 0, %s325
      %s327 = sphi 0, %s325
      %s328 = sphi 0, %s327
      %s342 = sphi 0, %s328
      %s346 = sphi 0, %s346
      %s348 = sphi 0, %s346
      %s349 = sphi 0, %s348
      %s363 = sphi 0, %s349
    $region4: #{enhanced_molecular_graph_forward.11} parent=1 // loop_header_branch
      %37 = sbr.rel (%p35) target = $region8
    $region5: #{enhanced_molecular_graph_forward.11} parent=1 // loop_body
      %s39 = ssub.s32 %s34, 1
      %s40 = ssub.s32 %s34, 2
      %s41 = sadd.s32 %s34, 1
      %s42 = ssub.s32 %s34, %s41
      %p43 = scmp.eq.s32.totalorder %s42, 0
      %s45 = sadd.s32 %s44, 1
      %s46 = scalar_select %p43, %s44, %s45
      %p49 = pneg %p43
      %p50 = scmp.eq.s32.totalorder %s34, 1
      %p51 = por %p49, %p50
      %p52 = scmp.ne.s32.totalorder %s44, %s47
      %p53 = scmp.eq.s32.totalorder %s34, 0
      %p54 = por %p52, %p53
      %p55 = scmp.ne.s32.totalorder %s44, %s47
      %p56 = scmp.eq.s32.totalorder %s39, 1
      %p57 = por %p55, %p56
      %p58 = scmp.ne.s32.totalorder %s47, %s48
      %p59 = scmp.eq.s32.totalorder %s39, 0
      %p60 = por %p58, %p59
      %p61 = scmp.ne.s32.totalorder %s47, %s48
      %p62 = scmp.eq.s32.totalorder %s40, 1
      %p63 = por %p61, %p62
      %p65 = scmp.ne.s32.totalorder %s48, %s64
      %p66 = scmp.eq.s32.totalorder %s40, 0
      %p67 = por %p65, %p66
      %s68 = ssub.s32 %s34, %s41
      %p69 = scmp.eq.s32.totalorder %s68, 0
      %s71 = sadd.s32 %s70, 1
      %s72 = scalar_select %p69, %s70, %s71
      %p75 = pneg %p69
      %p76 = scmp.eq.s32.totalorder %s34, 1
      %p77 = por %p75, %p76
      %p78 = scmp.ne.s32.totalorder %s70, %s73
      %p79 = scmp.eq.s32.totalorder %s34, 0
      %p80 = por %p78, %p79
      %p81 = scmp.ne.s32.totalorder %s70, %s73
      %p82 = scmp.eq.s32.totalorder %s39, 1
      %p83 = por %p81, %p82
      %p84 = scmp.ne.s32.totalorder %s73, %s74
      %p85 = scmp.eq.s32.totalorder %s39, 0
      %p86 = por %p84, %p85
      %p87 = scmp.ne.s32.totalorder %s73, %s74
      %p88 = scmp.eq.s32.totalorder %s40, 1
      %p89 = por %p87, %p88
      %p91 = scmp.ne.s32.totalorder %s74, %s90
      %p92 = scmp.eq.s32.totalorder %s40, 0
      %p93 = por %p91, %p92
      %s95 = sadd.s32 %s94, 1
      %p98 = scmp.eq.s32.totalorder %s34, 1
      %p99 = scmp.ne.s32.totalorder %s94, %s96
      %p100 = scmp.eq.s32.totalorder %s34, 0
      %p101 = por %p99, %p100
      %p102 = scmp.ne.s32.totalorder %s94, %s96
      %p103 = scmp.eq.s32.totalorder %s39, 1
      %p104 = por %p102, %p103
      %p105 = scmp.ne.s32.totalorder %s96, %s97
      %p106 = scmp.eq.s32.totalorder %s39, 0
      %p107 = por %p105, %p106
      %p108 = scmp.ne.s32.totalorder %s96, %s97
      %p109 = scmp.eq.s32.totalorder %s40, 1
      %p110 = por %p108, %p109
      %p112 = scmp.ne.s32.totalorder %s97, %s111
      %p113 = scmp.eq.s32.totalorder %s40, 0
      %p114 = por %p112, %p113
      %s116 = sadd.s32 %s115, 1
      %p119 = scmp.eq.s32.totalorder %s34, 1
      %p120 = scmp.ne.s32.totalorder %s115, %s117
      %p121 = scmp.eq.s32.totalorder %s34, 0
      %p122 = por %p120, %p121
      %p123 = scmp.ne.s32.totalorder %s115, %s117
      %p124 = scmp.eq.s32.totalorder %s39, 1
      %p125 = por %p123, %p124
      %p126 = scmp.ne.s32.totalorder %s117, %s118
      %p127 = scmp.eq.s32.totalorder %s39, 0
      %p128 = por %p126, %p127
      %p129 = scmp.ne.s32.totalorder %s117, %s118
      %p130 = scmp.eq.s32.totalorder %s40, 1
      %p131 = por %p129, %p130
      %p133 = scmp.ne.s32.totalorder %s118, %s132
      %p134 = scmp.eq.s32.totalorder %s40, 0
      %p135 = por %p133, %p134
      %s137 = sadd.s32 %s136, 1
      %p140 = scmp.eq.s32.totalorder %s34, 1
      %p141 = scmp.ne.s32.totalorder %s136, %s138
      %p142 = scmp.eq.s32.totalorder %s34, 0
      %p143 = por %p141, %p142
      %p144 = scmp.ne.s32.totalorder %s136, %s138
      %p145 = scmp.eq.s32.totalorder %s39, 1
      %p146 = por %p144, %p145
      %p147 = scmp.ne.s32.totalorder %s138, %s139
      %p148 = scmp.eq.s32.totalorder %s39, 0
      %p149 = por %p147, %p148
      %p150 = scmp.ne.s32.totalorder %s138, %s139
      %p151 = scmp.eq.s32.totalorder %s40, 1
      %p152 = por %p150, %p151
      %p154 = scmp.ne.s32.totalorder %s139, %s153
      %p155 = scmp.eq.s32.totalorder %s40, 0
      %p156 = por %p154, %p155
      %s158 = sadd.s32 %s157, 1
      %p161 = scmp.eq.s32.totalorder %s34, 1
      %p162 = scmp.ne.s32.totalorder %s157, %s159
      %p163 = scmp.eq.s32.totalorder %s34, 0
      %p164 = por %p162, %p163
      %p165 = scmp.ne.s32.totalorder %s157, %s159
      %p166 = scmp.eq.s32.totalorder %s39, 1
      %p167 = por %p165, %p166
      %p168 = scmp.ne.s32.totalorder %s159, %s160
      %p169 = scmp.eq.s32.totalorder %s39, 0
      %p170 = por %p168, %p169
      %p171 = scmp.ne.s32.totalorder %s159, %s160
      %p172 = scmp.eq.s32.totalorder %s40, 1
      %p173 = por %p171, %p172
      %p175 = scmp.ne.s32.totalorder %s160, %s174
      %p176 = scmp.eq.s32.totalorder %s40, 0
      %p177 = por %p175, %p176
      %s179 = sadd.s32 %s178, 1
      %p182 = scmp.eq.s32.totalorder %s34, 1
      %p183 = scmp.ne.s32.totalorder %s178, %s180
      %p184 = scmp.eq.s32.totalorder %s34, 0
      %p185 = por %p183, %p184
      %p186 = scmp.ne.s32.totalorder %s178, %s180
      %p187 = scmp.eq.s32.totalorder %s39, 1
      %p188 = por %p186, %p187
      %p189 = scmp.ne.s32.totalorder %s180, %s181
      %p190 = scmp.eq.s32.totalorder %s39, 0
      %p191 = por %p189, %p190
      %p192 = scmp.ne.s32.totalorder %s180, %s181
      %p193 = scmp.eq.s32.totalorder %s40, 1
      %p194 = por %p192, %p193
      %p196 = scmp.ne.s32.totalorder %s181, %s195
      %p197 = scmp.eq.s32.totalorder %s40, 0
      %p198 = por %p196, %p197
      %s200 = sadd.s32 %s199, 1
      %p203 = scmp.eq.s32.totalorder %s34, 1
      %p204 = scmp.ne.s32.totalorder %s199, %s201
      %p205 = scmp.eq.s32.totalorder %s34, 0
      %p206 = por %p204, %p205
      %p207 = scmp.ne.s32.totalorder %s199, %s201
      %p208 = scmp.eq.s32.totalorder %s39, 1
      %p209 = por %p207, %p208
      %p210 = scmp.ne.s32.totalorder %s201, %s202
      %p211 = scmp.eq.s32.totalorder %s39, 0
      %p212 = por %p210, %p211
      %p213 = scmp.ne.s32.totalorder %s201, %s202
      %p214 = scmp.eq.s32.totalorder %s40, 1
      %p215 = por %p213, %p214
      %p217 = scmp.ne.s32.totalorder %s202, %s216
      %p218 = scmp.eq.s32.totalorder %s40, 0
      %p219 = por %p217, %p218
      %s221 = sadd.s32 %s220, 1
      %p224 = scmp.eq.s32.totalorder %s34, 1
      %p225 = scmp.ne.s32.totalorder %s220, %s222
      %p226 = scmp.eq.s32.totalorder %s34, 0
      %p227 = por %p225, %p226
      %p228 = scmp.ne.s32.totalorder %s220, %s222
      %p229 = scmp.eq.s32.totalorder %s39, 1
      %p230 = por %p228, %p229
      %p231 = scmp.ne.s32.totalorder %s222, %s223
      %p232 = scmp.eq.s32.totalorder %s39, 0
      %p233 = por %p231, %p232
      %p234 = scmp.ne.s32.totalorder %s222, %s223
      %p235 = scmp.eq.s32.totalorder %s40, 1
      %p236 = por %p234, %p235
      %p238 = scmp.ne.s32.totalorder %s223, %s237
      %p239 = scmp.eq.s32.totalorder %s40, 0
      %p240 = por %p238, %p239
      %s242 = sadd.s32 %s241, 1
      %p245 = scmp.eq.s32.totalorder %s34, 1
      %p246 = scmp.ne.s32.totalorder %s241, %s243
      %p247 = scmp.eq.s32.totalorder %s34, 0
      %p248 = por %p246, %p247
      %p249 = scmp.ne.s32.totalorder %s241, %s243
      %p250 = scmp.eq.s32.totalorder %s39, 1
      %p251 = por %p249, %p250
      %p252 = scmp.ne.s32.totalorder %s243, %s244
      %p253 = scmp.eq.s32.totalorder %s39, 0
      %p254 = por %p252, %p253
      %p255 = scmp.ne.s32.totalorder %s243, %s244
      %p256 = scmp.eq.s32.totalorder %s40, 1
      %p257 = por %p255, %p256
      %p259 = scmp.ne.s32.totalorder %s244, %s258
      %p260 = scmp.eq.s32.totalorder %s40, 0
      %p261 = por %p259, %p260
      %s263 = sadd.s32 %s262, 1
      %p266 = scmp.eq.s32.totalorder %s34, 1
      %p267 = scmp.ne.s32.totalorder %s262, %s264
      %p268 = scmp.eq.s32.totalorder %s34, 0
      %p269 = por %p267, %p268
      %p270 = scmp.ne.s32.totalorder %s262, %s264
      %p271 = scmp.eq.s32.totalorder %s39, 1
      %p272 = por %p270, %p271
      %p273 = scmp.ne.s32.totalorder %s264, %s265
      %p274 = scmp.eq.s32.totalorder %s39, 0
      %p275 = por %p273, %p274
      %p276 = scmp.ne.s32.totalorder %s264, %s265
      %p277 = scmp.eq.s32.totalorder %s40, 1
      %p278 = por %p276, %p277
      %p280 = scmp.ne.s32.totalorder %s265, %s279
      %p281 = scmp.eq.s32.totalorder %s40, 0
      %p282 = por %p280, %p281
      %s284 = sadd.s32 %s283, 1
      %p287 = scmp.eq.s32.totalorder %s34, 1
      %p288 = scmp.ne.s32.totalorder %s283, %s285
      %p289 = scmp.eq.s32.totalorder %s34, 0
      %p290 = por %p288, %p289
      %p291 = scmp.ne.s32.totalorder %s283, %s285
      %p292 = scmp.eq.s32.totalorder %s39, 1
      %p293 = por %p291, %p292
      %p294 = scmp.ne.s32.totalorder %s285, %s286
      %p295 = scmp.eq.s32.totalorder %s39, 0
      %p296 = por %p294, %p295
      %p297 = scmp.ne.s32.totalorder %s285, %s286
      %p298 = scmp.eq.s32.totalorder %s40, 1
      %p299 = por %p297, %p298
      %p301 = scmp.ne.s32.totalorder %s286, %s300
      %p302 = scmp.eq.s32.totalorder %s40, 0
      %p303 = por %p301, %p302
      %s305 = sadd.s32 %s304, 1
      %p308 = scmp.eq.s32.totalorder %s34, 1
      %p309 = scmp.ne.s32.totalorder %s304, %s306
      %p310 = scmp.eq.s32.totalorder %s34, 0
      %p311 = por %p309, %p310
      %p312 = scmp.ne.s32.totalorder %s304, %s306
      %p313 = scmp.eq.s32.totalorder %s39, 1
      %p314 = por %p312, %p313
      %p315 = scmp.ne.s32.totalorder %s306, %s307
      %p316 = scmp.eq.s32.totalorder %s39, 0
      %p317 = por %p315, %p316
      %p318 = scmp.ne.s32.totalorder %s306, %s307
      %p319 = scmp.eq.s32.totalorder %s40, 1
      %p320 = por %p318, %p319
      %p322 = scmp.ne.s32.totalorder %s307, %s321
      %p323 = scmp.eq.s32.totalorder %s40, 0
      %p324 = por %p322, %p323
      %s326 = sadd.s32 %s325, 1
      %p329 = scmp.eq.s32.totalorder %s34, 1
      %p330 = scmp.ne.s32.totalorder %s325, %s327
      %p331 = scmp.eq.s32.totalorder %s34, 0
      %p332 = por %p330, %p331
      %p333 = scmp.ne.s32.totalorder %s325, %s327
      %p334 = scmp.eq.s32.totalorder %s39, 1
      %p335 = por %p333, %p334
      %p336 = scmp.ne.s32.totalorder %s327, %s328
      %p337 = scmp.eq.s32.totalorder %s39, 0
      %p338 = por %p336, %p337
      %p339 = scmp.ne.s32.totalorder %s327, %s328
      %p340 = scmp.eq.s32.totalorder %s40, 1
      %p341 = por %p339, %p340
      %p343 = scmp.ne.s32.totalorder %s328, %s342
      %p344 = scmp.eq.s32.totalorder %s40, 0
      %p345 = por %p343, %p344
      %s347 = sadd.s32 %s346, 1
      %p350 = scmp.eq.s32.totalorder %s34, 1
      %p351 = scmp.ne.s32.totalorder %s346, %s348
      %p352 = scmp.eq.s32.totalorder %s34, 0
      %p353 = por %p351, %p352
      %p354 = scmp.ne.s32.totalorder %s346, %s348
      %p355 = scmp.eq.s32.totalorder %s39, 1
      %p356 = por %p354, %p355
      %p357 = scmp.ne.s32.totalorder %s348, %s349
      %p358 = scmp.eq.s32.totalorder %s39, 0
      %p359 = por %p357, %p358
      %p360 = scmp.ne.s32.totalorder %s348, %s349
      %p361 = scmp.eq.s32.totalorder %s40, 1
      %p362 = por %p360, %p361
      %p364 = scmp.ne.s32.totalorder %s349, %s363
      %p365 = scmp.eq.s32.totalorder %s40, 0
      %p366 = por %p364, %p365
      %p367 = scmp.le.s32.totalorder 1, %s34
      %p368 = scmp.lt.s32.totalorder %s34, 3
      %p369 = pnand %p367, %p368
      %p370 = pneg %p369
      // Predicated region
      $region9: #{enhanced_molecular_graph_forward.11} parent=5 // pred_check
        _
      $region10: #{enhanced_molecular_graph_forward.11} parent=5 // pred_check_branch
        %372 = sbr.rel (%p369) target = $region12
      $region11: #{enhanced_molecular_graph_forward.11} parent=5 // pred_region
        %s373 = ssub.s32 %s34, 1
        // Predicated region
        $region13: #{enhanced_molecular_graph_forward.11} parent=11 // pred_check
          %p374 = pneg %p107
        $region14: #{enhanced_molecular_graph_forward.11} parent=11 // pred_check_branch
          %376 = sbr.rel (%p374) target = $region16
        $region15: #{enhanced_molecular_graph_forward.11} parent=11 // pred_region
          %s378 = ssub.s32 128, 128
          %379 = vsyncadd [#allocation8], %s378
          %s381 = sshll.u32 [#allocation9], 4
          %s382 = int_to_ptr.vmem [resolvable:$true] %s381
          %384 = dma.hbm_to_vmem [thread:$0]  %s2, 128, %s382, [#allocation8]
        $region16: #{enhanced_molecular_graph_forward.11} parent=11 // pred_fallthru
          _
        // Predicated region
        $region17: #{enhanced_molecular_graph_forward.11} parent=11 // pred_check
          %p385 = pneg %p128
        $region18: #{enhanced_molecular_graph_forward.11} parent=11 // pred_check_branch
          %387 = sbr.rel (%p385) target = $region20
        $region19: #{enhanced_molecular_graph_forward.11} parent=11 // pred_region
          %s389 = ssub.s32 256, 256
          %390 = vsyncadd [#allocation11], %s389
          %s391 = sshll.u32 [#allocation10], 4
          %s392 = int_to_ptr.vmem [resolvable:$true] %s391
          %397 = dma.hbm_to_vmem [thread:$0]  %s3, 256, %s392, [#allocation11], 64, 64, 4
        $region20: #{enhanced_molecular_graph_forward.11} parent=11 // pred_fallthru
          _
        // Predicated region
        $region21: #{enhanced_molecular_graph_forward.11} parent=11 // pred_check
          %p398 = pneg %p149
        $region22: #{enhanced_molecular_graph_forward.11} parent=11 // pred_check_branch
          %400 = sbr.rel (%p398) target = $region24
        $region23: #{enhanced_molecular_graph_forward.11} parent=11 // pred_region
          %s402 = ssub.s32 256, 256
          %403 = vsyncadd [#allocation11], %s402
          %s404 = sshll.u32 [#allocation12], 4
          %s405 = int_to_ptr.vmem [resolvable:$true] %s404
          %410 = dma.hbm_to_vmem [thread:$0]  %s4, 256, %s405, [#allocation11], 64, 64, 4
        $region24: #{enhanced_molecular_graph_forward.11} parent=11 // pred_fallthru
          _
        // Predicated region
        $region25: #{enhanced_molecular_graph_forward.11} parent=11 // pred_check
          %p411 = pneg %p170
        $region26: #{enhanced_molecular_graph_forward.11} parent=11 // pred_check_branch
          %413 = sbr.rel (%p411) target = $region28
        $region27: #{enhanced_molecular_graph_forward.11} parent=11 // pred_region
          %s415 = ssub.s32 16, 16
          %416 = vsyncadd [#allocation14], %s415
          %s418 = sshll.u32 [#allocation13], 4
          %s419 = int_to_ptr.vmem [resolvable:$true] %s418
          %421 = dma.hbm_to_vmem [thread:$0]  %s5, 16, %s419, [#allocation14]
        $region28: #{enhanced_molecular_graph_forward.11} parent=11 // pred_fallthru
          _
        // Predicated region
        $region29: #{enhanced_molecular_graph_forward.11} parent=11 // pred_check
          %p422 = pneg %p191
        $region30: #{enhanced_molecular_graph_forward.11} parent=11 // pred_check_branch
          %424 = sbr.rel (%p422) target = $region32
        $region31: #{enhanced_molecular_graph_forward.11} parent=11 // pred_region
          %s426 = ssub.s32 16, 16
          %427 = vsyncadd [#allocation14], %s426
          %s429 = sshll.u32 [#allocation15], 4
          %s430 = int_to_ptr.vmem [resolvable:$true] %s429
          %432 = dma.hbm_to_vmem [thread:$0]  %s6, 16, %s430, [#allocation14]
        $region32: #{enhanced_molecular_graph_forward.11} parent=11 // pred_fallthru
          _
        // Predicated region
        $region33: #{enhanced_molecular_graph_forward.11} parent=11 // pred_check
          %p433 = pneg %p212
        $region34: #{enhanced_molecular_graph_forward.11} parent=11 // pred_check_branch
          %435 = sbr.rel (%p433) target = $region36
        $region35: #{enhanced_molecular_graph_forward.11} parent=11 // pred_region
          %s437 = ssub.s32 16, 16
          %438 = vsyncadd [#allocation17], %s437
          %s440 = sshll.u32 [#allocation16], 4
          %s441 = int_to_ptr.vmem [resolvable:$true] %s440
          %443 = dma.hbm_to_vmem [thread:$0]  %s7, 16, %s441, [#allocation17]
        $region36: #{enhanced_molecular_graph_forward.11} parent=11 // pred_fallthru
          _
        // Predicated region
        $region37: #{enhanced_molecular_graph_forward.11} parent=11 // pred_check
          %p444 = pneg %p233
        $region38: #{enhanced_molecular_graph_forward.11} parent=11 // pred_check_branch
          %446 = sbr.rel (%p444) target = $region40
        $region39: #{enhanced_molecular_graph_forward.11} parent=11 // pred_region
          %s448 = ssub.s32 16, 16
          %449 = vsyncadd [#allocation17], %s448
          %s451 = sshll.u32 [#allocation18], 4
          %s452 = int_to_ptr.vmem [resolvable:$true] %s451
          %454 = dma.hbm_to_vmem [thread:$0]  %s8, 16, %s452, [#allocation17]
        $region40: #{enhanced_molecular_graph_forward.11} parent=11 // pred_fallthru
          _
        // Predicated region
        $region41: #{enhanced_molecular_graph_forward.11} parent=11 // pred_check
          %p455 = pneg %p254
        $region42: #{enhanced_molecular_graph_forward.11} parent=11 // pred_check_branch
          %457 = sbr.rel (%p455) target = $region44
        $region43: #{enhanced_molecular_graph_forward.11} parent=11 // pred_region
          %s459 = ssub.s32 16, 16
          %460 = vsyncadd [#allocation20], %s459
          %s462 = sshll.u32 [#allocation19], 4
          %s463 = int_to_ptr.vmem [resolvable:$true] %s462
          %465 = dma.hbm_to_vmem [thread:$0]  %s9, 16, %s463, [#allocation20]
        $region44: #{enhanced_molecular_graph_forward.11} parent=11 // pred_fallthru
          _
        // Predicated region
        $region45: #{enhanced_molecular_graph_forward.11} parent=11 // pred_check
          %p466 = pneg %p275
        $region46: #{enhanced_molecular_graph_forward.11} parent=11 // pred_check_branch
          %468 = sbr.rel (%p466) target = $region48
        $region47: #{enhanced_molecular_graph_forward.11} parent=11 // pred_region
          %s470 = ssub.s32 256, 256
          %471 = vsyncadd [#allocation20], %s470
          %s472 = sshll.u32 [#allocation21], 4
          %s473 = int_to_ptr.vmem [resolvable:$true] %s472
          %478 = dma.hbm_to_vmem [thread:$0]  %s10, 256, %s473, [#allocation20], 64, 64, 4
        $region48: #{enhanced_molecular_graph_forward.11} parent=11 // pred_fallthru
          _
        // Predicated region
        $region49: #{enhanced_molecular_graph_forward.11} parent=11 // pred_check
          %p479 = pneg %p296
        $region50: #{enhanced_molecular_graph_forward.11} parent=11 // pred_check_branch
          %481 = sbr.rel (%p479) target = $region52
        $region51: #{enhanced_molecular_graph_forward.11} parent=11 // pred_region
          %s483 = ssub.s32 16, 16
          %484 = vsyncadd [#allocation23], %s483
          %s486 = sshll.u32 [#allocation22], 4
          %s487 = int_to_ptr.vmem [resolvable:$true] %s486
          %489 = dma.hbm_to_vmem [thread:$0]  %s11, 16, %s487, [#allocation23]
        $region52: #{enhanced_molecular_graph_forward.11} parent=11 // pred_fallthru
          _
        // Predicated region
        $region53: #{enhanced_molecular_graph_forward.11} parent=11 // pred_check
          %p490 = pneg %p317
        $region54: #{enhanced_molecular_graph_forward.11} parent=11 // pred_check_branch
          %492 = sbr.rel (%p490) target = $region56
        $region55: #{enhanced_molecular_graph_forward.11} parent=11 // pred_region
          %s494 = ssub.s32 128, 128
          %495 = vsyncadd [#allocation23], %s494
          %s496 = sshll.u32 [#allocation24], 4
          %s497 = int_to_ptr.vmem [resolvable:$true] %s496
          %502 = dma.hbm_to_vmem [thread:$0]  %s12, 128, %s497, [#allocation23], 64, 64, 4
        $region56: #{enhanced_molecular_graph_forward.11} parent=11 // pred_fallthru
          _
        // Predicated region
        $region57: #{enhanced_molecular_graph_forward.11} parent=11 // pred_check
          %p503 = pneg %p338
        $region58: #{enhanced_molecular_graph_forward.11} parent=11 // pred_check_branch
          %505 = sbr.rel (%p503) target = $region60
        $region59: #{enhanced_molecular_graph_forward.11} parent=11 // pred_region
          _
        $region60: #{enhanced_molecular_graph_forward.11} parent=11 // pred_fallthru
          _
      $region12: #{enhanced_molecular_graph_forward.11} parent=5 // pred_fallthru
        _
      %p506 = scmp.lt.s32.totalorder %s34, 2
      // Predicated region
      $region61: #{enhanced_molecular_graph_forward.11} parent=5 // pred_check
        %p507 = pneg %p506
      $region62: #{enhanced_molecular_graph_forward.11} parent=5 // pred_check_branch
        %509 = sbr.rel (%p507) target = $region64
      $region63: #{enhanced_molecular_graph_forward.11} parent=5 // pred_region
        // Predicated region
        $region65: #{enhanced_molecular_graph_forward.11} parent=63 // pred_check
          %p510 = pneg %p54
        $region66: #{enhanced_molecular_graph_forward.11} parent=63 // pred_check_branch
          %512 = sbr.rel (%p510) target = $region68
        $region67: #{enhanced_molecular_graph_forward.11} parent=63 // pred_region
          %s513 = sand.u32 %s44, 1
          %s514 = scalar_lea.sflag [#allocation5], %s513
          %s515 = sand.u32 %s44, 1
          %s516 = smul.addr %s515, 8
          %s517 = scalar_lea.vmem [#allocation4], %s516
          %s519 = ssub.s32 128, 128
          %520 = vsyncadd %s514, %s519
          %s521 = smul.addr %s34, 128
          %s522 = scalar_lea.hbm %s0, %s521
          %s524 = sshll.u32 %s517, 4
          %s525 = int_to_ptr.vmem [resolvable:$true] %s524
          %527 = dma.hbm_to_vmem [thread:$0]  %s522, 128, %s525, %s514
        $region68: #{enhanced_molecular_graph_forward.11} parent=63 // pred_fallthru
          _
        // Predicated region
        $region69: #{enhanced_molecular_graph_forward.11} parent=63 // pred_check
          %p528 = pneg %p80
        $region70: #{enhanced_molecular_graph_forward.11} parent=63 // pred_check_branch
          %530 = sbr.rel (%p528) target = $region72
        $region71: #{enhanced_molecular_graph_forward.11} parent=63 // pred_region
          %s531 = sand.u32 %s34, 1
          %s532 = scalar_lea.sflag [#allocation8], %s531
          %s533 = sand.u32 %s70, 1
          %s534 = scalar_lea.vmem [#allocation7], %s533
          %s536 = ssub.s32 16, 16
          %537 = vsyncadd %s532, %s536
          %s538 = smul.addr %s34, 16
          %s539 = scalar_lea.hbm %s1, %s538
          %s541 = sshll.u32 %s534, 4
          %s542 = int_to_ptr.vmem [resolvable:$true] %s541
          %544 = dma.hbm_to_vmem [thread:$0]  %s539, 16, %s542, %s532
        $region72: #{enhanced_molecular_graph_forward.11} parent=63 // pred_fallthru
          _
      $region64: #{enhanced_molecular_graph_forward.11} parent=5 // pred_fallthru
        _
      %p545 = scmp.le.s32.totalorder 1, %s34
      %p546 = scmp.lt.s32.totalorder %s34, 3
      %p547 = pnand %p545, %p546
      %p548 = pneg %p547
      // Predicated region
      $region73: #{enhanced_molecular_graph_forward.11} parent=5 // pred_check
        _
      $region74: #{enhanced_molecular_graph_forward.11} parent=5 // pred_check_branch
        %550 = sbr.rel (%p547) target = $region76
      $region75: #{enhanced_molecular_graph_forward.11} parent=5 // pred_region
        %s551 = ssub.s32 %s34, 1
        %s552 = sand.u32 %s47, 1
        %s553 = scalar_lea.sflag [#allocation5], %s552
        %s554 = sand.u32 %s47, 1
        %s555 = smul.addr %s554, 8
        %s556 = scalar_lea.vmem [#allocation4], %s555
        // Predicated region
        $region77: #{enhanced_molecular_graph_forward.11} parent=75 // pred_check
          %p557 = pneg %p60
        $region78: #{enhanced_molecular_graph_forward.11} parent=75 // pred_check_branch
          %559 = sbr.rel (%p557) target = $region80
        $region79: #{enhanced_molecular_graph_forward.11} parent=75 // pred_region
          %560 = dma.done %s553, 128
        $region80: #{enhanced_molecular_graph_forward.11} parent=75 // pred_fallthru
          _
        %s561 = sand.u32 %s39, 1
        %s562 = scalar_lea.sflag [#allocation8], %s561
        %s563 = sand.u32 %s73, 1
        %s564 = scalar_lea.vmem [#allocation7], %s563
        // Predicated region
        $region81: #{enhanced_molecular_graph_forward.11} parent=75 // pred_check
          %p565 = pneg %p86
        $region82: #{enhanced_molecular_graph_forward.11} parent=75 // pred_check_branch
          %567 = sbr.rel (%p565) target = $region84
        $region83: #{enhanced_molecular_graph_forward.11} parent=75 // pred_region
          %568 = dma.done %s562, 16
        $region84: #{enhanced_molecular_graph_forward.11} parent=75 // pred_fallthru
          _
        // Predicated region
        $region85: #{enhanced_molecular_graph_forward.11} parent=75 // pred_check
          %p569 = pneg %p107
        $region86: #{enhanced_molecular_graph_forward.11} parent=75 // pred_check_branch
          %571 = sbr.rel (%p569) target = $region88
        $region87: #{enhanced_molecular_graph_forward.11} parent=75 // pred_region
          %572 = dma.done [#allocation8], 128
        $region88: #{enhanced_molecular_graph_forward.11} parent=75 // pred_fallthru
          _
        // Predicated region
        $region89: #{enhanced_molecular_graph_forward.11} parent=75 // pred_check
          %p573 = pneg %p128
        $region90: #{enhanced_molecular_graph_forward.11} parent=75 // pred_check_branch
          %575 = sbr.rel (%p573) target = $region92
        $region91: #{enhanced_molecular_graph_forward.11} parent=75 // pred_region
          %576 = dma.done [#allocation11], 256
        $region92: #{enhanced_molecular_graph_forward.11} parent=75 // pred_fallthru
          _
        // Predicated region
        $region93: #{enhanced_molecular_graph_forward.11} parent=75 // pred_check
          %p577 = pneg %p149
        $region94: #{enhanced_molecular_graph_forward.11} parent=75 // pred_check_branch
          %579 = sbr.rel (%p577) target = $region96
        $region95: #{enhanced_molecular_graph_forward.11} parent=75 // pred_region
          %580 = dma.done [#allocation11], 256
        $region96: #{enhanced_molecular_graph_forward.11} parent=75 // pred_fallthru
          _
        // Predicated region
        $region97: #{enhanced_molecular_graph_forward.11} parent=75 // pred_check
          %p581 = pneg %p170
        $region98: #{enhanced_molecular_graph_forward.11} parent=75 // pred_check_branch
          %583 = sbr.rel (%p581) target = $region100
        $region99: #{enhanced_molecular_graph_forward.11} parent=75 // pred_region
          %584 = dma.done [#allocation14], 16
        $region100: #{enhanced_molecular_graph_forward.11} parent=75 // pred_fallthru
          _
        // Predicated region
        $region101: #{enhanced_molecular_graph_forward.11} parent=75 // pred_check
          %p585 = pneg %p191
        $region102: #{enhanced_molecular_graph_forward.11} parent=75 // pred_check_branch
          %587 = sbr.rel (%p585) target = $region104
        $region103: #{enhanced_molecular_graph_forward.11} parent=75 // pred_region
          %588 = dma.done [#allocation14], 16
        $region104: #{enhanced_molecular_graph_forward.11} parent=75 // pred_fallthru
          _
        // Predicated region
        $region105: #{enhanced_molecular_graph_forward.11} parent=75 // pred_check
          %p589 = pneg %p212
        $region106: #{enhanced_molecular_graph_forward.11} parent=75 // pred_check_branch
          %591 = sbr.rel (%p589) target = $region108
        $region107: #{enhanced_molecular_graph_forward.11} parent=75 // pred_region
          %592 = dma.done [#allocation17], 16
        $region108: #{enhanced_molecular_graph_forward.11} parent=75 // pred_fallthru
          _
        // Predicated region
        $region109: #{enhanced_molecular_graph_forward.11} parent=75 // pred_check
          %p593 = pneg %p233
        $region110: #{enhanced_molecular_graph_forward.11} parent=75 // pred_check_branch
          %595 = sbr.rel (%p593) target = $region112
        $region111: #{enhanced_molecular_graph_forward.11} parent=75 // pred_region
          %596 = dma.done [#allocation17], 16
        $region112: #{enhanced_molecular_graph_forward.11} parent=75 // pred_fallthru
          _
        // Predicated region
        $region113: #{enhanced_molecular_graph_forward.11} parent=75 // pred_check
          %p597 = pneg %p254
        $region114: #{enhanced_molecular_graph_forward.11} parent=75 // pred_check_branch
          %599 = sbr.rel (%p597) target = $region116
        $region115: #{enhanced_molecular_graph_forward.11} parent=75 // pred_region
          %600 = dma.done [#allocation20], 16
        $region116: #{enhanced_molecular_graph_forward.11} parent=75 // pred_fallthru
          _
        // Predicated region
        $region117: #{enhanced_molecular_graph_forward.11} parent=75 // pred_check
          %p601 = pneg %p275
        $region118: #{enhanced_molecular_graph_forward.11} parent=75 // pred_check_branch
          %603 = sbr.rel (%p601) target = $region120
        $region119: #{enhanced_molecular_graph_forward.11} parent=75 // pred_region
          %604 = dma.done [#allocation20], 256
        $region120: #{enhanced_molecular_graph_forward.11} parent=75 // pred_fallthru
          _
        // Predicated region
        $region121: #{enhanced_molecular_graph_forward.11} parent=75 // pred_check
          %p605 = pneg %p296
        $region122: #{enhanced_molecular_graph_forward.11} parent=75 // pred_check_branch
          %607 = sbr.rel (%p605) target = $region124
        $region123: #{enhanced_molecular_graph_forward.11} parent=75 // pred_region
          %608 = dma.done [#allocation23], 16
        $region124: #{enhanced_molecular_graph_forward.11} parent=75 // pred_fallthru
          _
        // Predicated region
        $region125: #{enhanced_molecular_graph_forward.11} parent=75 // pred_check
          %p609 = pneg %p317
        $region126: #{enhanced_molecular_graph_forward.11} parent=75 // pred_check_branch
          %611 = sbr.rel (%p609) target = $region128
        $region127: #{enhanced_molecular_graph_forward.11} parent=75 // pred_region
          %612 = dma.done [#allocation23], 128
        $region128: #{enhanced_molecular_graph_forward.11} parent=75 // pred_fallthru
          _
        %s613 = sand.u32 %s47, 1
        %s614 = scalar_lea.sflag [#allocation5], %s613
        %s615 = sand.u32 %s47, 1
        %s616 = smul.addr %s615, 8
        %s617 = scalar_lea.vmem [#allocation4], %s616
        %p618 = pneg %p60
        %p619 = pneg %p57
        %s620 = sand.u32 %s39, 1
        %s621 = scalar_lea.sflag [#allocation8], %s620
        %s622 = sand.u32 %s73, 1
        %s623 = scalar_lea.vmem [#allocation7], %s622
        %p624 = pneg %p86
        %p625 = pneg %p83
        %p626 = pneg %p107
        %p627 = pneg %p104
        %p628 = pneg %p128
        %p629 = pneg %p125
        %p630 = pneg %p149
        %p631 = pneg %p146
        %p632 = pneg %p170
        %p633 = pneg %p167
        %p634 = pneg %p191
        %p635 = pneg %p188
        %p636 = pneg %p212
        %p637 = pneg %p209
        %p638 = pneg %p233
        %p639 = pneg %p230
        %p640 = pneg %p254
        %p641 = pneg %p251
        %p642 = pneg %p275
        %p643 = pneg %p272
        %p644 = pneg %p296
        %p645 = pneg %p293
        %p646 = pneg %p317
        %p647 = pneg %p314
        %p648 = pneg %p338
        %p649 = pneg %p335
        %p650 = pneg %p359
        %p651 = pneg %p356
        %p653 = scmp.eq.s32.totalorder %s39, 0
        // Predicated region
        $region129: #{enhanced_molecular_graph_forward.11} parent=75 // pred_check
          %p654 = pneg %p653
        $region130: #{enhanced_molecular_graph_forward.11} parent=75 // pred_check_branch
          %656 = sbr.rel (%p654) target = $region132
        $region131: #{enhanced_molecular_graph_forward.11} parent=75 // pred_region
          %vm657 = vcmask 261120
          %658 = vst.msk [vmem:[#allocation2] sm:$0xff] %vm657, 0.0
        $region132: #{enhanced_molecular_graph_forward.11} parent=75 // pred_fallthru
          _
        %v659 = vlaneseq
        %v660 = vshrl.u32 %v659, 7
        %v661 = vld [vmem:[%s564] sm:$0x1]
        %v662 = vlaneseq
        %v663 = vshrl.u32 %v662, 7
        %v664 = vsub.s32 0, %v663
        %v665 = vrot.slane %v661, %v664
        %vm666 = vcmp.eq.s32.totalorder %v665, %v660
        %v667 = vsel %vm666, 1, 0
        %v668 = vcvt.s32.f32 %v667
        %v669 = vpack.c.bf16 %v668, %v668
        %v670 = vld [vmem:[#allocation2] sm:$0xff]
        %v671 = vld [vmem:[%s556] sm:$0xff]
        %v672 = vpack.c.bf16 %v671, %v671
        %vm673 = vcmask 64512
        %v675 = vsel %vm673, %v669, 0
        %vm677 = vcmask 1043456
        %v679 = vsel %vm677, %v672, 0
        %681 = vmatprep.subr.bf16.mxu0 0
        %682 = vmatpush1.bf16.msra.mxu0 %v679
        %683 = vmatprep.subr.bf16.mxu0 0
        %684 = vmatpush1.bf16.msra.mxu0 0
        %685 = vmatprep.subr.bf16.mxu0 0
        %686 = vmatpush1.bf16.msra.mxu0 0
        %687 = vmatprep.subr.bf16.mxu0 0
        %688 = vmatpush1.bf16.msra.mxu0 0
        %689 = vmatprep.subr.bf16.mxu0 0
        %690 = vmatpush1.bf16.msra.mxu0 0
        %691 = vmatprep.subr.bf16.mxu0 0
        %692 = vmatpush1.bf16.msra.mxu0 0
        %693 = vmatprep.subr.bf16.mxu0 0
        %694 = vmatpush1.bf16.msra.mxu0 0
        %695 = vmatprep.subr.bf16.mxu0 0
        %696 = vmatpush1.bf16.msra.mxu0 0
        %697 = vmatprep.subr.bf16.mxu0 0
        %698 = vmatpush1.bf16.msra.mxu0 0
        %699 = vmatprep.subr.bf16.mxu0 0
        %700 = vmatpush1.bf16.msra.mxu0 0
        %701 = vmatprep.subr.bf16.mxu0 0
        %702 = vmatpush1.bf16.msra.mxu0 0
        %703 = vmatprep.subr.bf16.mxu0 0
        %704 = vmatpush1.bf16.msra.mxu0 0
        %705 = vmatprep.subr.bf16.mxu0 0
        %706 = vmatpush1.bf16.msra.mxu0 0
        %707 = vmatprep.subr.bf16.mxu0 0
        %708 = vmatpush1.bf16.msra.mxu0 0
        %709 = vmatprep.subr.bf16.mxu0 0
        %710 = vmatpush1.bf16.msra.mxu0 0
        %711 = vmatprep.subr.bf16.mxu0 0
        %712 = vmatpush1.bf16.msra.mxu0 0
        %713 = vmatprep.mubr.bf16.mxu0 0
        %714 = vmatmul.mubr.bf16.gmra.mrb[0].mxu0 %v675
        %v715 = vpop.f32.mrb[0].mxu0
        %v716 = vadd.f32 0.0, %v715
        %v717 = vpop.f32.mrb[0].mxu0
        %v718 = vpop.f32.mrb[0].mxu0
        %v719 = vpop.f32.mrb[0].mxu0
        %720 = vdwg.mxu0
        %v721 = vadd.f32 %v670, %v716
        %vm722 = vcmask 261120
        %723 = vst.msk [vmem:[#allocation2] sm:$0xff] %vm722, %v721
        %p724 = scmp.eq.s32.totalorder %s39, 1
        // Predicated region
        $region133: #{enhanced_molecular_graph_forward.11} parent=75 // pred_check
          %p725 = pneg %p724
        $region134: #{enhanced_molecular_graph_forward.11} parent=75 // pred_check_branch
          %727 = sbr.rel (%p725) target = $region136
        $region135: #{enhanced_molecular_graph_forward.11} parent=75 // pred_region
          %v728 = vld [vmem:[#allocation2] sm:$0xff]
          %v729 = vld [vmem:[#allocation9] sm:$0xff]
          %731 = vset.pattern.permute.xlu0 0
          %732 = vperm.xlu0 %731, %v729
          %v733 = vpop.permute.xlu0 %732
          %v735 = vmul.f32 %v728, %v733
          %v736 = vpack.c.bf16 %v735, %v735
          %v737 = vld [vmem:[#allocation10] sm:$0xf]
          %v738 = vld [vmem:[#allocation10 + $0x4] sm:$0xf]
          %v739 = vld [vmem:[#allocation10 + $0x8] sm:$0xf]
          %v740 = vld [vmem:[#allocation10 + $0xc] sm:$0xf]
          %v741 = vpack.c.bf16 %v728, %v728
          %v742 = vld [vmem:[#allocation12] sm:$0xf]
          %v743 = vld [vmem:[#allocation12 + $0x4] sm:$0xf]
          %v744 = vld [vmem:[#allocation12 + $0x8] sm:$0xf]
          %v745 = vld [vmem:[#allocation12 + $0xc] sm:$0xf]
          %v750 = vunpack.c.l.b16 %v742
          %v751 = vunpack.c.l.b16 %v743
          %v752 = vunpack.c.l.b16 %v744
          %v753 = vunpack.c.l.b16 %v745
          %v754 = vpack.c.b16 %v751, %v750
          %v755 = vpack.c.b16 %v753, %v752
          %v759 = vsel %vm722, %v741, 0
          %761 = vmatprep.subr.bf16.mxu0 0
          %762 = vmatpush1.bf16.msra.mxu0 %v754
          %763 = vmatprep.subr.bf16.mxu0 0
          %764 = vmatpush1.bf16.msra.mxu0 %v755
          %765 = vmatprep.subr.bf16.mxu0 0
          %766 = vmatpush1.bf16.msra.mxu0 0
          %767 = vmatprep.subr.bf16.mxu0 0
          %768 = vmatpush1.bf16.msra.mxu0 0
          %769 = vmatprep.subr.bf16.mxu0 0
          %770 = vmatpush1.bf16.msra.mxu0 0
          %771 = vmatprep.subr.bf16.mxu0 0
          %772 = vmatpush1.bf16.msra.mxu0 0
          %773 = vmatprep.subr.bf16.mxu0 0
          %774 = vmatpush1.bf16.msra.mxu0 0
          %775 = vmatprep.subr.bf16.mxu0 0
          %776 = vmatpush1.bf16.msra.mxu0 0
          %777 = vmatprep.subr.bf16.mxu0 0
          %778 = vmatpush1.bf16.msra.mxu0 0
          %779 = vmatprep.subr.bf16.mxu0 0
          %780 = vmatpush1.bf16.msra.mxu0 0
          %781 = vmatprep.subr.bf16.mxu0 0
          %782 = vmatpush1.bf16.msra.mxu0 0
          %783 = vmatprep.subr.bf16.mxu0 0
          %784 = vmatpush1.bf16.msra.mxu0 0
          %785 = vmatprep.subr.bf16.mxu0 0
          %786 = vmatpush1.bf16.msra.mxu0 0
          %787 = vmatprep.subr.bf16.mxu0 0
          %788 = vmatpush1.bf16.msra.mxu0 0
          %789 = vmatprep.subr.bf16.mxu0 0
          %790 = vmatpush1.bf16.msra.mxu0 0
          %791 = vmatprep.subr.bf16.mxu0 0
          %792 = vmatpush1.bf16.msra.mxu0 0
          %793 = vmatprep.mubr.bf16.mxu0 0
          %794 = vmatmul.mubr.bf16.gmra.mrb[0].mxu0 %v759
          %v795 = vpop.f32.mrb[0].mxu0
          %v796 = vadd.f32 0.0, %v795
          %v797 = vpop.f32.mrb[0].mxu0
          %v798 = vpop.f32.mrb[0].mxu0
          %v799 = vpop.f32.mrb[0].mxu0
          %800 = vdwg.mxu0
          %v805 = vunpack.c.l.b16 %v737
          %v806 = vunpack.c.l.b16 %v738
          %v807 = vunpack.c.l.b16 %v739
          %v808 = vunpack.c.l.b16 %v740
          %v809 = vpack.c.b16 %v806, %v805
          %v810 = vpack.c.b16 %v808, %v807
          %v814 = vsel %vm722, %v736, 0
          %816 = vmatprep.subr.bf16.mxu0 0
          %817 = vmatpush1.bf16.msra.mxu0 %v809
          %818 = vmatprep.subr.bf16.mxu0 0
          %819 = vmatpush1.bf16.msra.mxu0 %v810
          %820 = vmatprep.subr.bf16.mxu0 0
          %821 = vmatpush1.bf16.msra.mxu0 0
          %822 = vmatprep.subr.bf16.mxu0 0
          %823 = vmatpush1.bf16.msra.mxu0 0
          %824 = vmatprep.subr.bf16.mxu0 0
          %825 = vmatpush1.bf16.msra.mxu0 0
          %826 = vmatprep.subr.bf16.mxu0 0
          %827 = vmatpush1.bf16.msra.mxu0 0
          %828 = vmatprep.subr.bf16.mxu0 0
          %829 = vmatpush1.bf16.msra.mxu0 0
          %830 = vmatprep.subr.bf16.mxu0 0
          %831 = vmatpush1.bf16.msra.mxu0 0
          %832 = vmatprep.subr.bf16.mxu0 0
          %833 = vmatpush1.bf16.msra.mxu0 0
          %834 = vmatprep.subr.bf16.mxu0 0
          %835 = vmatpush1.bf16.msra.mxu0 0
          %836 = vmatprep.subr.bf16.mxu0 0
          %837 = vmatpush1.bf16.msra.mxu0 0
          %838 = vmatprep.subr.bf16.mxu0 0
          %839 = vmatpush1.bf16.msra.mxu0 0
          %840 = vmatprep.subr.bf16.mxu0 0
          %841 = vmatpush1.bf16.msra.mxu0 0
          %842 = vmatprep.subr.bf16.mxu0 0
          %843 = vmatpush1.bf16.msra.mxu0 0
          %844 = vmatprep.subr.bf16.mxu0 0
          %845 = vmatpush1.bf16.msra.mxu0 0
          %846 = vmatprep.subr.bf16.mxu0 0
          %847 = vmatpush1.bf16.msra.mxu0 0
          %848 = vmatprep.mubr.bf16.mxu0 0
          %849 = vmatmul.mubr.bf16.gmra.mrb[0].mxu0 %v814
          %v850 = vpop.f32.mrb[0].mxu0
          %v851 = vadd.f32 %v796, %v850
          %v852 = vpop.f32.mrb[0].mxu0
          %v853 = vpop.f32.mrb[0].mxu0
          %v854 = vpop.f32.mrb[0].mxu0
          %855 = vdwg.mxu0
          %v856 = vld [vmem:[#allocation13] sm:$0x1]
          %v858 = vlaneseq
          %v859 = vshrl.u32 %v858, 7
          %v860 = vsub.s32 0, %v859
          %v861 = vrot.slane %v856, %v860
          %v863 = vadd.f32 %v851, %v861
          %v864 = vld [vmem:[#allocation15] sm:$0x1]
          %v865 = vld [vmem:[#allocation16] sm:$0x1]
          %v866 = vld [vmem:[#allocation18] sm:$0x1]
          %v867 = vld [vmem:[#allocation19] sm:$0x1]
          %v869 = vlaneseq
          %v870 = vshrl.u32 %v869, 7
          %v871 = vsub.s32 0, %v870
          %v872 = vrot.slane %v866, %v871
          %v874 = vsub.f32 %v863, %v872
          %v876 = vlaneseq
          %v877 = vshrl.u32 %v876, 7
          %v878 = vsub.s32 0, %v877
          %v879 = vrot.slane %v864, %v878
          %v881 = vmul.f32 %v874, %v879
          %v882 = vadd.f32 %v867, 1e-05
          %v883 = vrsqrt.pop %v882
          %v885 = vlaneseq
          %v886 = vshrl.u32 %v885, 7
          %v887 = vsub.s32 0, %v886
          %v888 = vrot.slane %v883, %v887
          %v890 = vmul.f32 %v881, %v888
          %v892 = vlaneseq
          %v893 = vshrl.u32 %v892, 7
          %v894 = vsub.s32 0, %v893
          %v895 = vrot.slane %v865, %v894
          %v897 = vadd.f32 %v890, %v895
          %v898 = vmax.f32 %v897, 0.0
          %v899 = vpack.c.bf16 %v898, %v898
          %v900 = vld [vmem:[#allocation21] sm:$0xf]
          %v901 = vld [vmem:[#allocation21 + $0x4] sm:$0xf]
          %v902 = vld [vmem:[#allocation21 + $0x8] sm:$0xf]
          %v903 = vld [vmem:[#allocation21 + $0xc] sm:$0xf]
          %v904 = vld [vmem:[#allocation22] sm:$0x1]
          %v906 = vlaneseq
          %v907 = vshrl.u32 %v906, 7
          %v908 = vsub.s32 0, %v907
          %v909 = vrot.slane %v904, %v908
          %v915 = vunpack.c.l.b16 %v900
          %v916 = vunpack.c.l.b16 %v901
          %v917 = vunpack.c.l.b16 %v902
          %v918 = vunpack.c.l.b16 %v903
          %v919 = vpack.c.b16 %v916, %v915
          %v920 = vpack.c.b16 %v918, %v917
          %v924 = vsel %vm722, %v899, 0
          %926 = vmatprep.subr.bf16.mxu0 0
          %927 = vmatpush1.bf16.msra.mxu0 %v919
          %928 = vmatprep.subr.bf16.mxu0 0
          %929 = vmatpush1.bf16.msra.mxu0 %v920
          %930 = vmatprep.subr.bf16.mxu0 0
          %931 = vmatpush1.bf16.msra.mxu0 0
          %932 = vmatprep.subr.bf16.mxu0 0
          %933 = vmatpush1.bf16.msra.mxu0 0
          %934 = vmatprep.subr.bf16.mxu0 0
          %935 = vmatpush1.bf16.msra.mxu0 0
          %936 = vmatprep.subr.bf16.mxu0 0
          %937 = vmatpush1.bf16.msra.mxu0 0
          %938 = vmatprep.subr.bf16.mxu0 0
          %939 = vmatpush1.bf16.msra.mxu0 0
          %940 = vmatprep.subr.bf16.mxu0 0
          %941 = vmatpush1.bf16.msra.mxu0 0
          %942 = vmatprep.subr.bf16.mxu0 0
          %943 = vmatpush1.bf16.msra.mxu0 0
          %944 = vmatprep.subr.bf16.mxu0 0
          %945 = vmatpush1.bf16.msra.mxu0 0
          %946 = vmatprep.subr.bf16.mxu0 0
          %947 = vmatpush1.bf16.msra.mxu0 0
          %948 = vmatprep.subr.bf16.mxu0 0
          %949 = vmatpush1.bf16.msra.mxu0 0
          %950 = vmatprep.subr.bf16.mxu0 0
          %951 = vmatpush1.bf16.msra.mxu0 0
          %952 = vmatprep.subr.bf16.mxu0 0
          %953 = vmatpush1.bf16.msra.mxu0 0
          %954 = vmatprep.subr.bf16.mxu0 0
          %955 = vmatpush1.bf16.msra.mxu0 0
          %956 = vmatprep.subr.bf16.mxu0 0
          %957 = vmatpush1.bf16.msra.mxu0 0
          %958 = vmatprep.mubr.bf16.mxu0 0
          %959 = vmatmul.mubr.bf16.gmra.mrb[0].mxu0 %v924
          %v960 = vpop.f32.mrb[0].mxu0
          %v961 = vadd.f32 %v909, %v960
          %v962 = vpop.f32.mrb[0].mxu0
          %v963 = vpop.f32.mrb[0].mxu0
          %v964 = vpop.f32.mrb[0].mxu0
          %965 = vdwg.mxu0
          %v966 = vmax.f32 %v961, 0.0
          %v967 = vpack.c.bf16 %v966, %v966
          %v968 = vld [vmem:[#allocation24] sm:$0xf]
          %v969 = vld [vmem:[#allocation24 + $0x4] sm:$0xf]
          %v970 = vld [vmem:[#allocation3] sm:$0x1]
          %v972 = vlaneseq
          %v973 = vshrl.u32 %v972, 7
          %v974 = vsub.s32 0, %v973
          %v975 = vrot.slane %v970, %v974
          %v979 = vunpack.c.l.b16 %v968
          %v980 = vunpack.c.l.b16 %v969
          %v981 = vpack.c.b16 %v980, %v979
          %vm983 = vcmask 130048
          %v985 = vsel %vm983, %v967, 0
          %987 = vmatprep.subr.bf16.mxu0 0
          %988 = vmatpush1.bf16.msra.mxu0 %v981
          %989 = vmatprep.subr.bf16.mxu0 0
          %990 = vmatpush1.bf16.msra.mxu0 0
          %991 = vmatprep.subr.bf16.mxu0 0
          %992 = vmatpush1.bf16.msra.mxu0 0
          %993 = vmatprep.subr.bf16.mxu0 0
          %994 = vmatpush1.bf16.msra.mxu0 0
          %995 = vmatprep.subr.bf16.mxu0 0
          %996 = vmatpush1.bf16.msra.mxu0 0
          %997 = vmatprep.subr.bf16.mxu0 0
          %998 = vmatpush1.bf16.msra.mxu0 0
          %999 = vmatprep.subr.bf16.mxu0 0
          %1000 = vmatpush1.bf16.msra.mxu0 0
          %1001 = vmatprep.subr.bf16.mxu0 0
          %1002 = vmatpush1.bf16.msra.mxu0 0
          %1003 = vmatprep.subr.bf16.mxu0 0
          %1004 = vmatpush1.bf16.msra.mxu0 0
          %1005 = vmatprep.subr.bf16.mxu0 0
          %1006 = vmatpush1.bf16.msra.mxu0 0
          %1007 = vmatprep.subr.bf16.mxu0 0
          %1008 = vmatpush1.bf16.msra.mxu0 0
          %1009 = vmatprep.subr.bf16.mxu0 0
          %1010 = vmatpush1.bf16.msra.mxu0 0
          %1011 = vmatprep.subr.bf16.mxu0 0
          %1012 = vmatpush1.bf16.msra.mxu0 0
          %1013 = vmatprep.subr.bf16.mxu0 0
          %1014 = vmatpush1.bf16.msra.mxu0 0
          %1015 = vmatprep.subr.bf16.mxu0 0
          %1016 = vmatpush1.bf16.msra.mxu0 0
          %1017 = vmatprep.subr.bf16.mxu0 0
          %1018 = vmatpush1.bf16.msra.mxu0 0
          %1019 = vmatprep.mubr.bf16.mxu0 0
          %1020 = vmatmul.mubr.bf16.gmra.mrb[0].mxu0 %v985
          %v1021 = vpop.f32.mrb[0].mxu0
          %v1022 = vadd.f32 %v975, %v1021
          %v1023 = vpop.f32.mrb[0].mxu0
          %v1024 = vpop.f32.mrb[0].mxu0
          %v1025 = vpop.f32.mrb[0].mxu0
          %1026 = vdwg.mxu0
          %vm1027 = vcmask 7168
          %1028 = vst.msk [vmem:[#allocation25] sm:$0xff] %vm1027, %v1022
        $region136: #{enhanced_molecular_graph_forward.11} parent=75 // pred_fallthru
          _
        // Predicated region
        $region137: #{enhanced_molecular_graph_forward.11} parent=75 // pred_check
          %p1029 = pneg %p356
        $region138: #{enhanced_molecular_graph_forward.11} parent=75 // pred_check_branch
          %1031 = sbr.rel (%p1029) target = $region140
        $region139: #{enhanced_molecular_graph_forward.11} parent=75 // pred_region
          %s1033 = ssub.s32 128, 128
          %1034 = vsyncadd [#allocation6], %s1033
          %s1036 = sshll.u32 [#allocation25], 4
          %s1037 = int_to_ptr.vmem [resolvable:$true] %s1036
          %1039 = dma.vmem_to_hbm [thread:$0]  %s1037, 128, %s14, [#allocation6]
        $region140: #{enhanced_molecular_graph_forward.11} parent=75 // pred_fallthru
          _
        // Predicated region
        $region141: #{enhanced_molecular_graph_forward.11} parent=75 // pred_check
          %p1040 = pneg %p356
        $region142: #{enhanced_molecular_graph_forward.11} parent=75 // pred_check_branch
          %1042 = sbr.rel (%p1040) target = $region144
        $region143: #{enhanced_molecular_graph_forward.11} parent=75 // pred_region
          %1043 = dma.done [#allocation6], 128
        $region144: #{enhanced_molecular_graph_forward.11} parent=75 // pred_fallthru
          _
      $region76: #{enhanced_molecular_graph_forward.11} parent=5 // pred_fallthru
        _
      %p1044 = scmp.le.s32.totalorder 2, %s34
      // Predicated region
      $region145: #{enhanced_molecular_graph_forward.11} parent=5 // pred_check
        %p1045 = pneg %p1044
      $region146: #{enhanced_molecular_graph_forward.11} parent=5 // pred_check_branch
        %1047 = sbr.rel (%p1045) target = $region148
      $region147: #{enhanced_molecular_graph_forward.11} parent=5 // pred_region
        %s1048 = ssub.s32 %s34, 2
      $region148: #{enhanced_molecular_graph_forward.11} parent=5 // pred_fallthru
        _
    $region6: #{enhanced_molecular_graph_forward.11} parent=1 // loop_footer
      %s38 = sadd.s32 1, %s34
    $region7: #{enhanced_molecular_graph_forward.11} parent=1 // loop_footer_branch
      %33 = sbr.rel target = $region3
    $region8: #{enhanced_molecular_graph_forward.11} parent=1 // loop_exit
      _
    %1049 = vsyncpa [#allocation5], 1
    %s1050 = scalar_lea.sflag [#allocation5], 1
    %1051 = vsyncpa %s1050, 1
    %1052 = vsyncpa [#allocation8], 1
    %s1053 = scalar_lea.sflag [#allocation8], 1
    %1054 = vsyncpa %s1053, 1
    %1055 = vsyncpa [#allocation11], 1
    %1056 = vsyncpa [#allocation14], 1
    %1057 = vsyncpa [#allocation17], 1
    %1058 = vsyncpa [#allocation20], 1
    %1059 = vsyncpa [#allocation23], 1
    %1060 = vsyncpa [#allocation6], 1
    %s1061 = scalar_lea.sflag [#allocation6], 1
    %1062 = vsyncpa %s1061, 1

</llo_original>
